<compile_context>
chip_gen: v6e
topology: v6e:2x2x1
jax: 0.10.0
libtpu: 0.0.40
codegen_flags: <defaults>
</compile_context>

<pallas_src>
import jax
import jax.numpy as jnp
from jax import lax
from jax.experimental import pallas as pl
from jax.experimental.pallas import tpu as pltpu


# ---------------------------------------------------------------------------
# Vocab projection: (rows x H) @ (H x V) + bias, tiled over rows and V.
# ---------------------------------------------------------------------------
def matmul_bias_kernel(x_ref, w_ref, b_ref, o_ref):
    x = x_ref[...].astype(jnp.bfloat16)          # no-op when input is bf16
    acc = jnp.dot(x, w_ref[...], preferred_element_type=jnp.float32)
    o_ref[...] = (acc + b_ref[...]).astype(o_ref.dtype)


def matmul_bias(x, w, b):
    """x: (M, K) bf16/f32, w: (K, N) bf16, b: (1, N) f32  ->  (M, N) f32.

    K is kept whole (K = H here, small).
    # TODO(synk): for large K, add a K grid axis ("arbitrary") + f32 accumulator.
    """
    M, K = x.shape
    Kw, N = w.shape
    assert K == Kw and b.shape == (1, N)
    tn = 256 if N % 256 == 0 else 128            # 256-wide MXU on v6e/v7x
    tm = 256 if M % 256 == 0 else (128 if M % 128 == 0 else M)
    assert M % tm == 0 and N % tn == 0

    return pl.pallas_call(
        matmul_bias_kernel,
        out_shape=jax.ShapeDtypeStruct((M, N), jnp.float32),
        grid=(M // tm, N // tn),
        in_specs=[
            pl.BlockSpec((tm, K), lambda i, j: (i, 0)),
            pl.BlockSpec((K, tn), lambda i, j: (0, j)),   # W streamed per N tile
            pl.BlockSpec((1, tn), lambda i, j: (0, j)),
        ],
        out_specs=pl.BlockSpec((tm, tn), lambda i, j: (i, j)),
        compiler_params=pltpu.CompilerParams(
            dimension_semantics=("parallel", "parallel")),  # both TCs on v7x
    )(x, w, b)


# ---------------------------------------------------------------------------
# Fused input-gates + GRU recurrence.  One grid step == tb time steps.
# ---------------------------------------------------------------------------
def gru_decoder_kernel(emb_ref, h0_ref, wih_e_ref, wih_c_ref, bih_ref,
                       whh_ref, bhh_ref, hall_ref, h_scr):
    """
    emb_ref  : (tb, B, E)  bf16  time-major embeddings for this time block
    h0_ref   : (B, H)      f32   encoder final hidden state (== context)
    wih_e_ref: (E, 3H)     bf16  input->gates weights, embedding slice
    wih_c_ref: (H, 3H)     bf16  input->gates weights, context slice
    bih_ref  : (1, 3H)     f32
    whh_ref  : (H, 3H)     bf16  hidden->gates weights (PyTorch order r, z, n)
    bhh_ref  : (1, 3H)     f32
    hall_ref : (tb, B, H)  bf16  hidden states for this time block (time-major)
    h_scr    : (B, H) f32  VMEM  hidden state carried across time blocks
    """
    tb = emb_ref.shape[0]
    H = h0_ref.shape[-1]

    @pl.when(pl.program_id(0) == 0)
    def _():
        h_scr[...] = h0_ref[...]

    # Context gate contribution + input bias: constant over time.  Tiny matmul
    # recomputed once per grid step (usually exactly once since tb == T).
    ctx = jnp.dot(h0_ref[...].astype(jnp.bfloat16), wih_c_ref[...],
                  preferred_element_type=jnp.float32) + bih_ref[...]
    bhh = bhh_ref[...]

    def step(i, h):
        # Input->gates for step i: independent of h, rides on MXU slack.
        gi = jnp.dot(emb_ref[i], wih_e_ref[...],
                     preferred_element_type=jnp.float32) + ctx
        # Only this matmul sits on the serial critical chain.
        gh = jnp.dot(h.astype(jnp.bfloat16), whh_ref[...],
                     preferred_element_type=jnp.float32) + bhh
        # H is a multiple of 128, so gate splits fall on lane-tile boundaries.
        r = jax.nn.sigmoid(gi[:, 0:H] + gh[:, 0:H])
        z = jax.nn.sigmoid(gi[:, H:2 * H] + gh[:, H:2 * H])
        n = jnp.tanh(gi[:, 2 * H:] + r * gh[:, 2 * H:])    # b_hn inside r*(.)
        h = (1.0 - z) * n + z * h                           # PyTorch GRU update
        hall_ref[i] = h.astype(hall_ref.dtype)              # leading-axis store
        return h

    # Short fixed trip count -> unrolled fori_loop (LLO visibility, bounded
    # vreg live ranges).  Carry stays f32; only the stored H_all is bf16.
    h_scr[...] = lax.fori_loop(0, tb, step, h_scr[...], unroll=True)


def gru_recurrence(emb, h0, w_ih_emb, w_ih_ctx, b_ih, w_hh, b_hh, *, tb):
    T, B, E = emb.shape
    H = h0.shape[-1]
    assert T % tb == 0

    return pl.pallas_call(
        gru_decoder_kernel,
        out_shape=jax.ShapeDtypeStruct((T, B, H), jnp.bfloat16),
        grid_spec=pltpu.PrefetchScalarGridSpec(
            num_scalar_prefetch=0,
            grid=(T // tb,),
            in_specs=[
                pl.BlockSpec((tb, B, E), lambda t: (t, 0, 0)),   # embeddings
                # Constant-index resident blocks below (all tiny; default
                # double-buffering kept for robustness — pl.Buffered(1) would
                # trim the redundant second copy at large H).
                pl.BlockSpec((B, H), lambda t: (0, 0)),          # h0 / context
                pl.BlockSpec((E, 3 * H), lambda t: (0, 0)),      # W_ih[:E]
                pl.BlockSpec((H, 3 * H), lambda t: (0, 0)),      # W_ih[E:]
                pl.BlockSpec((1, 3 * H), lambda t: (0, 0)),      # b_ih
                pl.BlockSpec((H, 3 * H), lambda t: (0, 0)),      # W_hh
                pl.BlockSpec((1, 3 * H), lambda t: (0, 0)),      # b_hh
            ],
            out_specs=pl.BlockSpec((tb, B, H), lambda t: (t, 0, 0)),
            scratch_shapes=[pltpu.VMEM((B, H), jnp.float32)],
        ),
        # TODO(synk): for B >= 16 on v7x, add a leading "parallel" batch-tile
        #             grid axis so both TensorCores share the recurrence.
        compiler_params=pltpu.CompilerParams(
            dimension_semantics=("arbitrary",)),   # true recurrence over time
    )(emb, h0, w_ih_emb, w_ih_ctx, b_ih, w_hh, b_hh)


# ---------------------------------------------------------------------------
# Concrete Decoder.forward(X, state)
# ---------------------------------------------------------------------------
def decoder_forward(X_tokens, state, params, *, tb=None):
    """X_tokens: (B, T) int32 token ids; state: (num_layers=1, B, H).
    Returns (logits (B, T, V), new_state (1, B, H))."""
    B, T = X_tokens.shape
    H = state.shape[-1]
    E = params["embedding"].shape[-1]
    V = params["w_out"].shape[-1]
    if tb is None:
        tb = T if T <= 32 else 16      # amortize per-grid-step overhead
    assert T % tb == 0

    # Time-major embedding gather (bf16): only the small (B,T) index array is
    # transposed, never a large activation tensor.
    emb = jnp.take(params["embedding"], X_tokens.T, axis=0)      # (T, B, E) bf16
    context = state[-1].astype(jnp.float32)                      # (B, H)

    w_ih_emb = params["w_ih"][:E]          # (E, 3H) bf16
    w_ih_ctx = params["w_ih"][E:]          # (H, 3H) bf16

    # Fused input-gates + GRU recurrence (the only serial part).
    h_all = gru_recurrence(emb, context, w_ih_emb, w_ih_ctx,
                           params["b_ih"], params["w_hh"], params["b_hh"],
                           tb=tb)                                # (T, B, H) bf16

    # Vocab projection for all T*B rows at once; W_out streamed over V tiles.
    logits = matmul_bias(h_all.reshape(T * B, H),
                         params["w_out"], params["b_out"])       # (T*B, V) f32
    logits = logits.reshape(T, B, V).transpose(1, 0, 2)          # (B, T, V)
    new_state = h_all[-1].astype(jnp.float32)[None]              # (1, B, H)
    return logits, new_state


def init_params(key, vocab, embed, hidden):
    ks = jax.random.split(key, 7)
    s = 0.1
    f32, bf16 = jnp.float32, jnp.bfloat16

    def nrm(k, shape, dtype):
        return (s * jax.random.normal(k, shape, f32)).astype(dtype)

    return {
        # MXU-facing tensors stored in bf16 (f32 accumulation happens in-kernel).
        "embedding": nrm(ks[0], (vocab, embed), bf16),
        "w_ih": nrm(ks[1], (embed + hidden, 3 * hidden), bf16),
        "w_hh": nrm(ks[2], (hidden, 3 * hidden), bf16),
        "w_out": nrm(ks[5], (hidden, vocab), bf16),
        "b_ih": nrm(ks[3], (1, 3 * hidden), f32),
        "b_hh": nrm(ks[4], (1, 3 * hidden), f32),
        "b_out": nrm(ks[6], (1, vocab), f32),
    }


def reference_forward(X_tokens, state, params):
    """Plain-JAX reference mirroring the kernel's bf16-operand / f32-accum
    matmul precision (weights and embedding are already stored in bf16)."""
    B, T = X_tokens.shape
    H = state.shape[-1]
    emb = jnp.take(params["embedding"], X_tokens, axis=0).astype(jnp.float32)
    context = state[-1].astype(jnp.float32)
    w_ih = params["w_ih"].astype(jnp.float32)
    w_hh = params["w_hh"].astype(jnp.float32)
    w_out = params["w_out"].astype(jnp.float32)

    def bf16_round(v):
        return v.astype(jnp.bfloat16).astype(jnp.float32)

    h = context
    outs = []
    for t in range(T):
        x = jnp.concatenate([emb[:, t, :], context], axis=-1)
        gi = bf16_round(x) @ w_ih + params["b_ih"]
        gh = bf16_round(h) @ w_hh + params["b_hh"]
        r = jax.nn.sigmoid(gi[:, :H] + gh[:, :H])
        z = jax.nn.sigmoid(gi[:, H:2 * H] + gh[:, H:2 * H])
        n = jnp.tanh(gi[:, 2 * H:] + r * gh[:, 2 * H:])
        h = (1.0 - z) * n + z * h
        outs.append(bf16_round(h) @ w_out + params["b_out"])
    return jnp.stack(outs, axis=1), h[None]


if __name__ == "__main__":
    key = jax.random.PRNGKey(0)
    # Small but hardware-tile-aligned shapes: B >= 8 (sublane), E/H/V multiples
    # of 128 (lane), T a multiple of the per-grid-step time block.
    B, T, V, E, H = 8, 16, 256, 128, 128

    k_tok, k_state, k_param = jax.random.split(key, 3)
    X = jax.random.randint(k_tok, (B, T), 0, V, dtype=jnp.int32)
    # init_state(enc_outputs): the encoder's final hidden state, (layers, B, H).
    enc_state = jax.random.normal(k_state, (1, B, H), jnp.float32)
    params = init_params(k_param, V, E, H)

    fwd = jax.jit(decoder_forward)
    output, new_state = fwd(X, enc_state, params)
    jax.block_until_ready((output, new_state))

    assert output.shape == (B, T, V)
    assert new_state.shape == (1, B, H)

    ref_out, ref_state = reference_forward(X, enc_state, params)
    err_o = float(jnp.max(jnp.abs(output - ref_out)))
    err_s = float(jnp.max(jnp.abs(new_state - ref_state)))
    assert err_o < 3e-2 and err_s < 3e-2, ("mismatch vs reference", err_o, err_s)
    print("KERNEL_OK")
</pallas_src>

<mosaic_0001>
module attributes {stable_mosaic.version = 11 : i64} {
  func.func @matmul_bias_kernel(%arg0: i32, %arg1: i32, %arg2: memref<128x128xbf16, #tpu.memory_space<vmem>>, %arg3: memref<128x256xbf16, #tpu.memory_space<vmem>>, %arg4: memref<1x256xf32, #tpu.memory_space<vmem>>, %arg5: memref<128x256xf32, #tpu.memory_space<vmem>>) attributes {dimension_semantics = [#tpu.dimension_semantics<parallel>, #tpu.dimension_semantics<parallel>], iteration_bounds = array<i64: 1, 1>, scalar_prefetch = 0 : i64, scratch_operands = 0 : i64, tpu.core_type = #tpu.core_type<tc>, window_params = [{transform_indices = @transform_0, window_bounds = array<i64: 128, 128>}, {transform_indices = @transform_1, window_bounds = array<i64: 128, 256>}, {transform_indices = @transform_2, window_bounds = array<i64: 1, 256>}, {transform_indices = @transform_3, window_bounds = array<i64: 128, 256>}]} {
    %c0 = arith.constant 0 : index
    %c0_0 = arith.constant 0 : index
    %0 = vector.load %arg2[%c0, %c0_0] : memref<128x128xbf16, #tpu.memory_space<vmem>>, vector<128x128xbf16>
    %c0_1 = arith.constant 0 : index
    %c0_2 = arith.constant 0 : index
    %1 = vector.load %arg3[%c0_1, %c0_2] : memref<128x256xbf16, #tpu.memory_space<vmem>>, vector<128x256xbf16>
    %cst = arith.constant dense<0.000000e+00> : vector<128x256xf32>
    %2 = tpu.matmul %0, %1, %cst {dimension_numbers = #tpu.dot_dimension_numbers<[1], [0], [0], [1], [0, 0, 1, 1], [], []>} : vector<128x128xbf16>, vector<128x256xbf16>, vector<128x256xf32> -> vector<128x256xf32>
    %c0_3 = arith.constant 0 : index
    %c0_4 = arith.constant 0 : index
    %3 = vector.load %arg4[%c0_3, %c0_4] : memref<1x256xf32, #tpu.memory_space<vmem>>, vector<1x256xf32>
    %4 = vector.broadcast %3 : vector<1x256xf32> to vector<128x256xf32>
    %5 = arith.addf %2, %4 : vector<128x256xf32>
    %c0_5 = arith.constant 0 : index
    %c0_6 = arith.constant 0 : index
    %6 = vector.load %arg5[%c0_5, %c0_6] : memref<128x256xf32, #tpu.memory_space<vmem>>, vector<128x256xf32>
    tpu.vector_store %arg5[%c0_5, %c0_6], %5 {strides = array<i32>} : memref<128x256xf32, #tpu.memory_space<vmem>>, vector<128x256xf32>,
    return
  }
  func.func @transform_0(%arg0: i32, %arg1: i32) -> (i32, i32) {
    %c0_i32 = arith.constant 0 : i32
    %c0_i32_0 = arith.constant 0 : i32
    return %arg0, %c0_i32 : i32, i32
  }
  func.func @transform_1(%arg0: i32, %arg1: i32) -> (i32, i32) {
    %c0_i32 = arith.constant 0 : i32
    %c0_i32_0 = arith.constant 0 : i32
    return %c0_i32, %arg1 : i32, i32
  }
  func.func @transform_2(%arg0: i32, %arg1: i32) -> (i32, i32) {
    %c0_i32 = arith.constant 0 : i32
    %c0_i32_0 = arith.constant 0 : i32
    return %c0_i32, %arg1 : i32, i32
  }
  func.func @transform_3(%arg0: i32, %arg1: i32) -> (i32, i32) {
    %c0_i32 = arith.constant 0 : i32
    return %arg0, %arg1 : i32, i32
  }
}

module attributes {stable_mosaic.version = 11 : i64} {
  func.func @gru_decoder_kernel(%arg0: i32, %arg1: memref<16x8x128xbf16, #tpu.memory_space<vmem>>, %arg2: memref<8x128xf32, #tpu.memory_space<vmem>>, %arg3: memref<128x384xbf16, #tpu.memory_space<vmem>>, %arg4: memref<128x384xbf16, #tpu.memory_space<vmem>>, %arg5: memref<1x384xf32, #tpu.memory_space<vmem>>, %arg6: memref<128x384xbf16, #tpu.memory_space<vmem>>, %arg7: memref<1x384xf32, #tpu.memory_space<vmem>>, %arg8: memref<16x8x128xbf16, #tpu.memory_space<vmem>>, %arg9: memref<8x128xf32, #tpu.memory_space<vmem>>) attributes {dimension_semantics = [#tpu.dimension_semantics<arbitrary>], iteration_bounds = array<i64: 1>, scalar_prefetch = 0 : i64, scratch_operands = 1 : i64, tpu.core_type = #tpu.core_type<tc>, window_params = [{transform_indices = @transform_0, window_bounds = array<i64: 16, 8, 128>}, {pipeline_mode = #tpu.pipeline_mode<synchronous>, transform_indices = @transform_1, window_bounds = array<i64: 8, 128>}, {pipeline_mode = #tpu.pipeline_mode<synchronous>, transform_indices = @transform_2, window_bounds = array<i64: 128, 384>}, {pipeline_mode = #tpu.pipeline_mode<synchronous>, transform_indices = @transform_3, window_bounds = array<i64: 128, 384>}, {pipeline_mode = #tpu.pipeline_mode<synchronous>, transform_indices = @transform_4, window_bounds = array<i64: 1, 384>}, {pipeline_mode = #tpu.pipeline_mode<synchronous>, transform_indices = @transform_5, window_bounds = array<i64: 128, 384>}, {pipeline_mode = #tpu.pipeline_mode<synchronous>, transform_indices = @transform_6, window_bounds = array<i64: 1, 384>}, {transform_indices = @transform_7, window_bounds = array<i64: 16, 8, 128>}]} {
    %c0_i32 = arith.constant 0 : i32
    %0 = arith.cmpi eq, %arg0, %c0_i32 : i32
    %1 = arith.extui %0 : i1 to i32
    %c0_i32_0 = arith.constant 0 : i32
    %2 = arith.cmpi ne, %1, %c0_i32_0 : i32
    scf.if %2 {
      %c0_221 = arith.constant 0 : index
      %c0_222 = arith.constant 0 : index
      %685 = vector.load %arg2[%c0_221, %c0_222] : memref<8x128xf32, #tpu.memory_space<vmem>>, vector<8x128xf32>
      %c0_223 = arith.constant 0 : index
      %c0_224 = arith.constant 0 : index
      %686 = vector.load %arg9[%c0_223, %c0_224] : memref<8x128xf32, #tpu.memory_space<vmem>>, vector<8x128xf32>
      tpu.vector_store %arg9[%c0_223, %c0_224], %685 {strides = array<i32>} : memref<8x128xf32, #tpu.memory_space<vmem>>, vector<8x128xf32>,
    } else {
    }
    %c0 = arith.constant 0 : index
    %c0_1 = arith.constant 0 : index
    %3 = vector.load %arg2[%c0, %c0_1] : memref<8x128xf32, #tpu.memory_space<vmem>>, vector<8x128xf32>
    %4 = arith.truncf %3 : vector<8x128xf32> to vector<8x128xbf16>
    %c0_2 = arith.constant 0 : index
    %c0_3 = arith.constant 0 : index
    %5 = vector.load %arg4[%c0_2, %c0_3] : memref<128x384xbf16, #tpu.memory_space<vmem>>, vector<128x384xbf16>
    %cst = arith.constant dense<0.000000e+00> : vector<8x384xf32>
    %6 = tpu.matmul %4, %5, %cst {dimension_numbers = #tpu.dot_dimension_numbers<[1], [0], [0], [1], [0, 0, 1, 1], [], []>} : vector<8x128xbf16>, vector<128x384xbf16>, vector<8x384xf32> -> vector<8x384xf32>
    %c0_4 = arith.constant 0 : index
    %c0_5 = arith.constant 0 : index
    %7 = vector.load %arg5[%c0_4, %c0_5] : memref<1x384xf32, #tpu.memory_space<vmem>>, vector<1x384xf32>
    %8 = vector.broadcast %7 : vector<1x384xf32> to vector<8x384xf32>
    %9 = arith.addf %6, %8 : vector<8x384xf32>
    %c0_6 = arith.constant 0 : index
    %c0_7 = arith.constant 0 : index
    %10 = vector.load %arg7[%c0_6, %c0_7] : memref<1x384xf32, #tpu.memory_space<vmem>>, vector<1x384xf32>
    %c0_8 = arith.constant 0 : index
    %c0_9 = arith.constant 0 : index
    %11 = vector.load %arg9[%c0_8, %c0_9] : memref<8x128xf32, #tpu.memory_space<vmem>>, vector<8x128xf32>
    %c0_i32_10 = arith.constant 0 : i32
    %12 = arith.index_cast %c0_i32_10 : i32 to index
    %c0_11 = arith.constant 0 : index
    %c0_12 = arith.constant 0 : index
    %13 = vector.load %arg1[%12, %c0_11, %c0_12] : memref<16x8x128xbf16, #tpu.memory_space<vmem>>, vector<1x8x128xbf16>
    %14 = vector.shape_cast %13 : vector<1x8x128xbf16> to vector<8x128xbf16>
    %c0_13 = arith.constant 0 : index
    %c0_14 = arith.constant 0 : index
    %15 = vector.load %arg3[%c0_13, %c0_14] : memref<128x384xbf16, #tpu.memory_space<vmem>>, vector<128x384xbf16>
    %cst_15 = arith.constant dense<0.000000e+00> : vector<8x384xf32>
    %16 = tpu.matmul %14, %15, %cst_15 {dimension_numbers = #tpu.dot_dimension_numbers<[1], [0], [0], [1], [0, 0, 1, 1], [], []>} : vector<8x128xbf16>, vector<128x384xbf16>, vector<8x384xf32> -> vector<8x384xf32>
    %17 = arith.addf %16, %9 : vector<8x384xf32>
    %18 = arith.truncf %11 : vector<8x128xf32> to vector<8x128xbf16>
    %c0_16 = arith.constant 0 : index
    %c0_17 = arith.constant 0 : index
    %19 = vector.load %arg6[%c0_16, %c0_17] : memref<128x384xbf16, #tpu.memory_space<vmem>>, vector<128x384xbf16>
    %cst_18 = arith.constant dense<0.000000e+00> : vector<8x384xf32>
    %20 = tpu.matmul %18, %19, %cst_18 {dimension_numbers = #tpu.dot_dimension_numbers<[1], [0], [0], [1], [0, 0, 1, 1], [], []>} : vector<8x128xbf16>, vector<128x384xbf16>, vector<8x384xf32> -> vector<8x384xf32>
    %21 = vector.broadcast %10 : vector<1x384xf32> to vector<8x384xf32>
    %22 = arith.addf %20, %21 : vector<8x384xf32>
    %23 = vector.extract_strided_slice %17 {offsets = [0, 0], sizes = [8, 128], strides = [1, 1]} : vector<8x384xf32> to vector<8x128xf32>
    %24 = vector.extract_strided_slice %22 {offsets = [0, 0], sizes = [8, 128], strides = [1, 1]} : vector<8x384xf32> to vector<8x128xf32>
    %25 = arith.addf %23, %24 : vector<8x128xf32>
    %26 = arith.negf %25 : vector<8x128xf32>
    %27 = math.exp %26 : vector<8x128xf32>
    %cst_19 = arith.constant 1.000000e+00 : f32
    %28 = vector.broadcast %cst_19 : f32 to vector<8x128xf32>
    %29 = arith.addf %28, %27 : vector<8x128xf32>
    %30 = arith.divf %28, %29 : vector<8x128xf32>
    %31 = vector.extract_strided_slice %17 {offsets = [0, 128], sizes = [8, 128], strides = [1, 1]} : vector<8x384xf32> to vector<8x128xf32>
    %32 = vector.extract_strided_slice %22 {offsets = [0, 128], sizes = [8, 128], strides = [1, 1]} : vector<8x384xf32> to vector<8x128xf32>
    %33 = arith.addf %31, %32 : vector<8x128xf32>
    %34 = arith.negf %33 : vector<8x128xf32>
    %35 = math.exp %34 : vector<8x128xf32>
    %cst_20 = arith.constant 1.000000e+00 : f32
    %36 = vector.broadcast %cst_20 : f32 to vector<8x128xf32>
    %37 = arith.addf %36, %35 : vector<8x128xf32>
    %38 = arith.divf %36, %37 : vector<8x128xf32>
    %39 = vector.extract_strided_slice %17 {offsets = [0, 256], sizes = [8, 128], strides = [1, 1]} : vector<8x384xf32> to vector<8x128xf32>
    %40 = vector.extract_strided_slice %22 {offsets = [0, 256], sizes = [8, 128], strides = [1, 1]} : vector<8x384xf32> to vector<8x128xf32>
    %41 = arith.mulf %30, %40 : vector<8x128xf32>
    %42 = arith.addf %39, %41 : vector<8x128xf32>
    %43 = math.tanh %42 : vector<8x128xf32>
    %cst_21 = arith.constant 1.000000e+00 : f32
    %44 = vector.broadcast %cst_21 : f32 to vector<8x128xf32>
    %45 = arith.subf %44, %38 : vector<8x128xf32>
    %46 = arith.mulf %45, %43 : vector<8x128xf32>
    %47 = arith.mulf %38, %11 : vector<8x128xf32>
    %48 = arith.addf %46, %47 : vector<8x128xf32>
    %49 = arith.truncf %48 : vector<8x128xf32> to vector<8x128xbf16>
    %50 = arith.index_cast %c0_i32_10 : i32 to index
    %c0_22 = arith.constant 0 : index
    %c0_23 = arith.constant 0 : index
    %51 = vector.load %arg8[%50, %c0_22, %c0_23] : memref<16x8x128xbf16, #tpu.memory_space<vmem>>, vector<1x8x128xbf16>
    %52 = vector.shape_cast %51 : vector<1x8x128xbf16> to vector<8x128xbf16>
    %53 = vector.shape_cast %49 : vector<8x128xbf16> to vector<1x8x128xbf16>
    tpu.vector_store %arg8[%50, %c0_22, %c0_23], %53 {strides = array<i32>} : memref<16x8x128xbf16, #tpu.memory_space<vmem>>, vector<1x8x128xbf16>,
    %c1_i32 = arith.constant 1 : i32
    %54 = arith.index_cast %c1_i32 : i32 to index
    %c0_24 = arith.constant 0 : index
    %c0_25 = arith.constant 0 : index
    %55 = vector.load %arg1[%54, %c0_24, %c0_25] : memref<16x8x128xbf16, #tpu.memory_space<vmem>>, vector<1x8x128xbf16>
    %56 = vector.shape_cast %55 : vector<1x8x128xbf16> to vector<8x128xbf16>
    %c0_26 = arith.constant 0 : index
    %c0_27 = arith.constant 0 : index
    %57 = vector.load %arg3[%c0_26, %c0_27] : memref<128x384xbf16, #tpu.memory_space<vmem>>, vector<128x384xbf16>
    %cst_28 = arith.constant dense<0.000000e+00> : vector<8x384xf32>
    %58 = tpu.matmul %56, %57, %cst_28 {dimension_numbers = #tpu.dot_dimension_numbers<[1], [0], [0], [1], [0, 0, 1, 1], [], []>} : vector<8x128xbf16>, vector<128x384xbf16>, vector<8x384xf32> -> vector<8x384xf32>
    %59 = arith.addf %58, %9 : vector<8x384xf32>
    %60 = arith.truncf %48 : vector<8x128xf32> to vector<8x128xbf16>
    %c0_29 = arith.constant 0 : index
    %c0_30 = arith.constant 0 : index
    %61 = vector.load %arg6[%c0_29, %c0_30] : memref<128x384xbf16, #tpu.memory_space<vmem>>, vector<128x384xbf16>
    %cst_31 = arith.constant dense<0.000000e+00> : vector<8x384xf32>
    %62 = tpu.matmul %60, %61, %cst_31 {dimension_numbers = #tpu.dot_dimension_numbers<[1], [0], [0], [1], [0, 0, 1, 1], [], []>} : vector<8x128xbf16>, vector<128x384xbf16>, vector<8x384xf32> -> vector<8x384xf32>
    %63 = vector.broadcast %10 : vector<1x384xf32> to vector<8x384xf32>
    %64 = arith.addf %62, %63 : vector<8x384xf32>
    %65 = vector.extract_strided_slice %59 {offsets = [0, 0], sizes = [8, 128], strides = [1, 1]} : vector<8x384xf32> to vector<8x128xf32>
    %66 = vector.extract_strided_slice %64 {offsets = [0, 0], sizes = [8, 128], strides = [1, 1]} : vector<8x384xf32> to vector<8x128xf32>
    %67 = arith.addf %65, %66 : vector<8x128xf32>
    %68 = arith.negf %67 : vector<8x128xf32>
    %69 = math.exp %68 : vector<8x128xf32>
    %cst_32 = arith.constant 1.000000e+00 : f32
    %70 = vector.broadcast %cst_32 : f32 to vector<8x128xf32>
    %71 = arith.addf %70, %69 : vector<8x128xf32>
    %72 = arith.divf %70, %71 : vector<8x128xf32>
    %73 = vector.extract_strided_slice %59 {offsets = [0, 128], sizes = [8, 128], strides = [1, 1]} : vector<8x384xf32> to vector<8x128xf32>
    %74 = vector.extract_strided_slice %64 {offsets = [0, 128], sizes = [8, 128], strides = [1, 1]} : vector<8x384xf32> to vector<8x128xf32>
    %75 = arith.addf %73, %74 : vector<8x128xf32>
    %76 = arith.negf %75 : vector<8x128xf32>
    %77 = math.exp %76 : vector<8x128xf32>
    %cst_33 = arith.constant 1.000000e+00 : f32
    %78 = vector.broadcast %cst_33 : f32 to vector<8x128xf32>
    %79 = arith.addf %78, %77 : vector<8x128xf32>
    %80 = arith.divf %78, %79 : vector<8x128xf32>
    %81 = vector.extract_strided_slice %59 {offsets = [0, 256], sizes = [8, 128], strides = [1, 1]} : vector<8x384xf32> to vector<8x128xf32>
    %82 = vector.extract_strided_slice %64 {offsets = [0, 256], sizes = [8, 128], strides = [1, 1]} : vector<8x384xf32> to vector<8x128xf32>
    %83 = arith.mulf %72, %82 : vector<8x128xf32>
    %84 = arith.addf %81, %83 : vector<8x128xf32>
    %85 = math.tanh %84 : vector<8x128xf32>
    %cst_34 = arith.constant 1.000000e+00 : f32
    %86 = vector.broadcast %cst_34 : f32 to vector<8x128xf32>
    %87 = arith.subf %86, %80 : vector<8x128xf32>
    %88 = arith.mulf %87, %85 : vector<8x128xf32>
    %89 = arith.mulf %80, %48 : vector<8x128xf32>
    %90 = arith.addf %88, %89 : vector<8x128xf32>
    %91 = arith.truncf %90 : vector<8x128xf32> to vector<8x128xbf16>
    %92 = arith.index_cast %c1_i32 : i32 to index
    %c0_35 = arith.constant 0 : index
    %c0_36 = arith.constant 0 : index
    %93 = vector.load %arg8[%92, %c0_35, %c0_36] : memref<16x8x128xbf16, #tpu.memory_space<vmem>>, vector<1x8x128xbf16>
    %94 = vector.shape_cast %93 : vector<1x8x128xbf16> to vector<8x128xbf16>
    %95 = vector.shape_cast %91 : vector<8x128xbf16> to vector<1x8x128xbf16>
    tpu.vector_store %arg8[%92, %c0_35, %c0_36], %95 {strides = array<i32>} : memref<16x8x128xbf16, #tpu.memory_space<vmem>>, vector<1x8x128xbf16>,
    %c2_i32 = arith.constant 2 : i32
    %96 = arith.index_cast %c2_i32 : i32 to index
    %c0_37 = arith.constant 0 : index
    %c0_38 = arith.constant 0 : index
    %97 = vector.load %arg1[%96, %c0_37, %c0_38] : memref<16x8x128xbf16, #tpu.memory_space<vmem>>, vector<1x8x128xbf16>
    %98 = vector.shape_cast %97 : vector<1x8x128xbf16> to vector<8x128xbf16>
    %c0_39 = arith.constant 0 : index
    %c0_40 = arith.constant 0 : index
    %99 = vector.load %arg3[%c0_39, %c0_40] : memref<128x384xbf16, #tpu.memory_space<vmem>>, vector<128x384xbf16>
    %cst_41 = arith.constant dense<0.000000e+00> : vector<8x384xf32>
    %100 = tpu.matmul %98, %99, %cst_41 {dimension_numbers = #tpu.dot_dimension_numbers<[1], [0], [0], [1], [0, 0, 1, 1], [], []>} : vector<8x128xbf16>, vector<128x384xbf16>, vector<8x384xf32> -> vector<8x384xf32>
    %101 = arith.addf %100, %9 : vector<8x384xf32>
    %102 = arith.truncf %90 : vector<8x128xf32> to vector<8x128xbf16>
    %c0_42 = arith.constant 0 : index
    %c0_43 = arith.constant 0 : index
    %103 = vector.load %arg6[%c0_42, %c0_43] : memref<128x384xbf16, #tpu.memory_space<vmem>>, vector<128x384xbf16>
    %cst_44 = arith.constant dense<0.000000e+00> : vector<8x384xf32>
    %104 = tpu.matmul %102, %103, %cst_44 {dimension_numbers = #tpu.dot_dimension_numbers<[1], [0], [0], [1], [0, 0, 1, 1], [], []>} : vector<8x128xbf16>, vector<128x384xbf16>, vector<8x384xf32> -> vector<8x384xf32>
    %105 = vector.broadcast %10 : vector<1x384xf32> to vector<8x384xf32>
    %106 = arith.addf %104, %105 : vector<8x384xf32>
    %107 = vector.extract_strided_slice %101 {offsets = [0, 0], sizes = [8, 128], strides = [1, 1]} : vector<8x384xf32> to vector<8x128xf32>
    %108 = vector.extract_strided_slice %106 {offsets = [0, 0], sizes = [8, 128], strides = [1, 1]} : vector<8x384xf32> to vector<8x128xf32>
    %109 = arith.addf %107, %108 : vector<8x128xf32>
    %110 = arith.negf %109 : vector<8x128xf32>
    %111 = math.exp %110 : vector<8x128xf32>
    %cst_45 = arith.constant 1.000000e+00 : f32
    %112 = vector.broadcast %cst_45 : f32 to vector<8x128xf32>
    %113 = arith.addf %112, %111 : vector<8x128xf32>
    %114 = arith.divf %112, %113 : vector<8x128xf32>
    %115 = vector.extract_strided_slice %101 {offsets = [0, 128], sizes = [8, 128], strides = [1, 1]} : vector<8x384xf32> to vector<8x128xf32>
    %116 = vector.extract_strided_slice %106 {offsets = [0, 128], sizes = [8, 128], strides = [1, 1]} : vector<8x384xf32> to vector<8x128xf32>
    %117 = arith.addf %115, %116 : vector<8x128xf32>
    %118 = arith.negf %117 : vector<8x128xf32>
    %119 = math.exp %118 : vector<8x128xf32>
    %cst_46 = arith.constant 1.000000e+00 : f32
    %120 = vector.broadcast %cst_46 : f32 to vector<8x128xf32>
    %121 = arith.addf %120, %119 : vector<8x128xf32>
    %122 = arith.divf %120, %121 : vector<8x128xf32>
    %123 = vector.extract_strided_slice %101 {offsets = [0, 256], sizes = [8, 128], strides = [1, 1]} : vector<8x384xf32> to vector<8x128xf32>
    %124 = vector.extract_strided_slice %106 {offsets = [0, 256], sizes = [8, 128], strides = [1, 1]} : vector<8x384xf32> to vector<8x128xf32>
    %125 = arith.mulf %114, %124 : vector<8x128xf32>
    %126 = arith.addf %123, %125 : vector<8x128xf32>
    %127 = math.tanh %126 : vector<8x128xf32>
    %cst_47 = arith.constant 1.000000e+00 : f32
    %128 = vector.broadcast %cst_47 : f32 to vector<8x128xf32>
    %129 = arith.subf %128, %122 : vector<8x128xf32>
    %130 = arith.mulf %129, %127 : vector<8x128xf32>
    %131 = arith.mulf %122, %90 : vector<8x128xf32>
    %132 = arith.addf %130, %131 : vector<8x128xf32>
    %133 = arith.truncf %132 : vector<8x128xf32> to vector<8x128xbf16>
    %134 = arith.index_cast %c2_i32 : i32 to index
    %c0_48 = arith.constant 0 : index
    %c0_49 = arith.constant 0 : index
    %135 = vector.load %arg8[%134, %c0_48, %c0_49] : memref<16x8x128xbf16, #tpu.memory_space<vmem>>, vector<1x8x128xbf16>
    %136 = vector.shape_cast %135 : vector<1x8x128xbf16> to vector<8x128xbf16>
    %137 = vector.shape_cast %133 : vector<8x128xbf16> to vector<1x8x128xbf16>
    tpu.vector_store %arg8[%134, %c0_48, %c0_49], %137 {strides = array<i32>} : memref<16x8x128xbf16, #tpu.memory_space<vmem>>, vector<1x8x128xbf16>,
    %c3_i32 = arith.constant 3 : i32
    %138 = arith.index_cast %c3_i32 : i32 to index
    %c0_50 = arith.constant 0 : index
    %c0_51 = arith.constant 0 : index
    %139 = vector.load %arg1[%138, %c0_50, %c0_51] : memref<16x8x128xbf16, #tpu.memory_space<vmem>>, vector<1x8x128xbf16>
    %140 = vector.shape_cast %139 : vector<1x8x128xbf16> to vector<8x128xbf16>
    %c0_52 = arith.constant 0 : index
    %c0_53 = arith.constant 0 : index
    %141 = vector.load %arg3[%c0_52, %c0_53] : memref<128x384xbf16, #tpu.memory_space<vmem>>, vector<128x384xbf16>
    %cst_54 = arith.constant dense<0.000000e+00> : vector<8x384xf32>
    %142 = tpu.matmul %140, %141, %cst_54 {dimension_numbers = #tpu.dot_dimension_numbers<[1], [0], [0], [1], [0, 0, 1, 1], [], []>} : vector<8x128xbf16>, vector<128x384xbf16>, vector<8x384xf32> -> vector<8x384xf32>
    %143 = arith.addf %142, %9 : vector<8x384xf32>
    %144 = arith.truncf %132 : vector<8x128xf32> to vector<8x128xbf16>
    %c0_55 = arith.constant 0 : index
    %c0_56 = arith.constant 0 : index
    %145 = vector.load %arg6[%c0_55, %c0_56] : memref<128x384xbf16, #tpu.memory_space<vmem>>, vector<128x384xbf16>
    %cst_57 = arith.constant dense<0.000000e+00> : vector<8x384xf32>
    %146 = tpu.matmul %144, %145, %cst_57 {dimension_numbers = #tpu.dot_dimension_numbers<[1], [0], [0], [1], [0, 0, 1, 1], [], []>} : vector<8x128xbf16>, vector<128x384xbf16>, vector<8x384xf32> -> vector<8x384xf32>
    %147 = vector.broadcast %10 : vector<1x384xf32> to vector<8x384xf32>
    %148 = arith.addf %146, %147 : vector<8x384xf32>
    %149 = vector.extract_strided_slice %143 {offsets = [0, 0], sizes = [8, 128], strides = [1, 1]} : vector<8x384xf32> to vector<8x128xf32>
    %150 = vector.extract_strided_slice %148 {offsets = [0, 0], sizes = [8, 128], strides = [1, 1]} : vector<8x384xf32> to vector<8x128xf32>
    %151 = arith.addf %149, %150 : vector<8x128xf32>
    %152 = arith.negf %151 : vector<8x128xf32>
    %153 = math.exp %152 : vector<8x128xf32>
    %cst_58 = arith.constant 1.000000e+00 : f32
    %154 = vector.broadcast %cst_58 : f32 to vector<8x128xf32>
    %155 = arith.addf %154, %153 : vector<8x128xf32>
    %156 = arith.divf %154, %155 : vector<8x128xf32>
    %157 = vector.extract_strided_slice %143 {offsets = [0, 128], sizes = [8, 128], strides = [1, 1]} : vector<8x384xf32> to vector<8x128xf32>
    %158 = vector.extract_strided_slice %148 {offsets = [0, 128], sizes = [8, 128], strides = [1, 1]} : vector<8x384xf32> to vector<8x128xf32>
    %159 = arith.addf %157, %158 : vector<8x128xf32>
    %160 = arith.negf %159 : vector<8x128xf32>
    %161 = math.exp %160 : vector<8x128xf32>
    %cst_59 = arith.constant 1.000000e+00 : f32
    %162 = vector.broadcast %cst_59 : f32 to vector<8x128xf32>
    %163 = arith.addf %162, %161 : vector<8x128xf32>
    %164 = arith.divf %162, %163 : vector<8x128xf32>
    %165 = vector.extract_strided_slice %143 {offsets = [0, 256], sizes = [8, 128], strides = [1, 1]} : vector<8x384xf32> to vector<8x128xf32>
    %166 = vector.extract_strided_slice %148 {offsets = [0, 256], sizes = [8, 128], strides = [1, 1]} : vector<8x384xf32> to vector<8x128xf32>
    %167 = arith.mulf %156, %166 : vector<8x128xf32>
    %168 = arith.addf %165, %167 : vector<8x128xf32>
    %169 = math.tanh %168 : vector<8x128xf32>
    %cst_60 = arith.constant 1.000000e+00 : f32
    %170 = vector.broadcast %cst_60 : f32 to vector<8x128xf32>
    %171 = arith.subf %170, %164 : vector<8x128xf32>
    %172 = arith.mulf %171, %169 : vector<8x128xf32>
    %173 = arith.mulf %164, %132 : vector<8x128xf32>
    %174 = arith.addf %172, %173 : vector<8x128xf32>
    %175 = arith.truncf %174 : vector<8x128xf32> to vector<8x128xbf16>
    %176 = arith.index_cast %c3_i32 : i32 to index
    %c0_61 = arith.constant 0 : index
    %c0_62 = arith.constant 0 : index
    %177 = vector.load %arg8[%176, %c0_61, %c0_62] : memref<16x8x128xbf16, #tpu.memory_space<vmem>>, vector<1x8x128xbf16>
    %178 = vector.shape_cast %177 : vector<1x8x128xbf16> to vector<8x128xbf16>
    %179 = vector.shape_cast %175 : vector<8x128xbf16> to vector<1x8x128xbf16>
    tpu.vector_store %arg8[%176, %c0_61, %c0_62], %179 {strides = array<i32>} : memref<16x8x128xbf16, #tpu.memory_space<vmem>>, vector<1x8x128xbf16>,
    %c4_i32 = arith.constant 4 : i32
    %180 = arith.index_cast %c4_i32 : i32 to index
    %c0_63 = arith.constant 0 : index
    %c0_64 = arith.constant 0 : index
    %181 = vector.load %arg1[%180, %c0_63, %c0_64] : memref<16x8x128xbf16, #tpu.memory_space<vmem>>, vector<1x8x128xbf16>
    %182 = vector.shape_cast %181 : vector<1x8x128xbf16> to vector<8x128xbf16>
    %c0_65 = arith.constant 0 : index
    %c0_66 = arith.constant 0 : index
    %183 = vector.load %arg3[%c0_65, %c0_66] : memref<128x384xbf16, #tpu.memory_space<vmem>>, vector<128x384xbf16>
    %cst_67 = arith.constant dense<0.000000e+00> : vector<8x384xf32>
    %184 = tpu.matmul %182, %183, %cst_67 {dimension_numbers = #tpu.dot_dimension_numbers<[1], [0], [0], [1], [0, 0, 1, 1], [], []>} : vector<8x128xbf16>, vector<128x384xbf16>, vector<8x384xf32> -> vector<8x384xf32>
    %185 = arith.addf %184, %9 : vector<8x384xf32>
    %186 = arith.truncf %174 : vector<8x128xf32> to vector<8x128xbf16>
    %c0_68 = arith.constant 0 : index
    %c0_69 = arith.constant 0 : index
    %187 = vector.load %arg6[%c0_68, %c0_69] : memref<128x384xbf16, #tpu.memory_space<vmem>>, vector<128x384xbf16>
    %cst_70 = arith.constant dense<0.000000e+00> : vector<8x384xf32>
    %188 = tpu.matmul %186, %187, %cst_70 {dimension_numbers = #tpu.dot_dimension_numbers<[1], [0], [0], [1], [0, 0, 1, 1], [], []>} : vector<8x128xbf16>, vector<128x384xbf16>, vector<8x384xf32> -> vector<8x384xf32>
    %189 = vector.broadcast %10 : vector<1x384xf32> to vector<8x384xf32>
    %190 = arith.addf %188, %189 : vector<8x384xf32>
    %191 = vector.extract_strided_slice %185 {offsets = [0, 0], sizes = [8, 128], strides = [1, 1]} : vector<8x384xf32> to vector<8x128xf32>
    %192 = vector.extract_strided_slice %190 {offsets = [0, 0], sizes = [8, 128], strides = [1, 1]} : vector<8x384xf32> to vector<8x128xf32>
    %193 = arith.addf %191, %192 : vector<8x128xf32>
    %194 = arith.negf %193 : vector<8x128xf32>
    %195 = math.exp %194 : vector<8x128xf32>
    %cst_71 = arith.constant 1.000000e+00 : f32
    %196 = vector.broadcast %cst_71 : f32 to vector<8x128xf32>
    %197 = arith.addf %196, %195 : vector<8x128xf32>
    %198 = arith.divf %196, %197 : vector<8x128xf32>
    %199 = vector.extract_strided_slice %185 {offsets = [0, 128], sizes = [8, 128], strides = [1, 1]} : vector<8x384xf32> to vector<8x128xf32>
    %200 = vector.extract_strided_slice %190 {offsets = [0, 128], sizes = [8, 128], strides = [1, 1]} : vector<8x384xf32> to vector<8x128xf32>
    %201 = arith.addf %199, %200 : vector<8x128xf32>
    %202 = arith.negf %201 : vector<8x128xf32>
    %203 = math.exp %202 : vector<8x128xf32>
    %cst_72 = arith.constant 1.000000e+00 : f32
    %204 = vector.broadcast %cst_72 : f32 to vector<8x128xf32>
    %205 = arith.addf %204, %203 : vector<8x128xf32>
    %206 = arith.divf %204, %205 : vector<8x128xf32>
    %207 = vector.extract_strided_slice %185 {offsets = [0, 256], sizes = [8, 128], strides = [1, 1]} : vector<8x384xf32> to vector<8x128xf32>
    %208 = vector.extract_strided_slice %190 {offsets = [0, 256], sizes = [8, 128], strides = [1, 1]} : vector<8x384xf32> to vector<8x128xf32>
    %209 = arith.mulf %198, %208 : vector<8x128xf32>
    %210 = arith.addf %207, %209 : vector<8x128xf32>
    %211 = math.tanh %210 : vector<8x128xf32>
    %cst_73 = arith.constant 1.000000e+00 : f32
    %212 = vector.broadcast %cst_73 : f32 to vector<8x128xf32>
    %213 = arith.subf %212, %206 : vector<8x128xf32>
    %214 = arith.mulf %213, %211 : vector<8x128xf32>
    %215 = arith.mulf %206, %174 : vector<8x128xf32>
    %216 = arith.addf %214, %215 : vector<8x128xf32>
    %217 = arith.truncf %216 : vector<8x128xf32> to vector<8x128xbf16>
    %218 = arith.index_cast %c4_i32 : i32 to index
    %c0_74 = arith.constant 0 : index
    %c0_75 = arith.constant 0 : index
    %219 = vector.load %arg8[%218, %c0_74, %c0_75] : memref<16x8x128xbf16, #tpu.memory_space<vmem>>, vector<1x8x128xbf16>
    %220 = vector.shape_cast %219 : vector<1x8x128xbf16> to vector<8x128xbf16>
    %221 = vector.shape_cast %217 : vector<8x128xbf16> to vector<1x8x128xbf16>
    tpu.vector_store %arg8[%218, %c0_74, %c0_75], %221 {strides = array<i32>} : memref<16x8x128xbf16, #tpu.memory_space<vmem>>, vector<1x8x128xbf16>,
    %c5_i32 = arith.constant 5 : i32
    %222 = arith.index_cast %c5_i32 : i32 to index
    %c0_76 = arith.constant 0 : index
    %c0_77 = arith.constant 0 : index
    %223 = vector.load %arg1[%222, %c0_76, %c0_77] : memref<16x8x128xbf16, #tpu.memory_space<vmem>>, vector<1x8x128xbf16>
    %224 = vector.shape_cast %223 : vector<1x8x128xbf16> to vector<8x128xbf16>
    %c0_78 = arith.constant 0 : index
    %c0_79 = arith.constant 0 : index
    %225 = vector.load %arg3[%c0_78, %c0_79] : memref<128x384xbf16, #tpu.memory_space<vmem>>, vector<128x384xbf16>
    %cst_80 = arith.constant dense<0.000000e+00> : vector<8x384xf32>
    %226 = tpu.matmul %224, %225, %cst_80 {dimension_numbers = #tpu.dot_dimension_numbers<[1], [0], [0], [1], [0, 0, 1, 1], [], []>} : vector<8x128xbf16>, vector<128x384xbf16>, vector<8x384xf32> -> vector<8x384xf32>
    %227 = arith.addf %226, %9 : vector<8x384xf32>
    %228 = arith.truncf %216 : vector<8x128xf32> to vector<8x128xbf16>
    %c0_81 = arith.constant 0 : index
    %c0_82 = arith.constant 0 : index
    %229 = vector.load %arg6[%c0_81, %c0_82] : memref<128x384xbf16, #tpu.memory_space<vmem>>, vector<128x384xbf16>
    %cst_83 = arith.constant dense<0.000000e+00> : vector<8x384xf32>
    %230 = tpu.matmul %228, %229, %cst_83 {dimension_numbers = #tpu.dot_dimension_numbers<[1], [0], [0], [1], [0, 0, 1, 1], [], []>} : vector<8x128xbf16>, vector<128x384xbf16>, vector<8x384xf32> -> vector<8x384xf32>
    %231 = vector.broadcast %10 : vector<1x384xf32> to vector<8x384xf32>
    %232 = arith.addf %230, %231 : vector<8x384xf32>
    %233 = vector.extract_strided_slice %227 {offsets = [0, 0], sizes = [8, 128], strides = [1, 1]} : vector<8x384xf32> to vector<8x128xf32>
    %234 = vector.extract_strided_slice %232 {offsets = [0, 0], sizes = [8, 128], strides = [1, 1]} : vector<8x384xf32> to vector<8x128xf32>
    %235 = arith.addf %233, %234 : vector<8x128xf32>
    %236 = arith.negf %235 : vector<8x128xf32>
    %237 = math.exp %236 : vector<8x128xf32>
    %cst_84 = arith.constant 1.000000e+00 : f32
    %238 = vector.broadcast %cst_84 : f32 to vector<8x128xf32>
    %239 = arith.addf %238, %237 : vector<8x128xf32>
    %240 = arith.divf %238, %239 : vector<8x128xf32>
    %241 = vector.extract_strided_slice %227 {offsets = [0, 128], sizes = [8, 128], strides = [1, 1]} : vector<8x384xf32> to vector<8x128xf32>
    %242 = vector.extract_strided_slice %232 {offsets = [0, 128], sizes = [8, 128], strides = [1, 1]} : vector<8x384xf32> to vector<8x128xf32>
    %243 = arith.addf %241, %242 : vector<8x128xf32>
    %244 = arith.negf %243 : vector<8x128xf32>
    %245 = math.exp %244 : vector<8x128xf32>
    %cst_85 = arith.constant 1.000000e+00 : f32
    %246 = vector.broadcast %cst_85 : f32 to vector<8x128xf32>
    %247 = arith.addf %246, %245 : vector<8x128xf32>
    %248 = arith.divf %246, %247 : vector<8x128xf32>
    %249 = vector.extract_strided_slice %227 {offsets = [0, 256], sizes = [8, 128], strides = [1, 1]} : vector<8x384xf32> to vector<8x128xf32>
    %250 = vector.extract_strided_slice %232 {offsets = [0, 256], sizes = [8, 128], strides = [1, 1]} : vector<8x384xf32> to vector<8x128xf32>
    %251 = arith.mulf %240, %250 : vector<8x128xf32>
    %252 = arith.addf %249, %251 : vector<8x128xf32>
    %253 = math.tanh %252 : vector<8x128xf32>
    %cst_86 = arith.constant 1.000000e+00 : f32
    %254 = vector.broadcast %cst_86 : f32 to vector<8x128xf32>
    %255 = arith.subf %254, %248 : vector<8x128xf32>
    %256 = arith.mulf %255, %253 : vector<8x128xf32>
    %257 = arith.mulf %248, %216 : vector<8x128xf32>
    %258 = arith.addf %256, %257 : vector<8x128xf32>
    %259 = arith.truncf %258 : vector<8x128xf32> to vector<8x128xbf16>
    %260 = arith.index_cast %c5_i32 : i32 to index
    %c0_87 = arith.constant 0 : index
    %c0_88 = arith.constant 0 : index
    %261 = vector.load %arg8[%260, %c0_87, %c0_88] : memref<16x8x128xbf16, #tpu.memory_space<vmem>>, vector<1x8x128xbf16>
    %262 = vector.shape_cast %261 : vector<1x8x128xbf16> to vector<8x128xbf16>
    %263 = vector.shape_cast %259 : vector<8x128xbf16> to vector<1x8x128xbf16>
    tpu.vector_store %arg8[%260, %c0_87, %c0_88], %263 {strides = array<i32>} : memref<16x8x128xbf16, #tpu.memory_space<vmem>>, vector<1x8x128xbf16>,
    %c6_i32 = arith.constant 6 : i32
    %264 = arith.index_cast %c6_i32 : i32 to index
    %c0_89 = arith.constant 0 : index
    %c0_90 = arith.constant 0 : index
    %265 = vector.load %arg1[%264, %c0_89, %c0_90] : memref<16x8x128xbf16, #tpu.memory_space<vmem>>, vector<1x8x128xbf16>
    %266 = vector.shape_cast %265 : vector<1x8x128xbf16> to vector<8x128xbf16>
    %c0_91 = arith.constant 0 : index
    %c0_92 = arith.constant 0 : index
    %267 = vector.load %arg3[%c0_91, %c0_92] : memref<128x384xbf16, #tpu.memory_space<vmem>>, vector<128x384xbf16>
    %cst_93 = arith.constant dense<0.000000e+00> : vector<8x384xf32>
    %268 = tpu.matmul %266, %267, %cst_93 {dimension_numbers = #tpu.dot_dimension_numbers<[1], [0], [0], [1], [0, 0, 1, 1], [], []>} : vector<8x128xbf16>, vector<128x384xbf16>, vector<8x384xf32> -> vector<8x384xf32>
    %269 = arith.addf %268, %9 : vector<8x384xf32>
    %270 = arith.truncf %258 : vector<8x128xf32> to vector<8x128xbf16>
    %c0_94 = arith.constant 0 : index
    %c0_95 = arith.constant 0 : index
    %271 = vector.load %arg6[%c0_94, %c0_95] : memref<128x384xbf16, #tpu.memory_space<vmem>>, vector<128x384xbf16>
    %cst_96 = arith.constant dense<0.000000e+00> : vector<8x384xf32>
    %272 = tpu.matmul %270, %271, %cst_96 {dimension_numbers = #tpu.dot_dimension_numbers<[1], [0], [0], [1], [0, 0, 1, 1], [], []>} : vector<8x128xbf16>, vector<128x384xbf16>, vector<8x384xf32> -> vector<8x384xf32>
    %273 = vector.broadcast %10 : vector<1x384xf32> to vector<8x384xf32>
    %274 = arith.addf %272, %273 : vector<8x384xf32>
    %275 = vector.extract_strided_slice %269 {offsets = [0, 0], sizes = [8, 128], strides = [1, 1]} : vector<8x384xf32> to vector<8x128xf32>
    %276 = vector.extract_strided_slice %274 {offsets = [0, 0], sizes = [8, 128], strides = [1, 1]} : vector<8x384xf32> to vector<8x128xf32>
    %277 = arith.addf %275, %276 : vector<8x128xf32>
    %278 = arith.negf %277 : vector<8x128xf32>
    %279 = math.exp %278 : vector<8x128xf32>
    %cst_97 = arith.constant 1.000000e+00 : f32
    %280 = vector.broadcast %cst_97 : f32 to vector<8x128xf32>
    %281 = arith.addf %280, %279 : vector<8x128xf32>
    %282 = arith.divf %280, %281 : vector<8x128xf32>
    %283 = vector.extract_strided_slice %269 {offsets = [0, 128], sizes = [8, 128], strides = [1, 1]} : vector<8x384xf32> to vector<8x128xf32>
    %284 = vector.extract_strided_slice %274 {offsets = [0, 128], sizes = [8, 128], strides = [1, 1]} : vector<8x384xf32> to vector<8x128xf32>
    %285 = arith.addf %283, %284 : vector<8x128xf32>
    %286 = arith.negf %285 : vector<8x128xf32>
    %287 = math.exp %286 : vector<8x128xf32>
    %cst_98 = arith.constant 1.000000e+00 : f32
    %288 = vector.broadcast %cst_98 : f32 to vector<8x128xf32>
    %289 = arith.addf %288, %287 : vector<8x128xf32>
    %290 = arith.divf %288, %289 : vector<8x128xf32>
    %291 = vector.extract_strided_slice %269 {offsets = [0, 256], sizes = [8, 128], strides = [1, 1]} : vector<8x384xf32> to vector<8x128xf32>
    %292 = vector.extract_strided_slice %274 {offsets = [0, 256], sizes = [8, 128], strides = [1, 1]} : vector<8x384xf32> to vector<8x128xf32>
    %293 = arith.mulf %282, %292 : vector<8x128xf32>
    %294 = arith.addf %291, %293 : vector<8x128xf32>
    %295 = math.tanh %294 : vector<8x128xf32>
    %cst_99 = arith.constant 1.000000e+00 : f32
    %296 = vector.broadcast %cst_99 : f32 to vector<8x128xf32>
    %297 = arith.subf %296, %290 : vector<8x128xf32>
    %298 = arith.mulf %297, %295 : vector<8x128xf32>
    %299 = arith.mulf %290, %258 : vector<8x128xf32>
    %300 = arith.addf %298, %299 : vector<8x128xf32>
    %301 = arith.truncf %300 : vector<8x128xf32> to vector<8x128xbf16>
    %302 = arith.index_cast %c6_i32 : i32 to index
    %c0_100 = arith.constant 0 : index
    %c0_101 = arith.constant 0 : index
    %303 = vector.load %arg8[%302, %c0_100, %c0_101] : memref<16x8x128xbf16, #tpu.memory_space<vmem>>, vector<1x8x128xbf16>
    %304 = vector.shape_cast %303 : vector<1x8x128xbf16> to vector<8x128xbf16>
    %305 = vector.shape_cast %301 : vector<8x128xbf16> to vector<1x8x128xbf16>
    tpu.vector_store %arg8[%302, %c0_100, %c0_101], %305 {strides = array<i32>} : memref<16x8x128xbf16, #tpu.memory_space<vmem>>, vector<1x8x128xbf16>,
    %c7_i32 = arith.constant 7 : i32
    %306 = arith.index_cast %c7_i32 : i32 to index
    %c0_102 = arith.constant 0 : index
    %c0_103 = arith.constant 0 : index
    %307 = vector.load %arg1[%306, %c0_102, %c0_103] : memref<16x8x128xbf16, #tpu.memory_space<vmem>>, vector<1x8x128xbf16>
    %308 = vector.shape_cast %307 : vector<1x8x128xbf16> to vector<8x128xbf16>
    %c0_104 = arith.constant 0 : index
    %c0_105 = arith.constant 0 : index
    %309 = vector.load %arg3[%c0_104, %c0_105] : memref<128x384xbf16, #tpu.memory_space<vmem>>, vector<128x384xbf16>
    %cst_106 = arith.constant dense<0.000000e+00> : vector<8x384xf32>
    %310 = tpu.matmul %308, %309, %cst_106 {dimension_numbers = #tpu.dot_dimension_numbers<[1], [0], [0], [1], [0, 0, 1, 1], [], []>} : vector<8x128xbf16>, vector<128x384xbf16>, vector<8x384xf32> -> vector<8x384xf32>
    %311 = arith.addf %310, %9 : vector<8x384xf32>
    %312 = arith.truncf %300 : vector<8x128xf32> to vector<8x128xbf16>
    %c0_107 = arith.constant 0 : index
    %c0_108 = arith.constant 0 : index
    %313 = vector.load %arg6[%c0_107, %c0_108] : memref<128x384xbf16, #tpu.memory_space<vmem>>, vector<128x384xbf16>
    %cst_109 = arith.constant dense<0.000000e+00> : vector<8x384xf32>
    %314 = tpu.matmul %312, %313, %cst_109 {dimension_numbers = #tpu.dot_dimension_numbers<[1], [0], [0], [1], [0, 0, 1, 1], [], []>} : vector<8x128xbf16>, vector<128x384xbf16>, vector<8x384xf32> -> vector<8x384xf32>
    %315 = vector.broadcast %10 : vector<1x384xf32> to vector<8x384xf32>
    %316 = arith.addf %314, %315 : vector<8x384xf32>
    %317 = vector.extract_strided_slice %311 {offsets = [0, 0], sizes = [8, 128], strides = [1, 1]} : vector<8x384xf32> to vector<8x128xf32>
    %318 = vector.extract_strided_slice %316 {offsets = [0, 0], sizes = [8, 128], strides = [1, 1]} : vector<8x384xf32> to vector<8x128xf32>
    %319 = arith.addf %317, %318 : vector<8x128xf32>
    %320 = arith.negf %319 : vector<8x128xf32>
    %321 = math.exp %320 : vector<8x128xf32>
    %cst_110 = arith.constant 1.000000e+00 : f32
    %322 = vector.broadcast %cst_110 : f32 to vector<8x128xf32>
    %323 = arith.addf %322, %321 : vector<8x128xf32>
    %324 = arith.divf %322, %323 : vector<8x128xf32>
    %325 = vector.extract_strided_slice %311 {offsets = [0, 128], sizes = [8, 128], strides = [1, 1]} : vector<8x384xf32> to vector<8x128xf32>
    %326 = vector.extract_strided_slice %316 {offsets = [0, 128], sizes = [8, 128], strides = [1, 1]} : vector<8x384xf32> to vector<8x128xf32>
    %327 = arith.addf %325, %326 : vector<8x128xf32>
    %328 = arith.negf %327 : vector<8x128xf32>
    %329 = math.exp %328 : vector<8x128xf32>
    %cst_111 = arith.constant 1.000000e+00 : f32
    %330 = vector.broadcast %cst_111 : f32 to vector<8x128xf32>
    %331 = arith.addf %330, %329 : vector<8x128xf32>
    %332 = arith.divf %330, %331 : vector<8x128xf32>
    %333 = vector.extract_strided_slice %311 {offsets = [0, 256], sizes = [8, 128], strides = [1, 1]} : vector<8x384xf32> to vector<8x128xf32>
    %334 = vector.extract_strided_slice %316 {offsets = [0, 256], sizes = [8, 128], strides = [1, 1]} : vector<8x384xf32> to vector<8x128xf32>
    %335 = arith.mulf %324, %334 : vector<8x128xf32>
    %336 = arith.addf %333, %335 : vector<8x128xf32>
    %337 = math.tanh %336 : vector<8x128xf32>
    %cst_112 = arith.constant 1.000000e+00 : f32
    %338 = vector.broadcast %cst_112 : f32 to vector<8x128xf32>
    %339 = arith.subf %338, %332 : vector<8x128xf32>
    %340 = arith.mulf %339, %337 : vector<8x128xf32>
    %341 = arith.mulf %332, %300 : vector<8x128xf32>
    %342 = arith.addf %340, %341 : vector<8x128xf32>
    %343 = arith.truncf %342 : vector<8x128xf32> to vector<8x128xbf16>
    %344 = arith.index_cast %c7_i32 : i32 to index
    %c0_113 = arith.constant 0 : index
    %c0_114 = arith.constant 0 : index
    %345 = vector.load %arg8[%344, %c0_113, %c0_114] : memref<16x8x128xbf16, #tpu.memory_space<vmem>>, vector<1x8x128xbf16>
    %346 = vector.shape_cast %345 : vector<1x8x128xbf16> to vector<8x128xbf16>
    %347 = vector.shape_cast %343 : vector<8x128xbf16> to vector<1x8x128xbf16>
    tpu.vector_store %arg8[%344, %c0_113, %c0_114], %347 {strides = array<i32>} : memref<16x8x128xbf16, #tpu.memory_space<vmem>>, vector<1x8x128xbf16>,
    %c8_i32 = arith.constant 8 : i32
    %348 = arith.index_cast %c8_i32 : i32 to index
    %c0_115 = arith.constant 0 : index
    %c0_116 = arith.constant 0 : index
    %349 = vector.load %arg1[%348, %c0_115, %c0_116] : memref<16x8x128xbf16, #tpu.memory_space<vmem>>, vector<1x8x128xbf16>
    %350 = vector.shape_cast %349 : vector<1x8x128xbf16> to vector<8x128xbf16>
    %c0_117 = arith.constant 0 : index
    %c0_118 = arith.constant 0 : index
    %351 = vector.load %arg3[%c0_117, %c0_118] : memref<128x384xbf16, #tpu.memory_space<vmem>>, vector<128x384xbf16>
    %cst_119 = arith.constant dense<0.000000e+00> : vector<8x384xf32>
    %352 = tpu.matmul %350, %351, %cst_119 {dimension_numbers = #tpu.dot_dimension_numbers<[1], [0], [0], [1], [0, 0, 1, 1], [], []>} : vector<8x128xbf16>, vector<128x384xbf16>, vector<8x384xf32> -> vector<8x384xf32>
    %353 = arith.addf %352, %9 : vector<8x384xf32>
    %354 = arith.truncf %342 : vector<8x128xf32> to vector<8x128xbf16>
    %c0_120 = arith.constant 0 : index
    %c0_121 = arith.constant 0 : index
    %355 = vector.load %arg6[%c0_120, %c0_121] : memref<128x384xbf16, #tpu.memory_space<vmem>>, vector<128x384xbf16>
    %cst_122 = arith.constant dense<0.000000e+00> : vector<8x384xf32>
    %356 = tpu.matmul %354, %355, %cst_122 {dimension_numbers = #tpu.dot_dimension_numbers<[1], [0], [0], [1], [0, 0, 1, 1], [], []>} : vector<8x128xbf16>, vector<128x384xbf16>, vector<8x384xf32> -> vector<8x384xf32>
    %357 = vector.broadcast %10 : vector<1x384xf32> to vector<8x384xf32>
    %358 = arith.addf %356, %357 : vector<8x384xf32>
    %359 = vector.extract_strided_slice %353 {offsets = [0, 0], sizes = [8, 128], strides = [1, 1]} : vector<8x384xf32> to vector<8x128xf32>
    %360 = vector.extract_strided_slice %358 {offsets = [0, 0], sizes = [8, 128], strides = [1, 1]} : vector<8x384xf32> to vector<8x128xf32>
    %361 = arith.addf %359, %360 : vector<8x128xf32>
    %362 = arith.negf %361 : vector<8x128xf32>
    %363 = math.exp %362 : vector<8x128xf32>
    %cst_123 = arith.constant 1.000000e+00 : f32
    %364 = vector.broadcast %cst_123 : f32 to vector<8x128xf32>
    %365 = arith.addf %364, %363 : vector<8x128xf32>
    %366 = arith.divf %364, %365 : vector<8x128xf32>
    %367 = vector.extract_strided_slice %353 {offsets = [0, 128], sizes = [8, 128], strides = [1, 1]} : vector<8x384xf32> to vector<8x128xf32>
    %368 = vector.extract_strided_slice %358 {offsets = [0, 128], sizes = [8, 128], strides = [1, 1]} : vector<8x384xf32> to vector<8x128xf32>
    %369 = arith.addf %367, %368 : vector<8x128xf32>
    %370 = arith.negf %369 : vector<8x128xf32>
    %371 = math.exp %370 : vector<8x128xf32>
    %cst_124 = arith.constant 1.000000e+00 : f32
    %372 = vector.broadcast %cst_124 : f32 to vector<8x128xf32>
    %373 = arith.addf %372, %371 : vector<8x128xf32>
    %374 = arith.divf %372, %373 : vector<8x128xf32>
    %375 = vector.extract_strided_slice %353 {offsets = [0, 256], sizes = [8, 128], strides = [1, 1]} : vector<8x384xf32> to vector<8x128xf32>
    %376 = vector.extract_strided_slice %358 {offsets = [0, 256], sizes = [8, 128], strides = [1, 1]} : vector<8x384xf32> to vector<8x128xf32>
    %377 = arith.mulf %366, %376 : vector<8x128xf32>
    %378 = arith.addf %375, %377 : vector<8x128xf32>
    %379 = math.tanh %378 : vector<8x128xf32>
    %cst_125 = arith.constant 1.000000e+00 : f32
    %380 = vector.broadcast %cst_125 : f32 to vector<8x128xf32>
    %381 = arith.subf %380, %374 : vector<8x128xf32>
    %382 = arith.mulf %381, %379 : vector<8x128xf32>
    %383 = arith.mulf %374, %342 : vector<8x128xf32>
    %384 = arith.addf %382, %383 : vector<8x128xf32>
    %385 = arith.truncf %384 : vector<8x128xf32> to vector<8x128xbf16>
    %386 = arith.index_cast %c8_i32 : i32 to index
    %c0_126 = arith.constant 0 : index
    %c0_127 = arith.constant 0 : index
    %387 = vector.load %arg8[%386, %c0_126, %c0_127] : memref<16x8x128xbf16, #tpu.memory_space<vmem>>, vector<1x8x128xbf16>
    %388 = vector.shape_cast %387 : vector<1x8x128xbf16> to vector<8x128xbf16>
    %389 = vector.shape_cast %385 : vector<8x128xbf16> to vector<1x8x128xbf16>
    tpu.vector_store %arg8[%386, %c0_126, %c0_127], %389 {strides = array<i32>} : memref<16x8x128xbf16, #tpu.memory_space<vmem>>, vector<1x8x128xbf16>,
    %c9_i32 = arith.constant 9 : i32
    %390 = arith.index_cast %c9_i32 : i32 to index
    %c0_128 = arith.constant 0 : index
    %c0_129 = arith.constant 0 : index
    %391 = vector.load %arg1[%390, %c0_128, %c0_129] : memref<16x8x128xbf16, #tpu.memory_space<vmem>>, vector<1x8x128xbf16>
    %392 = vector.shape_cast %391 : vector<1x8x128xbf16> to vector<8x128xbf16>
    %c0_130 = arith.constant 0 : index
    %c0_131 = arith.constant 0 : index
    %393 = vector.load %arg3[%c0_130, %c0_131] : memref<128x384xbf16, #tpu.memory_space<vmem>>, vector<128x384xbf16>
    %cst_132 = arith.constant dense<0.000000e+00> : vector<8x384xf32>
    %394 = tpu.matmul %392, %393, %cst_132 {dimension_numbers = #tpu.dot_dimension_numbers<[1], [0], [0], [1], [0, 0, 1, 1], [], []>} : vector<8x128xbf16>, vector<128x384xbf16>, vector<8x384xf32> -> vector<8x384xf32>
    %395 = arith.addf %394, %9 : vector<8x384xf32>
    %396 = arith.truncf %384 : vector<8x128xf32> to vector<8x128xbf16>
    %c0_133 = arith.constant 0 : index
    %c0_134 = arith.constant 0 : index
    %397 = vector.load %arg6[%c0_133, %c0_134] : memref<128x384xbf16, #tpu.memory_space<vmem>>, vector<128x384xbf16>
    %cst_135 = arith.constant dense<0.000000e+00> : vector<8x384xf32>
    %398 = tpu.matmul %396, %397, %cst_135 {dimension_numbers = #tpu.dot_dimension_numbers<[1], [0], [0], [1], [0, 0, 1, 1], [], []>} : vector<8x128xbf16>, vector<128x384xbf16>, vector<8x384xf32> -> vector<8x384xf32>
    %399 = vector.broadcast %10 : vector<1x384xf32> to vector<8x384xf32>
    %400 = arith.addf %398, %399 : vector<8x384xf32>
    %401 = vector.extract_strided_slice %395 {offsets = [0, 0], sizes = [8, 128], strides = [1, 1]} : vector<8x384xf32> to vector<8x128xf32>
    %402 = vector.extract_strided_slice %400 {offsets = [0, 0], sizes = [8, 128], strides = [1, 1]} : vector<8x384xf32> to vector<8x128xf32>
    %403 = arith.addf %401, %402 : vector<8x128xf32>
    %404 = arith.negf %403 : vector<8x128xf32>
    %405 = math.exp %404 : vector<8x128xf32>
    %cst_136 = arith.constant 1.000000e+00 : f32
    %406 = vector.broadcast %cst_136 : f32 to vector<8x128xf32>
    %407 = arith.addf %406, %405 : vector<8x128xf32>
    %408 = arith.divf %406, %407 : vector<8x128xf32>
    %409 = vector.extract_strided_slice %395 {offsets = [0, 128], sizes = [8, 128], strides = [1, 1]} : vector<8x384xf32> to vector<8x128xf32>
    %410 = vector.extract_strided_slice %400 {offsets = [0, 128], sizes = [8, 128], strides = [1, 1]} : vector<8x384xf32> to vector<8x128xf32>
    %411 = arith.addf %409, %410 : vector<8x128xf32>
    %412 = arith.negf %411 : vector<8x128xf32>
    %413 = math.exp %412 : vector<8x128xf32>
    %cst_137 = arith.constant 1.000000e+00 : f32
    %414 = vector.broadcast %cst_137 : f32 to vector<8x128xf32>
    %415 = arith.addf %414, %413 : vector<8x128xf32>
    %416 = arith.divf %414, %415 : vector<8x128xf32>
    %417 = vector.extract_strided_slice %395 {offsets = [0, 256], sizes = [8, 128], strides = [1, 1]} : vector<8x384xf32> to vector<8x128xf32>
    %418 = vector.extract_strided_slice %400 {offsets = [0, 256], sizes = [8, 128], strides = [1, 1]} : vector<8x384xf32> to vector<8x128xf32>
    %419 = arith.mulf %408, %418 : vector<8x128xf32>
    %420 = arith.addf %417, %419 : vector<8x128xf32>
    %421 = math.tanh %420 : vector<8x128xf32>
    %cst_138 = arith.constant 1.000000e+00 : f32
    %422 = vector.broadcast %cst_138 : f32 to vector<8x128xf32>
    %423 = arith.subf %422, %416 : vector<8x128xf32>
    %424 = arith.mulf %423, %421 : vector<8x128xf32>
    %425 = arith.mulf %416, %384 : vector<8x128xf32>
    %426 = arith.addf %424, %425 : vector<8x128xf32>
    %427 = arith.truncf %426 : vector<8x128xf32> to vector<8x128xbf16>
    %428 = arith.index_cast %c9_i32 : i32 to index
    %c0_139 = arith.constant 0 : index
    %c0_140 = arith.constant 0 : index
    %429 = vector.load %arg8[%428, %c0_139, %c0_140] : memref<16x8x128xbf16, #tpu.memory_space<vmem>>, vector<1x8x128xbf16>
    %430 = vector.shape_cast %429 : vector<1x8x128xbf16> to vector<8x128xbf16>
    %431 = vector.shape_cast %427 : vector<8x128xbf16> to vector<1x8x128xbf16>
    tpu.vector_store %arg8[%428, %c0_139, %c0_140], %431 {strides = array<i32>} : memref<16x8x128xbf16, #tpu.memory_space<vmem>>, vector<1x8x128xbf16>,
    %c10_i32 = arith.constant 10 : i32
    %432 = arith.index_cast %c10_i32 : i32 to index
    %c0_141 = arith.constant 0 : index
    %c0_142 = arith.constant 0 : index
    %433 = vector.load %arg1[%432, %c0_141, %c0_142] : memref<16x8x128xbf16, #tpu.memory_space<vmem>>, vector<1x8x128xbf16>
    %434 = vector.shape_cast %433 : vector<1x8x128xbf16> to vector<8x128xbf16>
    %c0_143 = arith.constant 0 : index
    %c0_144 = arith.constant 0 : index
    %435 = vector.load %arg3[%c0_143, %c0_144] : memref<128x384xbf16, #tpu.memory_space<vmem>>, vector<128x384xbf16>
    %cst_145 = arith.constant dense<0.000000e+00> : vector<8x384xf32>
    %436 = tpu.matmul %434, %435, %cst_145 {dimension_numbers = #tpu.dot_dimension_numbers<[1], [0], [0], [1], [0, 0, 1, 1], [], []>} : vector<8x128xbf16>, vector<128x384xbf16>, vector<8x384xf32> -> vector<8x384xf32>
    %437 = arith.addf %436, %9 : vector<8x384xf32>
    %438 = arith.truncf %426 : vector<8x128xf32> to vector<8x128xbf16>
    %c0_146 = arith.constant 0 : index
    %c0_147 = arith.constant 0 : index
    %439 = vector.load %arg6[%c0_146, %c0_147] : memref<128x384xbf16, #tpu.memory_space<vmem>>, vector<128x384xbf16>
    %cst_148 = arith.constant dense<0.000000e+00> : vector<8x384xf32>
    %440 = tpu.matmul %438, %439, %cst_148 {dimension_numbers = #tpu.dot_dimension_numbers<[1], [0], [0], [1], [0, 0, 1, 1], [], []>} : vector<8x128xbf16>, vector<128x384xbf16>, vector<8x384xf32> -> vector<8x384xf32>
    %441 = vector.broadcast %10 : vector<1x384xf32> to vector<8x384xf32>
    %442 = arith.addf %440, %441 : vector<8x384xf32>
    %443 = vector.extract_strided_slice %437 {offsets = [0, 0], sizes = [8, 128], strides = [1, 1]} : vector<8x384xf32> to vector<8x128xf32>
    %444 = vector.extract_strided_slice %442 {offsets = [0, 0], sizes = [8, 128], strides = [1, 1]} : vector<8x384xf32> to vector<8x128xf32>
    %445 = arith.addf %443, %444 : vector<8x128xf32>
    %446 = arith.negf %445 : vector<8x128xf32>
    %447 = math.exp %446 : vector<8x128xf32>
    %cst_149 = arith.constant 1.000000e+00 : f32
    %448 = vector.broadcast %cst_149 : f32 to vector<8x128xf32>
    %449 = arith.addf %448, %447 : vector<8x128xf32>
    %450 = arith.divf %448, %449 : vector<8x128xf32>
    %451 = vector.extract_strided_slice %437 {offsets = [0, 128], sizes = [8, 128], strides = [1, 1]} : vector<8x384xf32> to vector<8x128xf32>
    %452 = vector.extract_strided_slice %442 {offsets = [0, 128], sizes = [8, 128], strides = [1, 1]} : vector<8x384xf32> to vector<8x128xf32>
    %453 = arith.addf %451, %452 : vector<8x128xf32>
    %454 = arith.negf %453 : vector<8x128xf32>
    %455 = math.exp %454 : vector<8x128xf32>
    %cst_150 = arith.constant 1.000000e+00 : f32
    %456 = vector.broadcast %cst_150 : f32 to vector<8x128xf32>
    %457 = arith.addf %456, %455 : vector<8x128xf32>
    %458 = arith.divf %456, %457 : vector<8x128xf32>
    %459 = vector.extract_strided_slice %437 {offsets = [0, 256], sizes = [8, 128], strides = [1, 1]} : vector<8x384xf32> to vector<8x128xf32>
    %460 = vector.extract_strided_slice %442 {offsets = [0, 256], sizes = [8, 128], strides = [1, 1]} : vector<8x384xf32> to vector<8x128xf32>
    %461 = arith.mulf %450, %460 : vector<8x128xf32>
    %462 = arith.addf %459, %461 : vector<8x128xf32>
    %463 = math.tanh %462 : vector<8x128xf32>
    %cst_151 = arith.constant 1.000000e+00 : f32
    %464 = vector.broadcast %cst_151 : f32 to vector<8x128xf32>
    %465 = arith.subf %464, %458 : vector<8x128xf32>
    %466 = arith.mulf %465, %463 : vector<8x128xf32>
    %467 = arith.mulf %458, %426 : vector<8x128xf32>
    %468 = arith.addf %466, %467 : vector<8x128xf32>
    %469 = arith.truncf %468 : vector<8x128xf32> to vector<8x128xbf16>
    %470 = arith.index_cast %c10_i32 : i32 to index
    %c0_152 = arith.constant 0 : index
    %c0_153 = arith.constant 0 : index
    %471 = vector.load %arg8[%470, %c0_152, %c0_153] : memref<16x8x128xbf16, #tpu.memory_space<vmem>>, vector<1x8x128xbf16>
    %472 = vector.shape_cast %471 : vector<1x8x128xbf16> to vector<8x128xbf16>
    %473 = vector.shape_cast %469 : vector<8x128xbf16> to vector<1x8x128xbf16>
    tpu.vector_store %arg8[%470, %c0_152, %c0_153], %473 {strides = array<i32>} : memref<16x8x128xbf16, #tpu.memory_space<vmem>>, vector<1x8x128xbf16>,
    %c11_i32 = arith.constant 11 : i32
    %474 = arith.index_cast %c11_i32 : i32 to index
    %c0_154 = arith.constant 0 : index
    %c0_155 = arith.constant 0 : index
    %475 = vector.load %arg1[%474, %c0_154, %c0_155] : memref<16x8x128xbf16, #tpu.memory_space<vmem>>, vector<1x8x128xbf16>
    %476 = vector.shape_cast %475 : vector<1x8x128xbf16> to vector<8x128xbf16>
    %c0_156 = arith.constant 0 : index
    %c0_157 = arith.constant 0 : index
    %477 = vector.load %arg3[%c0_156, %c0_157] : memref<128x384xbf16, #tpu.memory_space<vmem>>, vector<128x384xbf16>
    %cst_158 = arith.constant dense<0.000000e+00> : vector<8x384xf32>
    %478 = tpu.matmul %476, %477, %cst_158 {dimension_numbers = #tpu.dot_dimension_numbers<[1], [0], [0], [1], [0, 0, 1, 1], [], []>} : vector<8x128xbf16>, vector<128x384xbf16>, vector<8x384xf32> -> vector<8x384xf32>
    %479 = arith.addf %478, %9 : vector<8x384xf32>
    %480 = arith.truncf %468 : vector<8x128xf32> to vector<8x128xbf16>
    %c0_159 = arith.constant 0 : index
    %c0_160 = arith.constant 0 : index
    %481 = vector.load %arg6[%c0_159, %c0_160] : memref<128x384xbf16, #tpu.memory_space<vmem>>, vector<128x384xbf16>
    %cst_161 = arith.constant dense<0.000000e+00> : vector<8x384xf32>
    %482 = tpu.matmul %480, %481, %cst_161 {dimension_numbers = #tpu.dot_dimension_numbers<[1], [0], [0], [1], [0, 0, 1, 1], [], []>} : vector<8x128xbf16>, vector<128x384xbf16>, vector<8x384xf32> -> vector<8x384xf32>
    %483 = vector.broadcast %10 : vector<1x384xf32> to vector<8x384xf32>
    %484 = arith.addf %482, %483 : vector<8x384xf32>
    %485 = vector.extract_strided_slice %479 {offsets = [0, 0], sizes = [8, 128], strides = [1, 1]} : vector<8x384xf32> to vector<8x128xf32>
    %486 = vector.extract_strided_slice %484 {offsets = [0, 0], sizes = [8, 128], strides = [1, 1]} : vector<8x384xf32> to vector<8x128xf32>
    %487 = arith.addf %485, %486 : vector<8x128xf32>
    %488 = arith.negf %487 : vector<8x128xf32>
    %489 = math.exp %488 : vector<8x128xf32>
    %cst_162 = arith.constant 1.000000e+00 : f32
    %490 = vector.broadcast %cst_162 : f32 to vector<8x128xf32>
    %491 = arith.addf %490, %489 : vector<8x128xf32>
    %492 = arith.divf %490, %491 : vector<8x128xf32>
    %493 = vector.extract_strided_slice %479 {offsets = [0, 128], sizes = [8, 128], strides = [1, 1]} : vector<8x384xf32> to vector<8x128xf32>
    %494 = vector.extract_strided_slice %484 {offsets = [0, 128], sizes = [8, 128], strides = [1, 1]} : vector<8x384xf32> to vector<8x128xf32>
    %495 = arith.addf %493, %494 : vector<8x128xf32>
    %496 = arith.negf %495 : vector<8x128xf32>
    %497 = math.exp %496 : vector<8x128xf32>
    %cst_163 = arith.constant 1.000000e+00 : f32
    %498 = vector.broadcast %cst_163 : f32 to vector<8x128xf32>
    %499 = arith.addf %498, %497 : vector<8x128xf32>
    %500 = arith.divf %498, %499 : vector<8x128xf32>
    %501 = vector.extract_strided_slice %479 {offsets = [0, 256], sizes = [8, 128], strides = [1, 1]} : vector<8x384xf32> to vector<8x128xf32>
    %502 = vector.extract_strided_slice %484 {offsets = [0, 256], sizes = [8, 128], strides = [1, 1]} : vector<8x384xf32> to vector<8x128xf32>
    %503 = arith.mulf %492, %502 : vector<8x128xf32>
    %504 = arith.addf %501, %503 : vector<8x128xf32>
    %505 = math.tanh %504 : vector<8x128xf32>
    %cst_164 = arith.constant 1.000000e+00 : f32
    %506 = vector.broadcast %cst_164 : f32 to vector<8x128xf32>
    %507 = arith.subf %506, %500 : vector<8x128xf32>
    %508 = arith.mulf %507, %505 : vector<8x128xf32>
    %509 = arith.mulf %500, %468 : vector<8x128xf32>
    %510 = arith.addf %508, %509 : vector<8x128xf32>
    %511 = arith.truncf %510 : vector<8x128xf32> to vector<8x128xbf16>
    %512 = arith.index_cast %c11_i32 : i32 to index
    %c0_165 = arith.constant 0 : index
    %c0_166 = arith.constant 0 : index
    %513 = vector.load %arg8[%512, %c0_165, %c0_166] : memref<16x8x128xbf16, #tpu.memory_space<vmem>>, vector<1x8x128xbf16>
    %514 = vector.shape_cast %513 : vector<1x8x128xbf16> to vector<8x128xbf16>
    %515 = vector.shape_cast %511 : vector<8x128xbf16> to vector<1x8x128xbf16>
    tpu.vector_store %arg8[%512, %c0_165, %c0_166], %515 {strides = array<i32>} : memref<16x8x128xbf16, #tpu.memory_space<vmem>>, vector<1x8x128xbf16>,
    %c12_i32 = arith.constant 12 : i32
    %516 = arith.index_cast %c12_i32 : i32 to index
    %c0_167 = arith.constant 0 : index
    %c0_168 = arith.constant 0 : index
    %517 = vector.load %arg1[%516, %c0_167, %c0_168] : memref<16x8x128xbf16, #tpu.memory_space<vmem>>, vector<1x8x128xbf16>
    %518 = vector.shape_cast %517 : vector<1x8x128xbf16> to vector<8x128xbf16>
    %c0_169 = arith.constant 0 : index
    %c0_170 = arith.constant 0 : index
    %519 = vector.load %arg3[%c0_169, %c0_170] : memref<128x384xbf16, #tpu.memory_space<vmem>>, vector<128x384xbf16>
    %cst_171 = arith.constant dense<0.000000e+00> : vector<8x384xf32>
    %520 = tpu.matmul %518, %519, %cst_171 {dimension_numbers = #tpu.dot_dimension_numbers<[1], [0], [0], [1], [0, 0, 1, 1], [], []>} : vector<8x128xbf16>, vector<128x384xbf16>, vector<8x384xf32> -> vector<8x384xf32>
    %521 = arith.addf %520, %9 : vector<8x384xf32>
    %522 = arith.truncf %510 : vector<8x128xf32> to vector<8x128xbf16>
    %c0_172 = arith.constant 0 : index
    %c0_173 = arith.constant 0 : index
    %523 = vector.load %arg6[%c0_172, %c0_173] : memref<128x384xbf16, #tpu.memory_space<vmem>>, vector<128x384xbf16>
    %cst_174 = arith.constant dense<0.000000e+00> : vector<8x384xf32>
    %524 = tpu.matmul %522, %523, %cst_174 {dimension_numbers = #tpu.dot_dimension_numbers<[1], [0], [0], [1], [0, 0, 1, 1], [], []>} : vector<8x128xbf16>, vector<128x384xbf16>, vector<8x384xf32> -> vector<8x384xf32>
    %525 = vector.broadcast %10 : vector<1x384xf32> to vector<8x384xf32>
    %526 = arith.addf %524, %525 : vector<8x384xf32>
    %527 = vector.extract_strided_slice %521 {offsets = [0, 0], sizes = [8, 128], strides = [1, 1]} : vector<8x384xf32> to vector<8x128xf32>
    %528 = vector.extract_strided_slice %526 {offsets = [0, 0], sizes = [8, 128], strides = [1, 1]} : vector<8x384xf32> to vector<8x128xf32>
    %529 = arith.addf %527, %528 : vector<8x128xf32>
    %530 = arith.negf %529 : vector<8x128xf32>
    %531 = math.exp %530 : vector<8x128xf32>
    %cst_175 = arith.constant 1.000000e+00 : f32
    %532 = vector.broadcast %cst_175 : f32 to vector<8x128xf32>
    %533 = arith.addf %532, %531 : vector<8x128xf32>
    %534 = arith.divf %532, %533 : vector<8x128xf32>
    %535 = vector.extract_strided_slice %521 {offsets = [0, 128], sizes = [8, 128], strides = [1, 1]} : vector<8x384xf32> to vector<8x128xf32>
    %536 = vector.extract_strided_slice %526 {offsets = [0, 128], sizes = [8, 128], strides = [1, 1]} : vector<8x384xf32> to vector<8x128xf32>
    %537 = arith.addf %535, %536 : vector<8x128xf32>
    %538 = arith.negf %537 : vector<8x128xf32>
    %539 = math.exp %538 : vector<8x128xf32>
    %cst_176 = arith.constant 1.000000e+00 : f32
    %540 = vector.broadcast %cst_176 : f32 to vector<8x128xf32>
    %541 = arith.addf %540, %539 : vector<8x128xf32>
    %542 = arith.divf %540, %541 : vector<8x128xf32>
    %543 = vector.extract_strided_slice %521 {offsets = [0, 256], sizes = [8, 128], strides = [1, 1]} : vector<8x384xf32> to vector<8x128xf32>
    %544 = vector.extract_strided_slice %526 {offsets = [0, 256], sizes = [8, 128], strides = [1, 1]} : vector<8x384xf32> to vector<8x128xf32>
    %545 = arith.mulf %534, %544 : vector<8x128xf32>
    %546 = arith.addf %543, %545 : vector<8x128xf32>
    %547 = math.tanh %546 : vector<8x128xf32>
    %cst_177 = arith.constant 1.000000e+00 : f32
    %548 = vector.broadcast %cst_177 : f32 to vector<8x128xf32>
    %549 = arith.subf %548, %542 : vector<8x128xf32>
    %550 = arith.mulf %549, %547 : vector<8x128xf32>
    %551 = arith.mulf %542, %510 : vector<8x128xf32>
    %552 = arith.addf %550, %551 : vector<8x128xf32>
    %553 = arith.truncf %552 : vector<8x128xf32> to vector<8x128xbf16>
    %554 = arith.index_cast %c12_i32 : i32 to index
    %c0_178 = arith.constant 0 : index
    %c0_179 = arith.constant 0 : index
    %555 = vector.load %arg8[%554, %c0_178, %c0_179] : memref<16x8x128xbf16, #tpu.memory_space<vmem>>, vector<1x8x128xbf16>
    %556 = vector.shape_cast %555 : vector<1x8x128xbf16> to vector<8x128xbf16>
    %557 = vector.shape_cast %553 : vector<8x128xbf16> to vector<1x8x128xbf16>
    tpu.vector_store %arg8[%554, %c0_178, %c0_179], %557 {strides = array<i32>} : memref<16x8x128xbf16, #tpu.memory_space<vmem>>, vector<1x8x128xbf16>,
    %c13_i32 = arith.constant 13 : i32
    %558 = arith.index_cast %c13_i32 : i32 to index
    %c0_180 = arith.constant 0 : index
    %c0_181 = arith.constant 0 : index
    %559 = vector.load %arg1[%558, %c0_180, %c0_181] : memref<16x8x128xbf16, #tpu.memory_space<vmem>>, vector<1x8x128xbf16>
    %560 = vector.shape_cast %559 : vector<1x8x128xbf16> to vector<8x128xbf16>
    %c0_182 = arith.constant 0 : index
    %c0_183 = arith.constant 0 : index
    %561 = vector.load %arg3[%c0_182, %c0_183] : memref<128x384xbf16, #tpu.memory_space<vmem>>, vector<128x384xbf16>
    %cst_184 = arith.constant dense<0.000000e+00> : vector<8x384xf32>
    %562 = tpu.matmul %560, %561, %cst_184 {dimension_numbers = #tpu.dot_dimension_numbers<[1], [0], [0], [1], [0, 0, 1, 1], [], []>} : vector<8x128xbf16>, vector<128x384xbf16>, vector<8x384xf32> -> vector<8x384xf32>
    %563 = arith.addf %562, %9 : vector<8x384xf32>
    %564 = arith.truncf %552 : vector<8x128xf32> to vector<8x128xbf16>
    %c0_185 = arith.constant 0 : index
    %c0_186 = arith.constant 0 : index
    %565 = vector.load %arg6[%c0_185, %c0_186] : memref<128x384xbf16, #tpu.memory_space<vmem>>, vector<128x384xbf16>
    %cst_187 = arith.constant dense<0.000000e+00> : vector<8x384xf32>
    %566 = tpu.matmul %564, %565, %cst_187 {dimension_numbers = #tpu.dot_dimension_numbers<[1], [0], [0], [1], [0, 0, 1, 1], [], []>} : vector<8x128xbf16>, vector<128x384xbf16>, vector<8x384xf32> -> vector<8x384xf32>
    %567 = vector.broadcast %10 : vector<1x384xf32> to vector<8x384xf32>
    %568 = arith.addf %566, %567 : vector<8x384xf32>
    %569 = vector.extract_strided_slice %563 {offsets = [0, 0], sizes = [8, 128], strides = [1, 1]} : vector<8x384xf32> to vector<8x128xf32>
    %570 = vector.extract_strided_slice %568 {offsets = [0, 0], sizes = [8, 128], strides = [1, 1]} : vector<8x384xf32> to vector<8x128xf32>
    %571 = arith.addf %569, %570 : vector<8x128xf32>
    %572 = arith.negf %571 : vector<8x128xf32>
    %573 = math.exp %572 : vector<8x128xf32>
    %cst_188 = arith.constant 1.000000e+00 : f32
    %574 = vector.broadcast %cst_188 : f32 to vector<8x128xf32>
    %575 = arith.addf %574, %573 : vector<8x128xf32>
    %576 = arith.divf %574, %575 : vector<8x128xf32>
    %577 = vector.extract_strided_slice %563 {offsets = [0, 128], sizes = [8, 128], strides = [1, 1]} : vector<8x384xf32> to vector<8x128xf32>
    %578 = vector.extract_strided_slice %568 {offsets = [0, 128], sizes = [8, 128], strides = [1, 1]} : vector<8x384xf32> to vector<8x128xf32>
    %579 = arith.addf %577, %578 : vector<8x128xf32>
    %580 = arith.negf %579 : vector<8x128xf32>
    %581 = math.exp %580 : vector<8x128xf32>
    %cst_189 = arith.constant 1.000000e+00 : f32
    %582 = vector.broadcast %cst_189 : f32 to vector<8x128xf32>
    %583 = arith.addf %582, %581 : vector<8x128xf32>
    %584 = arith.divf %582, %583 : vector<8x128xf32>
    %585 = vector.extract_strided_slice %563 {offsets = [0, 256], sizes = [8, 128], strides = [1, 1]} : vector<8x384xf32> to vector<8x128xf32>
    %586 = vector.extract_strided_slice %568 {offsets = [0, 256], sizes = [8, 128], strides = [1, 1]} : vector<8x384xf32> to vector<8x128xf32>
    %587 = arith.mulf %576, %586 : vector<8x128xf32>
    %588 = arith.addf %585, %587 : vector<8x128xf32>
    %589 = math.tanh %588 : vector<8x128xf32>
    %cst_190 = arith.constant 1.000000e+00 : f32
    %590 = vector.broadcast %cst_190 : f32 to vector<8x128xf32>
    %591 = arith.subf %590, %584 : vector<8x128xf32>
    %592 = arith.mulf %591, %589 : vector<8x128xf32>
    %593 = arith.mulf %584, %552 : vector<8x128xf32>
    %594 = arith.addf %592, %593 : vector<8x128xf32>
    %595 = arith.truncf %594 : vector<8x128xf32> to vector<8x128xbf16>
    %596 = arith.index_cast %c13_i32 : i32 to index
    %c0_191 = arith.constant 0 : index
    %c0_192 = arith.constant 0 : index
    %597 = vector.load %arg8[%596, %c0_191, %c0_192] : memref<16x8x128xbf16, #tpu.memory_space<vmem>>, vector<1x8x128xbf16>
    %598 = vector.shape_cast %597 : vector<1x8x128xbf16> to vector<8x128xbf16>
    %599 = vector.shape_cast %595 : vector<8x128xbf16> to vector<1x8x128xbf16>
    tpu.vector_store %arg8[%596, %c0_191, %c0_192], %599 {strides = array<i32>} : memref<16x8x128xbf16, #tpu.memory_space<vmem>>, vector<1x8x128xbf16>,
    %c14_i32 = arith.constant 14 : i32
    %600 = arith.index_cast %c14_i32 : i32 to index
    %c0_193 = arith.constant 0 : index
    %c0_194 = arith.constant 0 : index
    %601 = vector.load %arg1[%600, %c0_193, %c0_194] : memref<16x8x128xbf16, #tpu.memory_space<vmem>>, vector<1x8x128xbf16>
    %602 = vector.shape_cast %601 : vector<1x8x128xbf16> to vector<8x128xbf16>
    %c0_195 = arith.constant 0 : index
    %c0_196 = arith.constant 0 : index
    %603 = vector.load %arg3[%c0_195, %c0_196] : memref<128x384xbf16, #tpu.memory_space<vmem>>, vector<128x384xbf16>
    %cst_197 = arith.constant dense<0.000000e+00> : vector<8x384xf32>
    %604 = tpu.matmul %602, %603, %cst_197 {dimension_numbers = #tpu.dot_dimension_numbers<[1], [0], [0], [1], [0, 0, 1, 1], [], []>} : vector<8x128xbf16>, vector<128x384xbf16>, vector<8x384xf32> -> vector<8x384xf32>
    %605 = arith.addf %604, %9 : vector<8x384xf32>
    %606 = arith.truncf %594 : vector<8x128xf32> to vector<8x128xbf16>
    %c0_198 = arith.constant 0 : index
    %c0_199 = arith.constant 0 : index
    %607 = vector.load %arg6[%c0_198, %c0_199] : memref<128x384xbf16, #tpu.memory_space<vmem>>, vector<128x384xbf16>
    %cst_200 = arith.constant dense<0.000000e+00> : vector<8x384xf32>
    %608 = tpu.matmul %606, %607, %cst_200 {dimension_numbers = #tpu.dot_dimension_numbers<[1], [0], [0], [1], [0, 0, 1, 1], [], []>} : vector<8x128xbf16>, vector<128x384xbf16>, vector<8x384xf32> -> vector<8x384xf32>
    %609 = vector.broadcast %10 : vector<1x384xf32> to vector<8x384xf32>
    %610 = arith.addf %608, %609 : vector<8x384xf32>
    %611 = vector.extract_strided_slice %605 {offsets = [0, 0], sizes = [8, 128], strides = [1, 1]} : vector<8x384xf32> to vector<8x128xf32>
    %612 = vector.extract_strided_slice %610 {offsets = [0, 0], sizes = [8, 128], strides = [1, 1]} : vector<8x384xf32> to vector<8x128xf32>
    %613 = arith.addf %611, %612 : vector<8x128xf32>
    %614 = arith.negf %613 : vector<8x128xf32>
    %615 = math.exp %614 : vector<8x128xf32>
    %cst_201 = arith.constant 1.000000e+00 : f32
    %616 = vector.broadcast %cst_201 : f32 to vector<8x128xf32>
    %617 = arith.addf %616, %615 : vector<8x128xf32>
    %618 = arith.divf %616, %617 : vector<8x128xf32>
    %619 = vector.extract_strided_slice %605 {offsets = [0, 128], sizes = [8, 128], strides = [1, 1]} : vector<8x384xf32> to vector<8x128xf32>
    %620 = vector.extract_strided_slice %610 {offsets = [0, 128], sizes = [8, 128], strides = [1, 1]} : vector<8x384xf32> to vector<8x128xf32>
    %621 = arith.addf %619, %620 : vector<8x128xf32>
    %622 = arith.negf %621 : vector<8x128xf32>
    %623 = math.exp %622 : vector<8x128xf32>
    %cst_202 = arith.constant 1.000000e+00 : f32
    %624 = vector.broadcast %cst_202 : f32 to vector<8x128xf32>
    %625 = arith.addf %624, %623 : vector<8x128xf32>
    %626 = arith.divf %624, %625 : vector<8x128xf32>
    %627 = vector.extract_strided_slice %605 {offsets = [0, 256], sizes = [8, 128], strides = [1, 1]} : vector<8x384xf32> to vector<8x128xf32>
    %628 = vector.extract_strided_slice %610 {offsets = [0, 256], sizes = [8, 128], strides = [1, 1]} : vector<8x384xf32> to vector<8x128xf32>
    %629 = arith.mulf %618, %628 : vector<8x128xf32>
    %630 = arith.addf %627, %629 : vector<8x128xf32>
    %631 = math.tanh %630 : vector<8x128xf32>
    %cst_203 = arith.constant 1.000000e+00 : f32
    %632 = vector.broadcast %cst_203 : f32 to vector<8x128xf32>
    %633 = arith.subf %632, %626 : vector<8x128xf32>
    %634 = arith.mulf %633, %631 : vector<8x128xf32>
    %635 = arith.mulf %626, %594 : vector<8x128xf32>
    %636 = arith.addf %634, %635 : vector<8x128xf32>
    %637 = arith.truncf %636 : vector<8x128xf32> to vector<8x128xbf16>
    %638 = arith.index_cast %c14_i32 : i32 to index
    %c0_204 = arith.constant 0 : index
    %c0_205 = arith.constant 0 : index
    %639 = vector.load %arg8[%638, %c0_204, %c0_205] : memref<16x8x128xbf16, #tpu.memory_space<vmem>>, vector<1x8x128xbf16>
    %640 = vector.shape_cast %639 : vector<1x8x128xbf16> to vector<8x128xbf16>
    %641 = vector.shape_cast %637 : vector<8x128xbf16> to vector<1x8x128xbf16>
    tpu.vector_store %arg8[%638, %c0_204, %c0_205], %641 {strides = array<i32>} : memref<16x8x128xbf16, #tpu.memory_space<vmem>>, vector<1x8x128xbf16>,
    %c15_i32 = arith.constant 15 : i32
    %642 = arith.index_cast %c15_i32 : i32 to index
    %c0_206 = arith.constant 0 : index
    %c0_207 = arith.constant 0 : index
    %643 = vector.load %arg1[%642, %c0_206, %c0_207] : memref<16x8x128xbf16, #tpu.memory_space<vmem>>, vector<1x8x128xbf16>
    %644 = vector.shape_cast %643 : vector<1x8x128xbf16> to vector<8x128xbf16>
    %c0_208 = arith.constant 0 : index
    %c0_209 = arith.constant 0 : index
    %645 = vector.load %arg3[%c0_208, %c0_209] : memref<128x384xbf16, #tpu.memory_space<vmem>>, vector<128x384xbf16>
    %cst_210 = arith.constant dense<0.000000e+00> : vector<8x384xf32>
    %646 = tpu.matmul %644, %645, %cst_210 {dimension_numbers = #tpu.dot_dimension_numbers<[1], [0], [0], [1], [0, 0, 1, 1], [], []>} : vector<8x128xbf16>, vector<128x384xbf16>, vector<8x384xf32> -> vector<8x384xf32>
    %647 = arith.addf %646, %9 : vector<8x384xf32>
    %648 = arith.truncf %636 : vector<8x128xf32> to vector<8x128xbf16>
    %c0_211 = arith.constant 0 : index
    %c0_212 = arith.constant 0 : index
    %649 = vector.load %arg6[%c0_211, %c0_212] : memref<128x384xbf16, #tpu.memory_space<vmem>>, vector<128x384xbf16>
    %cst_213 = arith.constant dense<0.000000e+00> : vector<8x384xf32>
    %650 = tpu.matmul %648, %649, %cst_213 {dimension_numbers = #tpu.dot_dimension_numbers<[1], [0], [0], [1], [0, 0, 1, 1], [], []>} : vector<8x128xbf16>, vector<128x384xbf16>, vector<8x384xf32> -> vector<8x384xf32>
    %651 = vector.broadcast %10 : vector<1x384xf32> to vector<8x384xf32>
    %652 = arith.addf %650, %651 : vector<8x384xf32>
    %653 = vector.extract_strided_slice %647 {offsets = [0, 0], sizes = [8, 128], strides = [1, 1]} : vector<8x384xf32> to vector<8x128xf32>
    %654 = vector.extract_strided_slice %652 {offsets = [0, 0], sizes = [8, 128], strides = [1, 1]} : vector<8x384xf32> to vector<8x128xf32>
    %655 = arith.addf %653, %654 : vector<8x128xf32>
    %656 = arith.negf %655 : vector<8x128xf32>
    %657 = math.exp %656 : vector<8x128xf32>
    %cst_214 = arith.constant 1.000000e+00 : f32
    %658 = vector.broadcast %cst_214 : f32 to vector<8x128xf32>
    %659 = arith.addf %658, %657 : vector<8x128xf32>
    %660 = arith.divf %658, %659 : vector<8x128xf32>
    %661 = vector.extract_strided_slice %647 {offsets = [0, 128], sizes = [8, 128], strides = [1, 1]} : vector<8x384xf32> to vector<8x128xf32>
    %662 = vector.extract_strided_slice %652 {offsets = [0, 128], sizes = [8, 128], strides = [1, 1]} : vector<8x384xf32> to vector<8x128xf32>
    %663 = arith.addf %661, %662 : vector<8x128xf32>
    %664 = arith.negf %663 : vector<8x128xf32>
    %665 = math.exp %664 : vector<8x128xf32>
    %cst_215 = arith.constant 1.000000e+00 : f32
    %666 = vector.broadcast %cst_215 : f32 to vector<8x128xf32>
    %667 = arith.addf %666, %665 : vector<8x128xf32>
    %668 = arith.divf %666, %667 : vector<8x128xf32>
    %669 = vector.extract_strided_slice %647 {offsets = [0, 256], sizes = [8, 128], strides = [1, 1]} : vector<8x384xf32> to vector<8x128xf32>
    %670 = vector.extract_strided_slice %652 {offsets = [0, 256], sizes = [8, 128], strides = [1, 1]} : vector<8x384xf32> to vector<8x128xf32>
    %671 = arith.mulf %660, %670 : vector<8x128xf32>
    %672 = arith.addf %669, %671 : vector<8x128xf32>
    %673 = math.tanh %672 : vector<8x128xf32>
    %cst_216 = arith.constant 1.000000e+00 : f32
    %674 = vector.broadcast %cst_216 : f32 to vector<8x128xf32>
    %675 = arith.subf %674, %668 : vector<8x128xf32>
    %676 = arith.mulf %675, %673 : vector<8x128xf32>
    %677 = arith.mulf %668, %636 : vector<8x128xf32>
    %678 = arith.addf %676, %677 : vector<8x128xf32>
    %679 = arith.truncf %678 : vector<8x128xf32> to vector<8x128xbf16>
    %680 = arith.index_cast %c15_i32 : i32 to index
    %c0_217 = arith.constant 0 : index
    %c0_218 = arith.constant 0 : index
    %681 = vector.load %arg8[%680, %c0_217, %c0_218] : memref<16x8x128xbf16, #tpu.memory_space<vmem>>, vector<1x8x128xbf16>
    %682 = vector.shape_cast %681 : vector<1x8x128xbf16> to vector<8x128xbf16>
    %683 = vector.shape_cast %679 : vector<8x128xbf16> to vector<1x8x128xbf16>
    tpu.vector_store %arg8[%680, %c0_217, %c0_218], %683 {strides = array<i32>} : memref<16x8x128xbf16, #tpu.memory_space<vmem>>, vector<1x8x128xbf16>,
    %c16_i32 = arith.constant 16 : i32
    %c0_219 = arith.constant 0 : index
    %c0_220 = arith.constant 0 : index
    %684 = vector.load %arg9[%c0_219, %c0_220] : memref<8x128xf32, #tpu.memory_space<vmem>>, vector<8x128xf32>
    tpu.vector_store %arg9[%c0_219, %c0_220], %678 {strides = array<i32>} : memref<8x128xf32, #tpu.memory_space<vmem>>, vector<8x128xf32>,
    return
  }
  func.func @transform_0(%arg0: i32) -> (i32, i32, i32) {
    %c0_i32 = arith.constant 0 : i32
    %c0_i32_0 = arith.constant 0 : i32
    %c0_i32_1 = arith.constant 0 : i32
    return %arg0, %c0_i32, %c0_i32_0 : i32, i32, i32
  }
  func.func @transform_1(%arg0: i32) -> (i32, i32) {
    %c0_i32 = arith.constant 0 : i32
    %c0_i32_0 = arith.constant 0 : i32
    %c0_i32_1 = arith.constant 0 : i32
    return %c0_i32, %c0_i32_0 : i32, i32
  }
  func.func @transform_2(%arg0: i32) -> (i32, i32) {
    %c0_i32 = arith.constant 0 : i32
    %c0_i32_0 = arith.constant 0 : i32
    %c0_i32_1 = arith.constant 0 : i32
    return %c0_i32, %c0_i32_0 : i32, i32
  }
  func.func @transform_3(%arg0: i32) -> (i32, i32) {
    %c0_i32 = arith.constant 0 : i32
    %c0_i32_0 = arith.constant 0 : i32
    %c0_i32_1 = arith.constant 0 : i32
    return %c0_i32, %c0_i32_0 : i32, i32
  }
  func.func @transform_4(%arg0: i32) -> (i32, i32) {
    %c0_i32 = arith.constant 0 : i32
    %c0_i32_0 = arith.constant 0 : i32
    %c0_i32_1 = arith.constant 0 : i32
    return %c0_i32, %c0_i32_0 : i32, i32
  }
  func.func @transform_5(%arg0: i32) -> (i32, i32) {
    %c0_i32 = arith.constant 0 : i32
    %c0_i32_0 = arith.constant 0 : i32
    %c0_i32_1 = arith.constant 0 : i32
    return %c0_i32, %c0_i32_0 : i32, i32
  }
  func.func @transform_6(%arg0: i32) -> (i32, i32) {
    %c0_i32 = arith.constant 0 : i32
    %c0_i32_0 = arith.constant 0 : i32
    %c0_i32_1 = arith.constant 0 : i32
    return %c0_i32, %c0_i32_0 : i32, i32
  }
  func.func @transform_7(%arg0: i32) -> (i32, i32, i32) {
    %c0_i32 = arith.constant 0 : i32
    %c0_i32_0 = arith.constant 0 : i32
    %c0_i32_1 = arith.constant 0 : i32
    return %arg0, %c0_i32, %c0_i32_0 : i32, i32, i32
  }
}

</mosaic_0001>

<llo_original>
// kernel: decoder_forward.3
$region0: #{decoder_forward.3}
  #allocation0 [shape = 'u32[]', space=smem, size = 0x4, offset = 0x4, fixed_abs, tag = 'smem constant byte address 0x4 - core index']
  #allocation1 [shape = 'u32[144,128]{1,0:T(1,128)}', space=vmem, size = 0x12000, scoped, tag = 'internal scratch']
  %s0 = inlined_call_operand.vmem [shape: bf16[128,128], index: 0, kind: input, shape index: {}]
  %s1 = inlined_call_operand.vmem [shape: bf16[128,256], index: 1, kind: input, shape index: {}]
  %s2 = inlined_call_operand.vmem [shape: f32[1,256], index: 2, kind: input, shape index: {}]
  %s3 = inlined_call_operand.vmem [shape: f32[128,256], index: 3, kind: output, shape index: {}]
  %s4 = sld [smem:[#allocation0]]
  $region22: #{decoder_forward.3} parent=0
    _
  %s6 = ssub.s32 1, %s4
  %s7 = scalar_select 0, %s6, %s4
  // Predicated region
  $region2: #{decoder_forward.3} parent=0 // pred_check
    _
  $region3: #{decoder_forward.3} parent=0 // pred_check_branch
    %9 = sbr.rel (0) target = $region5
  $region4: #{decoder_forward.3} parent=0 // pred_region
    _
  $region5: #{decoder_forward.3} parent=0 // pred_fallthru
    _
  // Predicated region
  $region6: #{decoder_forward.3} parent=0 // pred_check
    _
  $region7: #{decoder_forward.3} parent=0 // pred_check_branch
    %11 = sbr.rel (0) target = $region9
  $region8: #{decoder_forward.3} parent=0 // pred_region
    _
  $region9: #{decoder_forward.3} parent=0 // pred_fallthru
    _
  // Predicated region
  $region10: #{decoder_forward.3} parent=0 // pred_check
    _
  $region11: #{decoder_forward.3} parent=0 // pred_check_branch
    %13 = sbr.rel (0) target = $region13
  $region12: #{decoder_forward.3} parent=0 // pred_region
    _
  $region13: #{decoder_forward.3} parent=0 // pred_fallthru
    _
  %v15 = vld [vmem:[%s0] sm:$0xf]
  %v16 = vld [vmem:[%s0 + $0x4] sm:$0xf]
  %v17 = vld [vmem:[%s0 + $0x8] sm:$0xf]
  %v18 = vld [vmem:[%s0 + $0xc] sm:$0xf]
  %v19 = vld [vmem:[%s0 + $0x10] sm:$0xf]
  %v20 = vld [vmem:[%s0 + $0x14] sm:$0xf]
  %v21 = vld [vmem:[%s0 + $0x18] sm:$0xf]
  %v22 = vld [vmem:[%s0 + $0x1c] sm:$0xf]
  %v23 = vld [vmem:[%s0 + $0x20] sm:$0xf]
  %v24 = vld [vmem:[%s0 + $0x24] sm:$0xf]
  %v25 = vld [vmem:[%s0 + $0x28] sm:$0xf]
  %v26 = vld [vmem:[%s0 + $0x2c] sm:$0xf]
  %v27 = vld [vmem:[%s0 + $0x30] sm:$0xf]
  %v28 = vld [vmem:[%s0 + $0x34] sm:$0xf]
  %v29 = vld [vmem:[%s0 + $0x38] sm:$0xf]
  %v30 = vld [vmem:[%s0 + $0x3c] sm:$0xf]
  %v31 = vld [vmem:[%s1] sm:$0xff]
  %v32 = vld [vmem:[%s1 + $0x8] sm:$0xff]
  %v33 = vld [vmem:[%s1 + $0x10] sm:$0xff]
  %v34 = vld [vmem:[%s1 + $0x18] sm:$0xff]
  %v35 = vld [vmem:[%s1 + $0x20] sm:$0xff]
  %v36 = vld [vmem:[%s1 + $0x28] sm:$0xff]
  %v37 = vld [vmem:[%s1 + $0x30] sm:$0xff]
  %v38 = vld [vmem:[%s1 + $0x38] sm:$0xff]
  %v39 = vld [vmem:[%s1 + $0x40] sm:$0xff]
  %v40 = vld [vmem:[%s1 + $0x48] sm:$0xff]
  %v41 = vld [vmem:[%s1 + $0x50] sm:$0xff]
  %v42 = vld [vmem:[%s1 + $0x58] sm:$0xff]
  %v43 = vld [vmem:[%s1 + $0x60] sm:$0xff]
  %v44 = vld [vmem:[%s1 + $0x68] sm:$0xff]
  %v45 = vld [vmem:[%s1 + $0x70] sm:$0xff]
  %v46 = vld [vmem:[%s1 + $0x78] sm:$0xff]
  %v47 = vld [vmem:[%s2] sm:$0x3]
  %v49 = vlaneseq
  %v50 = vshrl.u32 %v49, 7
  %v51 = vsub.s32 0, %v50
  %v52 = vrot.slane %v47, %v51
  %v53 = vlaneseq
  %v54 = vshrl.u32 %v53, 7
  %v55 = vsub.s32 1, %v54
  %v56 = vrot.slane %v47, %v55
  %v75 = vunpack.c.l.b16 %v15
  %v76 = vunpack.c.l.b16 %v16
  %v77 = vunpack.c.l.b16 %v17
  %v78 = vunpack.c.l.b16 %v18
  %v79 = vunpack.c.l.b16 %v19
  %v80 = vunpack.c.l.b16 %v20
  %v81 = vunpack.c.l.b16 %v21
  %v82 = vunpack.c.l.b16 %v22
  %v83 = vunpack.c.l.b16 %v23
  %v84 = vunpack.c.l.b16 %v24
  %v85 = vunpack.c.l.b16 %v25
  %v86 = vunpack.c.l.b16 %v26
  %v87 = vunpack.c.l.b16 %v27
  %v88 = vunpack.c.l.b16 %v28
  %v89 = vunpack.c.l.b16 %v29
  %v90 = vunpack.c.l.b16 %v30
  %v91 = vpack.c.b16 %v76, %v75
  %v92 = vpack.c.b16 %v78, %v77
  %v93 = vpack.c.b16 %v80, %v79
  %v94 = vpack.c.b16 %v82, %v81
  %v95 = vpack.c.b16 %v84, %v83
  %v96 = vpack.c.b16 %v86, %v85
  %v97 = vpack.c.b16 %v88, %v87
  %v98 = vpack.c.b16 %v90, %v89
  %v123 = vunpack.c.l.b16 %v31
  %v124 = vunpack.c.h.b16 %v31
  %v125 = vunpack.c.l.b16 %v32
  %v126 = vunpack.c.h.b16 %v32
  %v127 = vunpack.c.l.b16 %v33
  %v128 = vunpack.c.h.b16 %v33
  %v129 = vunpack.c.l.b16 %v34
  %v130 = vunpack.c.h.b16 %v34
  %v131 = vunpack.c.l.b16 %v35
  %v132 = vunpack.c.h.b16 %v35
  %v133 = vunpack.c.l.b16 %v36
  %v134 = vunpack.c.h.b16 %v36
  %v135 = vunpack.c.l.b16 %v37
  %v136 = vunpack.c.h.b16 %v37
  %v137 = vunpack.c.l.b16 %v38
  %v138 = vunpack.c.h.b16 %v38
  %v139 = vunpack.c.l.b16 %v39
  %v140 = vunpack.c.h.b16 %v39
  %v141 = vunpack.c.l.b16 %v40
  %v142 = vunpack.c.h.b16 %v40
  %v143 = vunpack.c.l.b16 %v41
  %v144 = vunpack.c.h.b16 %v41
  %v145 = vunpack.c.l.b16 %v42
  %v146 = vunpack.c.h.b16 %v42
  %v147 = vunpack.c.l.b16 %v43
  %v148 = vunpack.c.h.b16 %v43
  %v149 = vunpack.c.l.b16 %v44
  %v150 = vunpack.c.h.b16 %v44
  %v151 = vunpack.c.l.b16 %v45
  %v152 = vunpack.c.h.b16 %v45
  %v153 = vunpack.c.l.b16 %v46
  %v154 = vunpack.c.h.b16 %v46
  %v155 = vpack.c.b16 %v125, %v123
  %v156 = vpack.c.b16 %v126, %v124
  %v157 = vpack.c.b16 %v129, %v127
  %v158 = vpack.c.b16 %v130, %v128
  %v159 = vpack.c.b16 %v133, %v131
  %v160 = vpack.c.b16 %v134, %v132
  %v161 = vpack.c.b16 %v137, %v135
  %v162 = vpack.c.b16 %v138, %v136
  %v163 = vpack.c.b16 %v141, %v139
  %v164 = vpack.c.b16 %v142, %v140
  %v165 = vpack.c.b16 %v145, %v143
  %v166 = vpack.c.b16 %v146, %v144
  %v167 = vpack.c.b16 %v149, %v147
  %v168 = vpack.c.b16 %v150, %v148
  %v169 = vpack.c.b16 %v153, %v151
  %v170 = vpack.c.b16 %v154, %v152
  %187 = vmatprep.subr.bf16.mxu0 %v170
  %188 = vmatpush1.bf16.msra.mxu0 %v169
  %189 = vmatprep.subr.bf16.mxu0 %v168
  %190 = vmatpush1.bf16.msra.mxu0 %v167
  %191 = vmatprep.subr.bf16.mxu0 %v166
  %192 = vmatpush1.bf16.msra.mxu0 %v165
  %193 = vmatprep.subr.bf16.mxu0 %v164
  %194 = vmatpush1.bf16.msra.mxu0 %v163
  %195 = vmatprep.subr.bf16.mxu0 %v162
  %196 = vmatpush1.bf16.msra.mxu0 %v161
  %197 = vmatprep.subr.bf16.mxu0 %v160
  %198 = vmatpush1.bf16.msra.mxu0 %v159
  %199 = vmatprep.subr.bf16.mxu0 %v158
  %200 = vmatpush1.bf16.msra.mxu0 %v157
  %201 = vmatprep.subr.bf16.mxu0 %v156
  %202 = vmatpush1.bf16.msra.mxu0 %v155
  %203 = vmatprep.subr.bf16.mxu0 0
  %204 = vmatpush2.bf16.msra.mxu0 0
  %205 = vmatprep.subr.bf16.mxu0 0
  %206 = vmatpush2.bf16.msra.mxu0 0
  %207 = vmatprep.subr.bf16.mxu0 0
  %208 = vmatpush2.bf16.msra.mxu0 0
  %209 = vmatprep.subr.bf16.mxu0 0
  %210 = vmatpush2.bf16.msra.mxu0 0
  %211 = vmatprep.subr.bf16.mxu0 0
  %212 = vmatpush2.bf16.msra.mxu0 0
  %213 = vmatprep.subr.bf16.mxu0 0
  %214 = vmatpush2.bf16.msra.mxu0 0
  %215 = vmatprep.subr.bf16.mxu0 0
  %216 = vmatpush2.bf16.msra.mxu0 0
  %217 = vmatprep.subr.bf16.mxu0 0
  %218 = vmatpush2.bf16.msra.mxu0 0
  %219 = vmatprep.mubr.bf16.mxu0 0
  %220 = vmatmul.mubr.bf16.gmra.mxu0 %v91
  %v221 = vpop.f32.mrf.mxu0
  %v222 = vadd.f32 %v52, %v221
  %v223 = vpop.f32.mrf.mxu0
  %v224 = vadd.f32 %v56, %v223
  %v225 = vpop.f32.mrf.mxu0
  %v226 = vadd.f32 %v52, %v225
  %v227 = vpop.f32.mrf.mxu0
  %v228 = vadd.f32 %v56, %v227
  %229 = vmatprep.mubr.bf16.mxu0 0
  %230 = vmatmul.mubr.bf16.gmra.mxu0 %v92
  %v231 = vpop.f32.mrf.mxu0
  %v232 = vadd.f32 %v52, %v231
  %v233 = vpop.f32.mrf.mxu0
  %v234 = vadd.f32 %v56, %v233
  %v235 = vpop.f32.mrf.mxu0
  %v236 = vadd.f32 %v52, %v235
  %v237 = vpop.f32.mrf.mxu0
  %v238 = vadd.f32 %v56, %v237
  %239 = vmatprep.mubr.bf16.mxu0 0
  %240 = vmatmul.mubr.bf16.gmra.mxu0 %v93
  %v241 = vpop.f32.mrf.mxu0
  %v242 = vadd.f32 %v52, %v241
  %v243 = vpop.f32.mrf.mxu0
  %v244 = vadd.f32 %v56, %v243
  %v245 = vpop.f32.mrf.mxu0
  %v246 = vadd.f32 %v52, %v245
  %v247 = vpop.f32.mrf.mxu0
  %v248 = vadd.f32 %v56, %v247
  %249 = vmatprep.mubr.bf16.mxu0 0
  %250 = vmatmul.mubr.bf16.gmra.mxu0 %v94
  %v251 = vpop.f32.mrf.mxu0
  %v252 = vadd.f32 %v52, %v251
  %v253 = vpop.f32.mrf.mxu0
  %v254 = vadd.f32 %v56, %v253
  %v255 = vpop.f32.mrf.mxu0
  %v256 = vadd.f32 %v52, %v255
  %v257 = vpop.f32.mrf.mxu0
  %v258 = vadd.f32 %v56, %v257
  %259 = vmatprep.mubr.bf16.mxu0 0
  %260 = vmatmul.mubr.bf16.gmra.mxu0 %v95
  %v261 = vpop.f32.mrf.mxu0
  %v262 = vadd.f32 %v52, %v261
  %v263 = vpop.f32.mrf.mxu0
  %v264 = vadd.f32 %v56, %v263
  %v265 = vpop.f32.mrf.mxu0
  %v266 = vadd.f32 %v52, %v265
  %v267 = vpop.f32.mrf.mxu0
  %v268 = vadd.f32 %v56, %v267
  %269 = vmatprep.mubr.bf16.mxu0 0
  %270 = vmatmul.mubr.bf16.gmra.mxu0 %v96
  %v271 = vpop.f32.mrf.mxu0
  %v272 = vadd.f32 %v52, %v271
  %v273 = vpop.f32.mrf.mxu0
  %v274 = vadd.f32 %v56, %v273
  %v275 = vpop.f32.mrf.mxu0
  %v276 = vadd.f32 %v52, %v275
  %v277 = vpop.f32.mrf.mxu0
  %v278 = vadd.f32 %v56, %v277
  %279 = vmatprep.mubr.bf16.mxu0 0
  %280 = vmatmul.mubr.bf16.gmra.mxu0 %v97
  %v281 = vpop.f32.mrf.mxu0
  %v282 = vadd.f32 %v52, %v281
  %v283 = vpop.f32.mrf.mxu0
  %v284 = vadd.f32 %v56, %v283
  %v285 = vpop.f32.mrf.mxu0
  %v286 = vadd.f32 %v52, %v285
  %v287 = vpop.f32.mrf.mxu0
  %v288 = vadd.f32 %v56, %v287
  %289 = vmatprep.mubr.bf16.mxu0 0
  %290 = vmatmul.mubr.bf16.gmra.mxu0 %v98
  %v291 = vpop.f32.mrf.mxu0
  %v292 = vadd.f32 %v52, %v291
  %v293 = vpop.f32.mrf.mxu0
  %v294 = vadd.f32 %v56, %v293
  %v295 = vpop.f32.mrf.mxu0
  %v296 = vadd.f32 %v52, %v295
  %v297 = vpop.f32.mrf.mxu0
  %v298 = vadd.f32 %v56, %v297
  %299 = vdwg.mxu0
  %300 = vst [vmem:[%s3] sm:$0xff] %v222
  %301 = vst [vmem:[%s3 + $0x8] sm:$0xff] %v224
  %302 = vst [vmem:[%s3 + $0x10] sm:$0xff] %v226
  %303 = vst [vmem:[%s3 + $0x18] sm:$0xff] %v228
  %304 = vst [vmem:[%s3 + $0x20] sm:$0xff] %v232
  %305 = vst [vmem:[%s3 + $0x28] sm:$0xff] %v234
  %306 = vst [vmem:[%s3 + $0x30] sm:$0xff] %v236
  %307 = vst [vmem:[%s3 + $0x38] sm:$0xff] %v238
  %308 = vst [vmem:[%s3 + $0x40] sm:$0xff] %v242
  %309 = vst [vmem:[%s3 + $0x48] sm:$0xff] %v244
  %310 = vst [vmem:[%s3 + $0x50] sm:$0xff] %v246
  %311 = vst [vmem:[%s3 + $0x58] sm:$0xff] %v248
  %312 = vst [vmem:[%s3 + $0x60] sm:$0xff] %v252
  %313 = vst [vmem:[%s3 + $0x68] sm:$0xff] %v254
  %314 = vst [vmem:[%s3 + $0x70] sm:$0xff] %v256
  %315 = vst [vmem:[%s3 + $0x78] sm:$0xff] %v258
  %316 = vst [vmem:[%s3 + $0x80] sm:$0xff] %v262
  %317 = vst [vmem:[%s3 + $0x88] sm:$0xff] %v264
  %318 = vst [vmem:[%s3 + $0x90] sm:$0xff] %v266
  %319 = vst [vmem:[%s3 + $0x98] sm:$0xff] %v268
  %320 = vst [vmem:[%s3 + $0xa0] sm:$0xff] %v272
  %321 = vst [vmem:[%s3 + $0xa8] sm:$0xff] %v274
  %322 = vst [vmem:[%s3 + $0xb0] sm:$0xff] %v276
  %323 = vst [vmem:[%s3 + $0xb8] sm:$0xff] %v278
  %324 = vst [vmem:[%s3 + $0xc0] sm:$0xff] %v282
  %325 = vst [vmem:[%s3 + $0xc8] sm:$0xff] %v284
  %326 = vst [vmem:[%s3 + $0xd0] sm:$0xff] %v286
  %327 = vst [vmem:[%s3 + $0xd8] sm:$0xff] %v288
  %328 = vst [vmem:[%s3 + $0xe0] sm:$0xff] %v292
  %329 = vst [vmem:[%s3 + $0xe8] sm:$0xff] %v294
  %330 = vst [vmem:[%s3 + $0xf0] sm:$0xff] %v296
  %331 = vst [vmem:[%s3 + $0xf8] sm:$0xff] %v298
  // Predicated region
  $region14: #{decoder_forward.3} parent=0 // pred_check
    _
  $region15: #{decoder_forward.3} parent=0 // pred_check_branch
    %333 = sbr.rel (0) target = $region17
  $region16: #{decoder_forward.3} parent=0 // pred_region
    _
  $region17: #{decoder_forward.3} parent=0 // pred_fallthru
    _
  // Predicated region
  $region18: #{decoder_forward.3} parent=0 // pred_check
    _
  $region19: #{decoder_forward.3} parent=0 // pred_check_branch
    %335 = sbr.rel (0) target = $region21
  $region20: #{decoder_forward.3} parent=0 // pred_region
    _
  $region21: #{decoder_forward.3} parent=0 // pred_fallthru
    _

// kernel: decoder_forward.2
$region0: #{decoder_forward.2}
  #allocation0 [shape = 'u32[]', space=smem, size = 0x4, offset = 0x4, fixed_abs, tag = 'smem constant byte address 0x4 - core index']
  #allocation1 [shape = 'u32[144,128]{1,0:T(1,128)}', space=vmem, size = 0x12000, scoped, tag = 'internal scratch']
  #allocation2 [shape = 'f32[8,128]{1,0:T(8,128)}', space=vmem, size = 0x1000, scoped, tag = 'scratch operand']
  %s0 = inlined_call_operand.vmem [shape: bf16[16,8,128], index: 0, kind: input, shape index: {}]
  %s1 = inlined_call_operand.vmem [shape: f32[8,128], index: 1, kind: input, shape index: {}]
  %s2 = inlined_call_operand.vmem [shape: bf16[128,384], index: 2, kind: input, shape index: {}]
  %s3 = inlined_call_operand.vmem [shape: bf16[128,384], index: 3, kind: input, shape index: {}]
  %s4 = inlined_call_operand.vmem [shape: f32[1,384], index: 4, kind: input, shape index: {}]
  %s5 = inlined_call_operand.vmem [shape: bf16[128,384], index: 5, kind: input, shape index: {}]
  %s6 = inlined_call_operand.vmem [shape: f32[1,384], index: 6, kind: input, shape index: {}]
  %s7 = inlined_call_operand.vmem [shape: bf16[16,8,128], index: 7, kind: output, shape index: {}]
  %s8 = sld [smem:[#allocation0]]
  $region42: #{decoder_forward.2} parent=0
    _
  %s10 = ssub.s32 1, %s8
  %s11 = scalar_select 0, %s10, %s8
  // Predicated region
  $region2: #{decoder_forward.2} parent=0 // pred_check
    _
  $region3: #{decoder_forward.2} parent=0 // pred_check_branch
    %13 = sbr.rel (0) target = $region5
  $region4: #{decoder_forward.2} parent=0 // pred_region
    _
  $region5: #{decoder_forward.2} parent=0 // pred_fallthru
    _
  // Predicated region
  $region6: #{decoder_forward.2} parent=0 // pred_check
    _
  $region7: #{decoder_forward.2} parent=0 // pred_check_branch
    %15 = sbr.rel (0) target = $region9
  $region8: #{decoder_forward.2} parent=0 // pred_region
    _
  $region9: #{decoder_forward.2} parent=0 // pred_fallthru
    _
  // Predicated region
  $region10: #{decoder_forward.2} parent=0 // pred_check
    _
  $region11: #{decoder_forward.2} parent=0 // pred_check_branch
    %17 = sbr.rel (0) target = $region13
  $region12: #{decoder_forward.2} parent=0 // pred_region
    _
  $region13: #{decoder_forward.2} parent=0 // pred_fallthru
    _
  // Predicated region
  $region14: #{decoder_forward.2} parent=0 // pred_check
    _
  $region15: #{decoder_forward.2} parent=0 // pred_check_branch
    %19 = sbr.rel (0) target = $region17
  $region16: #{decoder_forward.2} parent=0 // pred_region
    _
  $region17: #{decoder_forward.2} parent=0 // pred_fallthru
    _
  // Predicated region
  $region18: #{decoder_forward.2} parent=0 // pred_check
    _
  $region19: #{decoder_forward.2} parent=0 // pred_check_branch
    %21 = sbr.rel (0) target = $region21
  $region20: #{decoder_forward.2} parent=0 // pred_region
    _
  $region21: #{decoder_forward.2} parent=0 // pred_fallthru
    _
  // Predicated region
  $region22: #{decoder_forward.2} parent=0 // pred_check
    _
  $region23: #{decoder_forward.2} parent=0 // pred_check_branch
    %23 = sbr.rel (0) target = $region25
  $region24: #{decoder_forward.2} parent=0 // pred_region
    _
  $region25: #{decoder_forward.2} parent=0 // pred_fallthru
    _
  // Predicated region
  $region26: #{decoder_forward.2} parent=0 // pred_check
    _
  $region27: #{decoder_forward.2} parent=0 // pred_check_branch
    %25 = sbr.rel (0) target = $region29
  $region28: #{decoder_forward.2} parent=0 // pred_region
    _
  $region29: #{decoder_forward.2} parent=0 // pred_fallthru
    _
  %p27 = scmp.eq.s32.totalorder 0, 0
  // Predicated region
  $region30: #{decoder_forward.2} parent=0 // pred_check
    %p28 = pneg %p27
  $region31: #{decoder_forward.2} parent=0 // pred_check_branch
    %30 = sbr.rel (%p28) target = $region33
  $region32: #{decoder_forward.2} parent=0 // pred_region
    %v31 = vld [vmem:[%s1] sm:$0xff]
    %32 = vst [vmem:[#allocation2] sm:$0xff] %v31
  $region33: #{decoder_forward.2} parent=0 // pred_fallthru
    _
  %v33 = vld [vmem:[%s1] sm:$0xff]
  %v34 = vpack.c.bf16 %v33, %v33
  %v35 = vld [vmem:[%s3] sm:$0xff]
  %v36 = vld [vmem:[%s3 + $0x8] sm:$0xf]
  %v37 = vld [vmem:[%s3 + $0xc] sm:$0xff]
  %v38 = vld [vmem:[%s3 + $0x14] sm:$0xf]
  %v39 = vld [vmem:[%s3 + $0x18] sm:$0xff]
  %v40 = vld [vmem:[%s3 + $0x20] sm:$0xf]
  %v41 = vld [vmem:[%s3 + $0x24] sm:$0xff]
  %v42 = vld [vmem:[%s3 + $0x2c] sm:$0xf]
  %v43 = vld [vmem:[%s3 + $0x30] sm:$0xff]
  %v44 = vld [vmem:[%s3 + $0x38] sm:$0xf]
  %v45 = vld [vmem:[%s3 + $0x3c] sm:$0xff]
  %v46 = vld [vmem:[%s3 + $0x44] sm:$0xf]
  %v47 = vld [vmem:[%s3 + $0x48] sm:$0xff]
  %v48 = vld [vmem:[%s3 + $0x50] sm:$0xf]
  %v49 = vld [vmem:[%s3 + $0x54] sm:$0xff]
  %v50 = vld [vmem:[%s3 + $0x5c] sm:$0xf]
  %v51 = vld [vmem:[%s3 + $0x60] sm:$0xff]
  %v52 = vld [vmem:[%s3 + $0x68] sm:$0xf]
  %v53 = vld [vmem:[%s3 + $0x6c] sm:$0xff]
  %v54 = vld [vmem:[%s3 + $0x74] sm:$0xf]
  %v55 = vld [vmem:[%s3 + $0x78] sm:$0xff]
  %v56 = vld [vmem:[%s3 + $0x80] sm:$0xf]
  %v57 = vld [vmem:[%s3 + $0x84] sm:$0xff]
  %v58 = vld [vmem:[%s3 + $0x8c] sm:$0xf]
  %v59 = vld [vmem:[%s3 + $0x90] sm:$0xff]
  %v60 = vld [vmem:[%s3 + $0x98] sm:$0xf]
  %v61 = vld [vmem:[%s3 + $0x9c] sm:$0xff]
  %v62 = vld [vmem:[%s3 + $0xa4] sm:$0xf]
  %v63 = vld [vmem:[%s3 + $0xa8] sm:$0xff]
  %v64 = vld [vmem:[%s3 + $0xb0] sm:$0xf]
  %v65 = vld [vmem:[%s3 + $0xb4] sm:$0xff]
  %v66 = vld [vmem:[%s3 + $0xbc] sm:$0xf]
  %v67 = vld [vmem:[%s4] sm:$0x7]
  %v69 = vlaneseq
  %v70 = vshrl.u32 %v69, 7
  %v71 = vsub.s32 0, %v70
  %v72 = vrot.slane %v67, %v71
  %v73 = vlaneseq
  %v74 = vshrl.u32 %v73, 7
  %v75 = vsub.s32 1, %v74
  %v76 = vrot.slane %v67, %v75
  %v77 = vlaneseq
  %v78 = vshrl.u32 %v77, 7
  %v79 = vsub.s32 2, %v78
  %v80 = vrot.slane %v67, %v79
  %v116 = vunpack.c.l.b16 %v35
  %v117 = vunpack.c.h.b16 %v35
  %v118 = vunpack.c.l.b16 %v36
  %v119 = vunpack.c.l.b16 %v37
  %v120 = vunpack.c.h.b16 %v37
  %v121 = vunpack.c.l.b16 %v38
  %v122 = vunpack.c.l.b16 %v39
  %v123 = vunpack.c.h.b16 %v39
  %v124 = vunpack.c.l.b16 %v40
  %v125 = vunpack.c.l.b16 %v41
  %v126 = vunpack.c.h.b16 %v41
  %v127 = vunpack.c.l.b16 %v42
  %v128 = vunpack.c.l.b16 %v43
  %v129 = vunpack.c.h.b16 %v43
  %v130 = vunpack.c.l.b16 %v44
  %v131 = vunpack.c.l.b16 %v45
  %v132 = vunpack.c.h.b16 %v45
  %v133 = vunpack.c.l.b16 %v46
  %v134 = vunpack.c.l.b16 %v47
  %v135 = vunpack.c.h.b16 %v47
  %v136 = vunpack.c.l.b16 %v48
  %v137 = vunpack.c.l.b16 %v49
  %v138 = vunpack.c.h.b16 %v49
  %v139 = vunpack.c.l.b16 %v50
  %v140 = vunpack.c.l.b16 %v51
  %v141 = vunpack.c.h.b16 %v51
  %v142 = vunpack.c.l.b16 %v52
  %v143 = vunpack.c.l.b16 %v53
  %v144 = vunpack.c.h.b16 %v53
  %v145 = vunpack.c.l.b16 %v54
  %v146 = vunpack.c.l.b16 %v55
  %v147 = vunpack.c.h.b16 %v55
  %v148 = vunpack.c.l.b16 %v56
  %v149 = vunpack.c.l.b16 %v57
  %v150 = vunpack.c.h.b16 %v57
  %v151 = vunpack.c.l.b16 %v58
  %v152 = vunpack.c.l.b16 %v59
  %v153 = vunpack.c.h.b16 %v59
  %v154 = vunpack.c.l.b16 %v60
  %v155 = vunpack.c.l.b16 %v61
  %v156 = vunpack.c.h.b16 %v61
  %v157 = vunpack.c.l.b16 %v62
  %v158 = vunpack.c.l.b16 %v63
  %v159 = vunpack.c.h.b16 %v63
  %v160 = vunpack.c.l.b16 %v64
  %v161 = vunpack.c.l.b16 %v65
  %v162 = vunpack.c.h.b16 %v65
  %v163 = vunpack.c.l.b16 %v66
  %v164 = vpack.c.b16 %v119, %v116
  %v165 = vpack.c.b16 %v120, %v117
  %v166 = vpack.c.b16 %v121, %v118
  %v167 = vpack.c.b16 %v125, %v122
  %v168 = vpack.c.b16 %v126, %v123
  %v169 = vpack.c.b16 %v127, %v124
  %v170 = vpack.c.b16 %v131, %v128
  %v171 = vpack.c.b16 %v132, %v129
  %v172 = vpack.c.b16 %v133, %v130
  %v173 = vpack.c.b16 %v137, %v134
  %v174 = vpack.c.b16 %v138, %v135
  %v175 = vpack.c.b16 %v139, %v136
  %v176 = vpack.c.b16 %v143, %v140
  %v177 = vpack.c.b16 %v144, %v141
  %v178 = vpack.c.b16 %v145, %v142
  %v179 = vpack.c.b16 %v149, %v146
  %v180 = vpack.c.b16 %v150, %v147
  %v181 = vpack.c.b16 %v151, %v148
  %v182 = vpack.c.b16 %v155, %v152
  %v183 = vpack.c.b16 %v156, %v153
  %v184 = vpack.c.b16 %v157, %v154
  %v185 = vpack.c.b16 %v161, %v158
  %v186 = vpack.c.b16 %v162, %v159
  %v187 = vpack.c.b16 %v163, %v160
  %212 = vmatprep.subr.bf16.mxu0 %v186
  %213 = vmatpush1.bf16.msra.mxu0 %v185
  %214 = vmatprep.subr.bf16.mxu0 %v183
  %215 = vmatpush1.bf16.msra.mxu0 %v182
  %216 = vmatprep.subr.bf16.mxu0 %v180
  %217 = vmatpush1.bf16.msra.mxu0 %v179
  %218 = vmatprep.subr.bf16.mxu0 %v177
  %219 = vmatpush1.bf16.msra.mxu0 %v176
  %220 = vmatprep.subr.bf16.mxu0 %v174
  %221 = vmatpush1.bf16.msra.mxu0 %v173
  %222 = vmatprep.subr.bf16.mxu0 %v171
  %223 = vmatpush1.bf16.msra.mxu0 %v170
  %224 = vmatprep.subr.bf16.mxu0 %v168
  %225 = vmatpush1.bf16.msra.mxu0 %v167
  %226 = vmatprep.subr.bf16.mxu0 %v165
  %227 = vmatpush1.bf16.msra.mxu0 %v164
  %228 = vmatprep.subr.bf16.mxu0 0
  %229 = vmatpush2.bf16.msra.mxu0 0
  %230 = vmatprep.subr.bf16.mxu0 0
  %231 = vmatpush2.bf16.msra.mxu0 0
  %232 = vmatprep.subr.bf16.mxu0 0
  %233 = vmatpush2.bf16.msra.mxu0 0
  %234 = vmatprep.subr.bf16.mxu0 0
  %235 = vmatpush2.bf16.msra.mxu0 0
  %236 = vmatprep.subr.bf16.mxu0 0
  %237 = vmatpush2.bf16.msra.mxu0 0
  %238 = vmatprep.subr.bf16.mxu0 0
  %239 = vmatpush2.bf16.msra.mxu0 0
  %240 = vmatprep.subr.bf16.mxu0 0
  %241 = vmatpush2.bf16.msra.mxu0 0
  %242 = vmatprep.subr.bf16.mxu0 0
  %243 = vmatpush2.bf16.msra.mxu0 0
  %244 = vmatprep.mubr.bf16.mxu0 0
  %245 = vmatmul.mubr.bf16.gmra.mxu0 %v34
  %v246 = vpop.f32.mrf.mxu0
  %v247 = vadd.f32 %v72, %v246
  %v248 = vpop.f32.mrf.mxu0
  %v249 = vadd.f32 %v76, %v248
  %v250 = vpop.f32.mrf.mxu0
  %v251 = vpop.f32.mrf.mxu0
  %252 = vdwg.mxu0
  %253 = vmatprep.subr.bf16.mxu0 0
  %254 = vmatpush1.bf16.msra.mxu0 %v187
  %255 = vmatprep.subr.bf16.mxu0 0
  %256 = vmatpush1.bf16.msra.mxu0 %v184
  %257 = vmatprep.subr.bf16.mxu0 0
  %258 = vmatpush1.bf16.msra.mxu0 %v181
  %259 = vmatprep.subr.bf16.mxu0 0
  %260 = vmatpush1.bf16.msra.mxu0 %v178
  %261 = vmatprep.subr.bf16.mxu0 0
  %262 = vmatpush1.bf16.msra.mxu0 %v175
  %263 = vmatprep.subr.bf16.mxu0 0
  %264 = vmatpush1.bf16.msra.mxu0 %v172
  %265 = vmatprep.subr.bf16.mxu0 0
  %266 = vmatpush1.bf16.msra.mxu0 %v169
  %267 = vmatprep.subr.bf16.mxu0 0
  %268 = vmatpush1.bf16.msra.mxu0 %v166
  %269 = vmatprep.subr.bf16.mxu0 0
  %270 = vmatpush2.bf16.msra.mxu0 0
  %271 = vmatprep.subr.bf16.mxu0 0
  %272 = vmatpush2.bf16.msra.mxu0 0
  %273 = vmatprep.subr.bf16.mxu0 0
  %274 = vmatpush2.bf16.msra.mxu0 0
  %275 = vmatprep.subr.bf16.mxu0 0
  %276 = vmatpush2.bf16.msra.mxu0 0
  %277 = vmatprep.subr.bf16.mxu0 0
  %278 = vmatpush2.bf16.msra.mxu0 0
  %279 = vmatprep.subr.bf16.mxu0 0
  %280 = vmatpush2.bf16.msra.mxu0 0
  %281 = vmatprep.subr.bf16.mxu0 0
  %282 = vmatpush2.bf16.msra.mxu0 0
  %283 = vmatprep.subr.bf16.mxu0 0
  %284 = vmatpush2.bf16.msra.mxu0 0
  %285 = vmatprep.mubr.bf16.mxu0 0
  %286 = vmatmul.mubr.bf16.gmra.mxu0 %v34
  %v287 = vpop.f32.mrf.mxu0
  %v288 = vadd.f32 %v80, %v287
  %v289 = vpop.f32.mrf.mxu0
  %v290 = vpop.f32.mrf.mxu0
  %v291 = vpop.f32.mrf.mxu0
  %292 = vdwg.mxu0
  %v293 = vld [vmem:[%s6] sm:$0x7]
  %v294 = vld [vmem:[#allocation2] sm:$0xff]
  %v295 = vld [vmem:[%s0] sm:$0xf]
  %v296 = vld [vmem:[%s2] sm:$0xff]
  %v297 = vld [vmem:[%s2 + $0x8] sm:$0xf]
  %v298 = vld [vmem:[%s2 + $0xc] sm:$0xff]
  %v299 = vld [vmem:[%s2 + $0x14] sm:$0xf]
  %v300 = vld [vmem:[%s2 + $0x18] sm:$0xff]
  %v301 = vld [vmem:[%s2 + $0x20] sm:$0xf]
  %v302 = vld [vmem:[%s2 + $0x24] sm:$0xff]
  %v303 = vld [vmem:[%s2 + $0x2c] sm:$0xf]
  %v304 = vld [vmem:[%s2 + $0x30] sm:$0xff]
  %v305 = vld [vmem:[%s2 + $0x38] sm:$0xf]
  %v306 = vld [vmem:[%s2 + $0x3c] sm:$0xff]
  %v307 = vld [vmem:[%s2 + $0x44] sm:$0xf]
  %v308 = vld [vmem:[%s2 + $0x48] sm:$0xff]
  %v309 = vld [vmem:[%s2 + $0x50] sm:$0xf]
  %v310 = vld [vmem:[%s2 + $0x54] sm:$0xff]
  %v311 = vld [vmem:[%s2 + $0x5c] sm:$0xf]
  %v312 = vld [vmem:[%s2 + $0x60] sm:$0xff]
  %v313 = vld [vmem:[%s2 + $0x68] sm:$0xf]
  %v314 = vld [vmem:[%s2 + $0x6c] sm:$0xff]
  %v315 = vld [vmem:[%s2 + $0x74] sm:$0xf]
  %v316 = vld [vmem:[%s2 + $0x78] sm:$0xff]
  %v317 = vld [vmem:[%s2 + $0x80] sm:$0xf]
  %v318 = vld [vmem:[%s2 + $0x84] sm:$0xff]
  %v319 = vld [vmem:[%s2 + $0x8c] sm:$0xf]
  %v320 = vld [vmem:[%s2 + $0x90] sm:$0xff]
  %v321 = vld [vmem:[%s2 + $0x98] sm:$0xf]
  %v322 = vld [vmem:[%s2 + $0x9c] sm:$0xff]
  %v323 = vld [vmem:[%s2 + $0xa4] sm:$0xf]
  %v324 = vld [vmem:[%s2 + $0xa8] sm:$0xff]
  %v325 = vld [vmem:[%s2 + $0xb0] sm:$0xf]
  %v326 = vld [vmem:[%s2 + $0xb4] sm:$0xff]
  %v327 = vld [vmem:[%s2 + $0xbc] sm:$0xf]
  %v360 = vunpack.c.l.b16 %v296
  %v361 = vunpack.c.h.b16 %v296
  %v362 = vunpack.c.l.b16 %v297
  %v363 = vunpack.c.l.b16 %v298
  %v364 = vunpack.c.h.b16 %v298
  %v365 = vunpack.c.l.b16 %v299
  %v366 = vunpack.c.l.b16 %v300
  %v367 = vunpack.c.h.b16 %v300
  %v368 = vunpack.c.l.b16 %v301
  %v369 = vunpack.c.l.b16 %v302
  %v370 = vunpack.c.h.b16 %v302
  %v371 = vunpack.c.l.b16 %v303
  %v372 = vunpack.c.l.b16 %v304
  %v373 = vunpack.c.h.b16 %v304
  %v374 = vunpack.c.l.b16 %v305
  %v375 = vunpack.c.l.b16 %v306
  %v376 = vunpack.c.h.b16 %v306
  %v377 = vunpack.c.l.b16 %v307
  %v378 = vunpack.c.l.b16 %v308
  %v379 = vunpack.c.h.b16 %v308
  %v380 = vunpack.c.l.b16 %v309
  %v381 = vunpack.c.l.b16 %v310
  %v382 = vunpack.c.h.b16 %v310
  %v383 = vunpack.c.l.b16 %v311
  %v384 = vunpack.c.l.b16 %v312
  %v385 = vunpack.c.h.b16 %v312
  %v386 = vunpack.c.l.b16 %v313
  %v387 = vunpack.c.l.b16 %v314
  %v388 = vunpack.c.h.b16 %v314
  %v389 = vunpack.c.l.b16 %v315
  %v390 = vunpack.c.l.b16 %v316
  %v391 = vunpack.c.h.b16 %v316
  %v392 = vunpack.c.l.b16 %v317
  %v393 = vunpack.c.l.b16 %v318
  %v394 = vunpack.c.h.b16 %v318
  %v395 = vunpack.c.l.b16 %v319
  %v396 = vunpack.c.l.b16 %v320
  %v397 = vunpack.c.h.b16 %v320
  %v398 = vunpack.c.l.b16 %v321
  %v399 = vunpack.c.l.b16 %v322
  %v400 = vunpack.c.h.b16 %v322
  %v401 = vunpack.c.l.b16 %v323
  %v402 = vunpack.c.l.b16 %v324
  %v403 = vunpack.c.h.b16 %v324
  %v404 = vunpack.c.l.b16 %v325
  %v405 = vunpack.c.l.b16 %v326
  %v406 = vunpack.c.h.b16 %v326
  %v407 = vunpack.c.l.b16 %v327
  %v408 = vpack.c.b16 %v363, %v360
  %v409 = vpack.c.b16 %v364, %v361
  %v410 = vpack.c.b16 %v365, %v362
  %v411 = vpack.c.b16 %v369, %v366
  %v412 = vpack.c.b16 %v370, %v367
  %v413 = vpack.c.b16 %v371, %v368
  %v414 = vpack.c.b16 %v375, %v372
  %v415 = vpack.c.b16 %v376, %v373
  %v416 = vpack.c.b16 %v377, %v374
  %v417 = vpack.c.b16 %v381, %v378
  %v418 = vpack.c.b16 %v382, %v379
  %v419 = vpack.c.b16 %v383, %v380
  %v420 = vpack.c.b16 %v387, %v384
  %v421 = vpack.c.b16 %v388, %v385
  %v422 = vpack.c.b16 %v389, %v386
  %v423 = vpack.c.b16 %v393, %v390
  %v424 = vpack.c.b16 %v394, %v391
  %v425 = vpack.c.b16 %v395, %v392
  %v426 = vpack.c.b16 %v399, %v396
  %v427 = vpack.c.b16 %v400, %v397
  %v428 = vpack.c.b16 %v401, %v398
  %v429 = vpack.c.b16 %v405, %v402
  %v430 = vpack.c.b16 %v406, %v403
  %v431 = vpack.c.b16 %v407, %v404
  %456 = vmatprep.subr.bf16.mxu0 %v430
  %457 = vmatpush1.bf16.msra.mxu0 %v429
  %458 = vmatprep.subr.bf16.mxu0 %v427
  %459 = vmatpush1.bf16.msra.mxu0 %v426
  %460 = vmatprep.subr.bf16.mxu0 %v424
  %461 = vmatpush1.bf16.msra.mxu0 %v423
  %462 = vmatprep.subr.bf16.mxu0 %v421
  %463 = vmatpush1.bf16.msra.mxu0 %v420
  %464 = vmatprep.subr.bf16.mxu0 %v418
  %465 = vmatpush1.bf16.msra.mxu0 %v417
  %466 = vmatprep.subr.bf16.mxu0 %v415
  %467 = vmatpush1.bf16.msra.mxu0 %v414
  %468 = vmatprep.subr.bf16.mxu0 %v412
  %469 = vmatpush1.bf16.msra.mxu0 %v411
  %470 = vmatprep.subr.bf16.mxu0 %v409
  %471 = vmatpush1.bf16.msra.mxu0 %v408
  %472 = vmatprep.subr.bf16.mxu0 0
  %473 = vmatpush2.bf16.msra.mxu0 0
  %474 = vmatprep.subr.bf16.mxu0 0
  %475 = vmatpush2.bf16.msra.mxu0 0
  %476 = vmatprep.subr.bf16.mxu0 0
  %477 = vmatpush2.bf16.msra.mxu0 0
  %478 = vmatprep.subr.bf16.mxu0 0
  %479 = vmatpush2.bf16.msra.mxu0 0
  %480 = vmatprep.subr.bf16.mxu0 0
  %481 = vmatpush2.bf16.msra.mxu0 0
  %482 = vmatprep.subr.bf16.mxu0 0
  %483 = vmatpush2.bf16.msra.mxu0 0
  %484 = vmatprep.subr.bf16.mxu0 0
  %485 = vmatpush2.bf16.msra.mxu0 0
  %486 = vmatprep.subr.bf16.mxu0 0
  %487 = vmatpush2.bf16.msra.mxu0 0
  %488 = vmatprep.mubr.bf16.mxu0 0
  %489 = vmatmul.mubr.bf16.gmra.mxu0 %v295
  %v490 = vpop.f32.mrf.mxu0
  %v491 = vadd.f32 %v247, %v490
  %v492 = vpop.f32.mrf.mxu0
  %v493 = vadd.f32 %v249, %v492
  %v494 = vpop.f32.mrf.mxu0
  %v495 = vpop.f32.mrf.mxu0
  %496 = vdwg.mxu0
  %497 = vmatprep.subr.bf16.mxu0 0
  %498 = vmatpush1.bf16.msra.mxu0 %v431
  %499 = vmatprep.subr.bf16.mxu0 0
  %500 = vmatpush1.bf16.msra.mxu0 %v428
  %501 = vmatprep.subr.bf16.mxu0 0
  %502 = vmatpush1.bf16.msra.mxu0 %v425
  %503 = vmatprep.subr.bf16.mxu0 0
  %504 = vmatpush1.bf16.msra.mxu0 %v422
  %505 = vmatprep.subr.bf16.mxu0 0
  %506 = vmatpush1.bf16.msra.mxu0 %v419
  %507 = vmatprep.subr.bf16.mxu0 0
  %508 = vmatpush1.bf16.msra.mxu0 %v416
  %509 = vmatprep.subr.bf16.mxu0 0
  %510 = vmatpush1.bf16.msra.mxu0 %v413
  %511 = vmatprep.subr.bf16.mxu0 0
  %512 = vmatpush1.bf16.msra.mxu0 %v410
  %513 = vmatprep.subr.bf16.mxu0 0
  %514 = vmatpush2.bf16.msra.mxu0 0
  %515 = vmatprep.subr.bf16.mxu0 0
  %516 = vmatpush2.bf16.msra.mxu0 0
  %517 = vmatprep.subr.bf16.mxu0 0
  %518 = vmatpush2.bf16.msra.mxu0 0
  %519 = vmatprep.subr.bf16.mxu0 0
  %520 = vmatpush2.bf16.msra.mxu0 0
  %521 = vmatprep.subr.bf16.mxu0 0
  %522 = vmatpush2.bf16.msra.mxu0 0
  %523 = vmatprep.subr.bf16.mxu0 0
  %524 = vmatpush2.bf16.msra.mxu0 0
  %525 = vmatprep.subr.bf16.mxu0 0
  %526 = vmatpush2.bf16.msra.mxu0 0
  %527 = vmatprep.subr.bf16.mxu0 0
  %528 = vmatpush2.bf16.msra.mxu0 0
  %529 = vmatprep.mubr.bf16.mxu0 0
  %530 = vmatmul.mubr.bf16.gmra.mxu0 %v295
  %v531 = vpop.f32.mrf.mxu0
  %v532 = vadd.f32 %v288, %v531
  %v533 = vpop.f32.mrf.mxu0
  %v534 = vpop.f32.mrf.mxu0
  %v535 = vpop.f32.mrf.mxu0
  %536 = vdwg.mxu0
  %v537 = vpack.c.bf16 %v294, %v294
  %v538 = vld [vmem:[%s5] sm:$0xff]
  %v539 = vld [vmem:[%s5 + $0x8] sm:$0xf]
  %v540 = vld [vmem:[%s5 + $0xc] sm:$0xff]
  %v541 = vld [vmem:[%s5 + $0x14] sm:$0xf]
  %v542 = vld [vmem:[%s5 + $0x18] sm:$0xff]
  %v543 = vld [vmem:[%s5 + $0x20] sm:$0xf]
  %v544 = vld [vmem:[%s5 + $0x24] sm:$0xff]
  %v545 = vld [vmem:[%s5 + $0x2c] sm:$0xf]
  %v546 = vld [vmem:[%s5 + $0x30] sm:$0xff]
  %v547 = vld [vmem:[%s5 + $0x38] sm:$0xf]
  %v548 = vld [vmem:[%s5 + $0x3c] sm:$0xff]
  %v549 = vld [vmem:[%s5 + $0x44] sm:$0xf]
  %v550 = vld [vmem:[%s5 + $0x48] sm:$0xff]
  %v551 = vld [vmem:[%s5 + $0x50] sm:$0xf]
  %v552 = vld [vmem:[%s5 + $0x54] sm:$0xff]
  %v553 = vld [vmem:[%s5 + $0x5c] sm:$0xf]
  %v554 = vld [vmem:[%s5 + $0x60] sm:$0xff]
  %v555 = vld [vmem:[%s5 + $0x68] sm:$0xf]
  %v556 = vld [vmem:[%s5 + $0x6c] sm:$0xff]
  %v557 = vld [vmem:[%s5 + $0x74] sm:$0xf]
  %v558 = vld [vmem:[%s5 + $0x78] sm:$0xff]
  %v559 = vld [vmem:[%s5 + $0x80] sm:$0xf]
  %v560 = vld [vmem:[%s5 + $0x84] sm:$0xff]
  %v561 = vld [vmem:[%s5 + $0x8c] sm:$0xf]
  %v562 = vld [vmem:[%s5 + $0x90] sm:$0xff]
  %v563 = vld [vmem:[%s5 + $0x98] sm:$0xf]
  %v564 = vld [vmem:[%s5 + $0x9c] sm:$0xff]
  %v565 = vld [vmem:[%s5 + $0xa4] sm:$0xf]
  %v566 = vld [vmem:[%s5 + $0xa8] sm:$0xff]
  %v567 = vld [vmem:[%s5 + $0xb0] sm:$0xf]
  %v568 = vld [vmem:[%s5 + $0xb4] sm:$0xff]
  %v569 = vld [vmem:[%s5 + $0xbc] sm:$0xf]
  %v571 = vlaneseq
  %v572 = vshrl.u32 %v571, 7
  %v573 = vsub.s32 0, %v572
  %v574 = vrot.slane %v293, %v573
  %v575 = vlaneseq
  %v576 = vshrl.u32 %v575, 7
  %v577 = vsub.s32 1, %v576
  %v578 = vrot.slane %v293, %v577
  %v579 = vlaneseq
  %v580 = vshrl.u32 %v579, 7
  %v581 = vsub.s32 2, %v580
  %v582 = vrot.slane %v293, %v581
  %v618 = vunpack.c.l.b16 %v538
  %v619 = vunpack.c.h.b16 %v538
  %v620 = vunpack.c.l.b16 %v539
  %v621 = vunpack.c.l.b16 %v540
  %v622 = vunpack.c.h.b16 %v540
  %v623 = vunpack.c.l.b16 %v541
  %v624 = vunpack.c.l.b16 %v542
  %v625 = vunpack.c.h.b16 %v542
  %v626 = vunpack.c.l.b16 %v543
  %v627 = vunpack.c.l.b16 %v544
  %v628 = vunpack.c.h.b16 %v544
  %v629 = vunpack.c.l.b16 %v545
  %v630 = vunpack.c.l.b16 %v546
  %v631 = vunpack.c.h.b16 %v546
  %v632 = vunpack.c.l.b16 %v547
  %v633 = vunpack.c.l.b16 %v548
  %v634 = vunpack.c.h.b16 %v548
  %v635 = vunpack.c.l.b16 %v549
  %v636 = vunpack.c.l.b16 %v550
  %v637 = vunpack.c.h.b16 %v550
  %v638 = vunpack.c.l.b16 %v551
  %v639 = vunpack.c.l.b16 %v552
  %v640 = vunpack.c.h.b16 %v552
  %v641 = vunpack.c.l.b16 %v553
  %v642 = vunpack.c.l.b16 %v554
  %v643 = vunpack.c.h.b16 %v554
  %v644 = vunpack.c.l.b16 %v555
  %v645 = vunpack.c.l.b16 %v556
  %v646 = vunpack.c.h.b16 %v556
  %v647 = vunpack.c.l.b16 %v557
  %v648 = vunpack.c.l.b16 %v558
  %v649 = vunpack.c.h.b16 %v558
  %v650 = vunpack.c.l.b16 %v559
  %v651 = vunpack.c.l.b16 %v560
  %v652 = vunpack.c.h.b16 %v560
  %v653 = vunpack.c.l.b16 %v561
  %v654 = vunpack.c.l.b16 %v562
  %v655 = vunpack.c.h.b16 %v562
  %v656 = vunpack.c.l.b16 %v563
  %v657 = vunpack.c.l.b16 %v564
  %v658 = vunpack.c.h.b16 %v564
  %v659 = vunpack.c.l.b16 %v565
  %v660 = vunpack.c.l.b16 %v566
  %v661 = vunpack.c.h.b16 %v566
  %v662 = vunpack.c.l.b16 %v567
  %v663 = vunpack.c.l.b16 %v568
  %v664 = vunpack.c.h.b16 %v568
  %v665 = vunpack.c.l.b16 %v569
  %v666 = vpack.c.b16 %v621, %v618
  %v667 = vpack.c.b16 %v622, %v619
  %v668 = vpack.c.b16 %v623, %v620
  %v669 = vpack.c.b16 %v627, %v624
  %v670 = vpack.c.b16 %v628, %v625
  %v671 = vpack.c.b16 %v629, %v626
  %v672 = vpack.c.b16 %v633, %v630
  %v673 = vpack.c.b16 %v634, %v631
  %v674 = vpack.c.b16 %v635, %v632
  %v675 = vpack.c.b16 %v639, %v636
  %v676 = vpack.c.b16 %v640, %v637
  %v677 = vpack.c.b16 %v641, %v638
  %v678 = vpack.c.b16 %v645, %v642
  %v679 = vpack.c.b16 %v646, %v643
  %v680 = vpack.c.b16 %v647, %v644
  %v681 = vpack.c.b16 %v651, %v648
  %v682 = vpack.c.b16 %v652, %v649
  %v683 = vpack.c.b16 %v653, %v650
  %v684 = vpack.c.b16 %v657, %v654
  %v685 = vpack.c.b16 %v658, %v655
  %v686 = vpack.c.b16 %v659, %v656
  %v687 = vpack.c.b16 %v663, %v660
  %v688 = vpack.c.b16 %v664, %v661
  %v689 = vpack.c.b16 %v665, %v662
  %714 = vmatprep.subr.bf16.mxu0 %v688
  %715 = vmatpush1.bf16.msra.mxu0 %v687
  %716 = vmatprep.subr.bf16.mxu0 %v685
  %717 = vmatpush1.bf16.msra.mxu0 %v684
  %718 = vmatprep.subr.bf16.mxu0 %v682
  %719 = vmatpush1.bf16.msra.mxu0 %v681
  %720 = vmatprep.subr.bf16.mxu0 %v679
  %721 = vmatpush1.bf16.msra.mxu0 %v678
  %722 = vmatprep.subr.bf16.mxu0 %v676
  %723 = vmatpush1.bf16.msra.mxu0 %v675
  %724 = vmatprep.subr.bf16.mxu0 %v673
  %725 = vmatpush1.bf16.msra.mxu0 %v672
  %726 = vmatprep.subr.bf16.mxu0 %v670
  %727 = vmatpush1.bf16.msra.mxu0 %v669
  %728 = vmatprep.subr.bf16.mxu0 %v667
  %729 = vmatpush1.bf16.msra.mxu0 %v666
  %730 = vmatprep.subr.bf16.mxu0 0
  %731 = vmatpush2.bf16.msra.mxu0 0
  %732 = vmatprep.subr.bf16.mxu0 0
  %733 = vmatpush2.bf16.msra.mxu0 0
  %734 = vmatprep.subr.bf16.mxu0 0
  %735 = vmatpush2.bf16.msra.mxu0 0
  %736 = vmatprep.subr.bf16.mxu0 0
  %737 = vmatpush2.bf16.msra.mxu0 0
  %738 = vmatprep.subr.bf16.mxu0 0
  %739 = vmatpush2.bf16.msra.mxu0 0
  %740 = vmatprep.subr.bf16.mxu0 0
  %741 = vmatpush2.bf16.msra.mxu0 0
  %742 = vmatprep.subr.bf16.mxu0 0
  %743 = vmatpush2.bf16.msra.mxu0 0
  %744 = vmatprep.subr.bf16.mxu0 0
  %745 = vmatpush2.bf16.msra.mxu0 0
  %746 = vmatprep.mubr.bf16.mxu0 0
  %747 = vmatmul.mubr.bf16.gmra.mxu0 %v537
  %v748 = vpop.f32.mrf.mxu0
  %v749 = vadd.f32 %v574, %v748
  %v750 = vpop.f32.mrf.mxu0
  %v751 = vadd.f32 %v578, %v750
  %v752 = vpop.f32.mrf.mxu0
  %v753 = vpop.f32.mrf.mxu0
  %754 = vdwg.mxu0
  %755 = vmatprep.subr.bf16.mxu0 0
  %756 = vmatpush1.bf16.msra.mxu0 %v689
  %757 = vmatprep.subr.bf16.mxu0 0
  %758 = vmatpush1.bf16.msra.mxu0 %v686
  %759 = vmatprep.subr.bf16.mxu0 0
  %760 = vmatpush1.bf16.msra.mxu0 %v683
  %761 = vmatprep.subr.bf16.mxu0 0
  %762 = vmatpush1.bf16.msra.mxu0 %v680
  %763 = vmatprep.subr.bf16.mxu0 0
  %764 = vmatpush1.bf16.msra.mxu0 %v677
  %765 = vmatprep.subr.bf16.mxu0 0
  %766 = vmatpush1.bf16.msra.mxu0 %v674
  %767 = vmatprep.subr.bf16.mxu0 0
  %768 = vmatpush1.bf16.msra.mxu0 %v671
  %769 = vmatprep.subr.bf16.mxu0 0
  %770 = vmatpush1.bf16.msra.mxu0 %v668
  %771 = vmatprep.subr.bf16.mxu0 0
  %772 = vmatpush2.bf16.msra.mxu0 0
  %773 = vmatprep.subr.bf16.mxu0 0
  %774 = vmatpush2.bf16.msra.mxu0 0
  %775 = vmatprep.subr.bf16.mxu0 0
  %776 = vmatpush2.bf16.msra.mxu0 0
  %777 = vmatprep.subr.bf16.mxu0 0
  %778 = vmatpush2.bf16.msra.mxu0 0
  %779 = vmatprep.subr.bf16.mxu0 0
  %780 = vmatpush2.bf16.msra.mxu0 0
  %781 = vmatprep.subr.bf16.mxu0 0
  %782 = vmatpush2.bf16.msra.mxu0 0
  %783 = vmatprep.subr.bf16.mxu0 0
  %784 = vmatpush2.bf16.msra.mxu0 0
  %785 = vmatprep.subr.bf16.mxu0 0
  %786 = vmatpush2.bf16.msra.mxu0 0
  %787 = vmatprep.mubr.bf16.mxu0 0
  %788 = vmatmul.mubr.bf16.gmra.mxu0 %v537
  %v789 = vpop.f32.mrf.mxu0
  %v790 = vadd.f32 %v582, %v789
  %v791 = vpop.f32.mrf.mxu0
  %v792 = vpop.f32.mrf.mxu0
  %v793 = vpop.f32.mrf.mxu0
  %794 = vdwg.mxu0
  %v795 = vadd.f32 %v491, %v749
  %v796 = vxor.u32 %v795, 2147483648
  %v797 = vmul.f32 %v796, 1.442695
  %v798 = vpow.pop %v797
  %v799 = vadd.f32 %v798, 1.0
  %v800 = vrcp.pop %v799
  %v801 = vmul.f32 1.0, %v800
  %v802 = vadd.f32 %v493, %v751
  %v803 = vxor.u32 %v802, 2147483648
  %v804 = vmul.f32 %v803, 1.442695
  %v805 = vpow.pop %v804
  %v806 = vadd.f32 %v805, 1.0
  %v807 = vrcp.pop %v806
  %v808 = vmul.f32 1.0, %v807
  %v809 = vmul.f32 %v801, %v790
  %v810 = vadd.f32 %v532, %v809
  %v811 = vtanh.pop %v810
  %v812 = vsub.f32 1.0, %v808
  %v813 = vmul.f32 %v812, %v811
  %v814 = vmul.f32 %v808, %v294
  %v815 = vadd.f32 %v813, %v814
  %v816 = vpack.c.bf16 %v815, %v815
  %817 = vst [vmem:[%s7] sm:$0xf] %v816
  %s818 = scalar_lea.vmem %s0, 4
  %v819 = vld [vmem:[%s818] sm:$0xf]
  %v820 = vld [vmem:[%s2] sm:$0xff]
  %v821 = vld [vmem:[%s2 + $0x8] sm:$0xf]
  %v822 = vld [vmem:[%s2 + $0xc] sm:$0xff]
  %v823 = vld [vmem:[%s2 + $0x14] sm:$0xf]
  %v824 = vld [vmem:[%s2 + $0x18] sm:$0xff]
  %v825 = vld [vmem:[%s2 + $0x20] sm:$0xf]
  %v826 = vld [vmem:[%s2 + $0x24] sm:$0xff]
  %v827 = vld [vmem:[%s2 + $0x2c] sm:$0xf]
  %v828 = vld [vmem:[%s2 + $0x30] sm:$0xff]
  %v829 = vld [vmem:[%s2 + $0x38] sm:$0xf]
  %v830 = vld [vmem:[%s2 + $0x3c] sm:$0xff]
  %v831 = vld [vmem:[%s2 + $0x44] sm:$0xf]
  %v832 = vld [vmem:[%s2 + $0x48] sm:$0xff]
  %v833 = vld [vmem:[%s2 + $0x50] sm:$0xf]
  %v834 = vld [vmem:[%s2 + $0x54] sm:$0xff]
  %v835 = vld [vmem:[%s2 + $0x5c] sm:$0xf]
  %v836 = vld [vmem:[%s2 + $0x60] sm:$0xff]
  %v837 = vld [vmem:[%s2 + $0x68] sm:$0xf]
  %v838 = vld [vmem:[%s2 + $0x6c] sm:$0xff]
  %v839 = vld [vmem:[%s2 + $0x74] sm:$0xf]
  %v840 = vld [vmem:[%s2 + $0x78] sm:$0xff]
  %v841 = vld [vmem:[%s2 + $0x80] sm:$0xf]
  %v842 = vld [vmem:[%s2 + $0x84] sm:$0xff]
  %v843 = vld [vmem:[%s2 + $0x8c] sm:$0xf]
  %v844 = vld [vmem:[%s2 + $0x90] sm:$0xff]
  %v845 = vld [vmem:[%s2 + $0x98] sm:$0xf]
  %v846 = vld [vmem:[%s2 + $0x9c] sm:$0xff]
  %v847 = vld [vmem:[%s2 + $0xa4] sm:$0xf]
  %v848 = vld [vmem:[%s2 + $0xa8] sm:$0xff]
  %v849 = vld [vmem:[%s2 + $0xb0] sm:$0xf]
  %v850 = vld [vmem:[%s2 + $0xb4] sm:$0xff]
  %v851 = vld [vmem:[%s2 + $0xbc] sm:$0xf]
  %v884 = vunpack.c.l.b16 %v820
  %v885 = vunpack.c.h.b16 %v820
  %v886 = vunpack.c.l.b16 %v821
  %v887 = vunpack.c.l.b16 %v822
  %v888 = vunpack.c.h.b16 %v822
  %v889 = vunpack.c.l.b16 %v823
  %v890 = vunpack.c.l.b16 %v824
  %v891 = vunpack.c.h.b16 %v824
  %v892 = vunpack.c.l.b16 %v825
  %v893 = vunpack.c.l.b16 %v826
  %v894 = vunpack.c.h.b16 %v826
  %v895 = vunpack.c.l.b16 %v827
  %v896 = vunpack.c.l.b16 %v828
  %v897 = vunpack.c.h.b16 %v828
  %v898 = vunpack.c.l.b16 %v829
  %v899 = vunpack.c.l.b16 %v830
  %v900 = vunpack.c.h.b16 %v830
  %v901 = vunpack.c.l.b16 %v831
  %v902 = vunpack.c.l.b16 %v832
  %v903 = vunpack.c.h.b16 %v832
  %v904 = vunpack.c.l.b16 %v833
  %v905 = vunpack.c.l.b16 %v834
  %v906 = vunpack.c.h.b16 %v834
  %v907 = vunpack.c.l.b16 %v835
  %v908 = vunpack.c.l.b16 %v836
  %v909 = vunpack.c.h.b16 %v836
  %v910 = vunpack.c.l.b16 %v837
  %v911 = vunpack.c.l.b16 %v838
  %v912 = vunpack.c.h.b16 %v838
  %v913 = vunpack.c.l.b16 %v839
  %v914 = vunpack.c.l.b16 %v840
  %v915 = vunpack.c.h.b16 %v840
  %v916 = vunpack.c.l.b16 %v841
  %v917 = vunpack.c.l.b16 %v842
  %v918 = vunpack.c.h.b16 %v842
  %v919 = vunpack.c.l.b16 %v843
  %v920 = vunpack.c.l.b16 %v844
  %v921 = vunpack.c.h.b16 %v844
  %v922 = vunpack.c.l.b16 %v845
  %v923 = vunpack.c.l.b16 %v846
  %v924 = vunpack.c.h.b16 %v846
  %v925 = vunpack.c.l.b16 %v847
  %v926 = vunpack.c.l.b16 %v848
  %v927 = vunpack.c.h.b16 %v848
  %v928 = vunpack.c.l.b16 %v849
  %v929 = vunpack.c.l.b16 %v850
  %v930 = vunpack.c.h.b16 %v850
  %v931 = vunpack.c.l.b16 %v851
  %v932 = vpack.c.b16 %v887, %v884
  %v933 = vpack.c.b16 %v888, %v885
  %v934 = vpack.c.b16 %v889, %v886
  %v935 = vpack.c.b16 %v893, %v890
  %v936 = vpack.c.b16 %v894, %v891
  %v937 = vpack.c.b16 %v895, %v892
  %v938 = vpack.c.b16 %v899, %v896
  %v939 = vpack.c.b16 %v900, %v897
  %v940 = vpack.c.b16 %v901, %v898
  %v941 = vpack.c.b16 %v905, %v902
  %v942 = vpack.c.b16 %v906, %v903
  %v943 = vpack.c.b16 %v907, %v904
  %v944 = vpack.c.b16 %v911, %v908
  %v945 = vpack.c.b16 %v912, %v909
  %v946 = vpack.c.b16 %v913, %v910
  %v947 = vpack.c.b16 %v917, %v914
  %v948 = vpack.c.b16 %v918, %v915
  %v949 = vpack.c.b16 %v919, %v916
  %v950 = vpack.c.b16 %v923, %v920
  %v951 = vpack.c.b16 %v924, %v921
  %v952 = vpack.c.b16 %v925, %v922
  %v953 = vpack.c.b16 %v929, %v926
  %v954 = vpack.c.b16 %v930, %v927
  %v955 = vpack.c.b16 %v931, %v928
  %980 = vmatprep.subr.bf16.mxu0 %v954
  %981 = vmatpush1.bf16.msra.mxu0 %v953
  %982 = vmatprep.subr.bf16.mxu0 %v951
  %983 = vmatpush1.bf16.msra.mxu0 %v950
  %984 = vmatprep.subr.bf16.mxu0 %v948
  %985 = vmatpush1.bf16.msra.mxu0 %v947
  %986 = vmatprep.subr.bf16.mxu0 %v945
  %987 = vmatpush1.bf16.msra.mxu0 %v944
  %988 = vmatprep.subr.bf16.mxu0 %v942
  %989 = vmatpush1.bf16.msra.mxu0 %v941
  %990 = vmatprep.subr.bf16.mxu0 %v939
  %991 = vmatpush1.bf16.msra.mxu0 %v938
  %992 = vmatprep.subr.bf16.mxu0 %v936
  %993 = vmatpush1.bf16.msra.mxu0 %v935
  %994 = vmatprep.subr.bf16.mxu0 %v933
  %995 = vmatpush1.bf16.msra.mxu0 %v932
  %996 = vmatprep.subr.bf16.mxu0 0
  %997 = vmatpush2.bf16.msra.mxu0 0
  %998 = vmatprep.subr.bf16.mxu0 0
  %999 = vmatpush2.bf16.msra.mxu0 0
  %1000 = vmatprep.subr.bf16.mxu0 0
  %1001 = vmatpush2.bf16.msra.mxu0 0
  %1002 = vmatprep.subr.bf16.mxu0 0
  %1003 = vmatpush2.bf16.msra.mxu0 0
  %1004 = vmatprep.subr.bf16.mxu0 0
  %1005 = vmatpush2.bf16.msra.mxu0 0
  %1006 = vmatprep.subr.bf16.mxu0 0
  %1007 = vmatpush2.bf16.msra.mxu0 0
  %1008 = vmatprep.subr.bf16.mxu0 0
  %1009 = vmatpush2.bf16.msra.mxu0 0
  %1010 = vmatprep.subr.bf16.mxu0 0
  %1011 = vmatpush2.bf16.msra.mxu0 0
  %1012 = vmatprep.mubr.bf16.mxu0 0
  %1013 = vmatmul.mubr.bf16.gmra.mxu0 %v819
  %v1014 = vpop.f32.mrf.mxu0
  %v1015 = vadd.f32 %v247, %v1014
  %v1016 = vpop.f32.mrf.mxu0
  %v1017 = vadd.f32 %v249, %v1016
  %v1018 = vpop.f32.mrf.mxu0
  %v1019 = vpop.f32.mrf.mxu0
  %1020 = vdwg.mxu0
  %1021 = vmatprep.subr.bf16.mxu0 0
  %1022 = vmatpush1.bf16.msra.mxu0 %v955
  %1023 = vmatprep.subr.bf16.mxu0 0
  %1024 = vmatpush1.bf16.msra.mxu0 %v952
  %1025 = vmatprep.subr.bf16.mxu0 0
  %1026 = vmatpush1.bf16.msra.mxu0 %v949
  %1027 = vmatprep.subr.bf16.mxu0 0
  %1028 = vmatpush1.bf16.msra.mxu0 %v946
  %1029 = vmatprep.subr.bf16.mxu0 0
  %1030 = vmatpush1.bf16.msra.mxu0 %v943
  %1031 = vmatprep.subr.bf16.mxu0 0
  %1032 = vmatpush1.bf16.msra.mxu0 %v940
  %1033 = vmatprep.subr.bf16.mxu0 0
  %1034 = vmatpush1.bf16.msra.mxu0 %v937
  %1035 = vmatprep.subr.bf16.mxu0 0
  %1036 = vmatpush1.bf16.msra.mxu0 %v934
  %1037 = vmatprep.subr.bf16.mxu0 0
  %1038 = vmatpush2.bf16.msra.mxu0 0
  %1039 = vmatprep.subr.bf16.mxu0 0
  %1040 = vmatpush2.bf16.msra.mxu0 0
  %1041 = vmatprep.subr.bf16.mxu0 0
  %1042 = vmatpush2.bf16.msra.mxu0 0
  %1043 = vmatprep.subr.bf16.mxu0 0
  %1044 = vmatpush2.bf16.msra.mxu0 0
  %1045 = vmatprep.subr.bf16.mxu0 0
  %1046 = vmatpush2.bf16.msra.mxu0 0
  %1047 = vmatprep.subr.bf16.mxu0 0
  %1048 = vmatpush2.bf16.msra.mxu0 0
  %1049 = vmatprep.subr.bf16.mxu0 0
  %1050 = vmatpush2.bf16.msra.mxu0 0
  %1051 = vmatprep.subr.bf16.mxu0 0
  %1052 = vmatpush2.bf16.msra.mxu0 0
  %1053 = vmatprep.mubr.bf16.mxu0 0
  %1054 = vmatmul.mubr.bf16.gmra.mxu0 %v819
  %v1055 = vpop.f32.mrf.mxu0
  %v1056 = vadd.f32 %v288, %v1055
  %v1057 = vpop.f32.mrf.mxu0
  %v1058 = vpop.f32.mrf.mxu0
  %v1059 = vpop.f32.mrf.mxu0
  %1060 = vdwg.mxu0
  %v1061 = vld [vmem:[%s5] sm:$0xff]
  %v1062 = vld [vmem:[%s5 + $0x8] sm:$0xf]
  %v1063 = vld [vmem:[%s5 + $0xc] sm:$0xff]
  %v1064 = vld [vmem:[%s5 + $0x14] sm:$0xf]
  %v1065 = vld [vmem:[%s5 + $0x18] sm:$0xff]
  %v1066 = vld [vmem:[%s5 + $0x20] sm:$0xf]
  %v1067 = vld [vmem:[%s5 + $0x24] sm:$0xff]
  %v1068 = vld [vmem:[%s5 + $0x2c] sm:$0xf]
  %v1069 = vld [vmem:[%s5 + $0x30] sm:$0xff]
  %v1070 = vld [vmem:[%s5 + $0x38] sm:$0xf]
  %v1071 = vld [vmem:[%s5 + $0x3c] sm:$0xff]
  %v1072 = vld [vmem:[%s5 + $0x44] sm:$0xf]
  %v1073 = vld [vmem:[%s5 + $0x48] sm:$0xff]
  %v1074 = vld [vmem:[%s5 + $0x50] sm:$0xf]
  %v1075 = vld [vmem:[%s5 + $0x54] sm:$0xff]
  %v1076 = vld [vmem:[%s5 + $0x5c] sm:$0xf]
  %v1077 = vld [vmem:[%s5 + $0x60] sm:$0xff]
  %v1078 = vld [vmem:[%s5 + $0x68] sm:$0xf]
  %v1079 = vld [vmem:[%s5 + $0x6c] sm:$0xff]
  %v1080 = vld [vmem:[%s5 + $0x74] sm:$0xf]
  %v1081 = vld [vmem:[%s5 + $0x78] sm:$0xff]
  %v1082 = vld [vmem:[%s5 + $0x80] sm:$0xf]
  %v1083 = vld [vmem:[%s5 + $0x84] sm:$0xff]
  %v1084 = vld [vmem:[%s5 + $0x8c] sm:$0xf]
  %v1085 = vld [vmem:[%s5 + $0x90] sm:$0xff]
  %v1086 = vld [vmem:[%s5 + $0x98] sm:$0xf]
  %v1087 = vld [vmem:[%s5 + $0x9c] sm:$0xff]
  %v1088 = vld [vmem:[%s5 + $0xa4] sm:$0xf]
  %v1089 = vld [vmem:[%s5 + $0xa8] sm:$0xff]
  %v1090 = vld [vmem:[%s5 + $0xb0] sm:$0xf]
  %v1091 = vld [vmem:[%s5 + $0xb4] sm:$0xff]
  %v1092 = vld [vmem:[%s5 + $0xbc] sm:$0xf]
  %v1125 = vunpack.c.l.b16 %v1061
  %v1126 = vunpack.c.h.b16 %v1061
  %v1127 = vunpack.c.l.b16 %v1062
  %v1128 = vunpack.c.l.b16 %v1063
  %v1129 = vunpack.c.h.b16 %v1063
  %v1130 = vunpack.c.l.b16 %v1064
  %v1131 = vunpack.c.l.b16 %v1065
  %v1132 = vunpack.c.h.b16 %v1065
  %v1133 = vunpack.c.l.b16 %v1066
  %v1134 = vunpack.c.l.b16 %v1067
  %v1135 = vunpack.c.h.b16 %v1067
  %v1136 = vunpack.c.l.b16 %v1068
  %v1137 = vunpack.c.l.b16 %v1069
  %v1138 = vunpack.c.h.b16 %v1069
  %v1139 = vunpack.c.l.b16 %v1070
  %v1140 = vunpack.c.l.b16 %v1071
  %v1141 = vunpack.c.h.b16 %v1071
  %v1142 = vunpack.c.l.b16 %v1072
  %v1143 = vunpack.c.l.b16 %v1073
  %v1144 = vunpack.c.h.b16 %v1073
  %v1145 = vunpack.c.l.b16 %v1074
  %v1146 = vunpack.c.l.b16 %v1075
  %v1147 = vunpack.c.h.b16 %v1075
  %v1148 = vunpack.c.l.b16 %v1076
  %v1149 = vunpack.c.l.b16 %v1077
  %v1150 = vunpack.c.h.b16 %v1077
  %v1151 = vunpack.c.l.b16 %v1078
  %v1152 = vunpack.c.l.b16 %v1079
  %v1153 = vunpack.c.h.b16 %v1079
  %v1154 = vunpack.c.l.b16 %v1080
  %v1155 = vunpack.c.l.b16 %v1081
  %v1156 = vunpack.c.h.b16 %v1081
  %v1157 = vunpack.c.l.b16 %v1082
  %v1158 = vunpack.c.l.b16 %v1083
  %v1159 = vunpack.c.h.b16 %v1083
  %v1160 = vunpack.c.l.b16 %v1084
  %v1161 = vunpack.c.l.b16 %v1085
  %v1162 = vunpack.c.h.b16 %v1085
  %v1163 = vunpack.c.l.b16 %v1086
  %v1164 = vunpack.c.l.b16 %v1087
  %v1165 = vunpack.c.h.b16 %v1087
  %v1166 = vunpack.c.l.b16 %v1088
  %v1167 = vunpack.c.l.b16 %v1089
  %v1168 = vunpack.c.h.b16 %v1089
  %v1169 = vunpack.c.l.b16 %v1090
  %v1170 = vunpack.c.l.b16 %v1091
  %v1171 = vunpack.c.h.b16 %v1091
  %v1172 = vunpack.c.l.b16 %v1092
  %v1173 = vpack.c.b16 %v1128, %v1125
  %v1174 = vpack.c.b16 %v1129, %v1126
  %v1175 = vpack.c.b16 %v1130, %v1127
  %v1176 = vpack.c.b16 %v1134, %v1131
  %v1177 = vpack.c.b16 %v1135, %v1132
  %v1178 = vpack.c.b16 %v1136, %v1133
  %v1179 = vpack.c.b16 %v1140, %v1137
  %v1180 = vpack.c.b16 %v1141, %v1138
  %v1181 = vpack.c.b16 %v1142, %v1139
  %v1182 = vpack.c.b16 %v1146, %v1143
  %v1183 = vpack.c.b16 %v1147, %v1144
  %v1184 = vpack.c.b16 %v1148, %v1145
  %v1185 = vpack.c.b16 %v1152, %v1149
  %v1186 = vpack.c.b16 %v1153, %v1150
  %v1187 = vpack.c.b16 %v1154, %v1151
  %v1188 = vpack.c.b16 %v1158, %v1155
  %v1189 = vpack.c.b16 %v1159, %v1156
  %v1190 = vpack.c.b16 %v1160, %v1157
  %v1191 = vpack.c.b16 %v1164, %v1161
  %v1192 = vpack.c.b16 %v1165, %v1162
  %v1193 = vpack.c.b16 %v1166, %v1163
  %v1194 = vpack.c.b16 %v1170, %v1167
  %v1195 = vpack.c.b16 %v1171, %v1168
  %v1196 = vpack.c.b16 %v1172, %v1169
  %1221 = vmatprep.subr.bf16.mxu0 %v1195
  %1222 = vmatpush1.bf16.msra.mxu0 %v1194
  %1223 = vmatprep.subr.bf16.mxu0 %v1192
  %1224 = vmatpush1.bf16.msra.mxu0 %v1191
  %1225 = vmatprep.subr.bf16.mxu0 %v1189
  %1226 = vmatpush1.bf16.msra.mxu0 %v1188
  %1227 = vmatprep.subr.bf16.mxu0 %v1186
  %1228 = vmatpush1.bf16.msra.mxu0 %v1185
  %1229 = vmatprep.subr.bf16.mxu0 %v1183
  %1230 = vmatpush1.bf16.msra.mxu0 %v1182
  %1231 = vmatprep.subr.bf16.mxu0 %v1180
  %1232 = vmatpush1.bf16.msra.mxu0 %v1179
  %1233 = vmatprep.subr.bf16.mxu0 %v1177
  %1234 = vmatpush1.bf16.msra.mxu0 %v1176
  %1235 = vmatprep.subr.bf16.mxu0 %v1174
  %1236 = vmatpush1.bf16.msra.mxu0 %v1173
  %1237 = vmatprep.subr.bf16.mxu0 0
  %1238 = vmatpush2.bf16.msra.mxu0 0
  %1239 = vmatprep.subr.bf16.mxu0 0
  %1240 = vmatpush2.bf16.msra.mxu0 0
  %1241 = vmatprep.subr.bf16.mxu0 0
  %1242 = vmatpush2.bf16.msra.mxu0 0
  %1243 = vmatprep.subr.bf16.mxu0 0
  %1244 = vmatpush2.bf16.msra.mxu0 0
  %1245 = vmatprep.subr.bf16.mxu0 0
  %1246 = vmatpush2.bf16.msra.mxu0 0
  %1247 = vmatprep.subr.bf16.mxu0 0
  %1248 = vmatpush2.bf16.msra.mxu0 0
  %1249 = vmatprep.subr.bf16.mxu0 0
  %1250 = vmatpush2.bf16.msra.mxu0 0
  %1251 = vmatprep.subr.bf16.mxu0 0
  %1252 = vmatpush2.bf16.msra.mxu0 0
  %1253 = vmatprep.mubr.bf16.mxu0 0
  %1254 = vmatmul.mubr.bf16.gmra.mxu0 %v816
  %v1255 = vpop.f32.mrf.mxu0
  %v1256 = vadd.f32 %v574, %v1255
  %v1257 = vpop.f32.mrf.mxu0
  %v1258 = vadd.f32 %v578, %v1257
  %v1259 = vpop.f32.mrf.mxu0
  %v1260 = vpop.f32.mrf.mxu0
  %1261 = vdwg.mxu0
  %1262 = vmatprep.subr.bf16.mxu0 0
  %1263 = vmatpush1.bf16.msra.mxu0 %v1196
  %1264 = vmatprep.subr.bf16.mxu0 0
  %1265 = vmatpush1.bf16.msra.mxu0 %v1193
  %1266 = vmatprep.subr.bf16.mxu0 0
  %1267 = vmatpush1.bf16.msra.mxu0 %v1190
  %1268 = vmatprep.subr.bf16.mxu0 0
  %1269 = vmatpush1.bf16.msra.mxu0 %v1187
  %1270 = vmatprep.subr.bf16.mxu0 0
  %1271 = vmatpush1.bf16.msra.mxu0 %v1184
  %1272 = vmatprep.subr.bf16.mxu0 0
  %1273 = vmatpush1.bf16.msra.mxu0 %v1181
  %1274 = vmatprep.subr.bf16.mxu0 0
  %1275 = vmatpush1.bf16.msra.mxu0 %v1178
  %1276 = vmatprep.subr.bf16.mxu0 0
  %1277 = vmatpush1.bf16.msra.mxu0 %v1175
  %1278 = vmatprep.subr.bf16.mxu0 0
  %1279 = vmatpush2.bf16.msra.mxu0 0
  %1280 = vmatprep.subr.bf16.mxu0 0
  %1281 = vmatpush2.bf16.msra.mxu0 0
  %1282 = vmatprep.subr.bf16.mxu0 0
  %1283 = vmatpush2.bf16.msra.mxu0 0
  %1284 = vmatprep.subr.bf16.mxu0 0
  %1285 = vmatpush2.bf16.msra.mxu0 0
  %1286 = vmatprep.subr.bf16.mxu0 0
  %1287 = vmatpush2.bf16.msra.mxu0 0
  %1288 = vmatprep.subr.bf16.mxu0 0
  %1289 = vmatpush2.bf16.msra.mxu0 0
  %1290 = vmatprep.subr.bf16.mxu0 0
  %1291 = vmatpush2.bf16.msra.mxu0 0
  %1292 = vmatprep.subr.bf16.mxu0 0
  %1293 = vmatpush2.bf16.msra.mxu0 0
  %1294 = vmatprep.mubr.bf16.mxu0 0
  %1295 = vmatmul.mubr.bf16.gmra.mxu0 %v816
  %v1296 = vpop.f32.mrf.mxu0
  %v1297 = vadd.f32 %v582, %v1296
  %v1298 = vpop.f32.mrf.mxu0
  %v1299 = vpop.f32.mrf.mxu0
  %v1300 = vpop.f32.mrf.mxu0
  %1301 = vdwg.mxu0
  %v1302 = vadd.f32 %v1015, %v1256
  %v1303 = vxor.u32 %v1302, 2147483648
  %v1304 = vmul.f32 %v1303, 1.442695
  %v1305 = vpow.pop %v1304
  %v1306 = vadd.f32 %v1305, 1.0
  %v1307 = vrcp.pop %v1306
  %v1308 = vmul.f32 1.0, %v1307
  %v1309 = vadd.f32 %v1017, %v1258
  %v1310 = vxor.u32 %v1309, 2147483648
  %v1311 = vmul.f32 %v1310, 1.442695
  %v1312 = vpow.pop %v1311
  %v1313 = vadd.f32 %v1312, 1.0
  %v1314 = vrcp.pop %v1313
  %v1315 = vmul.f32 1.0, %v1314
  %v1316 = vmul.f32 %v1308, %v1297
  %v1317 = vadd.f32 %v1056, %v1316
  %v1318 = vtanh.pop %v1317
  %v1319 = vsub.f32 1.0, %v1315
  %v1320 = vmul.f32 %v1319, %v1318
  %v1321 = vmul.f32 %v1315, %v815
  %v1322 = vadd.f32 %v1320, %v1321
  %v1323 = vpack.c.bf16 %v1322, %v1322
  %s1324 = scalar_lea.vmem %s7, 4
  %1325 = vst [vmem:[%s1324] sm:$0xf] %v1323
  %s1326 = scalar_lea.vmem %s0, 8
  %v1327 = vld [vmem:[%s1326] sm:$0xf]
  %v1328 = vld [vmem:[%s2] sm:$0xff]
  %v1329 = vld [vmem:[%s2 + $0x8] sm:$0xf]
  %v1330 = vld [vmem:[%s2 + $0xc] sm:$0xff]
  %v1331 = vld [vmem:[%s2 + $0x14] sm:$0xf]
  %v1332 = vld [vmem:[%s2 + $0x18] sm:$0xff]
  %v1333 = vld [vmem:[%s2 + $0x20] sm:$0xf]
  %v1334 = vld [vmem:[%s2 + $0x24] sm:$0xff]
  %v1335 = vld [vmem:[%s2 + $0x2c] sm:$0xf]
  %v1336 = vld [vmem:[%s2 + $0x30] sm:$0xff]
  %v1337 = vld [vmem:[%s2 + $0x38] sm:$0xf]
  %v1338 = vld [vmem:[%s2 + $0x3c] sm:$0xff]
  %v1339 = vld [vmem:[%s2 + $0x44] sm:$0xf]
  %v1340 = vld [vmem:[%s2 + $0x48] sm:$0xff]
  %v1341 = vld [vmem:[%s2 + $0x50] sm:$0xf]
  %v1342 = vld [vmem:[%s2 + $0x54] sm:$0xff]
  %v1343 = vld [vmem:[%s2 + $0x5c] sm:$0xf]
  %v1344 = vld [vmem:[%s2 + $0x60] sm:$0xff]
  %v1345 = vld [vmem:[%s2 + $0x68] sm:$0xf]
  %v1346 = vld [vmem:[%s2 + $0x6c] sm:$0xff]
  %v1347 = vld [vmem:[%s2 + $0x74] sm:$0xf]
  %v1348 = vld [vmem:[%s2 + $0x78] sm:$0xff]
  %v1349 = vld [vmem:[%s2 + $0x80] sm:$0xf]
  %v1350 = vld [vmem:[%s2 + $0x84] sm:$0xff]
  %v1351 = vld [vmem:[%s2 + $0x8c] sm:$0xf]
  %v1352 = vld [vmem:[%s2 + $0x90] sm:$0xff]
  %v1353 = vld [vmem:[%s2 + $0x98] sm:$0xf]
  %v1354 = vld [vmem:[%s2 + $0x9c] sm:$0xff]
  %v1355 = vld [vmem:[%s2 + $0xa4] sm:$0xf]
  %v1356 = vld [vmem:[%s2 + $0xa8] sm:$0xff]
  %v1357 = vld [vmem:[%s2 + $0xb0] sm:$0xf]
  %v1358 = vld [vmem:[%s2 + $0xb4] sm:$0xff]
  %v1359 = vld [vmem:[%s2 + $0xbc] sm:$0xf]
  %v1392 = vunpack.c.l.b16 %v1328
  %v1393 = vunpack.c.h.b16 %v1328
  %v1394 = vunpack.c.l.b16 %v1329
  %v1395 = vunpack.c.l.b16 %v1330
  %v1396 = vunpack.c.h.b16 %v1330
  %v1397 = vunpack.c.l.b16 %v1331
  %v1398 = vunpack.c.l.b16 %v1332
  %v1399 = vunpack.c.h.b16 %v1332
  %v1400 = vunpack.c.l.b16 %v1333
  %v1401 = vunpack.c.l.b16 %v1334
  %v1402 = vunpack.c.h.b16 %v1334
  %v1403 = vunpack.c.l.b16 %v1335
  %v1404 = vunpack.c.l.b16 %v1336
  %v1405 = vunpack.c.h.b16 %v1336
  %v1406 = vunpack.c.l.b16 %v1337
  %v1407 = vunpack.c.l.b16 %v1338
  %v1408 = vunpack.c.h.b16 %v1338
  %v1409 = vunpack.c.l.b16 %v1339
  %v1410 = vunpack.c.l.b16 %v1340
  %v1411 = vunpack.c.h.b16 %v1340
  %v1412 = vunpack.c.l.b16 %v1341
  %v1413 = vunpack.c.l.b16 %v1342
  %v1414 = vunpack.c.h.b16 %v1342
  %v1415 = vunpack.c.l.b16 %v1343
  %v1416 = vunpack.c.l.b16 %v1344
  %v1417 = vunpack.c.h.b16 %v1344
  %v1418 = vunpack.c.l.b16 %v1345
  %v1419 = vunpack.c.l.b16 %v1346
  %v1420 = vunpack.c.h.b16 %v1346
  %v1421 = vunpack.c.l.b16 %v1347
  %v1422 = vunpack.c.l.b16 %v1348
  %v1423 = vunpack.c.h.b16 %v1348
  %v1424 = vunpack.c.l.b16 %v1349
  %v1425 = vunpack.c.l.b16 %v1350
  %v1426 = vunpack.c.h.b16 %v1350
  %v1427 = vunpack.c.l.b16 %v1351
  %v1428 = vunpack.c.l.b16 %v1352
  %v1429 = vunpack.c.h.b16 %v1352
  %v1430 = vunpack.c.l.b16 %v1353
  %v1431 = vunpack.c.l.b16 %v1354
  %v1432 = vunpack.c.h.b16 %v1354
  %v1433 = vunpack.c.l.b16 %v1355
  %v1434 = vunpack.c.l.b16 %v1356
  %v1435 = vunpack.c.h.b16 %v1356
  %v1436 = vunpack.c.l.b16 %v1357
  %v1437 = vunpack.c.l.b16 %v1358
  %v1438 = vunpack.c.h.b16 %v1358
  %v1439 = vunpack.c.l.b16 %v1359
  %v1440 = vpack.c.b16 %v1395, %v1392
  %v1441 = vpack.c.b16 %v1396, %v1393
  %v1442 = vpack.c.b16 %v1397, %v1394
  %v1443 = vpack.c.b16 %v1401, %v1398
  %v1444 = vpack.c.b16 %v1402, %v1399
  %v1445 = vpack.c.b16 %v1403, %v1400
  %v1446 = vpack.c.b16 %v1407, %v1404
  %v1447 = vpack.c.b16 %v1408, %v1405
  %v1448 = vpack.c.b16 %v1409, %v1406
  %v1449 = vpack.c.b16 %v1413, %v1410
  %v1450 = vpack.c.b16 %v1414, %v1411
  %v1451 = vpack.c.b16 %v1415, %v1412
  %v1452 = vpack.c.b16 %v1419, %v1416
  %v1453 = vpack.c.b16 %v1420, %v1417
  %v1454 = vpack.c.b16 %v1421, %v1418
  %v1455 = vpack.c.b16 %v1425, %v1422
  %v1456 = vpack.c.b16 %v1426, %v1423
  %v1457 = vpack.c.b16 %v1427, %v1424
  %v1458 = vpack.c.b16 %v1431, %v1428
  %v1459 = vpack.c.b16 %v1432, %v1429
  %v1460 = vpack.c.b16 %v1433, %v1430
  %v1461 = vpack.c.b16 %v1437, %v1434
  %v1462 = vpack.c.b16 %v1438, %v1435
  %v1463 = vpack.c.b16 %v1439, %v1436
  %1488 = vmatprep.subr.bf16.mxu0 %v1462
  %1489 = vmatpush1.bf16.msra.mxu0 %v1461
  %1490 = vmatprep.subr.bf16.mxu0 %v1459
  %1491 = vmatpush1.bf16.msra.mxu0 %v1458
  %1492 = vmatprep.subr.bf16.mxu0 %v1456
  %1493 = vmatpush1.bf16.msra.mxu0 %v1455
  %1494 = vmatprep.subr.bf16.mxu0 %v1453
  %1495 = vmatpush1.bf16.msra.mxu0 %v1452
  %1496 = vmatprep.subr.bf16.mxu0 %v1450
  %1497 = vmatpush1.bf16.msra.mxu0 %v1449
  %1498 = vmatprep.subr.bf16.mxu0 %v1447
  %1499 = vmatpush1.bf16.msra.mxu0 %v1446
  %1500 = vmatprep.subr.bf16.mxu0 %v1444
  %1501 = vmatpush1.bf16.msra.mxu0 %v1443
  %1502 = vmatprep.subr.bf16.mxu0 %v1441
  %1503 = vmatpush1.bf16.msra.mxu0 %v1440
  %1504 = vmatprep.subr.bf16.mxu0 0
  %1505 = vmatpush2.bf16.msra.mxu0 0
  %1506 = vmatprep.subr.bf16.mxu0 0
  %1507 = vmatpush2.bf16.msra.mxu0 0
  %1508 = vmatprep.subr.bf16.mxu0 0
  %1509 = vmatpush2.bf16.msra.mxu0 0
  %1510 = vmatprep.subr.bf16.mxu0 0
  %1511 = vmatpush2.bf16.msra.mxu0 0
  %1512 = vmatprep.subr.bf16.mxu0 0
  %1513 = vmatpush2.bf16.msra.mxu0 0
  %1514 = vmatprep.subr.bf16.mxu0 0
  %1515 = vmatpush2.bf16.msra.mxu0 0
  %1516 = vmatprep.subr.bf16.mxu0 0
  %1517 = vmatpush2.bf16.msra.mxu0 0
  %1518 = vmatprep.subr.bf16.mxu0 0
  %1519 = vmatpush2.bf16.msra.mxu0 0
  %1520 = vmatprep.mubr.bf16.mxu0 0
  %1521 = vmatmul.mubr.bf16.gmra.mxu0 %v1327
  %v1522 = vpop.f32.mrf.mxu0
  %v1523 = vadd.f32 %v247, %v1522
  %v1524 = vpop.f32.mrf.mxu0
  %v1525 = vadd.f32 %v249, %v1524
  %v1526 = vpop.f32.mrf.mxu0
  %v1527 = vpop.f32.mrf.mxu0
  %1528 = vdwg.mxu0
  %1529 = vmatprep.subr.bf16.mxu0 0
  %1530 = vmatpush1.bf16.msra.mxu0 %v1463
  %1531 = vmatprep.subr.bf16.mxu0 0
  %1532 = vmatpush1.bf16.msra.mxu0 %v1460
  %1533 = vmatprep.subr.bf16.mxu0 0
  %1534 = vmatpush1.bf16.msra.mxu0 %v1457
  %1535 = vmatprep.subr.bf16.mxu0 0
  %1536 = vmatpush1.bf16.msra.mxu0 %v1454
  %1537 = vmatprep.subr.bf16.mxu0 0
  %1538 = vmatpush1.bf16.msra.mxu0 %v1451
  %1539 = vmatprep.subr.bf16.mxu0 0
  %1540 = vmatpush1.bf16.msra.mxu0 %v1448
  %1541 = vmatprep.subr.bf16.mxu0 0
  %1542 = vmatpush1.bf16.msra.mxu0 %v1445
  %1543 = vmatprep.subr.bf16.mxu0 0
  %1544 = vmatpush1.bf16.msra.mxu0 %v1442
  %1545 = vmatprep.subr.bf16.mxu0 0
  %1546 = vmatpush2.bf16.msra.mxu0 0
  %1547 = vmatprep.subr.bf16.mxu0 0
  %1548 = vmatpush2.bf16.msra.mxu0 0
  %1549 = vmatprep.subr.bf16.mxu0 0
  %1550 = vmatpush2.bf16.msra.mxu0 0
  %1551 = vmatprep.subr.bf16.mxu0 0
  %1552 = vmatpush2.bf16.msra.mxu0 0
  %1553 = vmatprep.subr.bf16.mxu0 0
  %1554 = vmatpush2.bf16.msra.mxu0 0
  %1555 = vmatprep.subr.bf16.mxu0 0
  %1556 = vmatpush2.bf16.msra.mxu0 0
  %1557 = vmatprep.subr.bf16.mxu0 0
  %1558 = vmatpush2.bf16.msra.mxu0 0
  %1559 = vmatprep.subr.bf16.mxu0 0
  %1560 = vmatpush2.bf16.msra.mxu0 0
  %1561 = vmatprep.mubr.bf16.mxu0 0
  %1562 = vmatmul.mubr.bf16.gmra.mxu0 %v1327
  %v1563 = vpop.f32.mrf.mxu0
  %v1564 = vadd.f32 %v288, %v1563
  %v1565 = vpop.f32.mrf.mxu0
  %v1566 = vpop.f32.mrf.mxu0
  %v1567 = vpop.f32.mrf.mxu0
  %1568 = vdwg.mxu0
  %v1569 = vld [vmem:[%s5] sm:$0xff]
  %v1570 = vld [vmem:[%s5 + $0x8] sm:$0xf]
  %v1571 = vld [vmem:[%s5 + $0xc] sm:$0xff]
  %v1572 = vld [vmem:[%s5 + $0x14] sm:$0xf]
  %v1573 = vld [vmem:[%s5 + $0x18] sm:$0xff]
  %v1574 = vld [vmem:[%s5 + $0x20] sm:$0xf]
  %v1575 = vld [vmem:[%s5 + $0x24] sm:$0xff]
  %v1576 = vld [vmem:[%s5 + $0x2c] sm:$0xf]
  %v1577 = vld [vmem:[%s5 + $0x30] sm:$0xff]
  %v1578 = vld [vmem:[%s5 + $0x38] sm:$0xf]
  %v1579 = vld [vmem:[%s5 + $0x3c] sm:$0xff]
  %v1580 = vld [vmem:[%s5 + $0x44] sm:$0xf]
  %v1581 = vld [vmem:[%s5 + $0x48] sm:$0xff]
  %v1582 = vld [vmem:[%s5 + $0x50] sm:$0xf]
  %v1583 = vld [vmem:[%s5 + $0x54] sm:$0xff]
  %v1584 = vld [vmem:[%s5 + $0x5c] sm:$0xf]
  %v1585 = vld [vmem:[%s5 + $0x60] sm:$0xff]
  %v1586 = vld [vmem:[%s5 + $0x68] sm:$0xf]
  %v1587 = vld [vmem:[%s5 + $0x6c] sm:$0xff]
  %v1588 = vld [vmem:[%s5 + $0x74] sm:$0xf]
  %v1589 = vld [vmem:[%s5 + $0x78] sm:$0xff]
  %v1590 = vld [vmem:[%s5 + $0x80] sm:$0xf]
  %v1591 = vld [vmem:[%s5 + $0x84] sm:$0xff]
  %v1592 = vld [vmem:[%s5 + $0x8c] sm:$0xf]
  %v1593 = vld [vmem:[%s5 + $0x90] sm:$0xff]
  %v1594 = vld [vmem:[%s5 + $0x98] sm:$0xf]
  %v1595 = vld [vmem:[%s5 + $0x9c] sm:$0xff]
  %v1596 = vld [vmem:[%s5 + $0xa4] sm:$0xf]
  %v1597 = vld [vmem:[%s5 + $0xa8] sm:$0xff]
  %v1598 = vld [vmem:[%s5 + $0xb0] sm:$0xf]
  %v1599 = vld [vmem:[%s5 + $0xb4] sm:$0xff]
  %v1600 = vld [vmem:[%s5 + $0xbc] sm:$0xf]
  %v1633 = vunpack.c.l.b16 %v1569
  %v1634 = vunpack.c.h.b16 %v1569
  %v1635 = vunpack.c.l.b16 %v1570
  %v1636 = vunpack.c.l.b16 %v1571
  %v1637 = vunpack.c.h.b16 %v1571
  %v1638 = vunpack.c.l.b16 %v1572
  %v1639 = vunpack.c.l.b16 %v1573
  %v1640 = vunpack.c.h.b16 %v1573
  %v1641 = vunpack.c.l.b16 %v1574
  %v1642 = vunpack.c.l.b16 %v1575
  %v1643 = vunpack.c.h.b16 %v1575
  %v1644 = vunpack.c.l.b16 %v1576
  %v1645 = vunpack.c.l.b16 %v1577
  %v1646 = vunpack.c.h.b16 %v1577
  %v1647 = vunpack.c.l.b16 %v1578
  %v1648 = vunpack.c.l.b16 %v1579
  %v1649 = vunpack.c.h.b16 %v1579
  %v1650 = vunpack.c.l.b16 %v1580
  %v1651 = vunpack.c.l.b16 %v1581
  %v1652 = vunpack.c.h.b16 %v1581
  %v1653 = vunpack.c.l.b16 %v1582
  %v1654 = vunpack.c.l.b16 %v1583
  %v1655 = vunpack.c.h.b16 %v1583
  %v1656 = vunpack.c.l.b16 %v1584
  %v1657 = vunpack.c.l.b16 %v1585
  %v1658 = vunpack.c.h.b16 %v1585
  %v1659 = vunpack.c.l.b16 %v1586
  %v1660 = vunpack.c.l.b16 %v1587
  %v1661 = vunpack.c.h.b16 %v1587
  %v1662 = vunpack.c.l.b16 %v1588
  %v1663 = vunpack.c.l.b16 %v1589
  %v1664 = vunpack.c.h.b16 %v1589
  %v1665 = vunpack.c.l.b16 %v1590
  %v1666 = vunpack.c.l.b16 %v1591
  %v1667 = vunpack.c.h.b16 %v1591
  %v1668 = vunpack.c.l.b16 %v1592
  %v1669 = vunpack.c.l.b16 %v1593
  %v1670 = vunpack.c.h.b16 %v1593
  %v1671 = vunpack.c.l.b16 %v1594
  %v1672 = vunpack.c.l.b16 %v1595
  %v1673 = vunpack.c.h.b16 %v1595
  %v1674 = vunpack.c.l.b16 %v1596
  %v1675 = vunpack.c.l.b16 %v1597
  %v1676 = vunpack.c.h.b16 %v1597
  %v1677 = vunpack.c.l.b16 %v1598
  %v1678 = vunpack.c.l.b16 %v1599
  %v1679 = vunpack.c.h.b16 %v1599
  %v1680 = vunpack.c.l.b16 %v1600
  %v1681 = vpack.c.b16 %v1636, %v1633
  %v1682 = vpack.c.b16 %v1637, %v1634
  %v1683 = vpack.c.b16 %v1638, %v1635
  %v1684 = vpack.c.b16 %v1642, %v1639
  %v1685 = vpack.c.b16 %v1643, %v1640
  %v1686 = vpack.c.b16 %v1644, %v1641
  %v1687 = vpack.c.b16 %v1648, %v1645
  %v1688 = vpack.c.b16 %v1649, %v1646
  %v1689 = vpack.c.b16 %v1650, %v1647
  %v1690 = vpack.c.b16 %v1654, %v1651
  %v1691 = vpack.c.b16 %v1655, %v1652
  %v1692 = vpack.c.b16 %v1656, %v1653
  %v1693 = vpack.c.b16 %v1660, %v1657
  %v1694 = vpack.c.b16 %v1661, %v1658
  %v1695 = vpack.c.b16 %v1662, %v1659
  %v1696 = vpack.c.b16 %v1666, %v1663
  %v1697 = vpack.c.b16 %v1667, %v1664
  %v1698 = vpack.c.b16 %v1668, %v1665
  %v1699 = vpack.c.b16 %v1672, %v1669
  %v1700 = vpack.c.b16 %v1673, %v1670
  %v1701 = vpack.c.b16 %v1674, %v1671
  %v1702 = vpack.c.b16 %v1678, %v1675
  %v1703 = vpack.c.b16 %v1679, %v1676
  %v1704 = vpack.c.b16 %v1680, %v1677
  %1729 = vmatprep.subr.bf16.mxu0 %v1703
  %1730 = vmatpush1.bf16.msra.mxu0 %v1702
  %1731 = vmatprep.subr.bf16.mxu0 %v1700
  %1732 = vmatpush1.bf16.msra.mxu0 %v1699
  %1733 = vmatprep.subr.bf16.mxu0 %v1697
  %1734 = vmatpush1.bf16.msra.mxu0 %v1696
  %1735 = vmatprep.subr.bf16.mxu0 %v1694
  %1736 = vmatpush1.bf16.msra.mxu0 %v1693
  %1737 = vmatprep.subr.bf16.mxu0 %v1691
  %1738 = vmatpush1.bf16.msra.mxu0 %v1690
  %1739 = vmatprep.subr.bf16.mxu0 %v1688
  %1740 = vmatpush1.bf16.msra.mxu0 %v1687
  %1741 = vmatprep.subr.bf16.mxu0 %v1685
  %1742 = vmatpush1.bf16.msra.mxu0 %v1684
  %1743 = vmatprep.subr.bf16.mxu0 %v1682
  %1744 = vmatpush1.bf16.msra.mxu0 %v1681
  %1745 = vmatprep.subr.bf16.mxu0 0
  %1746 = vmatpush2.bf16.msra.mxu0 0
  %1747 = vmatprep.subr.bf16.mxu0 0
  %1748 = vmatpush2.bf16.msra.mxu0 0
  %1749 = vmatprep.subr.bf16.mxu0 0
  %1750 = vmatpush2.bf16.msra.mxu0 0
  %1751 = vmatprep.subr.bf16.mxu0 0
  %1752 = vmatpush2.bf16.msra.mxu0 0
  %1753 = vmatprep.subr.bf16.mxu0 0
  %1754 = vmatpush2.bf16.msra.mxu0 0
  %1755 = vmatprep.subr.bf16.mxu0 0
  %1756 = vmatpush2.bf16.msra.mxu0 0
  %1757 = vmatprep.subr.bf16.mxu0 0
  %1758 = vmatpush2.bf16.msra.mxu0 0
  %1759 = vmatprep.subr.bf16.mxu0 0
  %1760 = vmatpush2.bf16.msra.mxu0 0
  %1761 = vmatprep.mubr.bf16.mxu0 0
  %1762 = vmatmul.mubr.bf16.gmra.mxu0 %v1323
  %v1763 = vpop.f32.mrf.mxu0
  %v1764 = vadd.f32 %v574, %v1763
  %v1765 = vpop.f32.mrf.mxu0
  %v1766 = vadd.f32 %v578, %v1765
  %v1767 = vpop.f32.mrf.mxu0
  %v1768 = vpop.f32.mrf.mxu0
  %1769 = vdwg.mxu0
  %1770 = vmatprep.subr.bf16.mxu0 0
  %1771 = vmatpush1.bf16.msra.mxu0 %v1704
  %1772 = vmatprep.subr.bf16.mxu0 0
  %1773 = vmatpush1.bf16.msra.mxu0 %v1701
  %1774 = vmatprep.subr.bf16.mxu0 0
  %1775 = vmatpush1.bf16.msra.mxu0 %v1698
  %1776 = vmatprep.subr.bf16.mxu0 0
  %1777 = vmatpush1.bf16.msra.mxu0 %v1695
  %1778 = vmatprep.subr.bf16.mxu0 0
  %1779 = vmatpush1.bf16.msra.mxu0 %v1692
  %1780 = vmatprep.subr.bf16.mxu0 0
  %1781 = vmatpush1.bf16.msra.mxu0 %v1689
  %1782 = vmatprep.subr.bf16.mxu0 0
  %1783 = vmatpush1.bf16.msra.mxu0 %v1686
  %1784 = vmatprep.subr.bf16.mxu0 0
  %1785 = vmatpush1.bf16.msra.mxu0 %v1683
  %1786 = vmatprep.subr.bf16.mxu0 0
  %1787 = vmatpush2.bf16.msra.mxu0 0
  %1788 = vmatprep.subr.bf16.mxu0 0
  %1789 = vmatpush2.bf16.msra.mxu0 0
  %1790 = vmatprep.subr.bf16.mxu0 0
  %1791 = vmatpush2.bf16.msra.mxu0 0
  %1792 = vmatprep.subr.bf16.mxu0 0
  %1793 = vmatpush2.bf16.msra.mxu0 0
  %1794 = vmatprep.subr.bf16.mxu0 0
  %1795 = vmatpush2.bf16.msra.mxu0 0
  %1796 = vmatprep.subr.bf16.mxu0 0
  %1797 = vmatpush2.bf16.msra.mxu0 0
  %1798 = vmatprep.subr.bf16.mxu0 0
  %1799 = vmatpush2.bf16.msra.mxu0 0
  %1800 = vmatprep.subr.bf16.mxu0 0
  %1801 = vmatpush2.bf16.msra.mxu0 0
  %1802 = vmatprep.mubr.bf16.mxu0 0
  %1803 = vmatmul.mubr.bf16.gmra.mxu0 %v1323
  %v1804 = vpop.f32.mrf.mxu0
  %v1805 = vadd.f32 %v582, %v1804
  %v1806 = vpop.f32.mrf.mxu0
  %v1807 = vpop.f32.mrf.mxu0
  %v1808 = vpop.f32.mrf.mxu0
  %1809 = vdwg.mxu0
  %v1810 = vadd.f32 %v1523, %v1764
  %v1811 = vxor.u32 %v1810, 2147483648
  %v1812 = vmul.f32 %v1811, 1.442695
  %v1813 = vpow.pop %v1812
  %v1814 = vadd.f32 %v1813, 1.0
  %v1815 = vrcp.pop %v1814
  %v1816 = vmul.f32 1.0, %v1815
  %v1817 = vadd.f32 %v1525, %v1766
  %v1818 = vxor.u32 %v1817, 2147483648
  %v1819 = vmul.f32 %v1818, 1.442695
  %v1820 = vpow.pop %v1819
  %v1821 = vadd.f32 %v1820, 1.0
  %v1822 = vrcp.pop %v1821
  %v1823 = vmul.f32 1.0, %v1822
  %v1824 = vmul.f32 %v1816, %v1805
  %v1825 = vadd.f32 %v1564, %v1824
  %v1826 = vtanh.pop %v1825
  %v1827 = vsub.f32 1.0, %v1823
  %v1828 = vmul.f32 %v1827, %v1826
  %v1829 = vmul.f32 %v1823, %v1322
  %v1830 = vadd.f32 %v1828, %v1829
  %v1831 = vpack.c.bf16 %v1830, %v1830
  %s1832 = scalar_lea.vmem %s7, 8
  %1833 = vst [vmem:[%s1832] sm:$0xf] %v1831
  %s1834 = scalar_lea.vmem %s0, 12
  %v1835 = vld [vmem:[%s1834] sm:$0xf]
  %v1836 = vld [vmem:[%s2] sm:$0xff]
  %v1837 = vld [vmem:[%s2 + $0x8] sm:$0xf]
  %v1838 = vld [vmem:[%s2 + $0xc] sm:$0xff]
  %v1839 = vld [vmem:[%s2 + $0x14] sm:$0xf]
  %v1840 = vld [vmem:[%s2 + $0x18] sm:$0xff]
  %v1841 = vld [vmem:[%s2 + $0x20] sm:$0xf]
  %v1842 = vld [vmem:[%s2 + $0x24] sm:$0xff]
  %v1843 = vld [vmem:[%s2 + $0x2c] sm:$0xf]
  %v1844 = vld [vmem:[%s2 + $0x30] sm:$0xff]
  %v1845 = vld [vmem:[%s2 + $0x38] sm:$0xf]
  %v1846 = vld [vmem:[%s2 + $0x3c] sm:$0xff]
  %v1847 = vld [vmem:[%s2 + $0x44] sm:$0xf]
  %v1848 = vld [vmem:[%s2 + $0x48] sm:$0xff]
  %v1849 = vld [vmem:[%s2 + $0x50] sm:$0xf]
  %v1850 = vld [vmem:[%s2 + $0x54] sm:$0xff]
  %v1851 = vld [vmem:[%s2 + $0x5c] sm:$0xf]
  %v1852 = vld [vmem:[%s2 + $0x60] sm:$0xff]
  %v1853 = vld [vmem:[%s2 + $0x68] sm:$0xf]
  %v1854 = vld [vmem:[%s2 + $0x6c] sm:$0xff]
  %v1855 = vld [vmem:[%s2 + $0x74] sm:$0xf]
  %v1856 = vld [vmem:[%s2 + $0x78] sm:$0xff]
  %v1857 = vld [vmem:[%s2 + $0x80] sm:$0xf]
  %v1858 = vld [vmem:[%s2 + $0x84] sm:$0xff]
  %v1859 = vld [vmem:[%s2 + $0x8c] sm:$0xf]
  %v1860 = vld [vmem:[%s2 + $0x90] sm:$0xff]
  %v1861 = vld [vmem:[%s2 + $0x98] sm:$0xf]
  %v1862 = vld [vmem:[%s2 + $0x9c] sm:$0xff]
  %v1863 = vld [vmem:[%s2 + $0xa4] sm:$0xf]
  %v1864 = vld [vmem:[%s2 + $0xa8] sm:$0xff]
  %v1865 = vld [vmem:[%s2 + $0xb0] sm:$0xf]
  %v1866 = vld [vmem:[%s2 + $0xb4] sm:$0xff]
  %v1867 = vld [vmem:[%s2 + $0xbc] sm:$0xf]
  %v1900 = vunpack.c.l.b16 %v1836
  %v1901 = vunpack.c.h.b16 %v1836
  %v1902 = vunpack.c.l.b16 %v1837
  %v1903 = vunpack.c.l.b16 %v1838
  %v1904 = vunpack.c.h.b16 %v1838
  %v1905 = vunpack.c.l.b16 %v1839
  %v1906 = vunpack.c.l.b16 %v1840
  %v1907 = vunpack.c.h.b16 %v1840
  %v1908 = vunpack.c.l.b16 %v1841
  %v1909 = vunpack.c.l.b16 %v1842
  %v1910 = vunpack.c.h.b16 %v1842
  %v1911 = vunpack.c.l.b16 %v1843
  %v1912 = vunpack.c.l.b16 %v1844
  %v1913 = vunpack.c.h.b16 %v1844
  %v1914 = vunpack.c.l.b16 %v1845
  %v1915 = vunpack.c.l.b16 %v1846
  %v1916 = vunpack.c.h.b16 %v1846
  %v1917 = vunpack.c.l.b16 %v1847
  %v1918 = vunpack.c.l.b16 %v1848
  %v1919 = vunpack.c.h.b16 %v1848
  %v1920 = vunpack.c.l.b16 %v1849
  %v1921 = vunpack.c.l.b16 %v1850
  %v1922 = vunpack.c.h.b16 %v1850
  %v1923 = vunpack.c.l.b16 %v1851
  %v1924 = vunpack.c.l.b16 %v1852
  %v1925 = vunpack.c.h.b16 %v1852
  %v1926 = vunpack.c.l.b16 %v1853
  %v1927 = vunpack.c.l.b16 %v1854
  %v1928 = vunpack.c.h.b16 %v1854
  %v1929 = vunpack.c.l.b16 %v1855
  %v1930 = vunpack.c.l.b16 %v1856
  %v1931 = vunpack.c.h.b16 %v1856
  %v1932 = vunpack.c.l.b16 %v1857
  %v1933 = vunpack.c.l.b16 %v1858
  %v1934 = vunpack.c.h.b16 %v1858
  %v1935 = vunpack.c.l.b16 %v1859
  %v1936 = vunpack.c.l.b16 %v1860
  %v1937 = vunpack.c.h.b16 %v1860
  %v1938 = vunpack.c.l.b16 %v1861
  %v1939 = vunpack.c.l.b16 %v1862
  %v1940 = vunpack.c.h.b16 %v1862
  %v1941 = vunpack.c.l.b16 %v1863
  %v1942 = vunpack.c.l.b16 %v1864
  %v1943 = vunpack.c.h.b16 %v1864
  %v1944 = vunpack.c.l.b16 %v1865
  %v1945 = vunpack.c.l.b16 %v1866
  %v1946 = vunpack.c.h.b16 %v1866
  %v1947 = vunpack.c.l.b16 %v1867
  %v1948 = vpack.c.b16 %v1903, %v1900
  %v1949 = vpack.c.b16 %v1904, %v1901
  %v1950 = vpack.c.b16 %v1905, %v1902
  %v1951 = vpack.c.b16 %v1909, %v1906
  %v1952 = vpack.c.b16 %v1910, %v1907
  %v1953 = vpack.c.b16 %v1911, %v1908
  %v1954 = vpack.c.b16 %v1915, %v1912
  %v1955 = vpack.c.b16 %v1916, %v1913
  %v1956 = vpack.c.b16 %v1917, %v1914
  %v1957 = vpack.c.b16 %v1921, %v1918
  %v1958 = vpack.c.b16 %v1922, %v1919
  %v1959 = vpack.c.b16 %v1923, %v1920
  %v1960 = vpack.c.b16 %v1927, %v1924
  %v1961 = vpack.c.b16 %v1928, %v1925
  %v1962 = vpack.c.b16 %v1929, %v1926
  %v1963 = vpack.c.b16 %v1933, %v1930
  %v1964 = vpack.c.b16 %v1934, %v1931
  %v1965 = vpack.c.b16 %v1935, %v1932
  %v1966 = vpack.c.b16 %v1939, %v1936
  %v1967 = vpack.c.b16 %v1940, %v1937
  %v1968 = vpack.c.b16 %v1941, %v1938
  %v1969 = vpack.c.b16 %v1945, %v1942
  %v1970 = vpack.c.b16 %v1946, %v1943
  %v1971 = vpack.c.b16 %v1947, %v1944
  %1996 = vmatprep.subr.bf16.mxu0 %v1970
  %1997 = vmatpush1.bf16.msra.mxu0 %v1969
  %1998 = vmatprep.subr.bf16.mxu0 %v1967
  %1999 = vmatpush1.bf16.msra.mxu0 %v1966
  %2000 = vmatprep.subr.bf16.mxu0 %v1964
  %2001 = vmatpush1.bf16.msra.mxu0 %v1963
  %2002 = vmatprep.subr.bf16.mxu0 %v1961
  %2003 = vmatpush1.bf16.msra.mxu0 %v1960
  %2004 = vmatprep.subr.bf16.mxu0 %v1958
  %2005 = vmatpush1.bf16.msra.mxu0 %v1957
  %2006 = vmatprep.subr.bf16.mxu0 %v1955
  %2007 = vmatpush1.bf16.msra.mxu0 %v1954
  %2008 = vmatprep.subr.bf16.mxu0 %v1952
  %2009 = vmatpush1.bf16.msra.mxu0 %v1951
  %2010 = vmatprep.subr.bf16.mxu0 %v1949
  %2011 = vmatpush1.bf16.msra.mxu0 %v1948
  %2012 = vmatprep.subr.bf16.mxu0 0
  %2013 = vmatpush2.bf16.msra.mxu0 0
  %2014 = vmatprep.subr.bf16.mxu0 0
  %2015 = vmatpush2.bf16.msra.mxu0 0
  %2016 = vmatprep.subr.bf16.mxu0 0
  %2017 = vmatpush2.bf16.msra.mxu0 0
  %2018 = vmatprep.subr.bf16.mxu0 0
  %2019 = vmatpush2.bf16.msra.mxu0 0
  %2020 = vmatprep.subr.bf16.mxu0 0
  %2021 = vmatpush2.bf16.msra.mxu0 0
  %2022 = vmatprep.subr.bf16.mxu0 0
  %2023 = vmatpush2.bf16.msra.mxu0 0
  %2024 = vmatprep.subr.bf16.mxu0 0
  %2025 = vmatpush2.bf16.msra.mxu0 0
  %2026 = vmatprep.subr.bf16.mxu0 0
  %2027 = vmatpush2.bf16.msra.mxu0 0
  %2028 = vmatprep.mubr.bf16.mxu0 0
  %2029 = vmatmul.mubr.bf16.gmra.mxu0 %v1835
  %v2030 = vpop.f32.mrf.mxu0
  %v2031 = vadd.f32 %v247, %v2030
  %v2032 = vpop.f32.mrf.mxu0
  %v2033 = vadd.f32 %v249, %v2032
  %v2034 = vpop.f32.mrf.mxu0
  %v2035 = vpop.f32.mrf.mxu0
  %2036 = vdwg.mxu0
  %2037 = vmatprep.subr.bf16.mxu0 0
  %2038 = vmatpush1.bf16.msra.mxu0 %v1971
  %2039 = vmatprep.subr.bf16.mxu0 0
  %2040 = vmatpush1.bf16.msra.mxu0 %v1968
  %2041 = vmatprep.subr.bf16.mxu0 0
  %2042 = vmatpush1.bf16.msra.mxu0 %v1965
  %2043 = vmatprep.subr.bf16.mxu0 0
  %2044 = vmatpush1.bf16.msra.mxu0 %v1962
  %2045 = vmatprep.subr.bf16.mxu0 0
  %2046 = vmatpush1.bf16.msra.mxu0 %v1959
  %2047 = vmatprep.subr.bf16.mxu0 0
  %2048 = vmatpush1.bf16.msra.mxu0 %v1956
  %2049 = vmatprep.subr.bf16.mxu0 0
  %2050 = vmatpush1.bf16.msra.mxu0 %v1953
  %2051 = vmatprep.subr.bf16.mxu0 0
  %2052 = vmatpush1.bf16.msra.mxu0 %v1950
  %2053 = vmatprep.subr.bf16.mxu0 0
  %2054 = vmatpush2.bf16.msra.mxu0 0
  %2055 = vmatprep.subr.bf16.mxu0 0
  %2056 = vmatpush2.bf16.msra.mxu0 0
  %2057 = vmatprep.subr.bf16.mxu0 0
  %2058 = vmatpush2.bf16.msra.mxu0 0
  %2059 = vmatprep.subr.bf16.mxu0 0
  %2060 = vmatpush2.bf16.msra.mxu0 0
  %2061 = vmatprep.subr.bf16.mxu0 0
  %2062 = vmatpush2.bf16.msra.mxu0 0
  %2063 = vmatprep.subr.bf16.mxu0 0
  %2064 = vmatpush2.bf16.msra.mxu0 0
  %2065 = vmatprep.subr.bf16.mxu0 0
  %2066 = vmatpush2.bf16.msra.mxu0 0
  %2067 = vmatprep.subr.bf16.mxu0 0
  %2068 = vmatpush2.bf16.msra.mxu0 0
  %2069 = vmatprep.mubr.bf16.mxu0 0
  %2070 = vmatmul.mubr.bf16.gmra.mxu0 %v1835
  %v2071 = vpop.f32.mrf.mxu0
  %v2072 = vadd.f32 %v288, %v2071
  %v2073 = vpop.f32.mrf.mxu0
  %v2074 = vpop.f32.mrf.mxu0
  %v2075 = vpop.f32.mrf.mxu0
  %2076 = vdwg.mxu0
  %v2077 = vld [vmem:[%s5] sm:$0xff]
  %v2078 = vld [vmem:[%s5 + $0x8] sm:$0xf]
  %v2079 = vld [vmem:[%s5 + $0xc] sm:$0xff]
  %v2080 = vld [vmem:[%s5 + $0x14] sm:$0xf]
  %v2081 = vld [vmem:[%s5 + $0x18] sm:$0xff]
  %v2082 = vld [vmem:[%s5 + $0x20] sm:$0xf]
  %v2083 = vld [vmem:[%s5 + $0x24] sm:$0xff]
  %v2084 = vld [vmem:[%s5 + $0x2c] sm:$0xf]
  %v2085 = vld [vmem:[%s5 + $0x30] sm:$0xff]
  %v2086 = vld [vmem:[%s5 + $0x38] sm:$0xf]
  %v2087 = vld [vmem:[%s5 + $0x3c] sm:$0xff]
  %v2088 = vld [vmem:[%s5 + $0x44] sm:$0xf]
  %v2089 = vld [vmem:[%s5 + $0x48] sm:$0xff]
  %v2090 = vld [vmem:[%s5 + $0x50] sm:$0xf]
  %v2091 = vld [vmem:[%s5 + $0x54] sm:$0xff]
  %v2092 = vld [vmem:[%s5 + $0x5c] sm:$0xf]
  %v2093 = vld [vmem:[%s5 + $0x60] sm:$0xff]
  %v2094 = vld [vmem:[%s5 + $0x68] sm:$0xf]
  %v2095 = vld [vmem:[%s5 + $0x6c] sm:$0xff]
  %v2096 = vld [vmem:[%s5 + $0x74] sm:$0xf]
  %v2097 = vld [vmem:[%s5 + $0x78] sm:$0xff]
  %v2098 = vld [vmem:[%s5 + $0x80] sm:$0xf]
  %v2099 = vld [vmem:[%s5 + $0x84] sm:$0xff]
  %v2100 = vld [vmem:[%s5 + $0x8c] sm:$0xf]
  %v2101 = vld [vmem:[%s5 + $0x90] sm:$0xff]
  %v2102 = vld [vmem:[%s5 + $0x98] sm:$0xf]
  %v2103 = vld [vmem:[%s5 + $0x9c] sm:$0xff]
  %v2104 = vld [vmem:[%s5 + $0xa4] sm:$0xf]
  %v2105 = vld [vmem:[%s5 + $0xa8] sm:$0xff]
  %v2106 = vld [vmem:[%s5 + $0xb0] sm:$0xf]
  %v2107 = vld [vmem:[%s5 + $0xb4] sm:$0xff]
  %v2108 = vld [vmem:[%s5 + $0xbc] sm:$0xf]
  %v2141 = vunpack.c.l.b16 %v2077
  %v2142 = vunpack.c.h.b16 %v2077
  %v2143 = vunpack.c.l.b16 %v2078
  %v2144 = vunpack.c.l.b16 %v2079
  %v2145 = vunpack.c.h.b16 %v2079
  %v2146 = vunpack.c.l.b16 %v2080
  %v2147 = vunpack.c.l.b16 %v2081
  %v2148 = vunpack.c.h.b16 %v2081
  %v2149 = vunpack.c.l.b16 %v2082
  %v2150 = vunpack.c.l.b16 %v2083
  %v2151 = vunpack.c.h.b16 %v2083
  %v2152 = vunpack.c.l.b16 %v2084
  %v2153 = vunpack.c.l.b16 %v2085
  %v2154 = vunpack.c.h.b16 %v2085
  %v2155 = vunpack.c.l.b16 %v2086
  %v2156 = vunpack.c.l.b16 %v2087
  %v2157 = vunpack.c.h.b16 %v2087
  %v2158 = vunpack.c.l.b16 %v2088
  %v2159 = vunpack.c.l.b16 %v2089
  %v2160 = vunpack.c.h.b16 %v2089
  %v2161 = vunpack.c.l.b16 %v2090
  %v2162 = vunpack.c.l.b16 %v2091
  %v2163 = vunpack.c.h.b16 %v2091
  %v2164 = vunpack.c.l.b16 %v2092
  %v2165 = vunpack.c.l.b16 %v2093
  %v2166 = vunpack.c.h.b16 %v2093
  %v2167 = vunpack.c.l.b16 %v2094
  %v2168 = vunpack.c.l.b16 %v2095
  %v2169 = vunpack.c.h.b16 %v2095
  %v2170 = vunpack.c.l.b16 %v2096
  %v2171 = vunpack.c.l.b16 %v2097
  %v2172 = vunpack.c.h.b16 %v2097
  %v2173 = vunpack.c.l.b16 %v2098
  %v2174 = vunpack.c.l.b16 %v2099
  %v2175 = vunpack.c.h.b16 %v2099
  %v2176 = vunpack.c.l.b16 %v2100
  %v2177 = vunpack.c.l.b16 %v2101
  %v2178 = vunpack.c.h.b16 %v2101
  %v2179 = vunpack.c.l.b16 %v2102
  %v2180 = vunpack.c.l.b16 %v2103
  %v2181 = vunpack.c.h.b16 %v2103
  %v2182 = vunpack.c.l.b16 %v2104
  %v2183 = vunpack.c.l.b16 %v2105
  %v2184 = vunpack.c.h.b16 %v2105
  %v2185 = vunpack.c.l.b16 %v2106
  %v2186 = vunpack.c.l.b16 %v2107
  %v2187 = vunpack.c.h.b16 %v2107
  %v2188 = vunpack.c.l.b16 %v2108
  %v2189 = vpack.c.b16 %v2144, %v2141
  %v2190 = vpack.c.b16 %v2145, %v2142
  %v2191 = vpack.c.b16 %v2146, %v2143
  %v2192 = vpack.c.b16 %v2150, %v2147
  %v2193 = vpack.c.b16 %v2151, %v2148
  %v2194 = vpack.c.b16 %v2152, %v2149
  %v2195 = vpack.c.b16 %v2156, %v2153
  %v2196 = vpack.c.b16 %v2157, %v2154
  %v2197 = vpack.c.b16 %v2158, %v2155
  %v2198 = vpack.c.b16 %v2162, %v2159
  %v2199 = vpack.c.b16 %v2163, %v2160
  %v2200 = vpack.c.b16 %v2164, %v2161
  %v2201 = vpack.c.b16 %v2168, %v2165
  %v2202 = vpack.c.b16 %v2169, %v2166
  %v2203 = vpack.c.b16 %v2170, %v2167
  %v2204 = vpack.c.b16 %v2174, %v2171
  %v2205 = vpack.c.b16 %v2175, %v2172
  %v2206 = vpack.c.b16 %v2176, %v2173
  %v2207 = vpack.c.b16 %v2180, %v2177
  %v2208 = vpack.c.b16 %v2181, %v2178
  %v2209 = vpack.c.b16 %v2182, %v2179
  %v2210 = vpack.c.b16 %v2186, %v2183
  %v2211 = vpack.c.b16 %v2187, %v2184
  %v2212 = vpack.c.b16 %v2188, %v2185
  %2237 = vmatprep.subr.bf16.mxu0 %v2211
  %2238 = vmatpush1.bf16.msra.mxu0 %v2210
  %2239 = vmatprep.subr.bf16.mxu0 %v2208
  %2240 = vmatpush1.bf16.msra.mxu0 %v2207
  %2241 = vmatprep.subr.bf16.mxu0 %v2205
  %2242 = vmatpush1.bf16.msra.mxu0 %v2204
  %2243 = vmatprep.subr.bf16.mxu0 %v2202
  %2244 = vmatpush1.bf16.msra.mxu0 %v2201
  %2245 = vmatprep.subr.bf16.mxu0 %v2199
  %2246 = vmatpush1.bf16.msra.mxu0 %v2198
  %2247 = vmatprep.subr.bf16.mxu0 %v2196
  %2248 = vmatpush1.bf16.msra.mxu0 %v2195
  %2249 = vmatprep.subr.bf16.mxu0 %v2193
  %2250 = vmatpush1.bf16.msra.mxu0 %v2192
  %2251 = vmatprep.subr.bf16.mxu0 %v2190
  %2252 = vmatpush1.bf16.msra.mxu0 %v2189
  %2253 = vmatprep.subr.bf16.mxu0 0
  %2254 = vmatpush2.bf16.msra.mxu0 0
  %2255 = vmatprep.subr.bf16.mxu0 0
  %2256 = vmatpush2.bf16.msra.mxu0 0
  %2257 = vmatprep.subr.bf16.mxu0 0
  %2258 = vmatpush2.bf16.msra.mxu0 0
  %2259 = vmatprep.subr.bf16.mxu0 0
  %2260 = vmatpush2.bf16.msra.mxu0 0
  %2261 = vmatprep.subr.bf16.mxu0 0
  %2262 = vmatpush2.bf16.msra.mxu0 0
  %2263 = vmatprep.subr.bf16.mxu0 0
  %2264 = vmatpush2.bf16.msra.mxu0 0
  %2265 = vmatprep.subr.bf16.mxu0 0
  %2266 = vmatpush2.bf16.msra.mxu0 0
  %2267 = vmatprep.subr.bf16.mxu0 0
  %2268 = vmatpush2.bf16.msra.mxu0 0
  %2269 = vmatprep.mubr.bf16.mxu0 0
  %2270 = vmatmul.mubr.bf16.gmra.mxu0 %v1831
  %v2271 = vpop.f32.mrf.mxu0
  %v2272 = vadd.f32 %v574, %v2271
  %v2273 = vpop.f32.mrf.mxu0
  %v2274 = vadd.f32 %v578, %v2273
  %v2275 = vpop.f32.mrf.mxu0
  %v2276 = vpop.f32.mrf.mxu0
  %2277 = vdwg.mxu0
  %2278 = vmatprep.subr.bf16.mxu0 0
  %2279 = vmatpush1.bf16.msra.mxu0 %v2212
  %2280 = vmatprep.subr.bf16.mxu0 0
  %2281 = vmatpush1.bf16.msra.mxu0 %v2209
  %2282 = vmatprep.subr.bf16.mxu0 0
  %2283 = vmatpush1.bf16.msra.mxu0 %v2206
  %2284 = vmatprep.subr.bf16.mxu0 0
  %2285 = vmatpush1.bf16.msra.mxu0 %v2203
  %2286 = vmatprep.subr.bf16.mxu0 0
  %2287 = vmatpush1.bf16.msra.mxu0 %v2200
  %2288 = vmatprep.subr.bf16.mxu0 0
  %2289 = vmatpush1.bf16.msra.mxu0 %v2197
  %2290 = vmatprep.subr.bf16.mxu0 0
  %2291 = vmatpush1.bf16.msra.mxu0 %v2194
  %2292 = vmatprep.subr.bf16.mxu0 0
  %2293 = vmatpush1.bf16.msra.mxu0 %v2191
  %2294 = vmatprep.subr.bf16.mxu0 0
  %2295 = vmatpush2.bf16.msra.mxu0 0
  %2296 = vmatprep.subr.bf16.mxu0 0
  %2297 = vmatpush2.bf16.msra.mxu0 0
  %2298 = vmatprep.subr.bf16.mxu0 0
  %2299 = vmatpush2.bf16.msra.mxu0 0
  %2300 = vmatprep.subr.bf16.mxu0 0
  %2301 = vmatpush2.bf16.msra.mxu0 0
  %2302 = vmatprep.subr.bf16.mxu0 0
  %2303 = vmatpush2.bf16.msra.mxu0 0
  %2304 = vmatprep.subr.bf16.mxu0 0
  %2305 = vmatpush2.bf16.msra.mxu0 0
  %2306 = vmatprep.subr.bf16.mxu0 0
  %2307 = vmatpush2.bf16.msra.mxu0 0
  %2308 = vmatprep.subr.bf16.mxu0 0
  %2309 = vmatpush2.bf16.msra.mxu0 0
  %2310 = vmatprep.mubr.bf16.mxu0 0
  %2311 = vmatmul.mubr.bf16.gmra.mxu0 %v1831
  %v2312 = vpop.f32.mrf.mxu0
  %v2313 = vadd.f32 %v582, %v2312
  %v2314 = vpop.f32.mrf.mxu0
  %v2315 = vpop.f32.mrf.mxu0
  %v2316 = vpop.f32.mrf.mxu0
  %2317 = vdwg.mxu0
  %v2318 = vadd.f32 %v2031, %v2272
  %v2319 = vxor.u32 %v2318, 2147483648
  %v2320 = vmul.f32 %v2319, 1.442695
  %v2321 = vpow.pop %v2320
  %v2322 = vadd.f32 %v2321, 1.0
  %v2323 = vrcp.pop %v2322
  %v2324 = vmul.f32 1.0, %v2323
  %v2325 = vadd.f32 %v2033, %v2274
  %v2326 = vxor.u32 %v2325, 2147483648
  %v2327 = vmul.f32 %v2326, 1.442695
  %v2328 = vpow.pop %v2327
  %v2329 = vadd.f32 %v2328, 1.0
  %v2330 = vrcp.pop %v2329
  %v2331 = vmul.f32 1.0, %v2330
  %v2332 = vmul.f32 %v2324, %v2313
  %v2333 = vadd.f32 %v2072, %v2332
  %v2334 = vtanh.pop %v2333
  %v2335 = vsub.f32 1.0, %v2331
  %v2336 = vmul.f32 %v2335, %v2334
  %v2337 = vmul.f32 %v2331, %v1830
  %v2338 = vadd.f32 %v2336, %v2337
  %v2339 = vpack.c.bf16 %v2338, %v2338
  %s2340 = scalar_lea.vmem %s7, 12
  %2341 = vst [vmem:[%s2340] sm:$0xf] %v2339
  %s2342 = scalar_lea.vmem %s0, 16
  %v2343 = vld [vmem:[%s2342] sm:$0xf]
  %v2344 = vld [vmem:[%s2] sm:$0xff]
  %v2345 = vld [vmem:[%s2 + $0x8] sm:$0xf]
  %v2346 = vld [vmem:[%s2 + $0xc] sm:$0xff]
  %v2347 = vld [vmem:[%s2 + $0x14] sm:$0xf]
  %v2348 = vld [vmem:[%s2 + $0x18] sm:$0xff]
  %v2349 = vld [vmem:[%s2 + $0x20] sm:$0xf]
  %v2350 = vld [vmem:[%s2 + $0x24] sm:$0xff]
  %v2351 = vld [vmem:[%s2 + $0x2c] sm:$0xf]
  %v2352 = vld [vmem:[%s2 + $0x30] sm:$0xff]
  %v2353 = vld [vmem:[%s2 + $0x38] sm:$0xf]
  %v2354 = vld [vmem:[%s2 + $0x3c] sm:$0xff]
  %v2355 = vld [vmem:[%s2 + $0x44] sm:$0xf]
  %v2356 = vld [vmem:[%s2 + $0x48] sm:$0xff]
  %v2357 = vld [vmem:[%s2 + $0x50] sm:$0xf]
  %v2358 = vld [vmem:[%s2 + $0x54] sm:$0xff]
  %v2359 = vld [vmem:[%s2 + $0x5c] sm:$0xf]
  %v2360 = vld [vmem:[%s2 + $0x60] sm:$0xff]
  %v2361 = vld [vmem:[%s2 + $0x68] sm:$0xf]
  %v2362 = vld [vmem:[%s2 + $0x6c] sm:$0xff]
  %v2363 = vld [vmem:[%s2 + $0x74] sm:$0xf]
  %v2364 = vld [vmem:[%s2 + $0x78] sm:$0xff]
  %v2365 = vld [vmem:[%s2 + $0x80] sm:$0xf]
  %v2366 = vld [vmem:[%s2 + $0x84] sm:$0xff]
  %v2367 = vld [vmem:[%s2 + $0x8c] sm:$0xf]
  %v2368 = vld [vmem:[%s2 + $0x90] sm:$0xff]
  %v2369 = vld [vmem:[%s2 + $0x98] sm:$0xf]
  %v2370 = vld [vmem:[%s2 + $0x9c] sm:$0xff]
  %v2371 = vld [vmem:[%s2 + $0xa4] sm:$0xf]
  %v2372 = vld [vmem:[%s2 + $0xa8] sm:$0xff]
  %v2373 = vld [vmem:[%s2 + $0xb0] sm:$0xf]
  %v2374 = vld [vmem:[%s2 + $0xb4] sm:$0xff]
  %v2375 = vld [vmem:[%s2 + $0xbc] sm:$0xf]
  %v2408 = vunpack.c.l.b16 %v2344
  %v2409 = vunpack.c.h.b16 %v2344
  %v2410 = vunpack.c.l.b16 %v2345
  %v2411 = vunpack.c.l.b16 %v2346
  %v2412 = vunpack.c.h.b16 %v2346
  %v2413 = vunpack.c.l.b16 %v2347
  %v2414 = vunpack.c.l.b16 %v2348
  %v2415 = vunpack.c.h.b16 %v2348
  %v2416 = vunpack.c.l.b16 %v2349
  %v2417 = vunpack.c.l.b16 %v2350
  %v2418 = vunpack.c.h.b16 %v2350
  %v2419 = vunpack.c.l.b16 %v2351
  %v2420 = vunpack.c.l.b16 %v2352
  %v2421 = vunpack.c.h.b16 %v2352
  %v2422 = vunpack.c.l.b16 %v2353
  %v2423 = vunpack.c.l.b16 %v2354
  %v2424 = vunpack.c.h.b16 %v2354
  %v2425 = vunpack.c.l.b16 %v2355
  %v2426 = vunpack.c.l.b16 %v2356
  %v2427 = vunpack.c.h.b16 %v2356
  %v2428 = vunpack.c.l.b16 %v2357
  %v2429 = vunpack.c.l.b16 %v2358
  %v2430 = vunpack.c.h.b16 %v2358
  %v2431 = vunpack.c.l.b16 %v2359
  %v2432 = vunpack.c.l.b16 %v2360
  %v2433 = vunpack.c.h.b16 %v2360
  %v2434 = vunpack.c.l.b16 %v2361
  %v2435 = vunpack.c.l.b16 %v2362
  %v2436 = vunpack.c.h.b16 %v2362
  %v2437 = vunpack.c.l.b16 %v2363
  %v2438 = vunpack.c.l.b16 %v2364
  %v2439 = vunpack.c.h.b16 %v2364
  %v2440 = vunpack.c.l.b16 %v2365
  %v2441 = vunpack.c.l.b16 %v2366
  %v2442 = vunpack.c.h.b16 %v2366
  %v2443 = vunpack.c.l.b16 %v2367
  %v2444 = vunpack.c.l.b16 %v2368
  %v2445 = vunpack.c.h.b16 %v2368
  %v2446 = vunpack.c.l.b16 %v2369
  %v2447 = vunpack.c.l.b16 %v2370
  %v2448 = vunpack.c.h.b16 %v2370
  %v2449 = vunpack.c.l.b16 %v2371
  %v2450 = vunpack.c.l.b16 %v2372
  %v2451 = vunpack.c.h.b16 %v2372
  %v2452 = vunpack.c.l.b16 %v2373
  %v2453 = vunpack.c.l.b16 %v2374
  %v2454 = vunpack.c.h.b16 %v2374
  %v2455 = vunpack.c.l.b16 %v2375
  %v2456 = vpack.c.b16 %v2411, %v2408
  %v2457 = vpack.c.b16 %v2412, %v2409
  %v2458 = vpack.c.b16 %v2413, %v2410
  %v2459 = vpack.c.b16 %v2417, %v2414
  %v2460 = vpack.c.b16 %v2418, %v2415
  %v2461 = vpack.c.b16 %v2419, %v2416
  %v2462 = vpack.c.b16 %v2423, %v2420
  %v2463 = vpack.c.b16 %v2424, %v2421
  %v2464 = vpack.c.b16 %v2425, %v2422
  %v2465 = vpack.c.b16 %v2429, %v2426
  %v2466 = vpack.c.b16 %v2430, %v2427
  %v2467 = vpack.c.b16 %v2431, %v2428
  %v2468 = vpack.c.b16 %v2435, %v2432
  %v2469 = vpack.c.b16 %v2436, %v2433
  %v2470 = vpack.c.b16 %v2437, %v2434
  %v2471 = vpack.c.b16 %v2441, %v2438
  %v2472 = vpack.c.b16 %v2442, %v2439
  %v2473 = vpack.c.b16 %v2443, %v2440
  %v2474 = vpack.c.b16 %v2447, %v2444
  %v2475 = vpack.c.b16 %v2448, %v2445
  %v2476 = vpack.c.b16 %v2449, %v2446
  %v2477 = vpack.c.b16 %v2453, %v2450
  %v2478 = vpack.c.b16 %v2454, %v2451
  %v2479 = vpack.c.b16 %v2455, %v2452
  %2504 = vmatprep.subr.bf16.mxu0 %v2478
  %2505 = vmatpush1.bf16.msra.mxu0 %v2477
  %2506 = vmatprep.subr.bf16.mxu0 %v2475
  %2507 = vmatpush1.bf16.msra.mxu0 %v2474
  %2508 = vmatprep.subr.bf16.mxu0 %v2472
  %2509 = vmatpush1.bf16.msra.mxu0 %v2471
  %2510 = vmatprep.subr.bf16.mxu0 %v2469
  %2511 = vmatpush1.bf16.msra.mxu0 %v2468
  %2512 = vmatprep.subr.bf16.mxu0 %v2466
  %2513 = vmatpush1.bf16.msra.mxu0 %v2465
  %2514 = vmatprep.subr.bf16.mxu0 %v2463
  %2515 = vmatpush1.bf16.msra.mxu0 %v2462
  %2516 = vmatprep.subr.bf16.mxu0 %v2460
  %2517 = vmatpush1.bf16.msra.mxu0 %v2459
  %2518 = vmatprep.subr.bf16.mxu0 %v2457
  %2519 = vmatpush1.bf16.msra.mxu0 %v2456
  %2520 = vmatprep.subr.bf16.mxu0 0
  %2521 = vmatpush2.bf16.msra.mxu0 0
  %2522 = vmatprep.subr.bf16.mxu0 0
  %2523 = vmatpush2.bf16.msra.mxu0 0
  %2524 = vmatprep.subr.bf16.mxu0 0
  %2525 = vmatpush2.bf16.msra.mxu0 0
  %2526 = vmatprep.subr.bf16.mxu0 0
  %2527 = vmatpush2.bf16.msra.mxu0 0
  %2528 = vmatprep.subr.bf16.mxu0 0
  %2529 = vmatpush2.bf16.msra.mxu0 0
  %2530 = vmatprep.subr.bf16.mxu0 0
  %2531 = vmatpush2.bf16.msra.mxu0 0
  %2532 = vmatprep.subr.bf16.mxu0 0
  %2533 = vmatpush2.bf16.msra.mxu0 0
  %2534 = vmatprep.subr.bf16.mxu0 0
  %2535 = vmatpush2.bf16.msra.mxu0 0
  %2536 = vmatprep.mubr.bf16.mxu0 0
  %2537 = vmatmul.mubr.bf16.gmra.mxu0 %v2343
  %v2538 = vpop.f32.mrf.mxu0
  %v2539 = vadd.f32 %v247, %v2538
  %v2540 = vpop.f32.mrf.mxu0
  %v2541 = vadd.f32 %v249, %v2540
  %v2542 = vpop.f32.mrf.mxu0
  %v2543 = vpop.f32.mrf.mxu0
  %2544 = vdwg.mxu0
  %2545 = vmatprep.subr.bf16.mxu0 0
  %2546 = vmatpush1.bf16.msra.mxu0 %v2479
  %2547 = vmatprep.subr.bf16.mxu0 0
  %2548 = vmatpush1.bf16.msra.mxu0 %v2476
  %2549 = vmatprep.subr.bf16.mxu0 0
  %2550 = vmatpush1.bf16.msra.mxu0 %v2473
  %2551 = vmatprep.subr.bf16.mxu0 0
  %2552 = vmatpush1.bf16.msra.mxu0 %v2470
  %2553 = vmatprep.subr.bf16.mxu0 0
  %2554 = vmatpush1.bf16.msra.mxu0 %v2467
  %2555 = vmatprep.subr.bf16.mxu0 0
  %2556 = vmatpush1.bf16.msra.mxu0 %v2464
  %2557 = vmatprep.subr.bf16.mxu0 0
  %2558 = vmatpush1.bf16.msra.mxu0 %v2461
  %2559 = vmatprep.subr.bf16.mxu0 0
  %2560 = vmatpush1.bf16.msra.mxu0 %v2458
  %2561 = vmatprep.subr.bf16.mxu0 0
  %2562 = vmatpush2.bf16.msra.mxu0 0
  %2563 = vmatprep.subr.bf16.mxu0 0
  %2564 = vmatpush2.bf16.msra.mxu0 0
  %2565 = vmatprep.subr.bf16.mxu0 0
  %2566 = vmatpush2.bf16.msra.mxu0 0
  %2567 = vmatprep.subr.bf16.mxu0 0
  %2568 = vmatpush2.bf16.msra.mxu0 0
  %2569 = vmatprep.subr.bf16.mxu0 0
  %2570 = vmatpush2.bf16.msra.mxu0 0
  %2571 = vmatprep.subr.bf16.mxu0 0
  %2572 = vmatpush2.bf16.msra.mxu0 0
  %2573 = vmatprep.subr.bf16.mxu0 0
  %2574 = vmatpush2.bf16.msra.mxu0 0
  %2575 = vmatprep.subr.bf16.mxu0 0
  %2576 = vmatpush2.bf16.msra.mxu0 0
  %2577 = vmatprep.mubr.bf16.mxu0 0
  %2578 = vmatmul.mubr.bf16.gmra.mxu0 %v2343
  %v2579 = vpop.f32.mrf.mxu0
  %v2580 = vadd.f32 %v288, %v2579
  %v2581 = vpop.f32.mrf.mxu0
  %v2582 = vpop.f32.mrf.mxu0
  %v2583 = vpop.f32.mrf.mxu0
  %2584 = vdwg.mxu0
  %v2585 = vld [vmem:[%s5] sm:$0xff]
  %v2586 = vld [vmem:[%s5 + $0x8] sm:$0xf]
  %v2587 = vld [vmem:[%s5 + $0xc] sm:$0xff]
  %v2588 = vld [vmem:[%s5 + $0x14] sm:$0xf]
  %v2589 = vld [vmem:[%s5 + $0x18] sm:$0xff]
  %v2590 = vld [vmem:[%s5 + $0x20] sm:$0xf]
  %v2591 = vld [vmem:[%s5 + $0x24] sm:$0xff]
  %v2592 = vld [vmem:[%s5 + $0x2c] sm:$0xf]
  %v2593 = vld [vmem:[%s5 + $0x30] sm:$0xff]
  %v2594 = vld [vmem:[%s5 + $0x38] sm:$0xf]
  %v2595 = vld [vmem:[%s5 + $0x3c] sm:$0xff]
  %v2596 = vld [vmem:[%s5 + $0x44] sm:$0xf]
  %v2597 = vld [vmem:[%s5 + $0x48] sm:$0xff]
  %v2598 = vld [vmem:[%s5 + $0x50] sm:$0xf]
  %v2599 = vld [vmem:[%s5 + $0x54] sm:$0xff]
  %v2600 = vld [vmem:[%s5 + $0x5c] sm:$0xf]
  %v2601 = vld [vmem:[%s5 + $0x60] sm:$0xff]
  %v2602 = vld [vmem:[%s5 + $0x68] sm:$0xf]
  %v2603 = vld [vmem:[%s5 + $0x6c] sm:$0xff]
  %v2604 = vld [vmem:[%s5 + $0x74] sm:$0xf]
  %v2605 = vld [vmem:[%s5 + $0x78] sm:$0xff]
  %v2606 = vld [vmem:[%s5 + $0x80] sm:$0xf]
  %v2607 = vld [vmem:[%s5 + $0x84] sm:$0xff]
  %v2608 = vld [vmem:[%s5 + $0x8c] sm:$0xf]
  %v2609 = vld [vmem:[%s5 + $0x90] sm:$0xff]
  %v2610 = vld [vmem:[%s5 + $0x98] sm:$0xf]
  %v2611 = vld [vmem:[%s5 + $0x9c] sm:$0xff]
  %v2612 = vld [vmem:[%s5 + $0xa4] sm:$0xf]
  %v2613 = vld [vmem:[%s5 + $0xa8] sm:$0xff]
  %v2614 = vld [vmem:[%s5 + $0xb0] sm:$0xf]
  %v2615 = vld [vmem:[%s5 + $0xb4] sm:$0xff]
  %v2616 = vld [vmem:[%s5 + $0xbc] sm:$0xf]
  %v2649 = vunpack.c.l.b16 %v2585
  %v2650 = vunpack.c.h.b16 %v2585
  %v2651 = vunpack.c.l.b16 %v2586
  %v2652 = vunpack.c.l.b16 %v2587
  %v2653 = vunpack.c.h.b16 %v2587
  %v2654 = vunpack.c.l.b16 %v2588
  %v2655 = vunpack.c.l.b16 %v2589
  %v2656 = vunpack.c.h.b16 %v2589
  %v2657 = vunpack.c.l.b16 %v2590
  %v2658 = vunpack.c.l.b16 %v2591
  %v2659 = vunpack.c.h.b16 %v2591
  %v2660 = vunpack.c.l.b16 %v2592
  %v2661 = vunpack.c.l.b16 %v2593
  %v2662 = vunpack.c.h.b16 %v2593
  %v2663 = vunpack.c.l.b16 %v2594
  %v2664 = vunpack.c.l.b16 %v2595
  %v2665 = vunpack.c.h.b16 %v2595
  %v2666 = vunpack.c.l.b16 %v2596
  %v2667 = vunpack.c.l.b16 %v2597
  %v2668 = vunpack.c.h.b16 %v2597
  %v2669 = vunpack.c.l.b16 %v2598
  %v2670 = vunpack.c.l.b16 %v2599
  %v2671 = vunpack.c.h.b16 %v2599
  %v2672 = vunpack.c.l.b16 %v2600
  %v2673 = vunpack.c.l.b16 %v2601
  %v2674 = vunpack.c.h.b16 %v2601
  %v2675 = vunpack.c.l.b16 %v2602
  %v2676 = vunpack.c.l.b16 %v2603
  %v2677 = vunpack.c.h.b16 %v2603
  %v2678 = vunpack.c.l.b16 %v2604
  %v2679 = vunpack.c.l.b16 %v2605
  %v2680 = vunpack.c.h.b16 %v2605
  %v2681 = vunpack.c.l.b16 %v2606
  %v2682 = vunpack.c.l.b16 %v2607
  %v2683 = vunpack.c.h.b16 %v2607
  %v2684 = vunpack.c.l.b16 %v2608
  %v2685 = vunpack.c.l.b16 %v2609
  %v2686 = vunpack.c.h.b16 %v2609
  %v2687 = vunpack.c.l.b16 %v2610
  %v2688 = vunpack.c.l.b16 %v2611
  %v2689 = vunpack.c.h.b16 %v2611
  %v2690 = vunpack.c.l.b16 %v2612
  %v2691 = vunpack.c.l.b16 %v2613
  %v2692 = vunpack.c.h.b16 %v2613
  %v2693 = vunpack.c.l.b16 %v2614
  %v2694 = vunpack.c.l.b16 %v2615
  %v2695 = vunpack.c.h.b16 %v2615
  %v2696 = vunpack.c.l.b16 %v2616
  %v2697 = vpack.c.b16 %v2652, %v2649
  %v2698 = vpack.c.b16 %v2653, %v2650
  %v2699 = vpack.c.b16 %v2654, %v2651
  %v2700 = vpack.c.b16 %v2658, %v2655
  %v2701 = vpack.c.b16 %v2659, %v2656
  %v2702 = vpack.c.b16 %v2660, %v2657
  %v2703 = vpack.c.b16 %v2664, %v2661
  %v2704 = vpack.c.b16 %v2665, %v2662
  %v2705 = vpack.c.b16 %v2666, %v2663
  %v2706 = vpack.c.b16 %v2670, %v2667
  %v2707 = vpack.c.b16 %v2671, %v2668
  %v2708 = vpack.c.b16 %v2672, %v2669
  %v2709 = vpack.c.b16 %v2676, %v2673
  %v2710 = vpack.c.b16 %v2677, %v2674
  %v2711 = vpack.c.b16 %v2678, %v2675
  %v2712 = vpack.c.b16 %v2682, %v2679
  %v2713 = vpack.c.b16 %v2683, %v2680
  %v2714 = vpack.c.b16 %v2684, %v2681
  %v2715 = vpack.c.b16 %v2688, %v2685
  %v2716 = vpack.c.b16 %v2689, %v2686
  %v2717 = vpack.c.b16 %v2690, %v2687
  %v2718 = vpack.c.b16 %v2694, %v2691
  %v2719 = vpack.c.b16 %v2695, %v2692
  %v2720 = vpack.c.b16 %v2696, %v2693
  %2745 = vmatprep.subr.bf16.mxu0 %v2719
  %2746 = vmatpush1.bf16.msra.mxu0 %v2718
  %2747 = vmatprep.subr.bf16.mxu0 %v2716
  %2748 = vmatpush1.bf16.msra.mxu0 %v2715
  %2749 = vmatprep.subr.bf16.mxu0 %v2713
  %2750 = vmatpush1.bf16.msra.mxu0 %v2712
  %2751 = vmatprep.subr.bf16.mxu0 %v2710
  %2752 = vmatpush1.bf16.msra.mxu0 %v2709
  %2753 = vmatprep.subr.bf16.mxu0 %v2707
  %2754 = vmatpush1.bf16.msra.mxu0 %v2706
  %2755 = vmatprep.subr.bf16.mxu0 %v2704
  %2756 = vmatpush1.bf16.msra.mxu0 %v2703
  %2757 = vmatprep.subr.bf16.mxu0 %v2701
  %2758 = vmatpush1.bf16.msra.mxu0 %v2700
  %2759 = vmatprep.subr.bf16.mxu0 %v2698
  %2760 = vmatpush1.bf16.msra.mxu0 %v2697
  %2761 = vmatprep.subr.bf16.mxu0 0
  %2762 = vmatpush2.bf16.msra.mxu0 0
  %2763 = vmatprep.subr.bf16.mxu0 0
  %2764 = vmatpush2.bf16.msra.mxu0 0
  %2765 = vmatprep.subr.bf16.mxu0 0
  %2766 = vmatpush2.bf16.msra.mxu0 0
  %2767 = vmatprep.subr.bf16.mxu0 0
  %2768 = vmatpush2.bf16.msra.mxu0 0
  %2769 = vmatprep.subr.bf16.mxu0 0
  %2770 = vmatpush2.bf16.msra.mxu0 0
  %2771 = vmatprep.subr.bf16.mxu0 0
  %2772 = vmatpush2.bf16.msra.mxu0 0
  %2773 = vmatprep.subr.bf16.mxu0 0
  %2774 = vmatpush2.bf16.msra.mxu0 0
  %2775 = vmatprep.subr.bf16.mxu0 0
  %2776 = vmatpush2.bf16.msra.mxu0 0
  %2777 = vmatprep.mubr.bf16.mxu0 0
  %2778 = vmatmul.mubr.bf16.gmra.mxu0 %v2339
  %v2779 = vpop.f32.mrf.mxu0
  %v2780 = vadd.f32 %v574, %v2779
  %v2781 = vpop.f32.mrf.mxu0
  %v2782 = vadd.f32 %v578, %v2781
  %v2783 = vpop.f32.mrf.mxu0
  %v2784 = vpop.f32.mrf.mxu0
  %2785 = vdwg.mxu0
  %2786 = vmatprep.subr.bf16.mxu0 0
  %2787 = vmatpush1.bf16.msra.mxu0 %v2720
  %2788 = vmatprep.subr.bf16.mxu0 0
  %2789 = vmatpush1.bf16.msra.mxu0 %v2717
  %2790 = vmatprep.subr.bf16.mxu0 0
  %2791 = vmatpush1.bf16.msra.mxu0 %v2714
  %2792 = vmatprep.subr.bf16.mxu0 0
  %2793 = vmatpush1.bf16.msra.mxu0 %v2711
  %2794 = vmatprep.subr.bf16.mxu0 0
  %2795 = vmatpush1.bf16.msra.mxu0 %v2708
  %2796 = vmatprep.subr.bf16.mxu0 0
  %2797 = vmatpush1.bf16.msra.mxu0 %v2705
  %2798 = vmatprep.subr.bf16.mxu0 0
  %2799 = vmatpush1.bf16.msra.mxu0 %v2702
  %2800 = vmatprep.subr.bf16.mxu0 0
  %2801 = vmatpush1.bf16.msra.mxu0 %v2699
  %2802 = vmatprep.subr.bf16.mxu0 0
  %2803 = vmatpush2.bf16.msra.mxu0 0
  %2804 = vmatprep.subr.bf16.mxu0 0
  %2805 = vmatpush2.bf16.msra.mxu0 0
  %2806 = vmatprep.subr.bf16.mxu0 0
  %2807 = vmatpush2.bf16.msra.mxu0 0
  %2808 = vmatprep.subr.bf16.mxu0 0
  %2809 = vmatpush2.bf16.msra.mxu0 0
  %2810 = vmatprep.subr.bf16.mxu0 0
  %2811 = vmatpush2.bf16.msra.mxu0 0
  %2812 = vmatprep.subr.bf16.mxu0 0
  %2813 = vmatpush2.bf16.msra.mxu0 0
  %2814 = vmatprep.subr.bf16.mxu0 0
  %2815 = vmatpush2.bf16.msra.mxu0 0
  %2816 = vmatprep.subr.bf16.mxu0 0
  %2817 = vmatpush2.bf16.msra.mxu0 0
  %2818 = vmatprep.mubr.bf16.mxu0 0
  %2819 = vmatmul.mubr.bf16.gmra.mxu0 %v2339
  %v2820 = vpop.f32.mrf.mxu0
  %v2821 = vadd.f32 %v582, %v2820
  %v2822 = vpop.f32.mrf.mxu0
  %v2823 = vpop.f32.mrf.mxu0
  %v2824 = vpop.f32.mrf.mxu0
  %2825 = vdwg.mxu0
  %v2826 = vadd.f32 %v2539, %v2780
  %v2827 = vxor.u32 %v2826, 2147483648
  %v2828 = vmul.f32 %v2827, 1.442695
  %v2829 = vpow.pop %v2828
  %v2830 = vadd.f32 %v2829, 1.0
  %v2831 = vrcp.pop %v2830
  %v2832 = vmul.f32 1.0, %v2831
  %v2833 = vadd.f32 %v2541, %v2782
  %v2834 = vxor.u32 %v2833, 2147483648
  %v2835 = vmul.f32 %v2834, 1.442695
  %v2836 = vpow.pop %v2835
  %v2837 = vadd.f32 %v2836, 1.0
  %v2838 = vrcp.pop %v2837
  %v2839 = vmul.f32 1.0, %v2838
  %v2840 = vmul.f32 %v2832, %v2821
  %v2841 = vadd.f32 %v2580, %v2840
  %v2842 = vtanh.pop %v2841
  %v2843 = vsub.f32 1.0, %v2839
  %v2844 = vmul.f32 %v2843, %v2842
  %v2845 = vmul.f32 %v2839, %v2338
  %v2846 = vadd.f32 %v2844, %v2845
  %v2847 = vpack.c.bf16 %v2846, %v2846
  %s2848 = scalar_lea.vmem %s7, 16
  %2849 = vst [vmem:[%s2848] sm:$0xf] %v2847
  %s2850 = scalar_lea.vmem %s0, 20
  %v2851 = vld [vmem:[%s2850] sm:$0xf]
  %v2852 = vld [vmem:[%s2] sm:$0xff]
  %v2853 = vld [vmem:[%s2 + $0x8] sm:$0xf]
  %v2854 = vld [vmem:[%s2 + $0xc] sm:$0xff]
  %v2855 = vld [vmem:[%s2 + $0x14] sm:$0xf]
  %v2856 = vld [vmem:[%s2 + $0x18] sm:$0xff]
  %v2857 = vld [vmem:[%s2 + $0x20] sm:$0xf]
  %v2858 = vld [vmem:[%s2 + $0x24] sm:$0xff]
  %v2859 = vld [vmem:[%s2 + $0x2c] sm:$0xf]
  %v2860 = vld [vmem:[%s2 + $0x30] sm:$0xff]
  %v2861 = vld [vmem:[%s2 + $0x38] sm:$0xf]
  %v2862 = vld [vmem:[%s2 + $0x3c] sm:$0xff]
  %v2863 = vld [vmem:[%s2 + $0x44] sm:$0xf]
  %v2864 = vld [vmem:[%s2 + $0x48] sm:$0xff]
  %v2865 = vld [vmem:[%s2 + $0x50] sm:$0xf]
  %v2866 = vld [vmem:[%s2 + $0x54] sm:$0xff]
  %v2867 = vld [vmem:[%s2 + $0x5c] sm:$0xf]
  %v2868 = vld [vmem:[%s2 + $0x60] sm:$0xff]
  %v2869 = vld [vmem:[%s2 + $0x68] sm:$0xf]
  %v2870 = vld [vmem:[%s2 + $0x6c] sm:$0xff]
  %v2871 = vld [vmem:[%s2 + $0x74] sm:$0xf]
  %v2872 = vld [vmem:[%s2 + $0x78] sm:$0xff]
  %v2873 = vld [vmem:[%s2 + $0x80] sm:$0xf]
  %v2874 = vld [vmem:[%s2 + $0x84] sm:$0xff]
  %v2875 = vld [vmem:[%s2 + $0x8c] sm:$0xf]
  %v2876 = vld [vmem:[%s2 + $0x90] sm:$0xff]
  %v2877 = vld [vmem:[%s2 + $0x98] sm:$0xf]
  %v2878 = vld [vmem:[%s2 + $0x9c] sm:$0xff]
  %v2879 = vld [vmem:[%s2 + $0xa4] sm:$0xf]
  %v2880 = vld [vmem:[%s2 + $0xa8] sm:$0xff]
  %v2881 = vld [vmem:[%s2 + $0xb0] sm:$0xf]
  %v2882 = vld [vmem:[%s2 + $0xb4] sm:$0xff]
  %v2883 = vld [vmem:[%s2 + $0xbc] sm:$0xf]
  %v2916 = vunpack.c.l.b16 %v2852
  %v2917 = vunpack.c.h.b16 %v2852
  %v2918 = vunpack.c.l.b16 %v2853
  %v2919 = vunpack.c.l.b16 %v2854
  %v2920 = vunpack.c.h.b16 %v2854
  %v2921 = vunpack.c.l.b16 %v2855
  %v2922 = vunpack.c.l.b16 %v2856
  %v2923 = vunpack.c.h.b16 %v2856
  %v2924 = vunpack.c.l.b16 %v2857
  %v2925 = vunpack.c.l.b16 %v2858
  %v2926 = vunpack.c.h.b16 %v2858
  %v2927 = vunpack.c.l.b16 %v2859
  %v2928 = vunpack.c.l.b16 %v2860
  %v2929 = vunpack.c.h.b16 %v2860
  %v2930 = vunpack.c.l.b16 %v2861
  %v2931 = vunpack.c.l.b16 %v2862
  %v2932 = vunpack.c.h.b16 %v2862
  %v2933 = vunpack.c.l.b16 %v2863
  %v2934 = vunpack.c.l.b16 %v2864
  %v2935 = vunpack.c.h.b16 %v2864
  %v2936 = vunpack.c.l.b16 %v2865
  %v2937 = vunpack.c.l.b16 %v2866
  %v2938 = vunpack.c.h.b16 %v2866
  %v2939 = vunpack.c.l.b16 %v2867
  %v2940 = vunpack.c.l.b16 %v2868
  %v2941 = vunpack.c.h.b16 %v2868
  %v2942 = vunpack.c.l.b16 %v2869
  %v2943 = vunpack.c.l.b16 %v2870
  %v2944 = vunpack.c.h.b16 %v2870
  %v2945 = vunpack.c.l.b16 %v2871
  %v2946 = vunpack.c.l.b16 %v2872
  %v2947 = vunpack.c.h.b16 %v2872
  %v2948 = vunpack.c.l.b16 %v2873
  %v2949 = vunpack.c.l.b16 %v2874
  %v2950 = vunpack.c.h.b16 %v2874
  %v2951 = vunpack.c.l.b16 %v2875
  %v2952 = vunpack.c.l.b16 %v2876
  %v2953 = vunpack.c.h.b16 %v2876
  %v2954 = vunpack.c.l.b16 %v2877
  %v2955 = vunpack.c.l.b16 %v2878
  %v2956 = vunpack.c.h.b16 %v2878
  %v2957 = vunpack.c.l.b16 %v2879
  %v2958 = vunpack.c.l.b16 %v2880
  %v2959 = vunpack.c.h.b16 %v2880
  %v2960 = vunpack.c.l.b16 %v2881
  %v2961 = vunpack.c.l.b16 %v2882
  %v2962 = vunpack.c.h.b16 %v2882
  %v2963 = vunpack.c.l.b16 %v2883
  %v2964 = vpack.c.b16 %v2919, %v2916
  %v2965 = vpack.c.b16 %v2920, %v2917
  %v2966 = vpack.c.b16 %v2921, %v2918
  %v2967 = vpack.c.b16 %v2925, %v2922
  %v2968 = vpack.c.b16 %v2926, %v2923
  %v2969 = vpack.c.b16 %v2927, %v2924
  %v2970 = vpack.c.b16 %v2931, %v2928
  %v2971 = vpack.c.b16 %v2932, %v2929
  %v2972 = vpack.c.b16 %v2933, %v2930
  %v2973 = vpack.c.b16 %v2937, %v2934
  %v2974 = vpack.c.b16 %v2938, %v2935
  %v2975 = vpack.c.b16 %v2939, %v2936
  %v2976 = vpack.c.b16 %v2943, %v2940
  %v2977 = vpack.c.b16 %v2944, %v2941
  %v2978 = vpack.c.b16 %v2945, %v2942
  %v2979 = vpack.c.b16 %v2949, %v2946
  %v2980 = vpack.c.b16 %v2950, %v2947
  %v2981 = vpack.c.b16 %v2951, %v2948
  %v2982 = vpack.c.b16 %v2955, %v2952
  %v2983 = vpack.c.b16 %v2956, %v2953
  %v2984 = vpack.c.b16 %v2957, %v2954
  %v2985 = vpack.c.b16 %v2961, %v2958
  %v2986 = vpack.c.b16 %v2962, %v2959
  %v2987 = vpack.c.b16 %v2963, %v2960
  %3012 = vmatprep.subr.bf16.mxu0 %v2986
  %3013 = vmatpush1.bf16.msra.mxu0 %v2985
  %3014 = vmatprep.subr.bf16.mxu0 %v2983
  %3015 = vmatpush1.bf16.msra.mxu0 %v2982
  %3016 = vmatprep.subr.bf16.mxu0 %v2980
  %3017 = vmatpush1.bf16.msra.mxu0 %v2979
  %3018 = vmatprep.subr.bf16.mxu0 %v2977
  %3019 = vmatpush1.bf16.msra.mxu0 %v2976
  %3020 = vmatprep.subr.bf16.mxu0 %v2974
  %3021 = vmatpush1.bf16.msra.mxu0 %v2973
  %3022 = vmatprep.subr.bf16.mxu0 %v2971
  %3023 = vmatpush1.bf16.msra.mxu0 %v2970
  %3024 = vmatprep.subr.bf16.mxu0 %v2968
  %3025 = vmatpush1.bf16.msra.mxu0 %v2967
  %3026 = vmatprep.subr.bf16.mxu0 %v2965
  %3027 = vmatpush1.bf16.msra.mxu0 %v2964
  %3028 = vmatprep.subr.bf16.mxu0 0
  %3029 = vmatpush2.bf16.msra.mxu0 0
  %3030 = vmatprep.subr.bf16.mxu0 0
  %3031 = vmatpush2.bf16.msra.mxu0 0
  %3032 = vmatprep.subr.bf16.mxu0 0
  %3033 = vmatpush2.bf16.msra.mxu0 0
  %3034 = vmatprep.subr.bf16.mxu0 0
  %3035 = vmatpush2.bf16.msra.mxu0 0
  %3036 = vmatprep.subr.bf16.mxu0 0
  %3037 = vmatpush2.bf16.msra.mxu0 0
  %3038 = vmatprep.subr.bf16.mxu0 0
  %3039 = vmatpush2.bf16.msra.mxu0 0
  %3040 = vmatprep.subr.bf16.mxu0 0
  %3041 = vmatpush2.bf16.msra.mxu0 0
  %3042 = vmatprep.subr.bf16.mxu0 0
  %3043 = vmatpush2.bf16.msra.mxu0 0
  %3044 = vmatprep.mubr.bf16.mxu0 0
  %3045 = vmatmul.mubr.bf16.gmra.mxu0 %v2851
  %v3046 = vpop.f32.mrf.mxu0
  %v3047 = vadd.f32 %v247, %v3046
  %v3048 = vpop.f32.mrf.mxu0
  %v3049 = vadd.f32 %v249, %v3048
  %v3050 = vpop.f32.mrf.mxu0
  %v3051 = vpop.f32.mrf.mxu0
  %3052 = vdwg.mxu0
  %3053 = vmatprep.subr.bf16.mxu0 0
  %3054 = vmatpush1.bf16.msra.mxu0 %v2987
  %3055 = vmatprep.subr.bf16.mxu0 0
  %3056 = vmatpush1.bf16.msra.mxu0 %v2984
  %3057 = vmatprep.subr.bf16.mxu0 0
  %3058 = vmatpush1.bf16.msra.mxu0 %v2981
  %3059 = vmatprep.subr.bf16.mxu0 0
  %3060 = vmatpush1.bf16.msra.mxu0 %v2978
  %3061 = vmatprep.subr.bf16.mxu0 0
  %3062 = vmatpush1.bf16.msra.mxu0 %v2975
  %3063 = vmatprep.subr.bf16.mxu0 0
  %3064 = vmatpush1.bf16.msra.mxu0 %v2972
  %3065 = vmatprep.subr.bf16.mxu0 0
  %3066 = vmatpush1.bf16.msra.mxu0 %v2969
  %3067 = vmatprep.subr.bf16.mxu0 0
  %3068 = vmatpush1.bf16.msra.mxu0 %v2966
  %3069 = vmatprep.subr.bf16.mxu0 0
  %3070 = vmatpush2.bf16.msra.mxu0 0
  %3071 = vmatprep.subr.bf16.mxu0 0
  %3072 = vmatpush2.bf16.msra.mxu0 0
  %3073 = vmatprep.subr.bf16.mxu0 0
  %3074 = vmatpush2.bf16.msra.mxu0 0
  %3075 = vmatprep.subr.bf16.mxu0 0
  %3076 = vmatpush2.bf16.msra.mxu0 0
  %3077 = vmatprep.subr.bf16.mxu0 0
  %3078 = vmatpush2.bf16.msra.mxu0 0
  %3079 = vmatprep.subr.bf16.mxu0 0
  %3080 = vmatpush2.bf16.msra.mxu0 0
  %3081 = vmatprep.subr.bf16.mxu0 0
  %3082 = vmatpush2.bf16.msra.mxu0 0
  %3083 = vmatprep.subr.bf16.mxu0 0
  %3084 = vmatpush2.bf16.msra.mxu0 0
  %3085 = vmatprep.mubr.bf16.mxu0 0
  %3086 = vmatmul.mubr.bf16.gmra.mxu0 %v2851
  %v3087 = vpop.f32.mrf.mxu0
  %v3088 = vadd.f32 %v288, %v3087
  %v3089 = vpop.f32.mrf.mxu0
  %v3090 = vpop.f32.mrf.mxu0
  %v3091 = vpop.f32.mrf.mxu0
  %3092 = vdwg.mxu0
  %v3093 = vld [vmem:[%s5] sm:$0xff]
  %v3094 = vld [vmem:[%s5 + $0x8] sm:$0xf]
  %v3095 = vld [vmem:[%s5 + $0xc] sm:$0xff]
  %v3096 = vld [vmem:[%s5 + $0x14] sm:$0xf]
  %v3097 = vld [vmem:[%s5 + $0x18] sm:$0xff]
  %v3098 = vld [vmem:[%s5 + $0x20] sm:$0xf]
  %v3099 = vld [vmem:[%s5 + $0x24] sm:$0xff]
  %v3100 = vld [vmem:[%s5 + $0x2c] sm:$0xf]
  %v3101 = vld [vmem:[%s5 + $0x30] sm:$0xff]
  %v3102 = vld [vmem:[%s5 + $0x38] sm:$0xf]
  %v3103 = vld [vmem:[%s5 + $0x3c] sm:$0xff]
  %v3104 = vld [vmem:[%s5 + $0x44] sm:$0xf]
  %v3105 = vld [vmem:[%s5 + $0x48] sm:$0xff]
  %v3106 = vld [vmem:[%s5 + $0x50] sm:$0xf]
  %v3107 = vld [vmem:[%s5 + $0x54] sm:$0xff]
  %v3108 = vld [vmem:[%s5 + $0x5c] sm:$0xf]
  %v3109 = vld [vmem:[%s5 + $0x60] sm:$0xff]
  %v3110 = vld [vmem:[%s5 + $0x68] sm:$0xf]
  %v3111 = vld [vmem:[%s5 + $0x6c] sm:$0xff]
  %v3112 = vld [vmem:[%s5 + $0x74] sm:$0xf]
  %v3113 = vld [vmem:[%s5 + $0x78] sm:$0xff]
  %v3114 = vld [vmem:[%s5 + $0x80] sm:$0xf]
  %v3115 = vld [vmem:[%s5 + $0x84] sm:$0xff]
  %v3116 = vld [vmem:[%s5 + $0x8c] sm:$0xf]
  %v3117 = vld [vmem:[%s5 + $0x90] sm:$0xff]
  %v3118 = vld [vmem:[%s5 + $0x98] sm:$0xf]
  %v3119 = vld [vmem:[%s5 + $0x9c] sm:$0xff]
  %v3120 = vld [vmem:[%s5 + $0xa4] sm:$0xf]
  %v3121 = vld [vmem:[%s5 + $0xa8] sm:$0xff]
  %v3122 = vld [vmem:[%s5 + $0xb0] sm:$0xf]
  %v3123 = vld [vmem:[%s5 + $0xb4] sm:$0xff]
  %v3124 = vld [vmem:[%s5 + $0xbc] sm:$0xf]
  %v3157 = vunpack.c.l.b16 %v3093
  %v3158 = vunpack.c.h.b16 %v3093
  %v3159 = vunpack.c.l.b16 %v3094
  %v3160 = vunpack.c.l.b16 %v3095
  %v3161 = vunpack.c.h.b16 %v3095
  %v3162 = vunpack.c.l.b16 %v3096
  %v3163 = vunpack.c.l.b16 %v3097
  %v3164 = vunpack.c.h.b16 %v3097
  %v3165 = vunpack.c.l.b16 %v3098
  %v3166 = vunpack.c.l.b16 %v3099
  %v3167 = vunpack.c.h.b16 %v3099
  %v3168 = vunpack.c.l.b16 %v3100
  %v3169 = vunpack.c.l.b16 %v3101
  %v3170 = vunpack.c.h.b16 %v3101
  %v3171 = vunpack.c.l.b16 %v3102
  %v3172 = vunpack.c.l.b16 %v3103
  %v3173 = vunpack.c.h.b16 %v3103
  %v3174 = vunpack.c.l.b16 %v3104
  %v3175 = vunpack.c.l.b16 %v3105
  %v3176 = vunpack.c.h.b16 %v3105
  %v3177 = vunpack.c.l.b16 %v3106
  %v3178 = vunpack.c.l.b16 %v3107
  %v3179 = vunpack.c.h.b16 %v3107
  %v3180 = vunpack.c.l.b16 %v3108
  %v3181 = vunpack.c.l.b16 %v3109
  %v3182 = vunpack.c.h.b16 %v3109
  %v3183 = vunpack.c.l.b16 %v3110
  %v3184 = vunpack.c.l.b16 %v3111
  %v3185 = vunpack.c.h.b16 %v3111
  %v3186 = vunpack.c.l.b16 %v3112
  %v3187 = vunpack.c.l.b16 %v3113
  %v3188 = vunpack.c.h.b16 %v3113
  %v3189 = vunpack.c.l.b16 %v3114
  %v3190 = vunpack.c.l.b16 %v3115
  %v3191 = vunpack.c.h.b16 %v3115
  %v3192 = vunpack.c.l.b16 %v3116
  %v3193 = vunpack.c.l.b16 %v3117
  %v3194 = vunpack.c.h.b16 %v3117
  %v3195 = vunpack.c.l.b16 %v3118
  %v3196 = vunpack.c.l.b16 %v3119
  %v3197 = vunpack.c.h.b16 %v3119
  %v3198 = vunpack.c.l.b16 %v3120
  %v3199 = vunpack.c.l.b16 %v3121
  %v3200 = vunpack.c.h.b16 %v3121
  %v3201 = vunpack.c.l.b16 %v3122
  %v3202 = vunpack.c.l.b16 %v3123
  %v3203 = vunpack.c.h.b16 %v3123
  %v3204 = vunpack.c.l.b16 %v3124
  %v3205 = vpack.c.b16 %v3160, %v3157
  %v3206 = vpack.c.b16 %v3161, %v3158
  %v3207 = vpack.c.b16 %v3162, %v3159
  %v3208 = vpack.c.b16 %v3166, %v3163
  %v3209 = vpack.c.b16 %v3167, %v3164
  %v3210 = vpack.c.b16 %v3168, %v3165
  %v3211 = vpack.c.b16 %v3172, %v3169
  %v3212 = vpack.c.b16 %v3173, %v3170
  %v3213 = vpack.c.b16 %v3174, %v3171
  %v3214 = vpack.c.b16 %v3178, %v3175
  %v3215 = vpack.c.b16 %v3179, %v3176
  %v3216 = vpack.c.b16 %v3180, %v3177
  %v3217 = vpack.c.b16 %v3184, %v3181
  %v3218 = vpack.c.b16 %v3185, %v3182
  %v3219 = vpack.c.b16 %v3186, %v3183
  %v3220 = vpack.c.b16 %v3190, %v3187
  %v3221 = vpack.c.b16 %v3191, %v3188
  %v3222 = vpack.c.b16 %v3192, %v3189
  %v3223 = vpack.c.b16 %v3196, %v3193
  %v3224 = vpack.c.b16 %v3197, %v3194
  %v3225 = vpack.c.b16 %v3198, %v3195
  %v3226 = vpack.c.b16 %v3202, %v3199
  %v3227 = vpack.c.b16 %v3203, %v3200
  %v3228 = vpack.c.b16 %v3204, %v3201
  %3253 = vmatprep.subr.bf16.mxu0 %v3227
  %3254 = vmatpush1.bf16.msra.mxu0 %v3226
  %3255 = vmatprep.subr.bf16.mxu0 %v3224
  %3256 = vmatpush1.bf16.msra.mxu0 %v3223
  %3257 = vmatprep.subr.bf16.mxu0 %v3221
  %3258 = vmatpush1.bf16.msra.mxu0 %v3220
  %3259 = vmatprep.subr.bf16.mxu0 %v3218
  %3260 = vmatpush1.bf16.msra.mxu0 %v3217
  %3261 = vmatprep.subr.bf16.mxu0 %v3215
  %3262 = vmatpush1.bf16.msra.mxu0 %v3214
  %3263 = vmatprep.subr.bf16.mxu0 %v3212
  %3264 = vmatpush1.bf16.msra.mxu0 %v3211
  %3265 = vmatprep.subr.bf16.mxu0 %v3209
  %3266 = vmatpush1.bf16.msra.mxu0 %v3208
  %3267 = vmatprep.subr.bf16.mxu0 %v3206
  %3268 = vmatpush1.bf16.msra.mxu0 %v3205
  %3269 = vmatprep.subr.bf16.mxu0 0
  %3270 = vmatpush2.bf16.msra.mxu0 0
  %3271 = vmatprep.subr.bf16.mxu0 0
  %3272 = vmatpush2.bf16.msra.mxu0 0
  %3273 = vmatprep.subr.bf16.mxu0 0
  %3274 = vmatpush2.bf16.msra.mxu0 0
  %3275 = vmatprep.subr.bf16.mxu0 0
  %3276 = vmatpush2.bf16.msra.mxu0 0
  %3277 = vmatprep.subr.bf16.mxu0 0
  %3278 = vmatpush2.bf16.msra.mxu0 0
  %3279 = vmatprep.subr.bf16.mxu0 0
  %3280 = vmatpush2.bf16.msra.mxu0 0
  %3281 = vmatprep.subr.bf16.mxu0 0
  %3282 = vmatpush2.bf16.msra.mxu0 0
  %3283 = vmatprep.subr.bf16.mxu0 0
  %3284 = vmatpush2.bf16.msra.mxu0 0
  %3285 = vmatprep.mubr.bf16.mxu0 0
  %3286 = vmatmul.mubr.bf16.gmra.mxu0 %v2847
  %v3287 = vpop.f32.mrf.mxu0
  %v3288 = vadd.f32 %v574, %v3287
  %v3289 = vpop.f32.mrf.mxu0
  %v3290 = vadd.f32 %v578, %v3289
  %v3291 = vpop.f32.mrf.mxu0
  %v3292 = vpop.f32.mrf.mxu0
  %3293 = vdwg.mxu0
  %3294 = vmatprep.subr.bf16.mxu0 0
  %3295 = vmatpush1.bf16.msra.mxu0 %v3228
  %3296 = vmatprep.subr.bf16.mxu0 0
  %3297 = vmatpush1.bf16.msra.mxu0 %v3225
  %3298 = vmatprep.subr.bf16.mxu0 0
  %3299 = vmatpush1.bf16.msra.mxu0 %v3222
  %3300 = vmatprep.subr.bf16.mxu0 0
  %3301 = vmatpush1.bf16.msra.mxu0 %v3219
  %3302 = vmatprep.subr.bf16.mxu0 0
  %3303 = vmatpush1.bf16.msra.mxu0 %v3216
  %3304 = vmatprep.subr.bf16.mxu0 0
  %3305 = vmatpush1.bf16.msra.mxu0 %v3213
  %3306 = vmatprep.subr.bf16.mxu0 0
  %3307 = vmatpush1.bf16.msra.mxu0 %v3210
  %3308 = vmatprep.subr.bf16.mxu0 0
  %3309 = vmatpush1.bf16.msra.mxu0 %v3207
  %3310 = vmatprep.subr.bf16.mxu0 0
  %3311 = vmatpush2.bf16.msra.mxu0 0
  %3312 = vmatprep.subr.bf16.mxu0 0
  %3313 = vmatpush2.bf16.msra.mxu0 0
  %3314 = vmatprep.subr.bf16.mxu0 0
  %3315 = vmatpush2.bf16.msra.mxu0 0
  %3316 = vmatprep.subr.bf16.mxu0 0
  %3317 = vmatpush2.bf16.msra.mxu0 0
  %3318 = vmatprep.subr.bf16.mxu0 0
  %3319 = vmatpush2.bf16.msra.mxu0 0
  %3320 = vmatprep.subr.bf16.mxu0 0
  %3321 = vmatpush2.bf16.msra.mxu0 0
  %3322 = vmatprep.subr.bf16.mxu0 0
  %3323 = vmatpush2.bf16.msra.mxu0 0
  %3324 = vmatprep.subr.bf16.mxu0 0
  %3325 = vmatpush2.bf16.msra.mxu0 0
  %3326 = vmatprep.mubr.bf16.mxu0 0
  %3327 = vmatmul.mubr.bf16.gmra.mxu0 %v2847
  %v3328 = vpop.f32.mrf.mxu0
  %v3329 = vadd.f32 %v582, %v3328
  %v3330 = vpop.f32.mrf.mxu0
  %v3331 = vpop.f32.mrf.mxu0
  %v3332 = vpop.f32.mrf.mxu0
  %3333 = vdwg.mxu0
  %v3334 = vadd.f32 %v3047, %v3288
  %v3335 = vxor.u32 %v3334, 2147483648
  %v3336 = vmul.f32 %v3335, 1.442695
  %v3337 = vpow.pop %v3336
  %v3338 = vadd.f32 %v3337, 1.0
  %v3339 = vrcp.pop %v3338
  %v3340 = vmul.f32 1.0, %v3339
  %v3341 = vadd.f32 %v3049, %v3290
  %v3342 = vxor.u32 %v3341, 2147483648
  %v3343 = vmul.f32 %v3342, 1.442695
  %v3344 = vpow.pop %v3343
  %v3345 = vadd.f32 %v3344, 1.0
  %v3346 = vrcp.pop %v3345
  %v3347 = vmul.f32 1.0, %v3346
  %v3348 = vmul.f32 %v3340, %v3329
  %v3349 = vadd.f32 %v3088, %v3348
  %v3350 = vtanh.pop %v3349
  %v3351 = vsub.f32 1.0, %v3347
  %v3352 = vmul.f32 %v3351, %v3350
  %v3353 = vmul.f32 %v3347, %v2846
  %v3354 = vadd.f32 %v3352, %v3353
  %v3355 = vpack.c.bf16 %v3354, %v3354
  %s3356 = scalar_lea.vmem %s7, 20
  %3357 = vst [vmem:[%s3356] sm:$0xf] %v3355
  %s3358 = scalar_lea.vmem %s0, 24
  %v3359 = vld [vmem:[%s3358] sm:$0xf]
  %v3360 = vld [vmem:[%s2] sm:$0xff]
  %v3361 = vld [vmem:[%s2 + $0x8] sm:$0xf]
  %v3362 = vld [vmem:[%s2 + $0xc] sm:$0xff]
  %v3363 = vld [vmem:[%s2 + $0x14] sm:$0xf]
  %v3364 = vld [vmem:[%s2 + $0x18] sm:$0xff]
  %v3365 = vld [vmem:[%s2 + $0x20] sm:$0xf]
  %v3366 = vld [vmem:[%s2 + $0x24] sm:$0xff]
  %v3367 = vld [vmem:[%s2 + $0x2c] sm:$0xf]
  %v3368 = vld [vmem:[%s2 + $0x30] sm:$0xff]
  %v3369 = vld [vmem:[%s2 + $0x38] sm:$0xf]
  %v3370 = vld [vmem:[%s2 + $0x3c] sm:$0xff]
  %v3371 = vld [vmem:[%s2 + $0x44] sm:$0xf]
  %v3372 = vld [vmem:[%s2 + $0x48] sm:$0xff]
  %v3373 = vld [vmem:[%s2 + $0x50] sm:$0xf]
  %v3374 = vld [vmem:[%s2 + $0x54] sm:$0xff]
  %v3375 = vld [vmem:[%s2 + $0x5c] sm:$0xf]
  %v3376 = vld [vmem:[%s2 + $0x60] sm:$0xff]
  %v3377 = vld [vmem:[%s2 + $0x68] sm:$0xf]
  %v3378 = vld [vmem:[%s2 + $0x6c] sm:$0xff]
  %v3379 = vld [vmem:[%s2 + $0x74] sm:$0xf]
  %v3380 = vld [vmem:[%s2 + $0x78] sm:$0xff]
  %v3381 = vld [vmem:[%s2 + $0x80] sm:$0xf]
  %v3382 = vld [vmem:[%s2 + $0x84] sm:$0xff]
  %v3383 = vld [vmem:[%s2 + $0x8c] sm:$0xf]
  %v3384 = vld [vmem:[%s2 + $0x90] sm:$0xff]
  %v3385 = vld [vmem:[%s2 + $0x98] sm:$0xf]
  %v3386 = vld [vmem:[%s2 + $0x9c] sm:$0xff]
  %v3387 = vld [vmem:[%s2 + $0xa4] sm:$0xf]
  %v3388 = vld [vmem:[%s2 + $0xa8] sm:$0xff]
  %v3389 = vld [vmem:[%s2 + $0xb0] sm:$0xf]
  %v3390 = vld [vmem:[%s2 + $0xb4] sm:$0xff]
  %v3391 = vld [vmem:[%s2 + $0xbc] sm:$0xf]
  %v3424 = vunpack.c.l.b16 %v3360
  %v3425 = vunpack.c.h.b16 %v3360
  %v3426 = vunpack.c.l.b16 %v3361
  %v3427 = vunpack.c.l.b16 %v3362
  %v3428 = vunpack.c.h.b16 %v3362
  %v3429 = vunpack.c.l.b16 %v3363
  %v3430 = vunpack.c.l.b16 %v3364
  %v3431 = vunpack.c.h.b16 %v3364
  %v3432 = vunpack.c.l.b16 %v3365
  %v3433 = vunpack.c.l.b16 %v3366
  %v3434 = vunpack.c.h.b16 %v3366
  %v3435 = vunpack.c.l.b16 %v3367
  %v3436 = vunpack.c.l.b16 %v3368
  %v3437 = vunpack.c.h.b16 %v3368
  %v3438 = vunpack.c.l.b16 %v3369
  %v3439 = vunpack.c.l.b16 %v3370
  %v3440 = vunpack.c.h.b16 %v3370
  %v3441 = vunpack.c.l.b16 %v3371
  %v3442 = vunpack.c.l.b16 %v3372
  %v3443 = vunpack.c.h.b16 %v3372
  %v3444 = vunpack.c.l.b16 %v3373
  %v3445 = vunpack.c.l.b16 %v3374
  %v3446 = vunpack.c.h.b16 %v3374
  %v3447 = vunpack.c.l.b16 %v3375
  %v3448 = vunpack.c.l.b16 %v3376
  %v3449 = vunpack.c.h.b16 %v3376
  %v3450 = vunpack.c.l.b16 %v3377
  %v3451 = vunpack.c.l.b16 %v3378
  %v3452 = vunpack.c.h.b16 %v3378
  %v3453 = vunpack.c.l.b16 %v3379
  %v3454 = vunpack.c.l.b16 %v3380
  %v3455 = vunpack.c.h.b16 %v3380
  %v3456 = vunpack.c.l.b16 %v3381
  %v3457 = vunpack.c.l.b16 %v3382
  %v3458 = vunpack.c.h.b16 %v3382
  %v3459 = vunpack.c.l.b16 %v3383
  %v3460 = vunpack.c.l.b16 %v3384
  %v3461 = vunpack.c.h.b16 %v3384
  %v3462 = vunpack.c.l.b16 %v3385
  %v3463 = vunpack.c.l.b16 %v3386
  %v3464 = vunpack.c.h.b16 %v3386
  %v3465 = vunpack.c.l.b16 %v3387
  %v3466 = vunpack.c.l.b16 %v3388
  %v3467 = vunpack.c.h.b16 %v3388
  %v3468 = vunpack.c.l.b16 %v3389
  %v3469 = vunpack.c.l.b16 %v3390
  %v3470 = vunpack.c.h.b16 %v3390
  %v3471 = vunpack.c.l.b16 %v3391
  %v3472 = vpack.c.b16 %v3427, %v3424
  %v3473 = vpack.c.b16 %v3428, %v3425
  %v3474 = vpack.c.b16 %v3429, %v3426
  %v3475 = vpack.c.b16 %v3433, %v3430
  %v3476 = vpack.c.b16 %v3434, %v3431
  %v3477 = vpack.c.b16 %v3435, %v3432
  %v3478 = vpack.c.b16 %v3439, %v3436
  %v3479 = vpack.c.b16 %v3440, %v3437
  %v3480 = vpack.c.b16 %v3441, %v3438
  %v3481 = vpack.c.b16 %v3445, %v3442
  %v3482 = vpack.c.b16 %v3446, %v3443
  %v3483 = vpack.c.b16 %v3447, %v3444
  %v3484 = vpack.c.b16 %v3451, %v3448
  %v3485 = vpack.c.b16 %v3452, %v3449
  %v3486 = vpack.c.b16 %v3453, %v3450
  %v3487 = vpack.c.b16 %v3457, %v3454
  %v3488 = vpack.c.b16 %v3458, %v3455
  %v3489 = vpack.c.b16 %v3459, %v3456
  %v3490 = vpack.c.b16 %v3463, %v3460
  %v3491 = vpack.c.b16 %v3464, %v3461
  %v3492 = vpack.c.b16 %v3465, %v3462
  %v3493 = vpack.c.b16 %v3469, %v3466
  %v3494 = vpack.c.b16 %v3470, %v3467
  %v3495 = vpack.c.b16 %v3471, %v3468
  %3520 = vmatprep.subr.bf16.mxu0 %v3494
  %3521 = vmatpush1.bf16.msra.mxu0 %v3493
  %3522 = vmatprep.subr.bf16.mxu0 %v3491
  %3523 = vmatpush1.bf16.msra.mxu0 %v3490
  %3524 = vmatprep.subr.bf16.mxu0 %v3488
  %3525 = vmatpush1.bf16.msra.mxu0 %v3487
  %3526 = vmatprep.subr.bf16.mxu0 %v3485
  %3527 = vmatpush1.bf16.msra.mxu0 %v3484
  %3528 = vmatprep.subr.bf16.mxu0 %v3482
  %3529 = vmatpush1.bf16.msra.mxu0 %v3481
  %3530 = vmatprep.subr.bf16.mxu0 %v3479
  %3531 = vmatpush1.bf16.msra.mxu0 %v3478
  %3532 = vmatprep.subr.bf16.mxu0 %v3476
  %3533 = vmatpush1.bf16.msra.mxu0 %v3475
  %3534 = vmatprep.subr.bf16.mxu0 %v3473
  %3535 = vmatpush1.bf16.msra.mxu0 %v3472
  %3536 = vmatprep.subr.bf16.mxu0 0
  %3537 = vmatpush2.bf16.msra.mxu0 0
  %3538 = vmatprep.subr.bf16.mxu0 0
  %3539 = vmatpush2.bf16.msra.mxu0 0
  %3540 = vmatprep.subr.bf16.mxu0 0
  %3541 = vmatpush2.bf16.msra.mxu0 0
  %3542 = vmatprep.subr.bf16.mxu0 0
  %3543 = vmatpush2.bf16.msra.mxu0 0
  %3544 = vmatprep.subr.bf16.mxu0 0
  %3545 = vmatpush2.bf16.msra.mxu0 0
  %3546 = vmatprep.subr.bf16.mxu0 0
  %3547 = vmatpush2.bf16.msra.mxu0 0
  %3548 = vmatprep.subr.bf16.mxu0 0
  %3549 = vmatpush2.bf16.msra.mxu0 0
  %3550 = vmatprep.subr.bf16.mxu0 0
  %3551 = vmatpush2.bf16.msra.mxu0 0
  %3552 = vmatprep.mubr.bf16.mxu0 0
  %3553 = vmatmul.mubr.bf16.gmra.mxu0 %v3359
  %v3554 = vpop.f32.mrf.mxu0
  %v3555 = vadd.f32 %v247, %v3554
  %v3556 = vpop.f32.mrf.mxu0
  %v3557 = vadd.f32 %v249, %v3556
  %v3558 = vpop.f32.mrf.mxu0
  %v3559 = vpop.f32.mrf.mxu0
  %3560 = vdwg.mxu0
  %3561 = vmatprep.subr.bf16.mxu0 0
  %3562 = vmatpush1.bf16.msra.mxu0 %v3495
  %3563 = vmatprep.subr.bf16.mxu0 0
  %3564 = vmatpush1.bf16.msra.mxu0 %v3492
  %3565 = vmatprep.subr.bf16.mxu0 0
  %3566 = vmatpush1.bf16.msra.mxu0 %v3489
  %3567 = vmatprep.subr.bf16.mxu0 0
  %3568 = vmatpush1.bf16.msra.mxu0 %v3486
  %3569 = vmatprep.subr.bf16.mxu0 0
  %3570 = vmatpush1.bf16.msra.mxu0 %v3483
  %3571 = vmatprep.subr.bf16.mxu0 0
  %3572 = vmatpush1.bf16.msra.mxu0 %v3480
  %3573 = vmatprep.subr.bf16.mxu0 0
  %3574 = vmatpush1.bf16.msra.mxu0 %v3477
  %3575 = vmatprep.subr.bf16.mxu0 0
  %3576 = vmatpush1.bf16.msra.mxu0 %v3474
  %3577 = vmatprep.subr.bf16.mxu0 0
  %3578 = vmatpush2.bf16.msra.mxu0 0
  %3579 = vmatprep.subr.bf16.mxu0 0
  %3580 = vmatpush2.bf16.msra.mxu0 0
  %3581 = vmatprep.subr.bf16.mxu0 0
  %3582 = vmatpush2.bf16.msra.mxu0 0
  %3583 = vmatprep.subr.bf16.mxu0 0
  %3584 = vmatpush2.bf16.msra.mxu0 0
  %3585 = vmatprep.subr.bf16.mxu0 0
  %3586 = vmatpush2.bf16.msra.mxu0 0
  %3587 = vmatprep.subr.bf16.mxu0 0
  %3588 = vmatpush2.bf16.msra.mxu0 0
  %3589 = vmatprep.subr.bf16.mxu0 0
  %3590 = vmatpush2.bf16.msra.mxu0 0
  %3591 = vmatprep.subr.bf16.mxu0 0
  %3592 = vmatpush2.bf16.msra.mxu0 0
  %3593 = vmatprep.mubr.bf16.mxu0 0
  %3594 = vmatmul.mubr.bf16.gmra.mxu0 %v3359
  %v3595 = vpop.f32.mrf.mxu0
  %v3596 = vadd.f32 %v288, %v3595
  %v3597 = vpop.f32.mrf.mxu0
  %v3598 = vpop.f32.mrf.mxu0
  %v3599 = vpop.f32.mrf.mxu0
  %3600 = vdwg.mxu0
  %v3601 = vld [vmem:[%s5] sm:$0xff]
  %v3602 = vld [vmem:[%s5 + $0x8] sm:$0xf]
  %v3603 = vld [vmem:[%s5 + $0xc] sm:$0xff]
  %v3604 = vld [vmem:[%s5 + $0x14] sm:$0xf]
  %v3605 = vld [vmem:[%s5 + $0x18] sm:$0xff]
  %v3606 = vld [vmem:[%s5 + $0x20] sm:$0xf]
  %v3607 = vld [vmem:[%s5 + $0x24] sm:$0xff]
  %v3608 = vld [vmem:[%s5 + $0x2c] sm:$0xf]
  %v3609 = vld [vmem:[%s5 + $0x30] sm:$0xff]
  %v3610 = vld [vmem:[%s5 + $0x38] sm:$0xf]
  %v3611 = vld [vmem:[%s5 + $0x3c] sm:$0xff]
  %v3612 = vld [vmem:[%s5 + $0x44] sm:$0xf]
  %v3613 = vld [vmem:[%s5 + $0x48] sm:$0xff]
  %v3614 = vld [vmem:[%s5 + $0x50] sm:$0xf]
  %v3615 = vld [vmem:[%s5 + $0x54] sm:$0xff]
  %v3616 = vld [vmem:[%s5 + $0x5c] sm:$0xf]
  %v3617 = vld [vmem:[%s5 + $0x60] sm:$0xff]
  %v3618 = vld [vmem:[%s5 + $0x68] sm:$0xf]
  %v3619 = vld [vmem:[%s5 + $0x6c] sm:$0xff]
  %v3620 = vld [vmem:[%s5 + $0x74] sm:$0xf]
  %v3621 = vld [vmem:[%s5 + $0x78] sm:$0xff]
  %v3622 = vld [vmem:[%s5 + $0x80] sm:$0xf]
  %v3623 = vld [vmem:[%s5 + $0x84] sm:$0xff]
  %v3624 = vld [vmem:[%s5 + $0x8c] sm:$0xf]
  %v3625 = vld [vmem:[%s5 + $0x90] sm:$0xff]
  %v3626 = vld [vmem:[%s5 + $0x98] sm:$0xf]
  %v3627 = vld [vmem:[%s5 + $0x9c] sm:$0xff]
  %v3628 = vld [vmem:[%s5 + $0xa4] sm:$0xf]
  %v3629 = vld [vmem:[%s5 + $0xa8] sm:$0xff]
  %v3630 = vld [vmem:[%s5 + $0xb0] sm:$0xf]
  %v3631 = vld [vmem:[%s5 + $0xb4] sm:$0xff]
  %v3632 = vld [vmem:[%s5 + $0xbc] sm:$0xf]
  %v3665 = vunpack.c.l.b16 %v3601
  %v3666 = vunpack.c.h.b16 %v3601
  %v3667 = vunpack.c.l.b16 %v3602
  %v3668 = vunpack.c.l.b16 %v3603
  %v3669 = vunpack.c.h.b16 %v3603
  %v3670 = vunpack.c.l.b16 %v3604
  %v3671 = vunpack.c.l.b16 %v3605
  %v3672 = vunpack.c.h.b16 %v3605
  %v3673 = vunpack.c.l.b16 %v3606
  %v3674 = vunpack.c.l.b16 %v3607
  %v3675 = vunpack.c.h.b16 %v3607
  %v3676 = vunpack.c.l.b16 %v3608
  %v3677 = vunpack.c.l.b16 %v3609
  %v3678 = vunpack.c.h.b16 %v3609
  %v3679 = vunpack.c.l.b16 %v3610
  %v3680 = vunpack.c.l.b16 %v3611
  %v3681 = vunpack.c.h.b16 %v3611
  %v3682 = vunpack.c.l.b16 %v3612
  %v3683 = vunpack.c.l.b16 %v3613
  %v3684 = vunpack.c.h.b16 %v3613
  %v3685 = vunpack.c.l.b16 %v3614
  %v3686 = vunpack.c.l.b16 %v3615
  %v3687 = vunpack.c.h.b16 %v3615
  %v3688 = vunpack.c.l.b16 %v3616
  %v3689 = vunpack.c.l.b16 %v3617
  %v3690 = vunpack.c.h.b16 %v3617
  %v3691 = vunpack.c.l.b16 %v3618
  %v3692 = vunpack.c.l.b16 %v3619
  %v3693 = vunpack.c.h.b16 %v3619
  %v3694 = vunpack.c.l.b16 %v3620
  %v3695 = vunpack.c.l.b16 %v3621
  %v3696 = vunpack.c.h.b16 %v3621
  %v3697 = vunpack.c.l.b16 %v3622
  %v3698 = vunpack.c.l.b16 %v3623
  %v3699 = vunpack.c.h.b16 %v3623
  %v3700 = vunpack.c.l.b16 %v3624
  %v3701 = vunpack.c.l.b16 %v3625
  %v3702 = vunpack.c.h.b16 %v3625
  %v3703 = vunpack.c.l.b16 %v3626
  %v3704 = vunpack.c.l.b16 %v3627
  %v3705 = vunpack.c.h.b16 %v3627
  %v3706 = vunpack.c.l.b16 %v3628
  %v3707 = vunpack.c.l.b16 %v3629
  %v3708 = vunpack.c.h.b16 %v3629
  %v3709 = vunpack.c.l.b16 %v3630
  %v3710 = vunpack.c.l.b16 %v3631
  %v3711 = vunpack.c.h.b16 %v3631
  %v3712 = vunpack.c.l.b16 %v3632
  %v3713 = vpack.c.b16 %v3668, %v3665
  %v3714 = vpack.c.b16 %v3669, %v3666
  %v3715 = vpack.c.b16 %v3670, %v3667
  %v3716 = vpack.c.b16 %v3674, %v3671
  %v3717 = vpack.c.b16 %v3675, %v3672
  %v3718 = vpack.c.b16 %v3676, %v3673
  %v3719 = vpack.c.b16 %v3680, %v3677
  %v3720 = vpack.c.b16 %v3681, %v3678
  %v3721 = vpack.c.b16 %v3682, %v3679
  %v3722 = vpack.c.b16 %v3686, %v3683
  %v3723 = vpack.c.b16 %v3687, %v3684
  %v3724 = vpack.c.b16 %v3688, %v3685
  %v3725 = vpack.c.b16 %v3692, %v3689
  %v3726 = vpack.c.b16 %v3693, %v3690
  %v3727 = vpack.c.b16 %v3694, %v3691
  %v3728 = vpack.c.b16 %v3698, %v3695
  %v3729 = vpack.c.b16 %v3699, %v3696
  %v3730 = vpack.c.b16 %v3700, %v3697
  %v3731 = vpack.c.b16 %v3704, %v3701
  %v3732 = vpack.c.b16 %v3705, %v3702
  %v3733 = vpack.c.b16 %v3706, %v3703
  %v3734 = vpack.c.b16 %v3710, %v3707
  %v3735 = vpack.c.b16 %v3711, %v3708
  %v3736 = vpack.c.b16 %v3712, %v3709
  %3761 = vmatprep.subr.bf16.mxu0 %v3735
  %3762 = vmatpush1.bf16.msra.mxu0 %v3734
  %3763 = vmatprep.subr.bf16.mxu0 %v3732
  %3764 = vmatpush1.bf16.msra.mxu0 %v3731
  %3765 = vmatprep.subr.bf16.mxu0 %v3729
  %3766 = vmatpush1.bf16.msra.mxu0 %v3728
  %3767 = vmatprep.subr.bf16.mxu0 %v3726
  %3768 = vmatpush1.bf16.msra.mxu0 %v3725
  %3769 = vmatprep.subr.bf16.mxu0 %v3723
  %3770 = vmatpush1.bf16.msra.mxu0 %v3722
  %3771 = vmatprep.subr.bf16.mxu0 %v3720
  %3772 = vmatpush1.bf16.msra.mxu0 %v3719
  %3773 = vmatprep.subr.bf16.mxu0 %v3717
  %3774 = vmatpush1.bf16.msra.mxu0 %v3716
  %3775 = vmatprep.subr.bf16.mxu0 %v3714
  %3776 = vmatpush1.bf16.msra.mxu0 %v3713
  %3777 = vmatprep.subr.bf16.mxu0 0
  %3778 = vmatpush2.bf16.msra.mxu0 0
  %3779 = vmatprep.subr.bf16.mxu0 0
  %3780 = vmatpush2.bf16.msra.mxu0 0
  %3781 = vmatprep.subr.bf16.mxu0 0
  %3782 = vmatpush2.bf16.msra.mxu0 0
  %3783 = vmatprep.subr.bf16.mxu0 0
  %3784 = vmatpush2.bf16.msra.mxu0 0
  %3785 = vmatprep.subr.bf16.mxu0 0
  %3786 = vmatpush2.bf16.msra.mxu0 0
  %3787 = vmatprep.subr.bf16.mxu0 0
  %3788 = vmatpush2.bf16.msra.mxu0 0
  %3789 = vmatprep.subr.bf16.mxu0 0
  %3790 = vmatpush2.bf16.msra.mxu0 0
  %3791 = vmatprep.subr.bf16.mxu0 0
  %3792 = vmatpush2.bf16.msra.mxu0 0
  %3793 = vmatprep.mubr.bf16.mxu0 0
  %3794 = vmatmul.mubr.bf16.gmra.mxu0 %v3355
  %v3795 = vpop.f32.mrf.mxu0
  %v3796 = vadd.f32 %v574, %v3795
  %v3797 = vpop.f32.mrf.mxu0
  %v3798 = vadd.f32 %v578, %v3797
  %v3799 = vpop.f32.mrf.mxu0
  %v3800 = vpop.f32.mrf.mxu0
  %3801 = vdwg.mxu0
  %3802 = vmatprep.subr.bf16.mxu0 0
  %3803 = vmatpush1.bf16.msra.mxu0 %v3736
  %3804 = vmatprep.subr.bf16.mxu0 0
  %3805 = vmatpush1.bf16.msra.mxu0 %v3733
  %3806 = vmatprep.subr.bf16.mxu0 0
  %3807 = vmatpush1.bf16.msra.mxu0 %v3730
  %3808 = vmatprep.subr.bf16.mxu0 0
  %3809 = vmatpush1.bf16.msra.mxu0 %v3727
  %3810 = vmatprep.subr.bf16.mxu0 0
  %3811 = vmatpush1.bf16.msra.mxu0 %v3724
  %3812 = vmatprep.subr.bf16.mxu0 0
  %3813 = vmatpush1.bf16.msra.mxu0 %v3721
  %3814 = vmatprep.subr.bf16.mxu0 0
  %3815 = vmatpush1.bf16.msra.mxu0 %v3718
  %3816 = vmatprep.subr.bf16.mxu0 0
  %3817 = vmatpush1.bf16.msra.mxu0 %v3715
  %3818 = vmatprep.subr.bf16.mxu0 0
  %3819 = vmatpush2.bf16.msra.mxu0 0
  %3820 = vmatprep.subr.bf16.mxu0 0
  %3821 = vmatpush2.bf16.msra.mxu0 0
  %3822 = vmatprep.subr.bf16.mxu0 0
  %3823 = vmatpush2.bf16.msra.mxu0 0
  %3824 = vmatprep.subr.bf16.mxu0 0
  %3825 = vmatpush2.bf16.msra.mxu0 0
  %3826 = vmatprep.subr.bf16.mxu0 0
  %3827 = vmatpush2.bf16.msra.mxu0 0
  %3828 = vmatprep.subr.bf16.mxu0 0
  %3829 = vmatpush2.bf16.msra.mxu0 0
  %3830 = vmatprep.subr.bf16.mxu0 0
  %3831 = vmatpush2.bf16.msra.mxu0 0
  %3832 = vmatprep.subr.bf16.mxu0 0
  %3833 = vmatpush2.bf16.msra.mxu0 0
  %3834 = vmatprep.mubr.bf16.mxu0 0
  %3835 = vmatmul.mubr.bf16.gmra.mxu0 %v3355
  %v3836 = vpop.f32.mrf.mxu0
  %v3837 = vadd.f32 %v582, %v3836
  %v3838 = vpop.f32.mrf.mxu0
  %v3839 = vpop.f32.mrf.mxu0
  %v3840 = vpop.f32.mrf.mxu0
  %3841 = vdwg.mxu0
  %v3842 = vadd.f32 %v3555, %v3796
  %v3843 = vxor.u32 %v3842, 2147483648
  %v3844 = vmul.f32 %v3843, 1.442695
  %v3845 = vpow.pop %v3844
  %v3846 = vadd.f32 %v3845, 1.0
  %v3847 = vrcp.pop %v3846
  %v3848 = vmul.f32 1.0, %v3847
  %v3849 = vadd.f32 %v3557, %v3798
  %v3850 = vxor.u32 %v3849, 2147483648
  %v3851 = vmul.f32 %v3850, 1.442695
  %v3852 = vpow.pop %v3851
  %v3853 = vadd.f32 %v3852, 1.0
  %v3854 = vrcp.pop %v3853
  %v3855 = vmul.f32 1.0, %v3854
  %v3856 = vmul.f32 %v3848, %v3837
  %v3857 = vadd.f32 %v3596, %v3856
  %v3858 = vtanh.pop %v3857
  %v3859 = vsub.f32 1.0, %v3855
  %v3860 = vmul.f32 %v3859, %v3858
  %v3861 = vmul.f32 %v3855, %v3354
  %v3862 = vadd.f32 %v3860, %v3861
  %v3863 = vpack.c.bf16 %v3862, %v3862
  %s3864 = scalar_lea.vmem %s7, 24
  %3865 = vst [vmem:[%s3864] sm:$0xf] %v3863
  %s3866 = scalar_lea.vmem %s0, 28
  %v3867 = vld [vmem:[%s3866] sm:$0xf]
  %v3868 = vld [vmem:[%s2] sm:$0xff]
  %v3869 = vld [vmem:[%s2 + $0x8] sm:$0xf]
  %v3870 = vld [vmem:[%s2 + $0xc] sm:$0xff]
  %v3871 = vld [vmem:[%s2 + $0x14] sm:$0xf]
  %v3872 = vld [vmem:[%s2 + $0x18] sm:$0xff]
  %v3873 = vld [vmem:[%s2 + $0x20] sm:$0xf]
  %v3874 = vld [vmem:[%s2 + $0x24] sm:$0xff]
  %v3875 = vld [vmem:[%s2 + $0x2c] sm:$0xf]
  %v3876 = vld [vmem:[%s2 + $0x30] sm:$0xff]
  %v3877 = vld [vmem:[%s2 + $0x38] sm:$0xf]
  %v3878 = vld [vmem:[%s2 + $0x3c] sm:$0xff]
  %v3879 = vld [vmem:[%s2 + $0x44] sm:$0xf]
  %v3880 = vld [vmem:[%s2 + $0x48] sm:$0xff]
  %v3881 = vld [vmem:[%s2 + $0x50] sm:$0xf]
  %v3882 = vld [vmem:[%s2 + $0x54] sm:$0xff]
  %v3883 = vld [vmem:[%s2 + $0x5c] sm:$0xf]
  %v3884 = vld [vmem:[%s2 + $0x60] sm:$0xff]
  %v3885 = vld [vmem:[%s2 + $0x68] sm:$0xf]
  %v3886 = vld [vmem:[%s2 + $0x6c] sm:$0xff]
  %v3887 = vld [vmem:[%s2 + $0x74] sm:$0xf]
  %v3888 = vld [vmem:[%s2 + $0x78] sm:$0xff]
  %v3889 = vld [vmem:[%s2 + $0x80] sm:$0xf]
  %v3890 = vld [vmem:[%s2 + $0x84] sm:$0xff]
  %v3891 = vld [vmem:[%s2 + $0x8c] sm:$0xf]
  %v3892 = vld [vmem:[%s2 + $0x90] sm:$0xff]
  %v3893 = vld [vmem:[%s2 + $0x98] sm:$0xf]
  %v3894 = vld [vmem:[%s2 + $0x9c] sm:$0xff]
  %v3895 = vld [vmem:[%s2 + $0xa4] sm:$0xf]
  %v3896 = vld [vmem:[%s2 + $0xa8] sm:$0xff]
  %v3897 = vld [vmem:[%s2 + $0xb0] sm:$0xf]
  %v3898 = vld [vmem:[%s2 + $0xb4] sm:$0xff]
  %v3899 = vld [vmem:[%s2 + $0xbc] sm:$0xf]
  %v3932 = vunpack.c.l.b16 %v3868
  %v3933 = vunpack.c.h.b16 %v3868
  %v3934 = vunpack.c.l.b16 %v3869
  %v3935 = vunpack.c.l.b16 %v3870
  %v3936 = vunpack.c.h.b16 %v3870
  %v3937 = vunpack.c.l.b16 %v3871
  %v3938 = vunpack.c.l.b16 %v3872
  %v3939 = vunpack.c.h.b16 %v3872
  %v3940 = vunpack.c.l.b16 %v3873
  %v3941 = vunpack.c.l.b16 %v3874
  %v3942 = vunpack.c.h.b16 %v3874
  %v3943 = vunpack.c.l.b16 %v3875
  %v3944 = vunpack.c.l.b16 %v3876
  %v3945 = vunpack.c.h.b16 %v3876
  %v3946 = vunpack.c.l.b16 %v3877
  %v3947 = vunpack.c.l.b16 %v3878
  %v3948 = vunpack.c.h.b16 %v3878
  %v3949 = vunpack.c.l.b16 %v3879
  %v3950 = vunpack.c.l.b16 %v3880
  %v3951 = vunpack.c.h.b16 %v3880
  %v3952 = vunpack.c.l.b16 %v3881
  %v3953 = vunpack.c.l.b16 %v3882
  %v3954 = vunpack.c.h.b16 %v3882
  %v3955 = vunpack.c.l.b16 %v3883
  %v3956 = vunpack.c.l.b16 %v3884
  %v3957 = vunpack.c.h.b16 %v3884
  %v3958 = vunpack.c.l.b16 %v3885
  %v3959 = vunpack.c.l.b16 %v3886
  %v3960 = vunpack.c.h.b16 %v3886
  %v3961 = vunpack.c.l.b16 %v3887
  %v3962 = vunpack.c.l.b16 %v3888
  %v3963 = vunpack.c.h.b16 %v3888
  %v3964 = vunpack.c.l.b16 %v3889
  %v3965 = vunpack.c.l.b16 %v3890
  %v3966 = vunpack.c.h.b16 %v3890
  %v3967 = vunpack.c.l.b16 %v3891
  %v3968 = vunpack.c.l.b16 %v3892
  %v3969 = vunpack.c.h.b16 %v3892
  %v3970 = vunpack.c.l.b16 %v3893
  %v3971 = vunpack.c.l.b16 %v3894
  %v3972 = vunpack.c.h.b16 %v3894
  %v3973 = vunpack.c.l.b16 %v3895
  %v3974 = vunpack.c.l.b16 %v3896
  %v3975 = vunpack.c.h.b16 %v3896
  %v3976 = vunpack.c.l.b16 %v3897
  %v3977 = vunpack.c.l.b16 %v3898
  %v3978 = vunpack.c.h.b16 %v3898
  %v3979 = vunpack.c.l.b16 %v3899
  %v3980 = vpack.c.b16 %v3935, %v3932
  %v3981 = vpack.c.b16 %v3936, %v3933
  %v3982 = vpack.c.b16 %v3937, %v3934
  %v3983 = vpack.c.b16 %v3941, %v3938
  %v3984 = vpack.c.b16 %v3942, %v3939
  %v3985 = vpack.c.b16 %v3943, %v3940
  %v3986 = vpack.c.b16 %v3947, %v3944
  %v3987 = vpack.c.b16 %v3948, %v3945
  %v3988 = vpack.c.b16 %v3949, %v3946
  %v3989 = vpack.c.b16 %v3953, %v3950
  %v3990 = vpack.c.b16 %v3954, %v3951
  %v3991 = vpack.c.b16 %v3955, %v3952
  %v3992 = vpack.c.b16 %v3959, %v3956
  %v3993 = vpack.c.b16 %v3960, %v3957
  %v3994 = vpack.c.b16 %v3961, %v3958
  %v3995 = vpack.c.b16 %v3965, %v3962
  %v3996 = vpack.c.b16 %v3966, %v3963
  %v3997 = vpack.c.b16 %v3967, %v3964
  %v3998 = vpack.c.b16 %v3971, %v3968
  %v3999 = vpack.c.b16 %v3972, %v3969
  %v4000 = vpack.c.b16 %v3973, %v3970
  %v4001 = vpack.c.b16 %v3977, %v3974
  %v4002 = vpack.c.b16 %v3978, %v3975
  %v4003 = vpack.c.b16 %v3979, %v3976
  %4028 = vmatprep.subr.bf16.mxu0 %v4002
  %4029 = vmatpush1.bf16.msra.mxu0 %v4001
  %4030 = vmatprep.subr.bf16.mxu0 %v3999
  %4031 = vmatpush1.bf16.msra.mxu0 %v3998
  %4032 = vmatprep.subr.bf16.mxu0 %v3996
  %4033 = vmatpush1.bf16.msra.mxu0 %v3995
  %4034 = vmatprep.subr.bf16.mxu0 %v3993
  %4035 = vmatpush1.bf16.msra.mxu0 %v3992
  %4036 = vmatprep.subr.bf16.mxu0 %v3990
  %4037 = vmatpush1.bf16.msra.mxu0 %v3989
  %4038 = vmatprep.subr.bf16.mxu0 %v3987
  %4039 = vmatpush1.bf16.msra.mxu0 %v3986
  %4040 = vmatprep.subr.bf16.mxu0 %v3984
  %4041 = vmatpush1.bf16.msra.mxu0 %v3983
  %4042 = vmatprep.subr.bf16.mxu0 %v3981
  %4043 = vmatpush1.bf16.msra.mxu0 %v3980
  %4044 = vmatprep.subr.bf16.mxu0 0
  %4045 = vmatpush2.bf16.msra.mxu0 0
  %4046 = vmatprep.subr.bf16.mxu0 0
  %4047 = vmatpush2.bf16.msra.mxu0 0
  %4048 = vmatprep.subr.bf16.mxu0 0
  %4049 = vmatpush2.bf16.msra.mxu0 0
  %4050 = vmatprep.subr.bf16.mxu0 0
  %4051 = vmatpush2.bf16.msra.mxu0 0
  %4052 = vmatprep.subr.bf16.mxu0 0
  %4053 = vmatpush2.bf16.msra.mxu0 0
  %4054 = vmatprep.subr.bf16.mxu0 0
  %4055 = vmatpush2.bf16.msra.mxu0 0
  %4056 = vmatprep.subr.bf16.mxu0 0
  %4057 = vmatpush2.bf16.msra.mxu0 0
  %4058 = vmatprep.subr.bf16.mxu0 0
  %4059 = vmatpush2.bf16.msra.mxu0 0
  %4060 = vmatprep.mubr.bf16.mxu0 0
  %4061 = vmatmul.mubr.bf16.gmra.mxu0 %v3867
  %v4062 = vpop.f32.mrf.mxu0
  %v4063 = vadd.f32 %v247, %v4062
  %v4064 = vpop.f32.mrf.mxu0
  %v4065 = vadd.f32 %v249, %v4064
  %v4066 = vpop.f32.mrf.mxu0
  %v4067 = vpop.f32.mrf.mxu0
  %4068 = vdwg.mxu0
  %4069 = vmatprep.subr.bf16.mxu0 0
  %4070 = vmatpush1.bf16.msra.mxu0 %v4003
  %4071 = vmatprep.subr.bf16.mxu0 0
  %4072 = vmatpush1.bf16.msra.mxu0 %v4000
  %4073 = vmatprep.subr.bf16.mxu0 0
  %4074 = vmatpush1.bf16.msra.mxu0 %v3997
  %4075 = vmatprep.subr.bf16.mxu0 0
  %4076 = vmatpush1.bf16.msra.mxu0 %v3994
  %4077 = vmatprep.subr.bf16.mxu0 0
  %4078 = vmatpush1.bf16.msra.mxu0 %v3991
  %4079 = vmatprep.subr.bf16.mxu0 0
  %4080 = vmatpush1.bf16.msra.mxu0 %v3988
  %4081 = vmatprep.subr.bf16.mxu0 0
  %4082 = vmatpush1.bf16.msra.mxu0 %v3985
  %4083 = vmatprep.subr.bf16.mxu0 0
  %4084 = vmatpush1.bf16.msra.mxu0 %v3982
  %4085 = vmatprep.subr.bf16.mxu0 0
  %4086 = vmatpush2.bf16.msra.mxu0 0
  %4087 = vmatprep.subr.bf16.mxu0 0
  %4088 = vmatpush2.bf16.msra.mxu0 0
  %4089 = vmatprep.subr.bf16.mxu0 0
  %4090 = vmatpush2.bf16.msra.mxu0 0
  %4091 = vmatprep.subr.bf16.mxu0 0
  %4092 = vmatpush2.bf16.msra.mxu0 0
  %4093 = vmatprep.subr.bf16.mxu0 0
  %4094 = vmatpush2.bf16.msra.mxu0 0
  %4095 = vmatprep.subr.bf16.mxu0 0
  %4096 = vmatpush2.bf16.msra.mxu0 0
  %4097 = vmatprep.subr.bf16.mxu0 0
  %4098 = vmatpush2.bf16.msra.mxu0 0
  %4099 = vmatprep.subr.bf16.mxu0 0
  %4100 = vmatpush2.bf16.msra.mxu0 0
  %4101 = vmatprep.mubr.bf16.mxu0 0
  %4102 = vmatmul.mubr.bf16.gmra.mxu0 %v3867
  %v4103 = vpop.f32.mrf.mxu0
  %v4104 = vadd.f32 %v288, %v4103
  %v4105 = vpop.f32.mrf.mxu0
  %v4106 = vpop.f32.mrf.mxu0
  %v4107 = vpop.f32.mrf.mxu0
  %4108 = vdwg.mxu0
  %v4109 = vld [vmem:[%s5] sm:$0xff]
  %v4110 = vld [vmem:[%s5 + $0x8] sm:$0xf]
  %v4111 = vld [vmem:[%s5 + $0xc] sm:$0xff]
  %v4112 = vld [vmem:[%s5 + $0x14] sm:$0xf]
  %v4113 = vld [vmem:[%s5 + $0x18] sm:$0xff]
  %v4114 = vld [vmem:[%s5 + $0x20] sm:$0xf]
  %v4115 = vld [vmem:[%s5 + $0x24] sm:$0xff]
  %v4116 = vld [vmem:[%s5 + $0x2c] sm:$0xf]
  %v4117 = vld [vmem:[%s5 + $0x30] sm:$0xff]
  %v4118 = vld [vmem:[%s5 + $0x38] sm:$0xf]
  %v4119 = vld [vmem:[%s5 + $0x3c] sm:$0xff]
  %v4120 = vld [vmem:[%s5 + $0x44] sm:$0xf]
  %v4121 = vld [vmem:[%s5 + $0x48] sm:$0xff]
  %v4122 = vld [vmem:[%s5 + $0x50] sm:$0xf]
  %v4123 = vld [vmem:[%s5 + $0x54] sm:$0xff]
  %v4124 = vld [vmem:[%s5 + $0x5c] sm:$0xf]
  %v4125 = vld [vmem:[%s5 + $0x60] sm:$0xff]
  %v4126 = vld [vmem:[%s5 + $0x68] sm:$0xf]
  %v4127 = vld [vmem:[%s5 + $0x6c] sm:$0xff]
  %v4128 = vld [vmem:[%s5 + $0x74] sm:$0xf]
  %v4129 = vld [vmem:[%s5 + $0x78] sm:$0xff]
  %v4130 = vld [vmem:[%s5 + $0x80] sm:$0xf]
  %v4131 = vld [vmem:[%s5 + $0x84] sm:$0xff]
  %v4132 = vld [vmem:[%s5 + $0x8c] sm:$0xf]
  %v4133 = vld [vmem:[%s5 + $0x90] sm:$0xff]
  %v4134 = vld [vmem:[%s5 + $0x98] sm:$0xf]
  %v4135 = vld [vmem:[%s5 + $0x9c] sm:$0xff]
  %v4136 = vld [vmem:[%s5 + $0xa4] sm:$0xf]
  %v4137 = vld [vmem:[%s5 + $0xa8] sm:$0xff]
  %v4138 = vld [vmem:[%s5 + $0xb0] sm:$0xf]
  %v4139 = vld [vmem:[%s5 + $0xb4] sm:$0xff]
  %v4140 = vld [vmem:[%s5 + $0xbc] sm:$0xf]
  %v4173 = vunpack.c.l.b16 %v4109
  %v4174 = vunpack.c.h.b16 %v4109
  %v4175 = vunpack.c.l.b16 %v4110
  %v4176 = vunpack.c.l.b16 %v4111
  %v4177 = vunpack.c.h.b16 %v4111
  %v4178 = vunpack.c.l.b16 %v4112
  %v4179 = vunpack.c.l.b16 %v4113
  %v4180 = vunpack.c.h.b16 %v4113
  %v4181 = vunpack.c.l.b16 %v4114
  %v4182 = vunpack.c.l.b16 %v4115
  %v4183 = vunpack.c.h.b16 %v4115
  %v4184 = vunpack.c.l.b16 %v4116
  %v4185 = vunpack.c.l.b16 %v4117
  %v4186 = vunpack.c.h.b16 %v4117
  %v4187 = vunpack.c.l.b16 %v4118
  %v4188 = vunpack.c.l.b16 %v4119
  %v4189 = vunpack.c.h.b16 %v4119
  %v4190 = vunpack.c.l.b16 %v4120
  %v4191 = vunpack.c.l.b16 %v4121
  %v4192 = vunpack.c.h.b16 %v4121
  %v4193 = vunpack.c.l.b16 %v4122
  %v4194 = vunpack.c.l.b16 %v4123
  %v4195 = vunpack.c.h.b16 %v4123
  %v4196 = vunpack.c.l.b16 %v4124
  %v4197 = vunpack.c.l.b16 %v4125
  %v4198 = vunpack.c.h.b16 %v4125
  %v4199 = vunpack.c.l.b16 %v4126
  %v4200 = vunpack.c.l.b16 %v4127
  %v4201 = vunpack.c.h.b16 %v4127
  %v4202 = vunpack.c.l.b16 %v4128
  %v4203 = vunpack.c.l.b16 %v4129
  %v4204 = vunpack.c.h.b16 %v4129
  %v4205 = vunpack.c.l.b16 %v4130
  %v4206 = vunpack.c.l.b16 %v4131
  %v4207 = vunpack.c.h.b16 %v4131
  %v4208 = vunpack.c.l.b16 %v4132
  %v4209 = vunpack.c.l.b16 %v4133
  %v4210 = vunpack.c.h.b16 %v4133
  %v4211 = vunpack.c.l.b16 %v4134
  %v4212 = vunpack.c.l.b16 %v4135
  %v4213 = vunpack.c.h.b16 %v4135
  %v4214 = vunpack.c.l.b16 %v4136
  %v4215 = vunpack.c.l.b16 %v4137
  %v4216 = vunpack.c.h.b16 %v4137
  %v4217 = vunpack.c.l.b16 %v4138
  %v4218 = vunpack.c.l.b16 %v4139
  %v4219 = vunpack.c.h.b16 %v4139
  %v4220 = vunpack.c.l.b16 %v4140
  %v4221 = vpack.c.b16 %v4176, %v4173
  %v4222 = vpack.c.b16 %v4177, %v4174
  %v4223 = vpack.c.b16 %v4178, %v4175
  %v4224 = vpack.c.b16 %v4182, %v4179
  %v4225 = vpack.c.b16 %v4183, %v4180
  %v4226 = vpack.c.b16 %v4184, %v4181
  %v4227 = vpack.c.b16 %v4188, %v4185
  %v4228 = vpack.c.b16 %v4189, %v4186
  %v4229 = vpack.c.b16 %v4190, %v4187
  %v4230 = vpack.c.b16 %v4194, %v4191
  %v4231 = vpack.c.b16 %v4195, %v4192
  %v4232 = vpack.c.b16 %v4196, %v4193
  %v4233 = vpack.c.b16 %v4200, %v4197
  %v4234 = vpack.c.b16 %v4201, %v4198
  %v4235 = vpack.c.b16 %v4202, %v4199
  %v4236 = vpack.c.b16 %v4206, %v4203
  %v4237 = vpack.c.b16 %v4207, %v4204
  %v4238 = vpack.c.b16 %v4208, %v4205
  %v4239 = vpack.c.b16 %v4212, %v4209
  %v4240 = vpack.c.b16 %v4213, %v4210
  %v4241 = vpack.c.b16 %v4214, %v4211
  %v4242 = vpack.c.b16 %v4218, %v4215
  %v4243 = vpack.c.b16 %v4219, %v4216
  %v4244 = vpack.c.b16 %v4220, %v4217
  %4269 = vmatprep.subr.bf16.mxu0 %v4243
  %4270 = vmatpush1.bf16.msra.mxu0 %v4242
  %4271 = vmatprep.subr.bf16.mxu0 %v4240
  %4272 = vmatpush1.bf16.msra.mxu0 %v4239
  %4273 = vmatprep.subr.bf16.mxu0 %v4237
  %4274 = vmatpush1.bf16.msra.mxu0 %v4236
  %4275 = vmatprep.subr.bf16.mxu0 %v4234
  %4276 = vmatpush1.bf16.msra.mxu0 %v4233
  %4277 = vmatprep.subr.bf16.mxu0 %v4231
  %4278 = vmatpush1.bf16.msra.mxu0 %v4230
  %4279 = vmatprep.subr.bf16.mxu0 %v4228
  %4280 = vmatpush1.bf16.msra.mxu0 %v4227
  %4281 = vmatprep.subr.bf16.mxu0 %v4225
  %4282 = vmatpush1.bf16.msra.mxu0 %v4224
  %4283 = vmatprep.subr.bf16.mxu0 %v4222
  %4284 = vmatpush1.bf16.msra.mxu0 %v4221
  %4285 = vmatprep.subr.bf16.mxu0 0
  %4286 = vmatpush2.bf16.msra.mxu0 0
  %4287 = vmatprep.subr.bf16.mxu0 0
  %4288 = vmatpush2.bf16.msra.mxu0 0
  %4289 = vmatprep.subr.bf16.mxu0 0
  %4290 = vmatpush2.bf16.msra.mxu0 0
  %4291 = vmatprep.subr.bf16.mxu0 0
  %4292 = vmatpush2.bf16.msra.mxu0 0
  %4293 = vmatprep.subr.bf16.mxu0 0
  %4294 = vmatpush2.bf16.msra.mxu0 0
  %4295 = vmatprep.subr.bf16.mxu0 0
  %4296 = vmatpush2.bf16.msra.mxu0 0
  %4297 = vmatprep.subr.bf16.mxu0 0
  %4298 = vmatpush2.bf16.msra.mxu0 0
  %4299 = vmatprep.subr.bf16.mxu0 0
  %4300 = vmatpush2.bf16.msra.mxu0 0
  %4301 = vmatprep.mubr.bf16.mxu0 0
  %4302 = vmatmul.mubr.bf16.gmra.mxu0 %v3863
  %v4303 = vpop.f32.mrf.mxu0
  %v4304 = vadd.f32 %v574, %v4303
  %v4305 = vpop.f32.mrf.mxu0
  %v4306 = vadd.f32 %v578, %v4305
  %v4307 = vpop.f32.mrf.mxu0
  %v4308 = vpop.f32.mrf.mxu0
  %4309 = vdwg.mxu0
  %4310 = vmatprep.subr.bf16.mxu0 0
  %4311 = vmatpush1.bf16.msra.mxu0 %v4244
  %4312 = vmatprep.subr.bf16.mxu0 0
  %4313 = vmatpush1.bf16.msra.mxu0 %v4241
  %4314 = vmatprep.subr.bf16.mxu0 0
  %4315 = vmatpush1.bf16.msra.mxu0 %v4238
  %4316 = vmatprep.subr.bf16.mxu0 0
  %4317 = vmatpush1.bf16.msra.mxu0 %v4235
  %4318 = vmatprep.subr.bf16.mxu0 0
  %4319 = vmatpush1.bf16.msra.mxu0 %v4232
  %4320 = vmatprep.subr.bf16.mxu0 0
  %4321 = vmatpush1.bf16.msra.mxu0 %v4229
  %4322 = vmatprep.subr.bf16.mxu0 0
  %4323 = vmatpush1.bf16.msra.mxu0 %v4226
  %4324 = vmatprep.subr.bf16.mxu0 0
  %4325 = vmatpush1.bf16.msra.mxu0 %v4223
  %4326 = vmatprep.subr.bf16.mxu0 0
  %4327 = vmatpush2.bf16.msra.mxu0 0
  %4328 = vmatprep.subr.bf16.mxu0 0
  %4329 = vmatpush2.bf16.msra.mxu0 0
  %4330 = vmatprep.subr.bf16.mxu0 0
  %4331 = vmatpush2.bf16.msra.mxu0 0
  %4332 = vmatprep.subr.bf16.mxu0 0
  %4333 = vmatpush2.bf16.msra.mxu0 0
  %4334 = vmatprep.subr.bf16.mxu0 0
  %4335 = vmatpush2.bf16.msra.mxu0 0
  %4336 = vmatprep.subr.bf16.mxu0 0
  %4337 = vmatpush2.bf16.msra.mxu0 0
  %4338 = vmatprep.subr.bf16.mxu0 0
  %4339 = vmatpush2.bf16.msra.mxu0 0
  %4340 = vmatprep.subr.bf16.mxu0 0
  %4341 = vmatpush2.bf16.msra.mxu0 0
  %4342 = vmatprep.mubr.bf16.mxu0 0
  %4343 = vmatmul.mubr.bf16.gmra.mxu0 %v3863
  %v4344 = vpop.f32.mrf.mxu0
  %v4345 = vadd.f32 %v582, %v4344
  %v4346 = vpop.f32.mrf.mxu0
  %v4347 = vpop.f32.mrf.mxu0
  %v4348 = vpop.f32.mrf.mxu0
  %4349 = vdwg.mxu0
  %v4350 = vadd.f32 %v4063, %v4304
  %v4351 = vxor.u32 %v4350, 2147483648
  %v4352 = vmul.f32 %v4351, 1.442695
  %v4353 = vpow.pop %v4352
  %v4354 = vadd.f32 %v4353, 1.0
  %v4355 = vrcp.pop %v4354
  %v4356 = vmul.f32 1.0, %v4355
  %v4357 = vadd.f32 %v4065, %v4306
  %v4358 = vxor.u32 %v4357, 2147483648
  %v4359 = vmul.f32 %v4358, 1.442695
  %v4360 = vpow.pop %v4359
  %v4361 = vadd.f32 %v4360, 1.0
  %v4362 = vrcp.pop %v4361
  %v4363 = vmul.f32 1.0, %v4362
  %v4364 = vmul.f32 %v4356, %v4345
  %v4365 = vadd.f32 %v4104, %v4364
  %v4366 = vtanh.pop %v4365
  %v4367 = vsub.f32 1.0, %v4363
  %v4368 = vmul.f32 %v4367, %v4366
  %v4369 = vmul.f32 %v4363, %v3862
  %v4370 = vadd.f32 %v4368, %v4369
  %v4371 = vpack.c.bf16 %v4370, %v4370
  %s4372 = scalar_lea.vmem %s7, 28
  %4373 = vst [vmem:[%s4372] sm:$0xf] %v4371
  %s4374 = scalar_lea.vmem %s0, 32
  %v4375 = vld [vmem:[%s4374] sm:$0xf]
  %v4376 = vld [vmem:[%s2] sm:$0xff]
  %v4377 = vld [vmem:[%s2 + $0x8] sm:$0xf]
  %v4378 = vld [vmem:[%s2 + $0xc] sm:$0xff]
  %v4379 = vld [vmem:[%s2 + $0x14] sm:$0xf]
  %v4380 = vld [vmem:[%s2 + $0x18] sm:$0xff]
  %v4381 = vld [vmem:[%s2 + $0x20] sm:$0xf]
  %v4382 = vld [vmem:[%s2 + $0x24] sm:$0xff]
  %v4383 = vld [vmem:[%s2 + $0x2c] sm:$0xf]
  %v4384 = vld [vmem:[%s2 + $0x30] sm:$0xff]
  %v4385 = vld [vmem:[%s2 + $0x38] sm:$0xf]
  %v4386 = vld [vmem:[%s2 + $0x3c] sm:$0xff]
  %v4387 = vld [vmem:[%s2 + $0x44] sm:$0xf]
  %v4388 = vld [vmem:[%s2 + $0x48] sm:$0xff]
  %v4389 = vld [vmem:[%s2 + $0x50] sm:$0xf]
  %v4390 = vld [vmem:[%s2 + $0x54] sm:$0xff]
  %v4391 = vld [vmem:[%s2 + $0x5c] sm:$0xf]
  %v4392 = vld [vmem:[%s2 + $0x60] sm:$0xff]
  %v4393 = vld [vmem:[%s2 + $0x68] sm:$0xf]
  %v4394 = vld [vmem:[%s2 + $0x6c] sm:$0xff]
  %v4395 = vld [vmem:[%s2 + $0x74] sm:$0xf]
  %v4396 = vld [vmem:[%s2 + $0x78] sm:$0xff]
  %v4397 = vld [vmem:[%s2 + $0x80] sm:$0xf]
  %v4398 = vld [vmem:[%s2 + $0x84] sm:$0xff]
  %v4399 = vld [vmem:[%s2 + $0x8c] sm:$0xf]
  %v4400 = vld [vmem:[%s2 + $0x90] sm:$0xff]
  %v4401 = vld [vmem:[%s2 + $0x98] sm:$0xf]
  %v4402 = vld [vmem:[%s2 + $0x9c] sm:$0xff]
  %v4403 = vld [vmem:[%s2 + $0xa4] sm:$0xf]
  %v4404 = vld [vmem:[%s2 + $0xa8] sm:$0xff]
  %v4405 = vld [vmem:[%s2 + $0xb0] sm:$0xf]
  %v4406 = vld [vmem:[%s2 + $0xb4] sm:$0xff]
  %v4407 = vld [vmem:[%s2 + $0xbc] sm:$0xf]
  %v4440 = vunpack.c.l.b16 %v4376
  %v4441 = vunpack.c.h.b16 %v4376
  %v4442 = vunpack.c.l.b16 %v4377
  %v4443 = vunpack.c.l.b16 %v4378
  %v4444 = vunpack.c.h.b16 %v4378
  %v4445 = vunpack.c.l.b16 %v4379
  %v4446 = vunpack.c.l.b16 %v4380
  %v4447 = vunpack.c.h.b16 %v4380
  %v4448 = vunpack.c.l.b16 %v4381
  %v4449 = vunpack.c.l.b16 %v4382
  %v4450 = vunpack.c.h.b16 %v4382
  %v4451 = vunpack.c.l.b16 %v4383
  %v4452 = vunpack.c.l.b16 %v4384
  %v4453 = vunpack.c.h.b16 %v4384
  %v4454 = vunpack.c.l.b16 %v4385
  %v4455 = vunpack.c.l.b16 %v4386
  %v4456 = vunpack.c.h.b16 %v4386
  %v4457 = vunpack.c.l.b16 %v4387
  %v4458 = vunpack.c.l.b16 %v4388
  %v4459 = vunpack.c.h.b16 %v4388
  %v4460 = vunpack.c.l.b16 %v4389
  %v4461 = vunpack.c.l.b16 %v4390
  %v4462 = vunpack.c.h.b16 %v4390
  %v4463 = vunpack.c.l.b16 %v4391
  %v4464 = vunpack.c.l.b16 %v4392
  %v4465 = vunpack.c.h.b16 %v4392
  %v4466 = vunpack.c.l.b16 %v4393
  %v4467 = vunpack.c.l.b16 %v4394
  %v4468 = vunpack.c.h.b16 %v4394
  %v4469 = vunpack.c.l.b16 %v4395
  %v4470 = vunpack.c.l.b16 %v4396
  %v4471 = vunpack.c.h.b16 %v4396
  %v4472 = vunpack.c.l.b16 %v4397
  %v4473 = vunpack.c.l.b16 %v4398
  %v4474 = vunpack.c.h.b16 %v4398
  %v4475 = vunpack.c.l.b16 %v4399
  %v4476 = vunpack.c.l.b16 %v4400
  %v4477 = vunpack.c.h.b16 %v4400
  %v4478 = vunpack.c.l.b16 %v4401
  %v4479 = vunpack.c.l.b16 %v4402
  %v4480 = vunpack.c.h.b16 %v4402
  %v4481 = vunpack.c.l.b16 %v4403
  %v4482 = vunpack.c.l.b16 %v4404
  %v4483 = vunpack.c.h.b16 %v4404
  %v4484 = vunpack.c.l.b16 %v4405
  %v4485 = vunpack.c.l.b16 %v4406
  %v4486 = vunpack.c.h.b16 %v4406
  %v4487 = vunpack.c.l.b16 %v4407
  %v4488 = vpack.c.b16 %v4443, %v4440
  %v4489 = vpack.c.b16 %v4444, %v4441
  %v4490 = vpack.c.b16 %v4445, %v4442
  %v4491 = vpack.c.b16 %v4449, %v4446
  %v4492 = vpack.c.b16 %v4450, %v4447
  %v4493 = vpack.c.b16 %v4451, %v4448
  %v4494 = vpack.c.b16 %v4455, %v4452
  %v4495 = vpack.c.b16 %v4456, %v4453
  %v4496 = vpack.c.b16 %v4457, %v4454
  %v4497 = vpack.c.b16 %v4461, %v4458
  %v4498 = vpack.c.b16 %v4462, %v4459
  %v4499 = vpack.c.b16 %v4463, %v4460
  %v4500 = vpack.c.b16 %v4467, %v4464
  %v4501 = vpack.c.b16 %v4468, %v4465
  %v4502 = vpack.c.b16 %v4469, %v4466
  %v4503 = vpack.c.b16 %v4473, %v4470
  %v4504 = vpack.c.b16 %v4474, %v4471
  %v4505 = vpack.c.b16 %v4475, %v4472
  %v4506 = vpack.c.b16 %v4479, %v4476
  %v4507 = vpack.c.b16 %v4480, %v4477
  %v4508 = vpack.c.b16 %v4481, %v4478
  %v4509 = vpack.c.b16 %v4485, %v4482
  %v4510 = vpack.c.b16 %v4486, %v4483
  %v4511 = vpack.c.b16 %v4487, %v4484
  %4536 = vmatprep.subr.bf16.mxu0 %v4510
  %4537 = vmatpush1.bf16.msra.mxu0 %v4509
  %4538 = vmatprep.subr.bf16.mxu0 %v4507
  %4539 = vmatpush1.bf16.msra.mxu0 %v4506
  %4540 = vmatprep.subr.bf16.mxu0 %v4504
  %4541 = vmatpush1.bf16.msra.mxu0 %v4503
  %4542 = vmatprep.subr.bf16.mxu0 %v4501
  %4543 = vmatpush1.bf16.msra.mxu0 %v4500
  %4544 = vmatprep.subr.bf16.mxu0 %v4498
  %4545 = vmatpush1.bf16.msra.mxu0 %v4497
  %4546 = vmatprep.subr.bf16.mxu0 %v4495
  %4547 = vmatpush1.bf16.msra.mxu0 %v4494
  %4548 = vmatprep.subr.bf16.mxu0 %v4492
  %4549 = vmatpush1.bf16.msra.mxu0 %v4491
  %4550 = vmatprep.subr.bf16.mxu0 %v4489
  %4551 = vmatpush1.bf16.msra.mxu0 %v4488
  %4552 = vmatprep.subr.bf16.mxu0 0
  %4553 = vmatpush2.bf16.msra.mxu0 0
  %4554 = vmatprep.subr.bf16.mxu0 0
  %4555 = vmatpush2.bf16.msra.mxu0 0
  %4556 = vmatprep.subr.bf16.mxu0 0
  %4557 = vmatpush2.bf16.msra.mxu0 0
  %4558 = vmatprep.subr.bf16.mxu0 0
  %4559 = vmatpush2.bf16.msra.mxu0 0
  %4560 = vmatprep.subr.bf16.mxu0 0
  %4561 = vmatpush2.bf16.msra.mxu0 0
  %4562 = vmatprep.subr.bf16.mxu0 0
  %4563 = vmatpush2.bf16.msra.mxu0 0
  %4564 = vmatprep.subr.bf16.mxu0 0
  %4565 = vmatpush2.bf16.msra.mxu0 0
  %4566 = vmatprep.subr.bf16.mxu0 0
  %4567 = vmatpush2.bf16.msra.mxu0 0
  %4568 = vmatprep.mubr.bf16.mxu0 0
  %4569 = vmatmul.mubr.bf16.gmra.mxu0 %v4375
  %v4570 = vpop.f32.mrf.mxu0
  %v4571 = vadd.f32 %v247, %v4570
  %v4572 = vpop.f32.mrf.mxu0
  %v4573 = vadd.f32 %v249, %v4572
  %v4574 = vpop.f32.mrf.mxu0
  %v4575 = vpop.f32.mrf.mxu0
  %4576 = vdwg.mxu0
  %4577 = vmatprep.subr.bf16.mxu0 0
  %4578 = vmatpush1.bf16.msra.mxu0 %v4511
  %4579 = vmatprep.subr.bf16.mxu0 0
  %4580 = vmatpush1.bf16.msra.mxu0 %v4508
  %4581 = vmatprep.subr.bf16.mxu0 0
  %4582 = vmatpush1.bf16.msra.mxu0 %v4505
  %4583 = vmatprep.subr.bf16.mxu0 0
  %4584 = vmatpush1.bf16.msra.mxu0 %v4502
  %4585 = vmatprep.subr.bf16.mxu0 0
  %4586 = vmatpush1.bf16.msra.mxu0 %v4499
  %4587 = vmatprep.subr.bf16.mxu0 0
  %4588 = vmatpush1.bf16.msra.mxu0 %v4496
  %4589 = vmatprep.subr.bf16.mxu0 0
  %4590 = vmatpush1.bf16.msra.mxu0 %v4493
  %4591 = vmatprep.subr.bf16.mxu0 0
  %4592 = vmatpush1.bf16.msra.mxu0 %v4490
  %4593 = vmatprep.subr.bf16.mxu0 0
  %4594 = vmatpush2.bf16.msra.mxu0 0
  %4595 = vmatprep.subr.bf16.mxu0 0
  %4596 = vmatpush2.bf16.msra.mxu0 0
  %4597 = vmatprep.subr.bf16.mxu0 0
  %4598 = vmatpush2.bf16.msra.mxu0 0
  %4599 = vmatprep.subr.bf16.mxu0 0
  %4600 = vmatpush2.bf16.msra.mxu0 0
  %4601 = vmatprep.subr.bf16.mxu0 0
  %4602 = vmatpush2.bf16.msra.mxu0 0
  %4603 = vmatprep.subr.bf16.mxu0 0
  %4604 = vmatpush2.bf16.msra.mxu0 0
  %4605 = vmatprep.subr.bf16.mxu0 0
  %4606 = vmatpush2.bf16.msra.mxu0 0
  %4607 = vmatprep.subr.bf16.mxu0 0
  %4608 = vmatpush2.bf16.msra.mxu0 0
  %4609 = vmatprep.mubr.bf16.mxu0 0
  %4610 = vmatmul.mubr.bf16.gmra.mxu0 %v4375
  %v4611 = vpop.f32.mrf.mxu0
  %v4612 = vadd.f32 %v288, %v4611
  %v4613 = vpop.f32.mrf.mxu0
  %v4614 = vpop.f32.mrf.mxu0
  %v4615 = vpop.f32.mrf.mxu0
  %4616 = vdwg.mxu0
  %v4617 = vld [vmem:[%s5] sm:$0xff]
  %v4618 = vld [vmem:[%s5 + $0x8] sm:$0xf]
  %v4619 = vld [vmem:[%s5 + $0xc] sm:$0xff]
  %v4620 = vld [vmem:[%s5 + $0x14] sm:$0xf]
  %v4621 = vld [vmem:[%s5 + $0x18] sm:$0xff]
  %v4622 = vld [vmem:[%s5 + $0x20] sm:$0xf]
  %v4623 = vld [vmem:[%s5 + $0x24] sm:$0xff]
  %v4624 = vld [vmem:[%s5 + $0x2c] sm:$0xf]
  %v4625 = vld [vmem:[%s5 + $0x30] sm:$0xff]
  %v4626 = vld [vmem:[%s5 + $0x38] sm:$0xf]
  %v4627 = vld [vmem:[%s5 + $0x3c] sm:$0xff]
  %v4628 = vld [vmem:[%s5 + $0x44] sm:$0xf]
  %v4629 = vld [vmem:[%s5 + $0x48] sm:$0xff]
  %v4630 = vld [vmem:[%s5 + $0x50] sm:$0xf]
  %v4631 = vld [vmem:[%s5 + $0x54] sm:$0xff]
  %v4632 = vld [vmem:[%s5 + $0x5c] sm:$0xf]
  %v4633 = vld [vmem:[%s5 + $0x60] sm:$0xff]
  %v4634 = vld [vmem:[%s5 + $0x68] sm:$0xf]
  %v4635 = vld [vmem:[%s5 + $0x6c] sm:$0xff]
  %v4636 = vld [vmem:[%s5 + $0x74] sm:$0xf]
  %v4637 = vld [vmem:[%s5 + $0x78] sm:$0xff]
  %v4638 = vld [vmem:[%s5 + $0x80] sm:$0xf]
  %v4639 = vld [vmem:[%s5 + $0x84] sm:$0xff]
  %v4640 = vld [vmem:[%s5 + $0x8c] sm:$0xf]
  %v4641 = vld [vmem:[%s5 + $0x90] sm:$0xff]
  %v4642 = vld [vmem:[%s5 + $0x98] sm:$0xf]
  %v4643 = vld [vmem:[%s5 + $0x9c] sm:$0xff]
  %v4644 = vld [vmem:[%s5 + $0xa4] sm:$0xf]
  %v4645 = vld [vmem:[%s5 + $0xa8] sm:$0xff]
  %v4646 = vld [vmem:[%s5 + $0xb0] sm:$0xf]
  %v4647 = vld [vmem:[%s5 + $0xb4] sm:$0xff]
  %v4648 = vld [vmem:[%s5 + $0xbc] sm:$0xf]
  %v4681 = vunpack.c.l.b16 %v4617
  %v4682 = vunpack.c.h.b16 %v4617
  %v4683 = vunpack.c.l.b16 %v4618
  %v4684 = vunpack.c.l.b16 %v4619
  %v4685 = vunpack.c.h.b16 %v4619
  %v4686 = vunpack.c.l.b16 %v4620
  %v4687 = vunpack.c.l.b16 %v4621
  %v4688 = vunpack.c.h.b16 %v4621
  %v4689 = vunpack.c.l.b16 %v4622
  %v4690 = vunpack.c.l.b16 %v4623
  %v4691 = vunpack.c.h.b16 %v4623
  %v4692 = vunpack.c.l.b16 %v4624
  %v4693 = vunpack.c.l.b16 %v4625
  %v4694 = vunpack.c.h.b16 %v4625
  %v4695 = vunpack.c.l.b16 %v4626
  %v4696 = vunpack.c.l.b16 %v4627
  %v4697 = vunpack.c.h.b16 %v4627
  %v4698 = vunpack.c.l.b16 %v4628
  %v4699 = vunpack.c.l.b16 %v4629
  %v4700 = vunpack.c.h.b16 %v4629
  %v4701 = vunpack.c.l.b16 %v4630
  %v4702 = vunpack.c.l.b16 %v4631
  %v4703 = vunpack.c.h.b16 %v4631
  %v4704 = vunpack.c.l.b16 %v4632
  %v4705 = vunpack.c.l.b16 %v4633
  %v4706 = vunpack.c.h.b16 %v4633
  %v4707 = vunpack.c.l.b16 %v4634
  %v4708 = vunpack.c.l.b16 %v4635
  %v4709 = vunpack.c.h.b16 %v4635
  %v4710 = vunpack.c.l.b16 %v4636
  %v4711 = vunpack.c.l.b16 %v4637
  %v4712 = vunpack.c.h.b16 %v4637
  %v4713 = vunpack.c.l.b16 %v4638
  %v4714 = vunpack.c.l.b16 %v4639
  %v4715 = vunpack.c.h.b16 %v4639
  %v4716 = vunpack.c.l.b16 %v4640
  %v4717 = vunpack.c.l.b16 %v4641
  %v4718 = vunpack.c.h.b16 %v4641
  %v4719 = vunpack.c.l.b16 %v4642
  %v4720 = vunpack.c.l.b16 %v4643
  %v4721 = vunpack.c.h.b16 %v4643
  %v4722 = vunpack.c.l.b16 %v4644
  %v4723 = vunpack.c.l.b16 %v4645
  %v4724 = vunpack.c.h.b16 %v4645
  %v4725 = vunpack.c.l.b16 %v4646
  %v4726 = vunpack.c.l.b16 %v4647
  %v4727 = vunpack.c.h.b16 %v4647
  %v4728 = vunpack.c.l.b16 %v4648
  %v4729 = vpack.c.b16 %v4684, %v4681
  %v4730 = vpack.c.b16 %v4685, %v4682
  %v4731 = vpack.c.b16 %v4686, %v4683
  %v4732 = vpack.c.b16 %v4690, %v4687
  %v4733 = vpack.c.b16 %v4691, %v4688
  %v4734 = vpack.c.b16 %v4692, %v4689
  %v4735 = vpack.c.b16 %v4696, %v4693
  %v4736 = vpack.c.b16 %v4697, %v4694
  %v4737 = vpack.c.b16 %v4698, %v4695
  %v4738 = vpack.c.b16 %v4702, %v4699
  %v4739 = vpack.c.b16 %v4703, %v4700
  %v4740 = vpack.c.b16 %v4704, %v4701
  %v4741 = vpack.c.b16 %v4708, %v4705
  %v4742 = vpack.c.b16 %v4709, %v4706
  %v4743 = vpack.c.b16 %v4710, %v4707
  %v4744 = vpack.c.b16 %v4714, %v4711
  %v4745 = vpack.c.b16 %v4715, %v4712
  %v4746 = vpack.c.b16 %v4716, %v4713
  %v4747 = vpack.c.b16 %v4720, %v4717
  %v4748 = vpack.c.b16 %v4721, %v4718
  %v4749 = vpack.c.b16 %v4722, %v4719
  %v4750 = vpack.c.b16 %v4726, %v4723
  %v4751 = vpack.c.b16 %v4727, %v4724
  %v4752 = vpack.c.b16 %v4728, %v4725
  %4777 = vmatprep.subr.bf16.mxu0 %v4751
  %4778 = vmatpush1.bf16.msra.mxu0 %v4750
  %4779 = vmatprep.subr.bf16.mxu0 %v4748
  %4780 = vmatpush1.bf16.msra.mxu0 %v4747
  %4781 = vmatprep.subr.bf16.mxu0 %v4745
  %4782 = vmatpush1.bf16.msra.mxu0 %v4744
  %4783 = vmatprep.subr.bf16.mxu0 %v4742
  %4784 = vmatpush1.bf16.msra.mxu0 %v4741
  %4785 = vmatprep.subr.bf16.mxu0 %v4739
  %4786 = vmatpush1.bf16.msra.mxu0 %v4738
  %4787 = vmatprep.subr.bf16.mxu0 %v4736
  %4788 = vmatpush1.bf16.msra.mxu0 %v4735
  %4789 = vmatprep.subr.bf16.mxu0 %v4733
  %4790 = vmatpush1.bf16.msra.mxu0 %v4732
  %4791 = vmatprep.subr.bf16.mxu0 %v4730
  %4792 = vmatpush1.bf16.msra.mxu0 %v4729
  %4793 = vmatprep.subr.bf16.mxu0 0
  %4794 = vmatpush2.bf16.msra.mxu0 0
  %4795 = vmatprep.subr.bf16.mxu0 0
  %4796 = vmatpush2.bf16.msra.mxu0 0
  %4797 = vmatprep.subr.bf16.mxu0 0
  %4798 = vmatpush2.bf16.msra.mxu0 0
  %4799 = vmatprep.subr.bf16.mxu0 0
  %4800 = vmatpush2.bf16.msra.mxu0 0
  %4801 = vmatprep.subr.bf16.mxu0 0
  %4802 = vmatpush2.bf16.msra.mxu0 0
  %4803 = vmatprep.subr.bf16.mxu0 0
  %4804 = vmatpush2.bf16.msra.mxu0 0
  %4805 = vmatprep.subr.bf16.mxu0 0
  %4806 = vmatpush2.bf16.msra.mxu0 0
  %4807 = vmatprep.subr.bf16.mxu0 0
  %4808 = vmatpush2.bf16.msra.mxu0 0
  %4809 = vmatprep.mubr.bf16.mxu0 0
  %4810 = vmatmul.mubr.bf16.gmra.mxu0 %v4371
  %v4811 = vpop.f32.mrf.mxu0
  %v4812 = vadd.f32 %v574, %v4811
  %v4813 = vpop.f32.mrf.mxu0
  %v4814 = vadd.f32 %v578, %v4813
  %v4815 = vpop.f32.mrf.mxu0
  %v4816 = vpop.f32.mrf.mxu0
  %4817 = vdwg.mxu0
  %4818 = vmatprep.subr.bf16.mxu0 0
  %4819 = vmatpush1.bf16.msra.mxu0 %v4752
  %4820 = vmatprep.subr.bf16.mxu0 0
  %4821 = vmatpush1.bf16.msra.mxu0 %v4749
  %4822 = vmatprep.subr.bf16.mxu0 0
  %4823 = vmatpush1.bf16.msra.mxu0 %v4746
  %4824 = vmatprep.subr.bf16.mxu0 0
  %4825 = vmatpush1.bf16.msra.mxu0 %v4743
  %4826 = vmatprep.subr.bf16.mxu0 0
  %4827 = vmatpush1.bf16.msra.mxu0 %v4740
  %4828 = vmatprep.subr.bf16.mxu0 0
  %4829 = vmatpush1.bf16.msra.mxu0 %v4737
  %4830 = vmatprep.subr.bf16.mxu0 0
  %4831 = vmatpush1.bf16.msra.mxu0 %v4734
  %4832 = vmatprep.subr.bf16.mxu0 0
  %4833 = vmatpush1.bf16.msra.mxu0 %v4731
  %4834 = vmatprep.subr.bf16.mxu0 0
  %4835 = vmatpush2.bf16.msra.mxu0 0
  %4836 = vmatprep.subr.bf16.mxu0 0
  %4837 = vmatpush2.bf16.msra.mxu0 0
  %4838 = vmatprep.subr.bf16.mxu0 0
  %4839 = vmatpush2.bf16.msra.mxu0 0
  %4840 = vmatprep.subr.bf16.mxu0 0
  %4841 = vmatpush2.bf16.msra.mxu0 0
  %4842 = vmatprep.subr.bf16.mxu0 0
  %4843 = vmatpush2.bf16.msra.mxu0 0
  %4844 = vmatprep.subr.bf16.mxu0 0
  %4845 = vmatpush2.bf16.msra.mxu0 0
  %4846 = vmatprep.subr.bf16.mxu0 0
  %4847 = vmatpush2.bf16.msra.mxu0 0
  %4848 = vmatprep.subr.bf16.mxu0 0
  %4849 = vmatpush2.bf16.msra.mxu0 0
  %4850 = vmatprep.mubr.bf16.mxu0 0
  %4851 = vmatmul.mubr.bf16.gmra.mxu0 %v4371
  %v4852 = vpop.f32.mrf.mxu0
  %v4853 = vadd.f32 %v582, %v4852
  %v4854 = vpop.f32.mrf.mxu0
  %v4855 = vpop.f32.mrf.mxu0
  %v4856 = vpop.f32.mrf.mxu0
  %4857 = vdwg.mxu0
  %v4858 = vadd.f32 %v4571, %v4812
  %v4859 = vxor.u32 %v4858, 2147483648
  %v4860 = vmul.f32 %v4859, 1.442695
  %v4861 = vpow.pop %v4860
  %v4862 = vadd.f32 %v4861, 1.0
  %v4863 = vrcp.pop %v4862
  %v4864 = vmul.f32 1.0, %v4863
  %v4865 = vadd.f32 %v4573, %v4814
  %v4866 = vxor.u32 %v4865, 2147483648
  %v4867 = vmul.f32 %v4866, 1.442695
  %v4868 = vpow.pop %v4867
  %v4869 = vadd.f32 %v4868, 1.0
  %v4870 = vrcp.pop %v4869
  %v4871 = vmul.f32 1.0, %v4870
  %v4872 = vmul.f32 %v4864, %v4853
  %v4873 = vadd.f32 %v4612, %v4872
  %v4874 = vtanh.pop %v4873
  %v4875 = vsub.f32 1.0, %v4871
  %v4876 = vmul.f32 %v4875, %v4874
  %v4877 = vmul.f32 %v4871, %v4370
  %v4878 = vadd.f32 %v4876, %v4877
  %v4879 = vpack.c.bf16 %v4878, %v4878
  %s4880 = scalar_lea.vmem %s7, 32
  %4881 = vst [vmem:[%s4880] sm:$0xf] %v4879
  %s4882 = scalar_lea.vmem %s0, 36
  %v4883 = vld [vmem:[%s4882] sm:$0xf]
  %v4884 = vld [vmem:[%s2] sm:$0xff]
  %v4885 = vld [vmem:[%s2 + $0x8] sm:$0xf]
  %v4886 = vld [vmem:[%s2 + $0xc] sm:$0xff]
  %v4887 = vld [vmem:[%s2 + $0x14] sm:$0xf]
  %v4888 = vld [vmem:[%s2 + $0x18] sm:$0xff]
  %v4889 = vld [vmem:[%s2 + $0x20] sm:$0xf]
  %v4890 = vld [vmem:[%s2 + $0x24] sm:$0xff]
  %v4891 = vld [vmem:[%s2 + $0x2c] sm:$0xf]
  %v4892 = vld [vmem:[%s2 + $0x30] sm:$0xff]
  %v4893 = vld [vmem:[%s2 + $0x38] sm:$0xf]
  %v4894 = vld [vmem:[%s2 + $0x3c] sm:$0xff]
  %v4895 = vld [vmem:[%s2 + $0x44] sm:$0xf]
  %v4896 = vld [vmem:[%s2 + $0x48] sm:$0xff]
  %v4897 = vld [vmem:[%s2 + $0x50] sm:$0xf]
  %v4898 = vld [vmem:[%s2 + $0x54] sm:$0xff]
  %v4899 = vld [vmem:[%s2 + $0x5c] sm:$0xf]
  %v4900 = vld [vmem:[%s2 + $0x60] sm:$0xff]
  %v4901 = vld [vmem:[%s2 + $0x68] sm:$0xf]
  %v4902 = vld [vmem:[%s2 + $0x6c] sm:$0xff]
  %v4903 = vld [vmem:[%s2 + $0x74] sm:$0xf]
  %v4904 = vld [vmem:[%s2 + $0x78] sm:$0xff]
  %v4905 = vld [vmem:[%s2 + $0x80] sm:$0xf]
  %v4906 = vld [vmem:[%s2 + $0x84] sm:$0xff]
  %v4907 = vld [vmem:[%s2 + $0x8c] sm:$0xf]
  %v4908 = vld [vmem:[%s2 + $0x90] sm:$0xff]
  %v4909 = vld [vmem:[%s2 + $0x98] sm:$0xf]
  %v4910 = vld [vmem:[%s2 + $0x9c] sm:$0xff]
  %v4911 = vld [vmem:[%s2 + $0xa4] sm:$0xf]
  %v4912 = vld [vmem:[%s2 + $0xa8] sm:$0xff]
  %v4913 = vld [vmem:[%s2 + $0xb0] sm:$0xf]
  %v4914 = vld [vmem:[%s2 + $0xb4] sm:$0xff]
  %v4915 = vld [vmem:[%s2 + $0xbc] sm:$0xf]
  %v4948 = vunpack.c.l.b16 %v4884
  %v4949 = vunpack.c.h.b16 %v4884
  %v4950 = vunpack.c.l.b16 %v4885
  %v4951 = vunpack.c.l.b16 %v4886
  %v4952 = vunpack.c.h.b16 %v4886
  %v4953 = vunpack.c.l.b16 %v4887
  %v4954 = vunpack.c.l.b16 %v4888
  %v4955 = vunpack.c.h.b16 %v4888
  %v4956 = vunpack.c.l.b16 %v4889
  %v4957 = vunpack.c.l.b16 %v4890
  %v4958 = vunpack.c.h.b16 %v4890
  %v4959 = vunpack.c.l.b16 %v4891
  %v4960 = vunpack.c.l.b16 %v4892
  %v4961 = vunpack.c.h.b16 %v4892
  %v4962 = vunpack.c.l.b16 %v4893
  %v4963 = vunpack.c.l.b16 %v4894
  %v4964 = vunpack.c.h.b16 %v4894
  %v4965 = vunpack.c.l.b16 %v4895
  %v4966 = vunpack.c.l.b16 %v4896
  %v4967 = vunpack.c.h.b16 %v4896
  %v4968 = vunpack.c.l.b16 %v4897
  %v4969 = vunpack.c.l.b16 %v4898
  %v4970 = vunpack.c.h.b16 %v4898
  %v4971 = vunpack.c.l.b16 %v4899
  %v4972 = vunpack.c.l.b16 %v4900
  %v4973 = vunpack.c.h.b16 %v4900
  %v4974 = vunpack.c.l.b16 %v4901
  %v4975 = vunpack.c.l.b16 %v4902
  %v4976 = vunpack.c.h.b16 %v4902
  %v4977 = vunpack.c.l.b16 %v4903
  %v4978 = vunpack.c.l.b16 %v4904
  %v4979 = vunpack.c.h.b16 %v4904
  %v4980 = vunpack.c.l.b16 %v4905
  %v4981 = vunpack.c.l.b16 %v4906
  %v4982 = vunpack.c.h.b16 %v4906
  %v4983 = vunpack.c.l.b16 %v4907
  %v4984 = vunpack.c.l.b16 %v4908
  %v4985 = vunpack.c.h.b16 %v4908
  %v4986 = vunpack.c.l.b16 %v4909
  %v4987 = vunpack.c.l.b16 %v4910
  %v4988 = vunpack.c.h.b16 %v4910
  %v4989 = vunpack.c.l.b16 %v4911
  %v4990 = vunpack.c.l.b16 %v4912
  %v4991 = vunpack.c.h.b16 %v4912
  %v4992 = vunpack.c.l.b16 %v4913
  %v4993 = vunpack.c.l.b16 %v4914
  %v4994 = vunpack.c.h.b16 %v4914
  %v4995 = vunpack.c.l.b16 %v4915
  %v4996 = vpack.c.b16 %v4951, %v4948
  %v4997 = vpack.c.b16 %v4952, %v4949
  %v4998 = vpack.c.b16 %v4953, %v4950
  %v4999 = vpack.c.b16 %v4957, %v4954
  %v5000 = vpack.c.b16 %v4958, %v4955
  %v5001 = vpack.c.b16 %v4959, %v4956
  %v5002 = vpack.c.b16 %v4963, %v4960
  %v5003 = vpack.c.b16 %v4964, %v4961
  %v5004 = vpack.c.b16 %v4965, %v4962
  %v5005 = vpack.c.b16 %v4969, %v4966
  %v5006 = vpack.c.b16 %v4970, %v4967
  %v5007 = vpack.c.b16 %v4971, %v4968
  %v5008 = vpack.c.b16 %v4975, %v4972
  %v5009 = vpack.c.b16 %v4976, %v4973
  %v5010 = vpack.c.b16 %v4977, %v4974
  %v5011 = vpack.c.b16 %v4981, %v4978
  %v5012 = vpack.c.b16 %v4982, %v4979
  %v5013 = vpack.c.b16 %v4983, %v4980
  %v5014 = vpack.c.b16 %v4987, %v4984
  %v5015 = vpack.c.b16 %v4988, %v4985
  %v5016 = vpack.c.b16 %v4989, %v4986
  %v5017 = vpack.c.b16 %v4993, %v4990
  %v5018 = vpack.c.b16 %v4994, %v4991
  %v5019 = vpack.c.b16 %v4995, %v4992
  %5044 = vmatprep.subr.bf16.mxu0 %v5018
  %5045 = vmatpush1.bf16.msra.mxu0 %v5017
  %5046 = vmatprep.subr.bf16.mxu0 %v5015
  %5047 = vmatpush1.bf16.msra.mxu0 %v5014
  %5048 = vmatprep.subr.bf16.mxu0 %v5012
  %5049 = vmatpush1.bf16.msra.mxu0 %v5011
  %5050 = vmatprep.subr.bf16.mxu0 %v5009
  %5051 = vmatpush1.bf16.msra.mxu0 %v5008
  %5052 = vmatprep.subr.bf16.mxu0 %v5006
  %5053 = vmatpush1.bf16.msra.mxu0 %v5005
  %5054 = vmatprep.subr.bf16.mxu0 %v5003
  %5055 = vmatpush1.bf16.msra.mxu0 %v5002
  %5056 = vmatprep.subr.bf16.mxu0 %v5000
  %5057 = vmatpush1.bf16.msra.mxu0 %v4999
  %5058 = vmatprep.subr.bf16.mxu0 %v4997
  %5059 = vmatpush1.bf16.msra.mxu0 %v4996
  %5060 = vmatprep.subr.bf16.mxu0 0
  %5061 = vmatpush2.bf16.msra.mxu0 0
  %5062 = vmatprep.subr.bf16.mxu0 0
  %5063 = vmatpush2.bf16.msra.mxu0 0
  %5064 = vmatprep.subr.bf16.mxu0 0
  %5065 = vmatpush2.bf16.msra.mxu0 0
  %5066 = vmatprep.subr.bf16.mxu0 0
  %5067 = vmatpush2.bf16.msra.mxu0 0
  %5068 = vmatprep.subr.bf16.mxu0 0
  %5069 = vmatpush2.bf16.msra.mxu0 0
  %5070 = vmatprep.subr.bf16.mxu0 0
  %5071 = vmatpush2.bf16.msra.mxu0 0
  %5072 = vmatprep.subr.bf16.mxu0 0
  %5073 = vmatpush2.bf16.msra.mxu0 0
  %5074 = vmatprep.subr.bf16.mxu0 0
  %5075 = vmatpush2.bf16.msra.mxu0 0
  %5076 = vmatprep.mubr.bf16.mxu0 0
  %5077 = vmatmul.mubr.bf16.gmra.mxu0 %v4883
  %v5078 = vpop.f32.mrf.mxu0
  %v5079 = vadd.f32 %v247, %v5078
  %v5080 = vpop.f32.mrf.mxu0
  %v5081 = vadd.f32 %v249, %v5080
  %v5082 = vpop.f32.mrf.mxu0
  %v5083 = vpop.f32.mrf.mxu0
  %5084 = vdwg.mxu0
  %5085 = vmatprep.subr.bf16.mxu0 0
  %5086 = vmatpush1.bf16.msra.mxu0 %v5019
  %5087 = vmatprep.subr.bf16.mxu0 0
  %5088 = vmatpush1.bf16.msra.mxu0 %v5016
  %5089 = vmatprep.subr.bf16.mxu0 0
  %5090 = vmatpush1.bf16.msra.mxu0 %v5013
  %5091 = vmatprep.subr.bf16.mxu0 0
  %5092 = vmatpush1.bf16.msra.mxu0 %v5010
  %5093 = vmatprep.subr.bf16.mxu0 0
  %5094 = vmatpush1.bf16.msra.mxu0 %v5007
  %5095 = vmatprep.subr.bf16.mxu0 0
  %5096 = vmatpush1.bf16.msra.mxu0 %v5004
  %5097 = vmatprep.subr.bf16.mxu0 0
  %5098 = vmatpush1.bf16.msra.mxu0 %v5001
  %5099 = vmatprep.subr.bf16.mxu0 0
  %5100 = vmatpush1.bf16.msra.mxu0 %v4998
  %5101 = vmatprep.subr.bf16.mxu0 0
  %5102 = vmatpush2.bf16.msra.mxu0 0
  %5103 = vmatprep.subr.bf16.mxu0 0
  %5104 = vmatpush2.bf16.msra.mxu0 0
  %5105 = vmatprep.subr.bf16.mxu0 0
  %5106 = vmatpush2.bf16.msra.mxu0 0
  %5107 = vmatprep.subr.bf16.mxu0 0
  %5108 = vmatpush2.bf16.msra.mxu0 0
  %5109 = vmatprep.subr.bf16.mxu0 0
  %5110 = vmatpush2.bf16.msra.mxu0 0
  %5111 = vmatprep.subr.bf16.mxu0 0
  %5112 = vmatpush2.bf16.msra.mxu0 0
  %5113 = vmatprep.subr.bf16.mxu0 0
  %5114 = vmatpush2.bf16.msra.mxu0 0
  %5115 = vmatprep.subr.bf16.mxu0 0
  %5116 = vmatpush2.bf16.msra.mxu0 0
  %5117 = vmatprep.mubr.bf16.mxu0 0
  %5118 = vmatmul.mubr.bf16.gmra.mxu0 %v4883
  %v5119 = vpop.f32.mrf.mxu0
  %v5120 = vadd.f32 %v288, %v5119
  %v5121 = vpop.f32.mrf.mxu0
  %v5122 = vpop.f32.mrf.mxu0
  %v5123 = vpop.f32.mrf.mxu0
  %5124 = vdwg.mxu0
  %v5125 = vld [vmem:[%s5] sm:$0xff]
  %v5126 = vld [vmem:[%s5 + $0x8] sm:$0xf]
  %v5127 = vld [vmem:[%s5 + $0xc] sm:$0xff]
  %v5128 = vld [vmem:[%s5 + $0x14] sm:$0xf]
  %v5129 = vld [vmem:[%s5 + $0x18] sm:$0xff]
  %v5130 = vld [vmem:[%s5 + $0x20] sm:$0xf]
  %v5131 = vld [vmem:[%s5 + $0x24] sm:$0xff]
  %v5132 = vld [vmem:[%s5 + $0x2c] sm:$0xf]
  %v5133 = vld [vmem:[%s5 + $0x30] sm:$0xff]
  %v5134 = vld [vmem:[%s5 + $0x38] sm:$0xf]
  %v5135 = vld [vmem:[%s5 + $0x3c] sm:$0xff]
  %v5136 = vld [vmem:[%s5 + $0x44] sm:$0xf]
  %v5137 = vld [vmem:[%s5 + $0x48] sm:$0xff]
  %v5138 = vld [vmem:[%s5 + $0x50] sm:$0xf]
  %v5139 = vld [vmem:[%s5 + $0x54] sm:$0xff]
  %v5140 = vld [vmem:[%s5 + $0x5c] sm:$0xf]
  %v5141 = vld [vmem:[%s5 + $0x60] sm:$0xff]
  %v5142 = vld [vmem:[%s5 + $0x68] sm:$0xf]
  %v5143 = vld [vmem:[%s5 + $0x6c] sm:$0xff]
  %v5144 = vld [vmem:[%s5 + $0x74] sm:$0xf]
  %v5145 = vld [vmem:[%s5 + $0x78] sm:$0xff]
  %v5146 = vld [vmem:[%s5 + $0x80] sm:$0xf]
  %v5147 = vld [vmem:[%s5 + $0x84] sm:$0xff]
  %v5148 = vld [vmem:[%s5 + $0x8c] sm:$0xf]
  %v5149 = vld [vmem:[%s5 + $0x90] sm:$0xff]
  %v5150 = vld [vmem:[%s5 + $0x98] sm:$0xf]
  %v5151 = vld [vmem:[%s5 + $0x9c] sm:$0xff]
  %v5152 = vld [vmem:[%s5 + $0xa4] sm:$0xf]
  %v5153 = vld [vmem:[%s5 + $0xa8] sm:$0xff]
  %v5154 = vld [vmem:[%s5 + $0xb0] sm:$0xf]
  %v5155 = vld [vmem:[%s5 + $0xb4] sm:$0xff]
  %v5156 = vld [vmem:[%s5 + $0xbc] sm:$0xf]
  %v5189 = vunpack.c.l.b16 %v5125
  %v5190 = vunpack.c.h.b16 %v5125
  %v5191 = vunpack.c.l.b16 %v5126
  %v5192 = vunpack.c.l.b16 %v5127
  %v5193 = vunpack.c.h.b16 %v5127
  %v5194 = vunpack.c.l.b16 %v5128
  %v5195 = vunpack.c.l.b16 %v5129
  %v5196 = vunpack.c.h.b16 %v5129
  %v5197 = vunpack.c.l.b16 %v5130
  %v5198 = vunpack.c.l.b16 %v5131
  %v5199 = vunpack.c.h.b16 %v5131
  %v5200 = vunpack.c.l.b16 %v5132
  %v5201 = vunpack.c.l.b16 %v5133
  %v5202 = vunpack.c.h.b16 %v5133
  %v5203 = vunpack.c.l.b16 %v5134
  %v5204 = vunpack.c.l.b16 %v5135
  %v5205 = vunpack.c.h.b16 %v5135
  %v5206 = vunpack.c.l.b16 %v5136
  %v5207 = vunpack.c.l.b16 %v5137
  %v5208 = vunpack.c.h.b16 %v5137
  %v5209 = vunpack.c.l.b16 %v5138
  %v5210 = vunpack.c.l.b16 %v5139
  %v5211 = vunpack.c.h.b16 %v5139
  %v5212 = vunpack.c.l.b16 %v5140
  %v5213 = vunpack.c.l.b16 %v5141
  %v5214 = vunpack.c.h.b16 %v5141
  %v5215 = vunpack.c.l.b16 %v5142
  %v5216 = vunpack.c.l.b16 %v5143
  %v5217 = vunpack.c.h.b16 %v5143
  %v5218 = vunpack.c.l.b16 %v5144
  %v5219 = vunpack.c.l.b16 %v5145
  %v5220 = vunpack.c.h.b16 %v5145
  %v5221 = vunpack.c.l.b16 %v5146
  %v5222 = vunpack.c.l.b16 %v5147
  %v5223 = vunpack.c.h.b16 %v5147
  %v5224 = vunpack.c.l.b16 %v5148
  %v5225 = vunpack.c.l.b16 %v5149
  %v5226 = vunpack.c.h.b16 %v5149
  %v5227 = vunpack.c.l.b16 %v5150
  %v5228 = vunpack.c.l.b16 %v5151
  %v5229 = vunpack.c.h.b16 %v5151
  %v5230 = vunpack.c.l.b16 %v5152
  %v5231 = vunpack.c.l.b16 %v5153
  %v5232 = vunpack.c.h.b16 %v5153
  %v5233 = vunpack.c.l.b16 %v5154
  %v5234 = vunpack.c.l.b16 %v5155
  %v5235 = vunpack.c.h.b16 %v5155
  %v5236 = vunpack.c.l.b16 %v5156
  %v5237 = vpack.c.b16 %v5192, %v5189
  %v5238 = vpack.c.b16 %v5193, %v5190
  %v5239 = vpack.c.b16 %v5194, %v5191
  %v5240 = vpack.c.b16 %v5198, %v5195
  %v5241 = vpack.c.b16 %v5199, %v5196
  %v5242 = vpack.c.b16 %v5200, %v5197
  %v5243 = vpack.c.b16 %v5204, %v5201
  %v5244 = vpack.c.b16 %v5205, %v5202
  %v5245 = vpack.c.b16 %v5206, %v5203
  %v5246 = vpack.c.b16 %v5210, %v5207
  %v5247 = vpack.c.b16 %v5211, %v5208
  %v5248 = vpack.c.b16 %v5212, %v5209
  %v5249 = vpack.c.b16 %v5216, %v5213
  %v5250 = vpack.c.b16 %v5217, %v5214
  %v5251 = vpack.c.b16 %v5218, %v5215
  %v5252 = vpack.c.b16 %v5222, %v5219
  %v5253 = vpack.c.b16 %v5223, %v5220
  %v5254 = vpack.c.b16 %v5224, %v5221
  %v5255 = vpack.c.b16 %v5228, %v5225
  %v5256 = vpack.c.b16 %v5229, %v5226
  %v5257 = vpack.c.b16 %v5230, %v5227
  %v5258 = vpack.c.b16 %v5234, %v5231
  %v5259 = vpack.c.b16 %v5235, %v5232
  %v5260 = vpack.c.b16 %v5236, %v5233
  %5285 = vmatprep.subr.bf16.mxu0 %v5259
  %5286 = vmatpush1.bf16.msra.mxu0 %v5258
  %5287 = vmatprep.subr.bf16.mxu0 %v5256
  %5288 = vmatpush1.bf16.msra.mxu0 %v5255
  %5289 = vmatprep.subr.bf16.mxu0 %v5253
  %5290 = vmatpush1.bf16.msra.mxu0 %v5252
  %5291 = vmatprep.subr.bf16.mxu0 %v5250
  %5292 = vmatpush1.bf16.msra.mxu0 %v5249
  %5293 = vmatprep.subr.bf16.mxu0 %v5247
  %5294 = vmatpush1.bf16.msra.mxu0 %v5246
  %5295 = vmatprep.subr.bf16.mxu0 %v5244
  %5296 = vmatpush1.bf16.msra.mxu0 %v5243
  %5297 = vmatprep.subr.bf16.mxu0 %v5241
  %5298 = vmatpush1.bf16.msra.mxu0 %v5240
  %5299 = vmatprep.subr.bf16.mxu0 %v5238
  %5300 = vmatpush1.bf16.msra.mxu0 %v5237
  %5301 = vmatprep.subr.bf16.mxu0 0
  %5302 = vmatpush2.bf16.msra.mxu0 0
  %5303 = vmatprep.subr.bf16.mxu0 0
  %5304 = vmatpush2.bf16.msra.mxu0 0
  %5305 = vmatprep.subr.bf16.mxu0 0
  %5306 = vmatpush2.bf16.msra.mxu0 0
  %5307 = vmatprep.subr.bf16.mxu0 0
  %5308 = vmatpush2.bf16.msra.mxu0 0
  %5309 = vmatprep.subr.bf16.mxu0 0
  %5310 = vmatpush2.bf16.msra.mxu0 0
  %5311 = vmatprep.subr.bf16.mxu0 0
  %5312 = vmatpush2.bf16.msra.mxu0 0
  %5313 = vmatprep.subr.bf16.mxu0 0
  %5314 = vmatpush2.bf16.msra.mxu0 0
  %5315 = vmatprep.subr.bf16.mxu0 0
  %5316 = vmatpush2.bf16.msra.mxu0 0
  %5317 = vmatprep.mubr.bf16.mxu0 0
  %5318 = vmatmul.mubr.bf16.gmra.mxu0 %v4879
  %v5319 = vpop.f32.mrf.mxu0
  %v5320 = vadd.f32 %v574, %v5319
  %v5321 = vpop.f32.mrf.mxu0
  %v5322 = vadd.f32 %v578, %v5321
  %v5323 = vpop.f32.mrf.mxu0
  %v5324 = vpop.f32.mrf.mxu0
  %5325 = vdwg.mxu0
  %5326 = vmatprep.subr.bf16.mxu0 0
  %5327 = vmatpush1.bf16.msra.mxu0 %v5260
  %5328 = vmatprep.subr.bf16.mxu0 0
  %5329 = vmatpush1.bf16.msra.mxu0 %v5257
  %5330 = vmatprep.subr.bf16.mxu0 0
  %5331 = vmatpush1.bf16.msra.mxu0 %v5254
  %5332 = vmatprep.subr.bf16.mxu0 0
  %5333 = vmatpush1.bf16.msra.mxu0 %v5251
  %5334 = vmatprep.subr.bf16.mxu0 0
  %5335 = vmatpush1.bf16.msra.mxu0 %v5248
  %5336 = vmatprep.subr.bf16.mxu0 0
  %5337 = vmatpush1.bf16.msra.mxu0 %v5245
  %5338 = vmatprep.subr.bf16.mxu0 0
  %5339 = vmatpush1.bf16.msra.mxu0 %v5242
  %5340 = vmatprep.subr.bf16.mxu0 0
  %5341 = vmatpush1.bf16.msra.mxu0 %v5239
  %5342 = vmatprep.subr.bf16.mxu0 0
  %5343 = vmatpush2.bf16.msra.mxu0 0
  %5344 = vmatprep.subr.bf16.mxu0 0
  %5345 = vmatpush2.bf16.msra.mxu0 0
  %5346 = vmatprep.subr.bf16.mxu0 0
  %5347 = vmatpush2.bf16.msra.mxu0 0
  %5348 = vmatprep.subr.bf16.mxu0 0
  %5349 = vmatpush2.bf16.msra.mxu0 0
  %5350 = vmatprep.subr.bf16.mxu0 0
  %5351 = vmatpush2.bf16.msra.mxu0 0
  %5352 = vmatprep.subr.bf16.mxu0 0
  %5353 = vmatpush2.bf16.msra.mxu0 0
  %5354 = vmatprep.subr.bf16.mxu0 0
  %5355 = vmatpush2.bf16.msra.mxu0 0
  %5356 = vmatprep.subr.bf16.mxu0 0
  %5357 = vmatpush2.bf16.msra.mxu0 0
  %5358 = vmatprep.mubr.bf16.mxu0 0
  %5359 = vmatmul.mubr.bf16.gmra.mxu0 %v4879
  %v5360 = vpop.f32.mrf.mxu0
  %v5361 = vadd.f32 %v582, %v5360
  %v5362 = vpop.f32.mrf.mxu0
  %v5363 = vpop.f32.mrf.mxu0
  %v5364 = vpop.f32.mrf.mxu0
  %5365 = vdwg.mxu0
  %v5366 = vadd.f32 %v5079, %v5320
  %v5367 = vxor.u32 %v5366, 2147483648
  %v5368 = vmul.f32 %v5367, 1.442695
  %v5369 = vpow.pop %v5368
  %v5370 = vadd.f32 %v5369, 1.0
  %v5371 = vrcp.pop %v5370
  %v5372 = vmul.f32 1.0, %v5371
  %v5373 = vadd.f32 %v5081, %v5322
  %v5374 = vxor.u32 %v5373, 2147483648
  %v5375 = vmul.f32 %v5374, 1.442695
  %v5376 = vpow.pop %v5375
  %v5377 = vadd.f32 %v5376, 1.0
  %v5378 = vrcp.pop %v5377
  %v5379 = vmul.f32 1.0, %v5378
  %v5380 = vmul.f32 %v5372, %v5361
  %v5381 = vadd.f32 %v5120, %v5380
  %v5382 = vtanh.pop %v5381
  %v5383 = vsub.f32 1.0, %v5379
  %v5384 = vmul.f32 %v5383, %v5382
  %v5385 = vmul.f32 %v5379, %v4878
  %v5386 = vadd.f32 %v5384, %v5385
  %v5387 = vpack.c.bf16 %v5386, %v5386
  %s5388 = scalar_lea.vmem %s7, 36
  %5389 = vst [vmem:[%s5388] sm:$0xf] %v5387
  %s5390 = scalar_lea.vmem %s0, 40
  %v5391 = vld [vmem:[%s5390] sm:$0xf]
  %v5392 = vld [vmem:[%s2] sm:$0xff]
  %v5393 = vld [vmem:[%s2 + $0x8] sm:$0xf]
  %v5394 = vld [vmem:[%s2 + $0xc] sm:$0xff]
  %v5395 = vld [vmem:[%s2 + $0x14] sm:$0xf]
  %v5396 = vld [vmem:[%s2 + $0x18] sm:$0xff]
  %v5397 = vld [vmem:[%s2 + $0x20] sm:$0xf]
  %v5398 = vld [vmem:[%s2 + $0x24] sm:$0xff]
  %v5399 = vld [vmem:[%s2 + $0x2c] sm:$0xf]
  %v5400 = vld [vmem:[%s2 + $0x30] sm:$0xff]
  %v5401 = vld [vmem:[%s2 + $0x38] sm:$0xf]
  %v5402 = vld [vmem:[%s2 + $0x3c] sm:$0xff]
  %v5403 = vld [vmem:[%s2 + $0x44] sm:$0xf]
  %v5404 = vld [vmem:[%s2 + $0x48] sm:$0xff]
  %v5405 = vld [vmem:[%s2 + $0x50] sm:$0xf]
  %v5406 = vld [vmem:[%s2 + $0x54] sm:$0xff]
  %v5407 = vld [vmem:[%s2 + $0x5c] sm:$0xf]
  %v5408 = vld [vmem:[%s2 + $0x60] sm:$0xff]
  %v5409 = vld [vmem:[%s2 + $0x68] sm:$0xf]
  %v5410 = vld [vmem:[%s2 + $0x6c] sm:$0xff]
  %v5411 = vld [vmem:[%s2 + $0x74] sm:$0xf]
  %v5412 = vld [vmem:[%s2 + $0x78] sm:$0xff]
  %v5413 = vld [vmem:[%s2 + $0x80] sm:$0xf]
  %v5414 = vld [vmem:[%s2 + $0x84] sm:$0xff]
  %v5415 = vld [vmem:[%s2 + $0x8c] sm:$0xf]
  %v5416 = vld [vmem:[%s2 + $0x90] sm:$0xff]
  %v5417 = vld [vmem:[%s2 + $0x98] sm:$0xf]
  %v5418 = vld [vmem:[%s2 + $0x9c] sm:$0xff]
  %v5419 = vld [vmem:[%s2 + $0xa4] sm:$0xf]
  %v5420 = vld [vmem:[%s2 + $0xa8] sm:$0xff]
  %v5421 = vld [vmem:[%s2 + $0xb0] sm:$0xf]
  %v5422 = vld [vmem:[%s2 + $0xb4] sm:$0xff]
  %v5423 = vld [vmem:[%s2 + $0xbc] sm:$0xf]
  %v5456 = vunpack.c.l.b16 %v5392
  %v5457 = vunpack.c.h.b16 %v5392
  %v5458 = vunpack.c.l.b16 %v5393
  %v5459 = vunpack.c.l.b16 %v5394
  %v5460 = vunpack.c.h.b16 %v5394
  %v5461 = vunpack.c.l.b16 %v5395
  %v5462 = vunpack.c.l.b16 %v5396
  %v5463 = vunpack.c.h.b16 %v5396
  %v5464 = vunpack.c.l.b16 %v5397
  %v5465 = vunpack.c.l.b16 %v5398
  %v5466 = vunpack.c.h.b16 %v5398
  %v5467 = vunpack.c.l.b16 %v5399
  %v5468 = vunpack.c.l.b16 %v5400
  %v5469 = vunpack.c.h.b16 %v5400
  %v5470 = vunpack.c.l.b16 %v5401
  %v5471 = vunpack.c.l.b16 %v5402
  %v5472 = vunpack.c.h.b16 %v5402
  %v5473 = vunpack.c.l.b16 %v5403
  %v5474 = vunpack.c.l.b16 %v5404
  %v5475 = vunpack.c.h.b16 %v5404
  %v5476 = vunpack.c.l.b16 %v5405
  %v5477 = vunpack.c.l.b16 %v5406
  %v5478 = vunpack.c.h.b16 %v5406
  %v5479 = vunpack.c.l.b16 %v5407
  %v5480 = vunpack.c.l.b16 %v5408
  %v5481 = vunpack.c.h.b16 %v5408
  %v5482 = vunpack.c.l.b16 %v5409
  %v5483 = vunpack.c.l.b16 %v5410
  %v5484 = vunpack.c.h.b16 %v5410
  %v5485 = vunpack.c.l.b16 %v5411
  %v5486 = vunpack.c.l.b16 %v5412
  %v5487 = vunpack.c.h.b16 %v5412
  %v5488 = vunpack.c.l.b16 %v5413
  %v5489 = vunpack.c.l.b16 %v5414
  %v5490 = vunpack.c.h.b16 %v5414
  %v5491 = vunpack.c.l.b16 %v5415
  %v5492 = vunpack.c.l.b16 %v5416
  %v5493 = vunpack.c.h.b16 %v5416
  %v5494 = vunpack.c.l.b16 %v5417
  %v5495 = vunpack.c.l.b16 %v5418
  %v5496 = vunpack.c.h.b16 %v5418
  %v5497 = vunpack.c.l.b16 %v5419
  %v5498 = vunpack.c.l.b16 %v5420
  %v5499 = vunpack.c.h.b16 %v5420
  %v5500 = vunpack.c.l.b16 %v5421
  %v5501 = vunpack.c.l.b16 %v5422
  %v5502 = vunpack.c.h.b16 %v5422
  %v5503 = vunpack.c.l.b16 %v5423
  %v5504 = vpack.c.b16 %v5459, %v5456
  %v5505 = vpack.c.b16 %v5460, %v5457
  %v5506 = vpack.c.b16 %v5461, %v5458
  %v5507 = vpack.c.b16 %v5465, %v5462
  %v5508 = vpack.c.b16 %v5466, %v5463
  %v5509 = vpack.c.b16 %v5467, %v5464
  %v5510 = vpack.c.b16 %v5471, %v5468
  %v5511 = vpack.c.b16 %v5472, %v5469
  %v5512 = vpack.c.b16 %v5473, %v5470
  %v5513 = vpack.c.b16 %v5477, %v5474
  %v5514 = vpack.c.b16 %v5478, %v5475
  %v5515 = vpack.c.b16 %v5479, %v5476
  %v5516 = vpack.c.b16 %v5483, %v5480
  %v5517 = vpack.c.b16 %v5484, %v5481
  %v5518 = vpack.c.b16 %v5485, %v5482
  %v5519 = vpack.c.b16 %v5489, %v5486
  %v5520 = vpack.c.b16 %v5490, %v5487
  %v5521 = vpack.c.b16 %v5491, %v5488
  %v5522 = vpack.c.b16 %v5495, %v5492
  %v5523 = vpack.c.b16 %v5496, %v5493
  %v5524 = vpack.c.b16 %v5497, %v5494
  %v5525 = vpack.c.b16 %v5501, %v5498
  %v5526 = vpack.c.b16 %v5502, %v5499
  %v5527 = vpack.c.b16 %v5503, %v5500
  %5552 = vmatprep.subr.bf16.mxu0 %v5526
  %5553 = vmatpush1.bf16.msra.mxu0 %v5525
  %5554 = vmatprep.subr.bf16.mxu0 %v5523
  %5555 = vmatpush1.bf16.msra.mxu0 %v5522
  %5556 = vmatprep.subr.bf16.mxu0 %v5520
  %5557 = vmatpush1.bf16.msra.mxu0 %v5519
  %5558 = vmatprep.subr.bf16.mxu0 %v5517
  %5559 = vmatpush1.bf16.msra.mxu0 %v5516
  %5560 = vmatprep.subr.bf16.mxu0 %v5514
  %5561 = vmatpush1.bf16.msra.mxu0 %v5513
  %5562 = vmatprep.subr.bf16.mxu0 %v5511
  %5563 = vmatpush1.bf16.msra.mxu0 %v5510
  %5564 = vmatprep.subr.bf16.mxu0 %v5508
  %5565 = vmatpush1.bf16.msra.mxu0 %v5507
  %5566 = vmatprep.subr.bf16.mxu0 %v5505
  %5567 = vmatpush1.bf16.msra.mxu0 %v5504
  %5568 = vmatprep.subr.bf16.mxu0 0
  %5569 = vmatpush2.bf16.msra.mxu0 0
  %5570 = vmatprep.subr.bf16.mxu0 0
  %5571 = vmatpush2.bf16.msra.mxu0 0
  %5572 = vmatprep.subr.bf16.mxu0 0
  %5573 = vmatpush2.bf16.msra.mxu0 0
  %5574 = vmatprep.subr.bf16.mxu0 0
  %5575 = vmatpush2.bf16.msra.mxu0 0
  %5576 = vmatprep.subr.bf16.mxu0 0
  %5577 = vmatpush2.bf16.msra.mxu0 0
  %5578 = vmatprep.subr.bf16.mxu0 0
  %5579 = vmatpush2.bf16.msra.mxu0 0
  %5580 = vmatprep.subr.bf16.mxu0 0
  %5581 = vmatpush2.bf16.msra.mxu0 0
  %5582 = vmatprep.subr.bf16.mxu0 0
  %5583 = vmatpush2.bf16.msra.mxu0 0
  %5584 = vmatprep.mubr.bf16.mxu0 0
  %5585 = vmatmul.mubr.bf16.gmra.mxu0 %v5391
  %v5586 = vpop.f32.mrf.mxu0
  %v5587 = vadd.f32 %v247, %v5586
  %v5588 = vpop.f32.mrf.mxu0
  %v5589 = vadd.f32 %v249, %v5588
  %v5590 = vpop.f32.mrf.mxu0
  %v5591 = vpop.f32.mrf.mxu0
  %5592 = vdwg.mxu0
  %5593 = vmatprep.subr.bf16.mxu0 0
  %5594 = vmatpush1.bf16.msra.mxu0 %v5527
  %5595 = vmatprep.subr.bf16.mxu0 0
  %5596 = vmatpush1.bf16.msra.mxu0 %v5524
  %5597 = vmatprep.subr.bf16.mxu0 0
  %5598 = vmatpush1.bf16.msra.mxu0 %v5521
  %5599 = vmatprep.subr.bf16.mxu0 0
  %5600 = vmatpush1.bf16.msra.mxu0 %v5518
  %5601 = vmatprep.subr.bf16.mxu0 0
  %5602 = vmatpush1.bf16.msra.mxu0 %v5515
  %5603 = vmatprep.subr.bf16.mxu0 0
  %5604 = vmatpush1.bf16.msra.mxu0 %v5512
  %5605 = vmatprep.subr.bf16.mxu0 0
  %5606 = vmatpush1.bf16.msra.mxu0 %v5509
  %5607 = vmatprep.subr.bf16.mxu0 0
  %5608 = vmatpush1.bf16.msra.mxu0 %v5506
  %5609 = vmatprep.subr.bf16.mxu0 0
  %5610 = vmatpush2.bf16.msra.mxu0 0
  %5611 = vmatprep.subr.bf16.mxu0 0
  %5612 = vmatpush2.bf16.msra.mxu0 0
  %5613 = vmatprep.subr.bf16.mxu0 0
  %5614 = vmatpush2.bf16.msra.mxu0 0
  %5615 = vmatprep.subr.bf16.mxu0 0
  %5616 = vmatpush2.bf16.msra.mxu0 0
  %5617 = vmatprep.subr.bf16.mxu0 0
  %5618 = vmatpush2.bf16.msra.mxu0 0
  %5619 = vmatprep.subr.bf16.mxu0 0
  %5620 = vmatpush2.bf16.msra.mxu0 0
  %5621 = vmatprep.subr.bf16.mxu0 0
  %5622 = vmatpush2.bf16.msra.mxu0 0
  %5623 = vmatprep.subr.bf16.mxu0 0
  %5624 = vmatpush2.bf16.msra.mxu0 0
  %5625 = vmatprep.mubr.bf16.mxu0 0
  %5626 = vmatmul.mubr.bf16.gmra.mxu0 %v5391
  %v5627 = vpop.f32.mrf.mxu0
  %v5628 = vadd.f32 %v288, %v5627
  %v5629 = vpop.f32.mrf.mxu0
  %v5630 = vpop.f32.mrf.mxu0
  %v5631 = vpop.f32.mrf.mxu0
  %5632 = vdwg.mxu0
  %v5633 = vld [vmem:[%s5] sm:$0xff]
  %v5634 = vld [vmem:[%s5 + $0x8] sm:$0xf]
  %v5635 = vld [vmem:[%s5 + $0xc] sm:$0xff]
  %v5636 = vld [vmem:[%s5 + $0x14] sm:$0xf]
  %v5637 = vld [vmem:[%s5 + $0x18] sm:$0xff]
  %v5638 = vld [vmem:[%s5 + $0x20] sm:$0xf]
  %v5639 = vld [vmem:[%s5 + $0x24] sm:$0xff]
  %v5640 = vld [vmem:[%s5 + $0x2c] sm:$0xf]
  %v5641 = vld [vmem:[%s5 + $0x30] sm:$0xff]
  %v5642 = vld [vmem:[%s5 + $0x38] sm:$0xf]
  %v5643 = vld [vmem:[%s5 + $0x3c] sm:$0xff]
  %v5644 = vld [vmem:[%s5 + $0x44] sm:$0xf]
  %v5645 = vld [vmem:[%s5 + $0x48] sm:$0xff]
  %v5646 = vld [vmem:[%s5 + $0x50] sm:$0xf]
  %v5647 = vld [vmem:[%s5 + $0x54] sm:$0xff]
  %v5648 = vld [vmem:[%s5 + $0x5c] sm:$0xf]
  %v5649 = vld [vmem:[%s5 + $0x60] sm:$0xff]
  %v5650 = vld [vmem:[%s5 + $0x68] sm:$0xf]
  %v5651 = vld [vmem:[%s5 + $0x6c] sm:$0xff]
  %v5652 = vld [vmem:[%s5 + $0x74] sm:$0xf]
  %v5653 = vld [vmem:[%s5 + $0x78] sm:$0xff]
  %v5654 = vld [vmem:[%s5 + $0x80] sm:$0xf]
  %v5655 = vld [vmem:[%s5 + $0x84] sm:$0xff]
  %v5656 = vld [vmem:[%s5 + $0x8c] sm:$0xf]
  %v5657 = vld [vmem:[%s5 + $0x90] sm:$0xff]
  %v5658 = vld [vmem:[%s5 + $0x98] sm:$0xf]
  %v5659 = vld [vmem:[%s5 + $0x9c] sm:$0xff]
  %v5660 = vld [vmem:[%s5 + $0xa4] sm:$0xf]
  %v5661 = vld [vmem:[%s5 + $0xa8] sm:$0xff]
  %v5662 = vld [vmem:[%s5 + $0xb0] sm:$0xf]
  %v5663 = vld [vmem:[%s5 + $0xb4] sm:$0xff]
  %v5664 = vld [vmem:[%s5 + $0xbc] sm:$0xf]
  %v5697 = vunpack.c.l.b16 %v5633
  %v5698 = vunpack.c.h.b16 %v5633
  %v5699 = vunpack.c.l.b16 %v5634
  %v5700 = vunpack.c.l.b16 %v5635
  %v5701 = vunpack.c.h.b16 %v5635
  %v5702 = vunpack.c.l.b16 %v5636
  %v5703 = vunpack.c.l.b16 %v5637
  %v5704 = vunpack.c.h.b16 %v5637
  %v5705 = vunpack.c.l.b16 %v5638
  %v5706 = vunpack.c.l.b16 %v5639
  %v5707 = vunpack.c.h.b16 %v5639
  %v5708 = vunpack.c.l.b16 %v5640
  %v5709 = vunpack.c.l.b16 %v5641
  %v5710 = vunpack.c.h.b16 %v5641
  %v5711 = vunpack.c.l.b16 %v5642
  %v5712 = vunpack.c.l.b16 %v5643
  %v5713 = vunpack.c.h.b16 %v5643
  %v5714 = vunpack.c.l.b16 %v5644
  %v5715 = vunpack.c.l.b16 %v5645
  %v5716 = vunpack.c.h.b16 %v5645
  %v5717 = vunpack.c.l.b16 %v5646
  %v5718 = vunpack.c.l.b16 %v5647
  %v5719 = vunpack.c.h.b16 %v5647
  %v5720 = vunpack.c.l.b16 %v5648
  %v5721 = vunpack.c.l.b16 %v5649
  %v5722 = vunpack.c.h.b16 %v5649
  %v5723 = vunpack.c.l.b16 %v5650
  %v5724 = vunpack.c.l.b16 %v5651
  %v5725 = vunpack.c.h.b16 %v5651
  %v5726 = vunpack.c.l.b16 %v5652
  %v5727 = vunpack.c.l.b16 %v5653
  %v5728 = vunpack.c.h.b16 %v5653
  %v5729 = vunpack.c.l.b16 %v5654
  %v5730 = vunpack.c.l.b16 %v5655
  %v5731 = vunpack.c.h.b16 %v5655
  %v5732 = vunpack.c.l.b16 %v5656
  %v5733 = vunpack.c.l.b16 %v5657
  %v5734 = vunpack.c.h.b16 %v5657
  %v5735 = vunpack.c.l.b16 %v5658
  %v5736 = vunpack.c.l.b16 %v5659
  %v5737 = vunpack.c.h.b16 %v5659
  %v5738 = vunpack.c.l.b16 %v5660
  %v5739 = vunpack.c.l.b16 %v5661
  %v5740 = vunpack.c.h.b16 %v5661
  %v5741 = vunpack.c.l.b16 %v5662
  %v5742 = vunpack.c.l.b16 %v5663
  %v5743 = vunpack.c.h.b16 %v5663
  %v5744 = vunpack.c.l.b16 %v5664
  %v5745 = vpack.c.b16 %v5700, %v5697
  %v5746 = vpack.c.b16 %v5701, %v5698
  %v5747 = vpack.c.b16 %v5702, %v5699
  %v5748 = vpack.c.b16 %v5706, %v5703
  %v5749 = vpack.c.b16 %v5707, %v5704
  %v5750 = vpack.c.b16 %v5708, %v5705
  %v5751 = vpack.c.b16 %v5712, %v5709
  %v5752 = vpack.c.b16 %v5713, %v5710
  %v5753 = vpack.c.b16 %v5714, %v5711
  %v5754 = vpack.c.b16 %v5718, %v5715
  %v5755 = vpack.c.b16 %v5719, %v5716
  %v5756 = vpack.c.b16 %v5720, %v5717
  %v5757 = vpack.c.b16 %v5724, %v5721
  %v5758 = vpack.c.b16 %v5725, %v5722
  %v5759 = vpack.c.b16 %v5726, %v5723
  %v5760 = vpack.c.b16 %v5730, %v5727
  %v5761 = vpack.c.b16 %v5731, %v5728
  %v5762 = vpack.c.b16 %v5732, %v5729
  %v5763 = vpack.c.b16 %v5736, %v5733
  %v5764 = vpack.c.b16 %v5737, %v5734
  %v5765 = vpack.c.b16 %v5738, %v5735
  %v5766 = vpack.c.b16 %v5742, %v5739
  %v5767 = vpack.c.b16 %v5743, %v5740
  %v5768 = vpack.c.b16 %v5744, %v5741
  %5793 = vmatprep.subr.bf16.mxu0 %v5767
  %5794 = vmatpush1.bf16.msra.mxu0 %v5766
  %5795 = vmatprep.subr.bf16.mxu0 %v5764
  %5796 = vmatpush1.bf16.msra.mxu0 %v5763
  %5797 = vmatprep.subr.bf16.mxu0 %v5761
  %5798 = vmatpush1.bf16.msra.mxu0 %v5760
  %5799 = vmatprep.subr.bf16.mxu0 %v5758
  %5800 = vmatpush1.bf16.msra.mxu0 %v5757
  %5801 = vmatprep.subr.bf16.mxu0 %v5755
  %5802 = vmatpush1.bf16.msra.mxu0 %v5754
  %5803 = vmatprep.subr.bf16.mxu0 %v5752
  %5804 = vmatpush1.bf16.msra.mxu0 %v5751
  %5805 = vmatprep.subr.bf16.mxu0 %v5749
  %5806 = vmatpush1.bf16.msra.mxu0 %v5748
  %5807 = vmatprep.subr.bf16.mxu0 %v5746
  %5808 = vmatpush1.bf16.msra.mxu0 %v5745
  %5809 = vmatprep.subr.bf16.mxu0 0
  %5810 = vmatpush2.bf16.msra.mxu0 0
  %5811 = vmatprep.subr.bf16.mxu0 0
  %5812 = vmatpush2.bf16.msra.mxu0 0
  %5813 = vmatprep.subr.bf16.mxu0 0
  %5814 = vmatpush2.bf16.msra.mxu0 0
  %5815 = vmatprep.subr.bf16.mxu0 0
  %5816 = vmatpush2.bf16.msra.mxu0 0
  %5817 = vmatprep.subr.bf16.mxu0 0
  %5818 = vmatpush2.bf16.msra.mxu0 0
  %5819 = vmatprep.subr.bf16.mxu0 0
  %5820 = vmatpush2.bf16.msra.mxu0 0
  %5821 = vmatprep.subr.bf16.mxu0 0
  %5822 = vmatpush2.bf16.msra.mxu0 0
  %5823 = vmatprep.subr.bf16.mxu0 0
  %5824 = vmatpush2.bf16.msra.mxu0 0
  %5825 = vmatprep.mubr.bf16.mxu0 0
  %5826 = vmatmul.mubr.bf16.gmra.mxu0 %v5387
  %v5827 = vpop.f32.mrf.mxu0
  %v5828 = vadd.f32 %v574, %v5827
  %v5829 = vpop.f32.mrf.mxu0
  %v5830 = vadd.f32 %v578, %v5829
  %v5831 = vpop.f32.mrf.mxu0
  %v5832 = vpop.f32.mrf.mxu0
  %5833 = vdwg.mxu0
  %5834 = vmatprep.subr.bf16.mxu0 0
  %5835 = vmatpush1.bf16.msra.mxu0 %v5768
  %5836 = vmatprep.subr.bf16.mxu0 0
  %5837 = vmatpush1.bf16.msra.mxu0 %v5765
  %5838 = vmatprep.subr.bf16.mxu0 0
  %5839 = vmatpush1.bf16.msra.mxu0 %v5762
  %5840 = vmatprep.subr.bf16.mxu0 0
  %5841 = vmatpush1.bf16.msra.mxu0 %v5759
  %5842 = vmatprep.subr.bf16.mxu0 0
  %5843 = vmatpush1.bf16.msra.mxu0 %v5756
  %5844 = vmatprep.subr.bf16.mxu0 0
  %5845 = vmatpush1.bf16.msra.mxu0 %v5753
  %5846 = vmatprep.subr.bf16.mxu0 0
  %5847 = vmatpush1.bf16.msra.mxu0 %v5750
  %5848 = vmatprep.subr.bf16.mxu0 0
  %5849 = vmatpush1.bf16.msra.mxu0 %v5747
  %5850 = vmatprep.subr.bf16.mxu0 0
  %5851 = vmatpush2.bf16.msra.mxu0 0
  %5852 = vmatprep.subr.bf16.mxu0 0
  %5853 = vmatpush2.bf16.msra.mxu0 0
  %5854 = vmatprep.subr.bf16.mxu0 0
  %5855 = vmatpush2.bf16.msra.mxu0 0
  %5856 = vmatprep.subr.bf16.mxu0 0
  %5857 = vmatpush2.bf16.msra.mxu0 0
  %5858 = vmatprep.subr.bf16.mxu0 0
  %5859 = vmatpush2.bf16.msra.mxu0 0
  %5860 = vmatprep.subr.bf16.mxu0 0
  %5861 = vmatpush2.bf16.msra.mxu0 0
  %5862 = vmatprep.subr.bf16.mxu0 0
  %5863 = vmatpush2.bf16.msra.mxu0 0
  %5864 = vmatprep.subr.bf16.mxu0 0
  %5865 = vmatpush2.bf16.msra.mxu0 0
  %5866 = vmatprep.mubr.bf16.mxu0 0
  %5867 = vmatmul.mubr.bf16.gmra.mxu0 %v5387
  %v5868 = vpop.f32.mrf.mxu0
  %v5869 = vadd.f32 %v582, %v5868
  %v5870 = vpop.f32.mrf.mxu0
  %v5871 = vpop.f32.mrf.mxu0
  %v5872 = vpop.f32.mrf.mxu0
  %5873 = vdwg.mxu0
  %v5874 = vadd.f32 %v5587, %v5828
  %v5875 = vxor.u32 %v5874, 2147483648
  %v5876 = vmul.f32 %v5875, 1.442695
  %v5877 = vpow.pop %v5876
  %v5878 = vadd.f32 %v5877, 1.0
  %v5879 = vrcp.pop %v5878
  %v5880 = vmul.f32 1.0, %v5879
  %v5881 = vadd.f32 %v5589, %v5830
  %v5882 = vxor.u32 %v5881, 2147483648
  %v5883 = vmul.f32 %v5882, 1.442695
  %v5884 = vpow.pop %v5883
  %v5885 = vadd.f32 %v5884, 1.0
  %v5886 = vrcp.pop %v5885
  %v5887 = vmul.f32 1.0, %v5886
  %v5888 = vmul.f32 %v5880, %v5869
  %v5889 = vadd.f32 %v5628, %v5888
  %v5890 = vtanh.pop %v5889
  %v5891 = vsub.f32 1.0, %v5887
  %v5892 = vmul.f32 %v5891, %v5890
  %v5893 = vmul.f32 %v5887, %v5386
  %v5894 = vadd.f32 %v5892, %v5893
  %v5895 = vpack.c.bf16 %v5894, %v5894
  %s5896 = scalar_lea.vmem %s7, 40
  %5897 = vst [vmem:[%s5896] sm:$0xf] %v5895
  %s5898 = scalar_lea.vmem %s0, 44
  %v5899 = vld [vmem:[%s5898] sm:$0xf]
  %v5900 = vld [vmem:[%s2] sm:$0xff]
  %v5901 = vld [vmem:[%s2 + $0x8] sm:$0xf]
  %v5902 = vld [vmem:[%s2 + $0xc] sm:$0xff]
  %v5903 = vld [vmem:[%s2 + $0x14] sm:$0xf]
  %v5904 = vld [vmem:[%s2 + $0x18] sm:$0xff]
  %v5905 = vld [vmem:[%s2 + $0x20] sm:$0xf]
  %v5906 = vld [vmem:[%s2 + $0x24] sm:$0xff]
  %v5907 = vld [vmem:[%s2 + $0x2c] sm:$0xf]
  %v5908 = vld [vmem:[%s2 + $0x30] sm:$0xff]
  %v5909 = vld [vmem:[%s2 + $0x38] sm:$0xf]
  %v5910 = vld [vmem:[%s2 + $0x3c] sm:$0xff]
  %v5911 = vld [vmem:[%s2 + $0x44] sm:$0xf]
  %v5912 = vld [vmem:[%s2 + $0x48] sm:$0xff]
  %v5913 = vld [vmem:[%s2 + $0x50] sm:$0xf]
  %v5914 = vld [vmem:[%s2 + $0x54] sm:$0xff]
  %v5915 = vld [vmem:[%s2 + $0x5c] sm:$0xf]
  %v5916 = vld [vmem:[%s2 + $0x60] sm:$0xff]
  %v5917 = vld [vmem:[%s2 + $0x68] sm:$0xf]
  %v5918 = vld [vmem:[%s2 + $0x6c] sm:$0xff]
  %v5919 = vld [vmem:[%s2 + $0x74] sm:$0xf]
  %v5920 = vld [vmem:[%s2 + $0x78] sm:$0xff]
  %v5921 = vld [vmem:[%s2 + $0x80] sm:$0xf]
  %v5922 = vld [vmem:[%s2 + $0x84] sm:$0xff]
  %v5923 = vld [vmem:[%s2 + $0x8c] sm:$0xf]
  %v5924 = vld [vmem:[%s2 + $0x90] sm:$0xff]
  %v5925 = vld [vmem:[%s2 + $0x98] sm:$0xf]
  %v5926 = vld [vmem:[%s2 + $0x9c] sm:$0xff]
  %v5927 = vld [vmem:[%s2 + $0xa4] sm:$0xf]
  %v5928 = vld [vmem:[%s2 + $0xa8] sm:$0xff]
  %v5929 = vld [vmem:[%s2 + $0xb0] sm:$0xf]
  %v5930 = vld [vmem:[%s2 + $0xb4] sm:$0xff]
  %v5931 = vld [vmem:[%s2 + $0xbc] sm:$0xf]
  %v5964 = vunpack.c.l.b16 %v5900
  %v5965 = vunpack.c.h.b16 %v5900
  %v5966 = vunpack.c.l.b16 %v5901
  %v5967 = vunpack.c.l.b16 %v5902
  %v5968 = vunpack.c.h.b16 %v5902
  %v5969 = vunpack.c.l.b16 %v5903
  %v5970 = vunpack.c.l.b16 %v5904
  %v5971 = vunpack.c.h.b16 %v5904
  %v5972 = vunpack.c.l.b16 %v5905
  %v5973 = vunpack.c.l.b16 %v5906
  %v5974 = vunpack.c.h.b16 %v5906
  %v5975 = vunpack.c.l.b16 %v5907
  %v5976 = vunpack.c.l.b16 %v5908
  %v5977 = vunpack.c.h.b16 %v5908
  %v5978 = vunpack.c.l.b16 %v5909
  %v5979 = vunpack.c.l.b16 %v5910
  %v5980 = vunpack.c.h.b16 %v5910
  %v5981 = vunpack.c.l.b16 %v5911
  %v5982 = vunpack.c.l.b16 %v5912
  %v5983 = vunpack.c.h.b16 %v5912
  %v5984 = vunpack.c.l.b16 %v5913
  %v5985 = vunpack.c.l.b16 %v5914
  %v5986 = vunpack.c.h.b16 %v5914
  %v5987 = vunpack.c.l.b16 %v5915
  %v5988 = vunpack.c.l.b16 %v5916
  %v5989 = vunpack.c.h.b16 %v5916
  %v5990 = vunpack.c.l.b16 %v5917
  %v5991 = vunpack.c.l.b16 %v5918
  %v5992 = vunpack.c.h.b16 %v5918
  %v5993 = vunpack.c.l.b16 %v5919
  %v5994 = vunpack.c.l.b16 %v5920
  %v5995 = vunpack.c.h.b16 %v5920
  %v5996 = vunpack.c.l.b16 %v5921
  %v5997 = vunpack.c.l.b16 %v5922
  %v5998 = vunpack.c.h.b16 %v5922
  %v5999 = vunpack.c.l.b16 %v5923
  %v6000 = vunpack.c.l.b16 %v5924
  %v6001 = vunpack.c.h.b16 %v5924
  %v6002 = vunpack.c.l.b16 %v5925
  %v6003 = vunpack.c.l.b16 %v5926
  %v6004 = vunpack.c.h.b16 %v5926
  %v6005 = vunpack.c.l.b16 %v5927
  %v6006 = vunpack.c.l.b16 %v5928
  %v6007 = vunpack.c.h.b16 %v5928
  %v6008 = vunpack.c.l.b16 %v5929
  %v6009 = vunpack.c.l.b16 %v5930
  %v6010 = vunpack.c.h.b16 %v5930
  %v6011 = vunpack.c.l.b16 %v5931
  %v6012 = vpack.c.b16 %v5967, %v5964
  %v6013 = vpack.c.b16 %v5968, %v5965
  %v6014 = vpack.c.b16 %v5969, %v5966
  %v6015 = vpack.c.b16 %v5973, %v5970
  %v6016 = vpack.c.b16 %v5974, %v5971
  %v6017 = vpack.c.b16 %v5975, %v5972
  %v6018 = vpack.c.b16 %v5979, %v5976
  %v6019 = vpack.c.b16 %v5980, %v5977
  %v6020 = vpack.c.b16 %v5981, %v5978
  %v6021 = vpack.c.b16 %v5985, %v5982
  %v6022 = vpack.c.b16 %v5986, %v5983
  %v6023 = vpack.c.b16 %v5987, %v5984
  %v6024 = vpack.c.b16 %v5991, %v5988
  %v6025 = vpack.c.b16 %v5992, %v5989
  %v6026 = vpack.c.b16 %v5993, %v5990
  %v6027 = vpack.c.b16 %v5997, %v5994
  %v6028 = vpack.c.b16 %v5998, %v5995
  %v6029 = vpack.c.b16 %v5999, %v5996
  %v6030 = vpack.c.b16 %v6003, %v6000
  %v6031 = vpack.c.b16 %v6004, %v6001
  %v6032 = vpack.c.b16 %v6005, %v6002
  %v6033 = vpack.c.b16 %v6009, %v6006
  %v6034 = vpack.c.b16 %v6010, %v6007
  %v6035 = vpack.c.b16 %v6011, %v6008
  %6060 = vmatprep.subr.bf16.mxu0 %v6034
  %6061 = vmatpush1.bf16.msra.mxu0 %v6033
  %6062 = vmatprep.subr.bf16.mxu0 %v6031
  %6063 = vmatpush1.bf16.msra.mxu0 %v6030
  %6064 = vmatprep.subr.bf16.mxu0 %v6028
  %6065 = vmatpush1.bf16.msra.mxu0 %v6027
  %6066 = vmatprep.subr.bf16.mxu0 %v6025
  %6067 = vmatpush1.bf16.msra.mxu0 %v6024
  %6068 = vmatprep.subr.bf16.mxu0 %v6022
  %6069 = vmatpush1.bf16.msra.mxu0 %v6021
  %6070 = vmatprep.subr.bf16.mxu0 %v6019
  %6071 = vmatpush1.bf16.msra.mxu0 %v6018
  %6072 = vmatprep.subr.bf16.mxu0 %v6016
  %6073 = vmatpush1.bf16.msra.mxu0 %v6015
  %6074 = vmatprep.subr.bf16.mxu0 %v6013
  %6075 = vmatpush1.bf16.msra.mxu0 %v6012
  %6076 = vmatprep.subr.bf16.mxu0 0
  %6077 = vmatpush2.bf16.msra.mxu0 0
  %6078 = vmatprep.subr.bf16.mxu0 0
  %6079 = vmatpush2.bf16.msra.mxu0 0
  %6080 = vmatprep.subr.bf16.mxu0 0
  %6081 = vmatpush2.bf16.msra.mxu0 0
  %6082 = vmatprep.subr.bf16.mxu0 0
  %6083 = vmatpush2.bf16.msra.mxu0 0
  %6084 = vmatprep.subr.bf16.mxu0 0
  %6085 = vmatpush2.bf16.msra.mxu0 0
  %6086 = vmatprep.subr.bf16.mxu0 0
  %6087 = vmatpush2.bf16.msra.mxu0 0
  %6088 = vmatprep.subr.bf16.mxu0 0
  %6089 = vmatpush2.bf16.msra.mxu0 0
  %6090 = vmatprep.subr.bf16.mxu0 0
  %6091 = vmatpush2.bf16.msra.mxu0 0
  %6092 = vmatprep.mubr.bf16.mxu0 0
  %6093 = vmatmul.mubr.bf16.gmra.mxu0 %v5899
  %v6094 = vpop.f32.mrf.mxu0
  %v6095 = vadd.f32 %v247, %v6094
  %v6096 = vpop.f32.mrf.mxu0
  %v6097 = vadd.f32 %v249, %v6096
  %v6098 = vpop.f32.mrf.mxu0
  %v6099 = vpop.f32.mrf.mxu0
  %6100 = vdwg.mxu0
  %6101 = vmatprep.subr.bf16.mxu0 0
  %6102 = vmatpush1.bf16.msra.mxu0 %v6035
  %6103 = vmatprep.subr.bf16.mxu0 0
  %6104 = vmatpush1.bf16.msra.mxu0 %v6032
  %6105 = vmatprep.subr.bf16.mxu0 0
  %6106 = vmatpush1.bf16.msra.mxu0 %v6029
  %6107 = vmatprep.subr.bf16.mxu0 0
  %6108 = vmatpush1.bf16.msra.mxu0 %v6026
  %6109 = vmatprep.subr.bf16.mxu0 0
  %6110 = vmatpush1.bf16.msra.mxu0 %v6023
  %6111 = vmatprep.subr.bf16.mxu0 0
  %6112 = vmatpush1.bf16.msra.mxu0 %v6020
  %6113 = vmatprep.subr.bf16.mxu0 0
  %6114 = vmatpush1.bf16.msra.mxu0 %v6017
  %6115 = vmatprep.subr.bf16.mxu0 0
  %6116 = vmatpush1.bf16.msra.mxu0 %v6014
  %6117 = vmatprep.subr.bf16.mxu0 0
  %6118 = vmatpush2.bf16.msra.mxu0 0
  %6119 = vmatprep.subr.bf16.mxu0 0
  %6120 = vmatpush2.bf16.msra.mxu0 0
  %6121 = vmatprep.subr.bf16.mxu0 0
  %6122 = vmatpush2.bf16.msra.mxu0 0
  %6123 = vmatprep.subr.bf16.mxu0 0
  %6124 = vmatpush2.bf16.msra.mxu0 0
  %6125 = vmatprep.subr.bf16.mxu0 0
  %6126 = vmatpush2.bf16.msra.mxu0 0
  %6127 = vmatprep.subr.bf16.mxu0 0
  %6128 = vmatpush2.bf16.msra.mxu0 0
  %6129 = vmatprep.subr.bf16.mxu0 0
  %6130 = vmatpush2.bf16.msra.mxu0 0
  %6131 = vmatprep.subr.bf16.mxu0 0
  %6132 = vmatpush2.bf16.msra.mxu0 0
  %6133 = vmatprep.mubr.bf16.mxu0 0
  %6134 = vmatmul.mubr.bf16.gmra.mxu0 %v5899
  %v6135 = vpop.f32.mrf.mxu0
  %v6136 = vadd.f32 %v288, %v6135
  %v6137 = vpop.f32.mrf.mxu0
  %v6138 = vpop.f32.mrf.mxu0
  %v6139 = vpop.f32.mrf.mxu0
  %6140 = vdwg.mxu0
  %v6141 = vld [vmem:[%s5] sm:$0xff]
  %v6142 = vld [vmem:[%s5 + $0x8] sm:$0xf]
  %v6143 = vld [vmem:[%s5 + $0xc] sm:$0xff]
  %v6144 = vld [vmem:[%s5 + $0x14] sm:$0xf]
  %v6145 = vld [vmem:[%s5 + $0x18] sm:$0xff]
  %v6146 = vld [vmem:[%s5 + $0x20] sm:$0xf]
  %v6147 = vld [vmem:[%s5 + $0x24] sm:$0xff]
  %v6148 = vld [vmem:[%s5 + $0x2c] sm:$0xf]
  %v6149 = vld [vmem:[%s5 + $0x30] sm:$0xff]
  %v6150 = vld [vmem:[%s5 + $0x38] sm:$0xf]
  %v6151 = vld [vmem:[%s5 + $0x3c] sm:$0xff]
  %v6152 = vld [vmem:[%s5 + $0x44] sm:$0xf]
  %v6153 = vld [vmem:[%s5 + $0x48] sm:$0xff]
  %v6154 = vld [vmem:[%s5 + $0x50] sm:$0xf]
  %v6155 = vld [vmem:[%s5 + $0x54] sm:$0xff]
  %v6156 = vld [vmem:[%s5 + $0x5c] sm:$0xf]
  %v6157 = vld [vmem:[%s5 + $0x60] sm:$0xff]
  %v6158 = vld [vmem:[%s5 + $0x68] sm:$0xf]
  %v6159 = vld [vmem:[%s5 + $0x6c] sm:$0xff]
  %v6160 = vld [vmem:[%s5 + $0x74] sm:$0xf]
  %v6161 = vld [vmem:[%s5 + $0x78] sm:$0xff]
  %v6162 = vld [vmem:[%s5 + $0x80] sm:$0xf]
  %v6163 = vld [vmem:[%s5 + $0x84] sm:$0xff]
  %v6164 = vld [vmem:[%s5 + $0x8c] sm:$0xf]
  %v6165 = vld [vmem:[%s5 + $0x90] sm:$0xff]
  %v6166 = vld [vmem:[%s5 + $0x98] sm:$0xf]
  %v6167 = vld [vmem:[%s5 + $0x9c] sm:$0xff]
  %v6168 = vld [vmem:[%s5 + $0xa4] sm:$0xf]
  %v6169 = vld [vmem:[%s5 + $0xa8] sm:$0xff]
  %v6170 = vld [vmem:[%s5 + $0xb0] sm:$0xf]
  %v6171 = vld [vmem:[%s5 + $0xb4] sm:$0xff]
  %v6172 = vld [vmem:[%s5 + $0xbc] sm:$0xf]
  %v6205 = vunpack.c.l.b16 %v6141
  %v6206 = vunpack.c.h.b16 %v6141
  %v6207 = vunpack.c.l.b16 %v6142
  %v6208 = vunpack.c.l.b16 %v6143
  %v6209 = vunpack.c.h.b16 %v6143
  %v6210 = vunpack.c.l.b16 %v6144
  %v6211 = vunpack.c.l.b16 %v6145
  %v6212 = vunpack.c.h.b16 %v6145
  %v6213 = vunpack.c.l.b16 %v6146
  %v6214 = vunpack.c.l.b16 %v6147
  %v6215 = vunpack.c.h.b16 %v6147
  %v6216 = vunpack.c.l.b16 %v6148
  %v6217 = vunpack.c.l.b16 %v6149
  %v6218 = vunpack.c.h.b16 %v6149
  %v6219 = vunpack.c.l.b16 %v6150
  %v6220 = vunpack.c.l.b16 %v6151
  %v6221 = vunpack.c.h.b16 %v6151
  %v6222 = vunpack.c.l.b16 %v6152
  %v6223 = vunpack.c.l.b16 %v6153
  %v6224 = vunpack.c.h.b16 %v6153
  %v6225 = vunpack.c.l.b16 %v6154
  %v6226 = vunpack.c.l.b16 %v6155
  %v6227 = vunpack.c.h.b16 %v6155
  %v6228 = vunpack.c.l.b16 %v6156
  %v6229 = vunpack.c.l.b16 %v6157
  %v6230 = vunpack.c.h.b16 %v6157
  %v6231 = vunpack.c.l.b16 %v6158
  %v6232 = vunpack.c.l.b16 %v6159
  %v6233 = vunpack.c.h.b16 %v6159
  %v6234 = vunpack.c.l.b16 %v6160
  %v6235 = vunpack.c.l.b16 %v6161
  %v6236 = vunpack.c.h.b16 %v6161
  %v6237 = vunpack.c.l.b16 %v6162
  %v6238 = vunpack.c.l.b16 %v6163
  %v6239 = vunpack.c.h.b16 %v6163
  %v6240 = vunpack.c.l.b16 %v6164
  %v6241 = vunpack.c.l.b16 %v6165
  %v6242 = vunpack.c.h.b16 %v6165
  %v6243 = vunpack.c.l.b16 %v6166
  %v6244 = vunpack.c.l.b16 %v6167
  %v6245 = vunpack.c.h.b16 %v6167
  %v6246 = vunpack.c.l.b16 %v6168
  %v6247 = vunpack.c.l.b16 %v6169
  %v6248 = vunpack.c.h.b16 %v6169
  %v6249 = vunpack.c.l.b16 %v6170
  %v6250 = vunpack.c.l.b16 %v6171
  %v6251 = vunpack.c.h.b16 %v6171
  %v6252 = vunpack.c.l.b16 %v6172
  %v6253 = vpack.c.b16 %v6208, %v6205
  %v6254 = vpack.c.b16 %v6209, %v6206
  %v6255 = vpack.c.b16 %v6210, %v6207
  %v6256 = vpack.c.b16 %v6214, %v6211
  %v6257 = vpack.c.b16 %v6215, %v6212
  %v6258 = vpack.c.b16 %v6216, %v6213
  %v6259 = vpack.c.b16 %v6220, %v6217
  %v6260 = vpack.c.b16 %v6221, %v6218
  %v6261 = vpack.c.b16 %v6222, %v6219
  %v6262 = vpack.c.b16 %v6226, %v6223
  %v6263 = vpack.c.b16 %v6227, %v6224
  %v6264 = vpack.c.b16 %v6228, %v6225
  %v6265 = vpack.c.b16 %v6232, %v6229
  %v6266 = vpack.c.b16 %v6233, %v6230
  %v6267 = vpack.c.b16 %v6234, %v6231
  %v6268 = vpack.c.b16 %v6238, %v6235
  %v6269 = vpack.c.b16 %v6239, %v6236
  %v6270 = vpack.c.b16 %v6240, %v6237
  %v6271 = vpack.c.b16 %v6244, %v6241
  %v6272 = vpack.c.b16 %v6245, %v6242
  %v6273 = vpack.c.b16 %v6246, %v6243
  %v6274 = vpack.c.b16 %v6250, %v6247
  %v6275 = vpack.c.b16 %v6251, %v6248
  %v6276 = vpack.c.b16 %v6252, %v6249
  %6301 = vmatprep.subr.bf16.mxu0 %v6275
  %6302 = vmatpush1.bf16.msra.mxu0 %v6274
  %6303 = vmatprep.subr.bf16.mxu0 %v6272
  %6304 = vmatpush1.bf16.msra.mxu0 %v6271
  %6305 = vmatprep.subr.bf16.mxu0 %v6269
  %6306 = vmatpush1.bf16.msra.mxu0 %v6268
  %6307 = vmatprep.subr.bf16.mxu0 %v6266
  %6308 = vmatpush1.bf16.msra.mxu0 %v6265
  %6309 = vmatprep.subr.bf16.mxu0 %v6263
  %6310 = vmatpush1.bf16.msra.mxu0 %v6262
  %6311 = vmatprep.subr.bf16.mxu0 %v6260
  %6312 = vmatpush1.bf16.msra.mxu0 %v6259
  %6313 = vmatprep.subr.bf16.mxu0 %v6257
  %6314 = vmatpush1.bf16.msra.mxu0 %v6256
  %6315 = vmatprep.subr.bf16.mxu0 %v6254
  %6316 = vmatpush1.bf16.msra.mxu0 %v6253
  %6317 = vmatprep.subr.bf16.mxu0 0
  %6318 = vmatpush2.bf16.msra.mxu0 0
  %6319 = vmatprep.subr.bf16.mxu0 0
  %6320 = vmatpush2.bf16.msra.mxu0 0
  %6321 = vmatprep.subr.bf16.mxu0 0
  %6322 = vmatpush2.bf16.msra.mxu0 0
  %6323 = vmatprep.subr.bf16.mxu0 0
  %6324 = vmatpush2.bf16.msra.mxu0 0
  %6325 = vmatprep.subr.bf16.mxu0 0
  %6326 = vmatpush2.bf16.msra.mxu0 0
  %6327 = vmatprep.subr.bf16.mxu0 0
  %6328 = vmatpush2.bf16.msra.mxu0 0
  %6329 = vmatprep.subr.bf16.mxu0 0
  %6330 = vmatpush2.bf16.msra.mxu0 0
  %6331 = vmatprep.subr.bf16.mxu0 0
  %6332 = vmatpush2.bf16.msra.mxu0 0
  %6333 = vmatprep.mubr.bf16.mxu0 0
  %6334 = vmatmul.mubr.bf16.gmra.mxu0 %v5895
  %v6335 = vpop.f32.mrf.mxu0
  %v6336 = vadd.f32 %v574, %v6335
  %v6337 = vpop.f32.mrf.mxu0
  %v6338 = vadd.f32 %v578, %v6337
  %v6339 = vpop.f32.mrf.mxu0
  %v6340 = vpop.f32.mrf.mxu0
  %6341 = vdwg.mxu0
  %6342 = vmatprep.subr.bf16.mxu0 0
  %6343 = vmatpush1.bf16.msra.mxu0 %v6276
  %6344 = vmatprep.subr.bf16.mxu0 0
  %6345 = vmatpush1.bf16.msra.mxu0 %v6273
  %6346 = vmatprep.subr.bf16.mxu0 0
  %6347 = vmatpush1.bf16.msra.mxu0 %v6270
  %6348 = vmatprep.subr.bf16.mxu0 0
  %6349 = vmatpush1.bf16.msra.mxu0 %v6267
  %6350 = vmatprep.subr.bf16.mxu0 0
  %6351 = vmatpush1.bf16.msra.mxu0 %v6264
  %6352 = vmatprep.subr.bf16.mxu0 0
  %6353 = vmatpush1.bf16.msra.mxu0 %v6261
  %6354 = vmatprep.subr.bf16.mxu0 0
  %6355 = vmatpush1.bf16.msra.mxu0 %v6258
  %6356 = vmatprep.subr.bf16.mxu0 0
  %6357 = vmatpush1.bf16.msra.mxu0 %v6255
  %6358 = vmatprep.subr.bf16.mxu0 0
  %6359 = vmatpush2.bf16.msra.mxu0 0
  %6360 = vmatprep.subr.bf16.mxu0 0
  %6361 = vmatpush2.bf16.msra.mxu0 0
  %6362 = vmatprep.subr.bf16.mxu0 0
  %6363 = vmatpush2.bf16.msra.mxu0 0
  %6364 = vmatprep.subr.bf16.mxu0 0
  %6365 = vmatpush2.bf16.msra.mxu0 0
  %6366 = vmatprep.subr.bf16.mxu0 0
  %6367 = vmatpush2.bf16.msra.mxu0 0
  %6368 = vmatprep.subr.bf16.mxu0 0
  %6369 = vmatpush2.bf16.msra.mxu0 0
  %6370 = vmatprep.subr.bf16.mxu0 0
  %6371 = vmatpush2.bf16.msra.mxu0 0
  %6372 = vmatprep.subr.bf16.mxu0 0
  %6373 = vmatpush2.bf16.msra.mxu0 0
  %6374 = vmatprep.mubr.bf16.mxu0 0
  %6375 = vmatmul.mubr.bf16.gmra.mxu0 %v5895
  %v6376 = vpop.f32.mrf.mxu0
  %v6377 = vadd.f32 %v582, %v6376
  %v6378 = vpop.f32.mrf.mxu0
  %v6379 = vpop.f32.mrf.mxu0
  %v6380 = vpop.f32.mrf.mxu0
  %6381 = vdwg.mxu0
  %v6382 = vadd.f32 %v6095, %v6336
  %v6383 = vxor.u32 %v6382, 2147483648
  %v6384 = vmul.f32 %v6383, 1.442695
  %v6385 = vpow.pop %v6384
  %v6386 = vadd.f32 %v6385, 1.0
  %v6387 = vrcp.pop %v6386
  %v6388 = vmul.f32 1.0, %v6387
  %v6389 = vadd.f32 %v6097, %v6338
  %v6390 = vxor.u32 %v6389, 2147483648
  %v6391 = vmul.f32 %v6390, 1.442695
  %v6392 = vpow.pop %v6391
  %v6393 = vadd.f32 %v6392, 1.0
  %v6394 = vrcp.pop %v6393
  %v6395 = vmul.f32 1.0, %v6394
  %v6396 = vmul.f32 %v6388, %v6377
  %v6397 = vadd.f32 %v6136, %v6396
  %v6398 = vtanh.pop %v6397
  %v6399 = vsub.f32 1.0, %v6395
  %v6400 = vmul.f32 %v6399, %v6398
  %v6401 = vmul.f32 %v6395, %v5894
  %v6402 = vadd.f32 %v6400, %v6401
  %v6403 = vpack.c.bf16 %v6402, %v6402
  %s6404 = scalar_lea.vmem %s7, 44
  %6405 = vst [vmem:[%s6404] sm:$0xf] %v6403
  %s6406 = scalar_lea.vmem %s0, 48
  %v6407 = vld [vmem:[%s6406] sm:$0xf]
  %v6408 = vld [vmem:[%s2] sm:$0xff]
  %v6409 = vld [vmem:[%s2 + $0x8] sm:$0xf]
  %v6410 = vld [vmem:[%s2 + $0xc] sm:$0xff]
  %v6411 = vld [vmem:[%s2 + $0x14] sm:$0xf]
  %v6412 = vld [vmem:[%s2 + $0x18] sm:$0xff]
  %v6413 = vld [vmem:[%s2 + $0x20] sm:$0xf]
  %v6414 = vld [vmem:[%s2 + $0x24] sm:$0xff]
  %v6415 = vld [vmem:[%s2 + $0x2c] sm:$0xf]
  %v6416 = vld [vmem:[%s2 + $0x30] sm:$0xff]
  %v6417 = vld [vmem:[%s2 + $0x38] sm:$0xf]
  %v6418 = vld [vmem:[%s2 + $0x3c] sm:$0xff]
  %v6419 = vld [vmem:[%s2 + $0x44] sm:$0xf]
  %v6420 = vld [vmem:[%s2 + $0x48] sm:$0xff]
  %v6421 = vld [vmem:[%s2 + $0x50] sm:$0xf]
  %v6422 = vld [vmem:[%s2 + $0x54] sm:$0xff]
  %v6423 = vld [vmem:[%s2 + $0x5c] sm:$0xf]
  %v6424 = vld [vmem:[%s2 + $0x60] sm:$0xff]
  %v6425 = vld [vmem:[%s2 + $0x68] sm:$0xf]
  %v6426 = vld [vmem:[%s2 + $0x6c] sm:$0xff]
  %v6427 = vld [vmem:[%s2 + $0x74] sm:$0xf]
  %v6428 = vld [vmem:[%s2 + $0x78] sm:$0xff]
  %v6429 = vld [vmem:[%s2 + $0x80] sm:$0xf]
  %v6430 = vld [vmem:[%s2 + $0x84] sm:$0xff]
  %v6431 = vld [vmem:[%s2 + $0x8c] sm:$0xf]
  %v6432 = vld [vmem:[%s2 + $0x90] sm:$0xff]
  %v6433 = vld [vmem:[%s2 + $0x98] sm:$0xf]
  %v6434 = vld [vmem:[%s2 + $0x9c] sm:$0xff]
  %v6435 = vld [vmem:[%s2 + $0xa4] sm:$0xf]
  %v6436 = vld [vmem:[%s2 + $0xa8] sm:$0xff]
  %v6437 = vld [vmem:[%s2 + $0xb0] sm:$0xf]
  %v6438 = vld [vmem:[%s2 + $0xb4] sm:$0xff]
  %v6439 = vld [vmem:[%s2 + $0xbc] sm:$0xf]
  %v6472 = vunpack.c.l.b16 %v6408
  %v6473 = vunpack.c.h.b16 %v6408
  %v6474 = vunpack.c.l.b16 %v6409
  %v6475 = vunpack.c.l.b16 %v6410
  %v6476 = vunpack.c.h.b16 %v6410
  %v6477 = vunpack.c.l.b16 %v6411
  %v6478 = vunpack.c.l.b16 %v6412
  %v6479 = vunpack.c.h.b16 %v6412
  %v6480 = vunpack.c.l.b16 %v6413
  %v6481 = vunpack.c.l.b16 %v6414
  %v6482 = vunpack.c.h.b16 %v6414
  %v6483 = vunpack.c.l.b16 %v6415
  %v6484 = vunpack.c.l.b16 %v6416
  %v6485 = vunpack.c.h.b16 %v6416
  %v6486 = vunpack.c.l.b16 %v6417
  %v6487 = vunpack.c.l.b16 %v6418
  %v6488 = vunpack.c.h.b16 %v6418
  %v6489 = vunpack.c.l.b16 %v6419
  %v6490 = vunpack.c.l.b16 %v6420
  %v6491 = vunpack.c.h.b16 %v6420
  %v6492 = vunpack.c.l.b16 %v6421
  %v6493 = vunpack.c.l.b16 %v6422
  %v6494 = vunpack.c.h.b16 %v6422
  %v6495 = vunpack.c.l.b16 %v6423
  %v6496 = vunpack.c.l.b16 %v6424
  %v6497 = vunpack.c.h.b16 %v6424
  %v6498 = vunpack.c.l.b16 %v6425
  %v6499 = vunpack.c.l.b16 %v6426
  %v6500 = vunpack.c.h.b16 %v6426
  %v6501 = vunpack.c.l.b16 %v6427
  %v6502 = vunpack.c.l.b16 %v6428
  %v6503 = vunpack.c.h.b16 %v6428
  %v6504 = vunpack.c.l.b16 %v6429
  %v6505 = vunpack.c.l.b16 %v6430
  %v6506 = vunpack.c.h.b16 %v6430
  %v6507 = vunpack.c.l.b16 %v6431
  %v6508 = vunpack.c.l.b16 %v6432
  %v6509 = vunpack.c.h.b16 %v6432
  %v6510 = vunpack.c.l.b16 %v6433
  %v6511 = vunpack.c.l.b16 %v6434
  %v6512 = vunpack.c.h.b16 %v6434
  %v6513 = vunpack.c.l.b16 %v6435
  %v6514 = vunpack.c.l.b16 %v6436
  %v6515 = vunpack.c.h.b16 %v6436
  %v6516 = vunpack.c.l.b16 %v6437
  %v6517 = vunpack.c.l.b16 %v6438
  %v6518 = vunpack.c.h.b16 %v6438
  %v6519 = vunpack.c.l.b16 %v6439
  %v6520 = vpack.c.b16 %v6475, %v6472
  %v6521 = vpack.c.b16 %v6476, %v6473
  %v6522 = vpack.c.b16 %v6477, %v6474
  %v6523 = vpack.c.b16 %v6481, %v6478
  %v6524 = vpack.c.b16 %v6482, %v6479
  %v6525 = vpack.c.b16 %v6483, %v6480
  %v6526 = vpack.c.b16 %v6487, %v6484
  %v6527 = vpack.c.b16 %v6488, %v6485
  %v6528 = vpack.c.b16 %v6489, %v6486
  %v6529 = vpack.c.b16 %v6493, %v6490
  %v6530 = vpack.c.b16 %v6494, %v6491
  %v6531 = vpack.c.b16 %v6495, %v6492
  %v6532 = vpack.c.b16 %v6499, %v6496
  %v6533 = vpack.c.b16 %v6500, %v6497
  %v6534 = vpack.c.b16 %v6501, %v6498
  %v6535 = vpack.c.b16 %v6505, %v6502
  %v6536 = vpack.c.b16 %v6506, %v6503
  %v6537 = vpack.c.b16 %v6507, %v6504
  %v6538 = vpack.c.b16 %v6511, %v6508
  %v6539 = vpack.c.b16 %v6512, %v6509
  %v6540 = vpack.c.b16 %v6513, %v6510
  %v6541 = vpack.c.b16 %v6517, %v6514
  %v6542 = vpack.c.b16 %v6518, %v6515
  %v6543 = vpack.c.b16 %v6519, %v6516
  %6568 = vmatprep.subr.bf16.mxu0 %v6542
  %6569 = vmatpush1.bf16.msra.mxu0 %v6541
  %6570 = vmatprep.subr.bf16.mxu0 %v6539
  %6571 = vmatpush1.bf16.msra.mxu0 %v6538
  %6572 = vmatprep.subr.bf16.mxu0 %v6536
  %6573 = vmatpush1.bf16.msra.mxu0 %v6535
  %6574 = vmatprep.subr.bf16.mxu0 %v6533
  %6575 = vmatpush1.bf16.msra.mxu0 %v6532
  %6576 = vmatprep.subr.bf16.mxu0 %v6530
  %6577 = vmatpush1.bf16.msra.mxu0 %v6529
  %6578 = vmatprep.subr.bf16.mxu0 %v6527
  %6579 = vmatpush1.bf16.msra.mxu0 %v6526
  %6580 = vmatprep.subr.bf16.mxu0 %v6524
  %6581 = vmatpush1.bf16.msra.mxu0 %v6523
  %6582 = vmatprep.subr.bf16.mxu0 %v6521
  %6583 = vmatpush1.bf16.msra.mxu0 %v6520
  %6584 = vmatprep.subr.bf16.mxu0 0
  %6585 = vmatpush2.bf16.msra.mxu0 0
  %6586 = vmatprep.subr.bf16.mxu0 0
  %6587 = vmatpush2.bf16.msra.mxu0 0
  %6588 = vmatprep.subr.bf16.mxu0 0
  %6589 = vmatpush2.bf16.msra.mxu0 0
  %6590 = vmatprep.subr.bf16.mxu0 0
  %6591 = vmatpush2.bf16.msra.mxu0 0
  %6592 = vmatprep.subr.bf16.mxu0 0
  %6593 = vmatpush2.bf16.msra.mxu0 0
  %6594 = vmatprep.subr.bf16.mxu0 0
  %6595 = vmatpush2.bf16.msra.mxu0 0
  %6596 = vmatprep.subr.bf16.mxu0 0
  %6597 = vmatpush2.bf16.msra.mxu0 0
  %6598 = vmatprep.subr.bf16.mxu0 0
  %6599 = vmatpush2.bf16.msra.mxu0 0
  %6600 = vmatprep.mubr.bf16.mxu0 0
  %6601 = vmatmul.mubr.bf16.gmra.mxu0 %v6407
  %v6602 = vpop.f32.mrf.mxu0
  %v6603 = vadd.f32 %v247, %v6602
  %v6604 = vpop.f32.mrf.mxu0
  %v6605 = vadd.f32 %v249, %v6604
  %v6606 = vpop.f32.mrf.mxu0
  %v6607 = vpop.f32.mrf.mxu0
  %6608 = vdwg.mxu0
  %6609 = vmatprep.subr.bf16.mxu0 0
  %6610 = vmatpush1.bf16.msra.mxu0 %v6543
  %6611 = vmatprep.subr.bf16.mxu0 0
  %6612 = vmatpush1.bf16.msra.mxu0 %v6540
  %6613 = vmatprep.subr.bf16.mxu0 0
  %6614 = vmatpush1.bf16.msra.mxu0 %v6537
  %6615 = vmatprep.subr.bf16.mxu0 0
  %6616 = vmatpush1.bf16.msra.mxu0 %v6534
  %6617 = vmatprep.subr.bf16.mxu0 0
  %6618 = vmatpush1.bf16.msra.mxu0 %v6531
  %6619 = vmatprep.subr.bf16.mxu0 0
  %6620 = vmatpush1.bf16.msra.mxu0 %v6528
  %6621 = vmatprep.subr.bf16.mxu0 0
  %6622 = vmatpush1.bf16.msra.mxu0 %v6525
  %6623 = vmatprep.subr.bf16.mxu0 0
  %6624 = vmatpush1.bf16.msra.mxu0 %v6522
  %6625 = vmatprep.subr.bf16.mxu0 0
  %6626 = vmatpush2.bf16.msra.mxu0 0
  %6627 = vmatprep.subr.bf16.mxu0 0
  %6628 = vmatpush2.bf16.msra.mxu0 0
  %6629 = vmatprep.subr.bf16.mxu0 0
  %6630 = vmatpush2.bf16.msra.mxu0 0
  %6631 = vmatprep.subr.bf16.mxu0 0
  %6632 = vmatpush2.bf16.msra.mxu0 0
  %6633 = vmatprep.subr.bf16.mxu0 0
  %6634 = vmatpush2.bf16.msra.mxu0 0
  %6635 = vmatprep.subr.bf16.mxu0 0
  %6636 = vmatpush2.bf16.msra.mxu0 0
  %6637 = vmatprep.subr.bf16.mxu0 0
  %6638 = vmatpush2.bf16.msra.mxu0 0
  %6639 = vmatprep.subr.bf16.mxu0 0
  %6640 = vmatpush2.bf16.msra.mxu0 0
  %6641 = vmatprep.mubr.bf16.mxu0 0
  %6642 = vmatmul.mubr.bf16.gmra.mxu0 %v6407
  %v6643 = vpop.f32.mrf.mxu0
  %v6644 = vadd.f32 %v288, %v6643
  %v6645 = vpop.f32.mrf.mxu0
  %v6646 = vpop.f32.mrf.mxu0
  %v6647 = vpop.f32.mrf.mxu0
  %6648 = vdwg.mxu0
  %v6649 = vld [vmem:[%s5] sm:$0xff]
  %v6650 = vld [vmem:[%s5 + $0x8] sm:$0xf]
  %v6651 = vld [vmem:[%s5 + $0xc] sm:$0xff]
  %v6652 = vld [vmem:[%s5 + $0x14] sm:$0xf]
  %v6653 = vld [vmem:[%s5 + $0x18] sm:$0xff]
  %v6654 = vld [vmem:[%s5 + $0x20] sm:$0xf]
  %v6655 = vld [vmem:[%s5 + $0x24] sm:$0xff]
  %v6656 = vld [vmem:[%s5 + $0x2c] sm:$0xf]
  %v6657 = vld [vmem:[%s5 + $0x30] sm:$0xff]
  %v6658 = vld [vmem:[%s5 + $0x38] sm:$0xf]
  %v6659 = vld [vmem:[%s5 + $0x3c] sm:$0xff]
  %v6660 = vld [vmem:[%s5 + $0x44] sm:$0xf]
  %v6661 = vld [vmem:[%s5 + $0x48] sm:$0xff]
  %v6662 = vld [vmem:[%s5 + $0x50] sm:$0xf]
  %v6663 = vld [vmem:[%s5 + $0x54] sm:$0xff]
  %v6664 = vld [vmem:[%s5 + $0x5c] sm:$0xf]
  %v6665 = vld [vmem:[%s5 + $0x60] sm:$0xff]
  %v6666 = vld [vmem:[%s5 + $0x68] sm:$0xf]
  %v6667 = vld [vmem:[%s5 + $0x6c] sm:$0xff]
  %v6668 = vld [vmem:[%s5 + $0x74] sm:$0xf]
  %v6669 = vld [vmem:[%s5 + $0x78] sm:$0xff]
  %v6670 = vld [vmem:[%s5 + $0x80] sm:$0xf]
  %v6671 = vld [vmem:[%s5 + $0x84] sm:$0xff]
  %v6672 = vld [vmem:[%s5 + $0x8c] sm:$0xf]
  %v6673 = vld [vmem:[%s5 + $0x90] sm:$0xff]
  %v6674 = vld [vmem:[%s5 + $0x98] sm:$0xf]
  %v6675 = vld [vmem:[%s5 + $0x9c] sm:$0xff]
  %v6676 = vld [vmem:[%s5 + $0xa4] sm:$0xf]
  %v6677 = vld [vmem:[%s5 + $0xa8] sm:$0xff]
  %v6678 = vld [vmem:[%s5 + $0xb0] sm:$0xf]
  %v6679 = vld [vmem:[%s5 + $0xb4] sm:$0xff]
  %v6680 = vld [vmem:[%s5 + $0xbc] sm:$0xf]
  %v6713 = vunpack.c.l.b16 %v6649
  %v6714 = vunpack.c.h.b16 %v6649
  %v6715 = vunpack.c.l.b16 %v6650
  %v6716 = vunpack.c.l.b16 %v6651
  %v6717 = vunpack.c.h.b16 %v6651
  %v6718 = vunpack.c.l.b16 %v6652
  %v6719 = vunpack.c.l.b16 %v6653
  %v6720 = vunpack.c.h.b16 %v6653
  %v6721 = vunpack.c.l.b16 %v6654
  %v6722 = vunpack.c.l.b16 %v6655
  %v6723 = vunpack.c.h.b16 %v6655
  %v6724 = vunpack.c.l.b16 %v6656
  %v6725 = vunpack.c.l.b16 %v6657
  %v6726 = vunpack.c.h.b16 %v6657
  %v6727 = vunpack.c.l.b16 %v6658
  %v6728 = vunpack.c.l.b16 %v6659
  %v6729 = vunpack.c.h.b16 %v6659
  %v6730 = vunpack.c.l.b16 %v6660
  %v6731 = vunpack.c.l.b16 %v6661
  %v6732 = vunpack.c.h.b16 %v6661
  %v6733 = vunpack.c.l.b16 %v6662
  %v6734 = vunpack.c.l.b16 %v6663
  %v6735 = vunpack.c.h.b16 %v6663
  %v6736 = vunpack.c.l.b16 %v6664
  %v6737 = vunpack.c.l.b16 %v6665
  %v6738 = vunpack.c.h.b16 %v6665
  %v6739 = vunpack.c.l.b16 %v6666
  %v6740 = vunpack.c.l.b16 %v6667
  %v6741 = vunpack.c.h.b16 %v6667
  %v6742 = vunpack.c.l.b16 %v6668
  %v6743 = vunpack.c.l.b16 %v6669
  %v6744 = vunpack.c.h.b16 %v6669
  %v6745 = vunpack.c.l.b16 %v6670
  %v6746 = vunpack.c.l.b16 %v6671
  %v6747 = vunpack.c.h.b16 %v6671
  %v6748 = vunpack.c.l.b16 %v6672
  %v6749 = vunpack.c.l.b16 %v6673
  %v6750 = vunpack.c.h.b16 %v6673
  %v6751 = vunpack.c.l.b16 %v6674
  %v6752 = vunpack.c.l.b16 %v6675
  %v6753 = vunpack.c.h.b16 %v6675
  %v6754 = vunpack.c.l.b16 %v6676
  %v6755 = vunpack.c.l.b16 %v6677
  %v6756 = vunpack.c.h.b16 %v6677
  %v6757 = vunpack.c.l.b16 %v6678
  %v6758 = vunpack.c.l.b16 %v6679
  %v6759 = vunpack.c.h.b16 %v6679
  %v6760 = vunpack.c.l.b16 %v6680
  %v6761 = vpack.c.b16 %v6716, %v6713
  %v6762 = vpack.c.b16 %v6717, %v6714
  %v6763 = vpack.c.b16 %v6718, %v6715
  %v6764 = vpack.c.b16 %v6722, %v6719
  %v6765 = vpack.c.b16 %v6723, %v6720
  %v6766 = vpack.c.b16 %v6724, %v6721
  %v6767 = vpack.c.b16 %v6728, %v6725
  %v6768 = vpack.c.b16 %v6729, %v6726
  %v6769 = vpack.c.b16 %v6730, %v6727
  %v6770 = vpack.c.b16 %v6734, %v6731
  %v6771 = vpack.c.b16 %v6735, %v6732
  %v6772 = vpack.c.b16 %v6736, %v6733
  %v6773 = vpack.c.b16 %v6740, %v6737
  %v6774 = vpack.c.b16 %v6741, %v6738
  %v6775 = vpack.c.b16 %v6742, %v6739
  %v6776 = vpack.c.b16 %v6746, %v6743
  %v6777 = vpack.c.b16 %v6747, %v6744
  %v6778 = vpack.c.b16 %v6748, %v6745
  %v6779 = vpack.c.b16 %v6752, %v6749
  %v6780 = vpack.c.b16 %v6753, %v6750
  %v6781 = vpack.c.b16 %v6754, %v6751
  %v6782 = vpack.c.b16 %v6758, %v6755
  %v6783 = vpack.c.b16 %v6759, %v6756
  %v6784 = vpack.c.b16 %v6760, %v6757
  %6809 = vmatprep.subr.bf16.mxu0 %v6783
  %6810 = vmatpush1.bf16.msra.mxu0 %v6782
  %6811 = vmatprep.subr.bf16.mxu0 %v6780
  %6812 = vmatpush1.bf16.msra.mxu0 %v6779
  %6813 = vmatprep.subr.bf16.mxu0 %v6777
  %6814 = vmatpush1.bf16.msra.mxu0 %v6776
  %6815 = vmatprep.subr.bf16.mxu0 %v6774
  %6816 = vmatpush1.bf16.msra.mxu0 %v6773
  %6817 = vmatprep.subr.bf16.mxu0 %v6771
  %6818 = vmatpush1.bf16.msra.mxu0 %v6770
  %6819 = vmatprep.subr.bf16.mxu0 %v6768
  %6820 = vmatpush1.bf16.msra.mxu0 %v6767
  %6821 = vmatprep.subr.bf16.mxu0 %v6765
  %6822 = vmatpush1.bf16.msra.mxu0 %v6764
  %6823 = vmatprep.subr.bf16.mxu0 %v6762
  %6824 = vmatpush1.bf16.msra.mxu0 %v6761
  %6825 = vmatprep.subr.bf16.mxu0 0
  %6826 = vmatpush2.bf16.msra.mxu0 0
  %6827 = vmatprep.subr.bf16.mxu0 0
  %6828 = vmatpush2.bf16.msra.mxu0 0
  %6829 = vmatprep.subr.bf16.mxu0 0
  %6830 = vmatpush2.bf16.msra.mxu0 0
  %6831 = vmatprep.subr.bf16.mxu0 0
  %6832 = vmatpush2.bf16.msra.mxu0 0
  %6833 = vmatprep.subr.bf16.mxu0 0
  %6834 = vmatpush2.bf16.msra.mxu0 0
  %6835 = vmatprep.subr.bf16.mxu0 0
  %6836 = vmatpush2.bf16.msra.mxu0 0
  %6837 = vmatprep.subr.bf16.mxu0 0
  %6838 = vmatpush2.bf16.msra.mxu0 0
  %6839 = vmatprep.subr.bf16.mxu0 0
  %6840 = vmatpush2.bf16.msra.mxu0 0
  %6841 = vmatprep.mubr.bf16.mxu0 0
  %6842 = vmatmul.mubr.bf16.gmra.mxu0 %v6403
  %v6843 = vpop.f32.mrf.mxu0
  %v6844 = vadd.f32 %v574, %v6843
  %v6845 = vpop.f32.mrf.mxu0
  %v6846 = vadd.f32 %v578, %v6845
  %v6847 = vpop.f32.mrf.mxu0
  %v6848 = vpop.f32.mrf.mxu0
  %6849 = vdwg.mxu0
  %6850 = vmatprep.subr.bf16.mxu0 0
  %6851 = vmatpush1.bf16.msra.mxu0 %v6784
  %6852 = vmatprep.subr.bf16.mxu0 0
  %6853 = vmatpush1.bf16.msra.mxu0 %v6781
  %6854 = vmatprep.subr.bf16.mxu0 0
  %6855 = vmatpush1.bf16.msra.mxu0 %v6778
  %6856 = vmatprep.subr.bf16.mxu0 0
  %6857 = vmatpush1.bf16.msra.mxu0 %v6775
  %6858 = vmatprep.subr.bf16.mxu0 0
  %6859 = vmatpush1.bf16.msra.mxu0 %v6772
  %6860 = vmatprep.subr.bf16.mxu0 0
  %6861 = vmatpush1.bf16.msra.mxu0 %v6769
  %6862 = vmatprep.subr.bf16.mxu0 0
  %6863 = vmatpush1.bf16.msra.mxu0 %v6766
  %6864 = vmatprep.subr.bf16.mxu0 0
  %6865 = vmatpush1.bf16.msra.mxu0 %v6763
  %6866 = vmatprep.subr.bf16.mxu0 0
  %6867 = vmatpush2.bf16.msra.mxu0 0
  %6868 = vmatprep.subr.bf16.mxu0 0
  %6869 = vmatpush2.bf16.msra.mxu0 0
  %6870 = vmatprep.subr.bf16.mxu0 0
  %6871 = vmatpush2.bf16.msra.mxu0 0
  %6872 = vmatprep.subr.bf16.mxu0 0
  %6873 = vmatpush2.bf16.msra.mxu0 0
  %6874 = vmatprep.subr.bf16.mxu0 0
  %6875 = vmatpush2.bf16.msra.mxu0 0
  %6876 = vmatprep.subr.bf16.mxu0 0
  %6877 = vmatpush2.bf16.msra.mxu0 0
  %6878 = vmatprep.subr.bf16.mxu0 0
  %6879 = vmatpush2.bf16.msra.mxu0 0
  %6880 = vmatprep.subr.bf16.mxu0 0
  %6881 = vmatpush2.bf16.msra.mxu0 0
  %6882 = vmatprep.mubr.bf16.mxu0 0
  %6883 = vmatmul.mubr.bf16.gmra.mxu0 %v6403
  %v6884 = vpop.f32.mrf.mxu0
  %v6885 = vadd.f32 %v582, %v6884
  %v6886 = vpop.f32.mrf.mxu0
  %v6887 = vpop.f32.mrf.mxu0
  %v6888 = vpop.f32.mrf.mxu0
  %6889 = vdwg.mxu0
  %v6890 = vadd.f32 %v6603, %v6844
  %v6891 = vxor.u32 %v6890, 2147483648
  %v6892 = vmul.f32 %v6891, 1.442695
  %v6893 = vpow.pop %v6892
  %v6894 = vadd.f32 %v6893, 1.0
  %v6895 = vrcp.pop %v6894
  %v6896 = vmul.f32 1.0, %v6895
  %v6897 = vadd.f32 %v6605, %v6846
  %v6898 = vxor.u32 %v6897, 2147483648
  %v6899 = vmul.f32 %v6898, 1.442695
  %v6900 = vpow.pop %v6899
  %v6901 = vadd.f32 %v6900, 1.0
  %v6902 = vrcp.pop %v6901
  %v6903 = vmul.f32 1.0, %v6902
  %v6904 = vmul.f32 %v6896, %v6885
  %v6905 = vadd.f32 %v6644, %v6904
  %v6906 = vtanh.pop %v6905
  %v6907 = vsub.f32 1.0, %v6903
  %v6908 = vmul.f32 %v6907, %v6906
  %v6909 = vmul.f32 %v6903, %v6402
  %v6910 = vadd.f32 %v6908, %v6909
  %v6911 = vpack.c.bf16 %v6910, %v6910
  %s6912 = scalar_lea.vmem %s7, 48
  %6913 = vst [vmem:[%s6912] sm:$0xf] %v6911
  %s6914 = scalar_lea.vmem %s0, 52
  %v6915 = vld [vmem:[%s6914] sm:$0xf]
  %v6916 = vld [vmem:[%s2] sm:$0xff]
  %v6917 = vld [vmem:[%s2 + $0x8] sm:$0xf]
  %v6918 = vld [vmem:[%s2 + $0xc] sm:$0xff]
  %v6919 = vld [vmem:[%s2 + $0x14] sm:$0xf]
  %v6920 = vld [vmem:[%s2 + $0x18] sm:$0xff]
  %v6921 = vld [vmem:[%s2 + $0x20] sm:$0xf]
  %v6922 = vld [vmem:[%s2 + $0x24] sm:$0xff]
  %v6923 = vld [vmem:[%s2 + $0x2c] sm:$0xf]
  %v6924 = vld [vmem:[%s2 + $0x30] sm:$0xff]
  %v6925 = vld [vmem:[%s2 + $0x38] sm:$0xf]
  %v6926 = vld [vmem:[%s2 + $0x3c] sm:$0xff]
  %v6927 = vld [vmem:[%s2 + $0x44] sm:$0xf]
  %v6928 = vld [vmem:[%s2 + $0x48] sm:$0xff]
  %v6929 = vld [vmem:[%s2 + $0x50] sm:$0xf]
  %v6930 = vld [vmem:[%s2 + $0x54] sm:$0xff]
  %v6931 = vld [vmem:[%s2 + $0x5c] sm:$0xf]
  %v6932 = vld [vmem:[%s2 + $0x60] sm:$0xff]
  %v6933 = vld [vmem:[%s2 + $0x68] sm:$0xf]
  %v6934 = vld [vmem:[%s2 + $0x6c] sm:$0xff]
  %v6935 = vld [vmem:[%s2 + $0x74] sm:$0xf]
  %v6936 = vld [vmem:[%s2 + $0x78] sm:$0xff]
  %v6937 = vld [vmem:[%s2 + $0x80] sm:$0xf]
  %v6938 = vld [vmem:[%s2 + $0x84] sm:$0xff]
  %v6939 = vld [vmem:[%s2 + $0x8c] sm:$0xf]
  %v6940 = vld [vmem:[%s2 + $0x90] sm:$0xff]
  %v6941 = vld [vmem:[%s2 + $0x98] sm:$0xf]
  %v6942 = vld [vmem:[%s2 + $0x9c] sm:$0xff]
  %v6943 = vld [vmem:[%s2 + $0xa4] sm:$0xf]
  %v6944 = vld [vmem:[%s2 + $0xa8] sm:$0xff]
  %v6945 = vld [vmem:[%s2 + $0xb0] sm:$0xf]
  %v6946 = vld [vmem:[%s2 + $0xb4] sm:$0xff]
  %v6947 = vld [vmem:[%s2 + $0xbc] sm:$0xf]
  %v6980 = vunpack.c.l.b16 %v6916
  %v6981 = vunpack.c.h.b16 %v6916
  %v6982 = vunpack.c.l.b16 %v6917
  %v6983 = vunpack.c.l.b16 %v6918
  %v6984 = vunpack.c.h.b16 %v6918
  %v6985 = vunpack.c.l.b16 %v6919
  %v6986 = vunpack.c.l.b16 %v6920
  %v6987 = vunpack.c.h.b16 %v6920
  %v6988 = vunpack.c.l.b16 %v6921
  %v6989 = vunpack.c.l.b16 %v6922
  %v6990 = vunpack.c.h.b16 %v6922
  %v6991 = vunpack.c.l.b16 %v6923
  %v6992 = vunpack.c.l.b16 %v6924
  %v6993 = vunpack.c.h.b16 %v6924
  %v6994 = vunpack.c.l.b16 %v6925
  %v6995 = vunpack.c.l.b16 %v6926
  %v6996 = vunpack.c.h.b16 %v6926
  %v6997 = vunpack.c.l.b16 %v6927
  %v6998 = vunpack.c.l.b16 %v6928
  %v6999 = vunpack.c.h.b16 %v6928
  %v7000 = vunpack.c.l.b16 %v6929
  %v7001 = vunpack.c.l.b16 %v6930
  %v7002 = vunpack.c.h.b16 %v6930
  %v7003 = vunpack.c.l.b16 %v6931
  %v7004 = vunpack.c.l.b16 %v6932
  %v7005 = vunpack.c.h.b16 %v6932
  %v7006 = vunpack.c.l.b16 %v6933
  %v7007 = vunpack.c.l.b16 %v6934
  %v7008 = vunpack.c.h.b16 %v6934
  %v7009 = vunpack.c.l.b16 %v6935
  %v7010 = vunpack.c.l.b16 %v6936
  %v7011 = vunpack.c.h.b16 %v6936
  %v7012 = vunpack.c.l.b16 %v6937
  %v7013 = vunpack.c.l.b16 %v6938
  %v7014 = vunpack.c.h.b16 %v6938
  %v7015 = vunpack.c.l.b16 %v6939
  %v7016 = vunpack.c.l.b16 %v6940
  %v7017 = vunpack.c.h.b16 %v6940
  %v7018 = vunpack.c.l.b16 %v6941
  %v7019 = vunpack.c.l.b16 %v6942
  %v7020 = vunpack.c.h.b16 %v6942
  %v7021 = vunpack.c.l.b16 %v6943
  %v7022 = vunpack.c.l.b16 %v6944
  %v7023 = vunpack.c.h.b16 %v6944
  %v7024 = vunpack.c.l.b16 %v6945
  %v7025 = vunpack.c.l.b16 %v6946
  %v7026 = vunpack.c.h.b16 %v6946
  %v7027 = vunpack.c.l.b16 %v6947
  %v7028 = vpack.c.b16 %v6983, %v6980
  %v7029 = vpack.c.b16 %v6984, %v6981
  %v7030 = vpack.c.b16 %v6985, %v6982
  %v7031 = vpack.c.b16 %v6989, %v6986
  %v7032 = vpack.c.b16 %v6990, %v6987
  %v7033 = vpack.c.b16 %v6991, %v6988
  %v7034 = vpack.c.b16 %v6995, %v6992
  %v7035 = vpack.c.b16 %v6996, %v6993
  %v7036 = vpack.c.b16 %v6997, %v6994
  %v7037 = vpack.c.b16 %v7001, %v6998
  %v7038 = vpack.c.b16 %v7002, %v6999
  %v7039 = vpack.c.b16 %v7003, %v7000
  %v7040 = vpack.c.b16 %v7007, %v7004
  %v7041 = vpack.c.b16 %v7008, %v7005
  %v7042 = vpack.c.b16 %v7009, %v7006
  %v7043 = vpack.c.b16 %v7013, %v7010
  %v7044 = vpack.c.b16 %v7014, %v7011
  %v7045 = vpack.c.b16 %v7015, %v7012
  %v7046 = vpack.c.b16 %v7019, %v7016
  %v7047 = vpack.c.b16 %v7020, %v7017
  %v7048 = vpack.c.b16 %v7021, %v7018
  %v7049 = vpack.c.b16 %v7025, %v7022
  %v7050 = vpack.c.b16 %v7026, %v7023
  %v7051 = vpack.c.b16 %v7027, %v7024
  %7076 = vmatprep.subr.bf16.mxu0 %v7050
  %7077 = vmatpush1.bf16.msra.mxu0 %v7049
  %7078 = vmatprep.subr.bf16.mxu0 %v7047
  %7079 = vmatpush1.bf16.msra.mxu0 %v7046
  %7080 = vmatprep.subr.bf16.mxu0 %v7044
  %7081 = vmatpush1.bf16.msra.mxu0 %v7043
  %7082 = vmatprep.subr.bf16.mxu0 %v7041
  %7083 = vmatpush1.bf16.msra.mxu0 %v7040
  %7084 = vmatprep.subr.bf16.mxu0 %v7038
  %7085 = vmatpush1.bf16.msra.mxu0 %v7037
  %7086 = vmatprep.subr.bf16.mxu0 %v7035
  %7087 = vmatpush1.bf16.msra.mxu0 %v7034
  %7088 = vmatprep.subr.bf16.mxu0 %v7032
  %7089 = vmatpush1.bf16.msra.mxu0 %v7031
  %7090 = vmatprep.subr.bf16.mxu0 %v7029
  %7091 = vmatpush1.bf16.msra.mxu0 %v7028
  %7092 = vmatprep.subr.bf16.mxu0 0
  %7093 = vmatpush2.bf16.msra.mxu0 0
  %7094 = vmatprep.subr.bf16.mxu0 0
  %7095 = vmatpush2.bf16.msra.mxu0 0
  %7096 = vmatprep.subr.bf16.mxu0 0
  %7097 = vmatpush2.bf16.msra.mxu0 0
  %7098 = vmatprep.subr.bf16.mxu0 0
  %7099 = vmatpush2.bf16.msra.mxu0 0
  %7100 = vmatprep.subr.bf16.mxu0 0
  %7101 = vmatpush2.bf16.msra.mxu0 0
  %7102 = vmatprep.subr.bf16.mxu0 0
  %7103 = vmatpush2.bf16.msra.mxu0 0
  %7104 = vmatprep.subr.bf16.mxu0 0
  %7105 = vmatpush2.bf16.msra.mxu0 0
  %7106 = vmatprep.subr.bf16.mxu0 0
  %7107 = vmatpush2.bf16.msra.mxu0 0
  %7108 = vmatprep.mubr.bf16.mxu0 0
  %7109 = vmatmul.mubr.bf16.gmra.mxu0 %v6915
  %v7110 = vpop.f32.mrf.mxu0
  %v7111 = vadd.f32 %v247, %v7110
  %v7112 = vpop.f32.mrf.mxu0
  %v7113 = vadd.f32 %v249, %v7112
  %v7114 = vpop.f32.mrf.mxu0
  %v7115 = vpop.f32.mrf.mxu0
  %7116 = vdwg.mxu0
  %7117 = vmatprep.subr.bf16.mxu0 0
  %7118 = vmatpush1.bf16.msra.mxu0 %v7051
  %7119 = vmatprep.subr.bf16.mxu0 0
  %7120 = vmatpush1.bf16.msra.mxu0 %v7048
  %7121 = vmatprep.subr.bf16.mxu0 0
  %7122 = vmatpush1.bf16.msra.mxu0 %v7045
  %7123 = vmatprep.subr.bf16.mxu0 0
  %7124 = vmatpush1.bf16.msra.mxu0 %v7042
  %7125 = vmatprep.subr.bf16.mxu0 0
  %7126 = vmatpush1.bf16.msra.mxu0 %v7039
  %7127 = vmatprep.subr.bf16.mxu0 0
  %7128 = vmatpush1.bf16.msra.mxu0 %v7036
  %7129 = vmatprep.subr.bf16.mxu0 0
  %7130 = vmatpush1.bf16.msra.mxu0 %v7033
  %7131 = vmatprep.subr.bf16.mxu0 0
  %7132 = vmatpush1.bf16.msra.mxu0 %v7030
  %7133 = vmatprep.subr.bf16.mxu0 0
  %7134 = vmatpush2.bf16.msra.mxu0 0
  %7135 = vmatprep.subr.bf16.mxu0 0
  %7136 = vmatpush2.bf16.msra.mxu0 0
  %7137 = vmatprep.subr.bf16.mxu0 0
  %7138 = vmatpush2.bf16.msra.mxu0 0
  %7139 = vmatprep.subr.bf16.mxu0 0
  %7140 = vmatpush2.bf16.msra.mxu0 0
  %7141 = vmatprep.subr.bf16.mxu0 0
  %7142 = vmatpush2.bf16.msra.mxu0 0
  %7143 = vmatprep.subr.bf16.mxu0 0
  %7144 = vmatpush2.bf16.msra.mxu0 0
  %7145 = vmatprep.subr.bf16.mxu0 0
  %7146 = vmatpush2.bf16.msra.mxu0 0
  %7147 = vmatprep.subr.bf16.mxu0 0
  %7148 = vmatpush2.bf16.msra.mxu0 0
  %7149 = vmatprep.mubr.bf16.mxu0 0
  %7150 = vmatmul.mubr.bf16.gmra.mxu0 %v6915
  %v7151 = vpop.f32.mrf.mxu0
  %v7152 = vadd.f32 %v288, %v7151
  %v7153 = vpop.f32.mrf.mxu0
  %v7154 = vpop.f32.mrf.mxu0
  %v7155 = vpop.f32.mrf.mxu0
  %7156 = vdwg.mxu0
  %v7157 = vld [vmem:[%s5] sm:$0xff]
  %v7158 = vld [vmem:[%s5 + $0x8] sm:$0xf]
  %v7159 = vld [vmem:[%s5 + $0xc] sm:$0xff]
  %v7160 = vld [vmem:[%s5 + $0x14] sm:$0xf]
  %v7161 = vld [vmem:[%s5 + $0x18] sm:$0xff]
  %v7162 = vld [vmem:[%s5 + $0x20] sm:$0xf]
  %v7163 = vld [vmem:[%s5 + $0x24] sm:$0xff]
  %v7164 = vld [vmem:[%s5 + $0x2c] sm:$0xf]
  %v7165 = vld [vmem:[%s5 + $0x30] sm:$0xff]
  %v7166 = vld [vmem:[%s5 + $0x38] sm:$0xf]
  %v7167 = vld [vmem:[%s5 + $0x3c] sm:$0xff]
  %v7168 = vld [vmem:[%s5 + $0x44] sm:$0xf]
  %v7169 = vld [vmem:[%s5 + $0x48] sm:$0xff]
  %v7170 = vld [vmem:[%s5 + $0x50] sm:$0xf]
  %v7171 = vld [vmem:[%s5 + $0x54] sm:$0xff]
  %v7172 = vld [vmem:[%s5 + $0x5c] sm:$0xf]
  %v7173 = vld [vmem:[%s5 + $0x60] sm:$0xff]
  %v7174 = vld [vmem:[%s5 + $0x68] sm:$0xf]
  %v7175 = vld [vmem:[%s5 + $0x6c] sm:$0xff]
  %v7176 = vld [vmem:[%s5 + $0x74] sm:$0xf]
  %v7177 = vld [vmem:[%s5 + $0x78] sm:$0xff]
  %v7178 = vld [vmem:[%s5 + $0x80] sm:$0xf]
  %v7179 = vld [vmem:[%s5 + $0x84] sm:$0xff]
  %v7180 = vld [vmem:[%s5 + $0x8c] sm:$0xf]
  %v7181 = vld [vmem:[%s5 + $0x90] sm:$0xff]
  %v7182 = vld [vmem:[%s5 + $0x98] sm:$0xf]
  %v7183 = vld [vmem:[%s5 + $0x9c] sm:$0xff]
  %v7184 = vld [vmem:[%s5 + $0xa4] sm:$0xf]
  %v7185 = vld [vmem:[%s5 + $0xa8] sm:$0xff]
  %v7186 = vld [vmem:[%s5 + $0xb0] sm:$0xf]
  %v7187 = vld [vmem:[%s5 + $0xb4] sm:$0xff]
  %v7188 = vld [vmem:[%s5 + $0xbc] sm:$0xf]
  %v7221 = vunpack.c.l.b16 %v7157
  %v7222 = vunpack.c.h.b16 %v7157
  %v7223 = vunpack.c.l.b16 %v7158
  %v7224 = vunpack.c.l.b16 %v7159
  %v7225 = vunpack.c.h.b16 %v7159
  %v7226 = vunpack.c.l.b16 %v7160
  %v7227 = vunpack.c.l.b16 %v7161
  %v7228 = vunpack.c.h.b16 %v7161
  %v7229 = vunpack.c.l.b16 %v7162
  %v7230 = vunpack.c.l.b16 %v7163
  %v7231 = vunpack.c.h.b16 %v7163
  %v7232 = vunpack.c.l.b16 %v7164
  %v7233 = vunpack.c.l.b16 %v7165
  %v7234 = vunpack.c.h.b16 %v7165
  %v7235 = vunpack.c.l.b16 %v7166
  %v7236 = vunpack.c.l.b16 %v7167
  %v7237 = vunpack.c.h.b16 %v7167
  %v7238 = vunpack.c.l.b16 %v7168
  %v7239 = vunpack.c.l.b16 %v7169
  %v7240 = vunpack.c.h.b16 %v7169
  %v7241 = vunpack.c.l.b16 %v7170
  %v7242 = vunpack.c.l.b16 %v7171
  %v7243 = vunpack.c.h.b16 %v7171
  %v7244 = vunpack.c.l.b16 %v7172
  %v7245 = vunpack.c.l.b16 %v7173
  %v7246 = vunpack.c.h.b16 %v7173
  %v7247 = vunpack.c.l.b16 %v7174
  %v7248 = vunpack.c.l.b16 %v7175
  %v7249 = vunpack.c.h.b16 %v7175
  %v7250 = vunpack.c.l.b16 %v7176
  %v7251 = vunpack.c.l.b16 %v7177
  %v7252 = vunpack.c.h.b16 %v7177
  %v7253 = vunpack.c.l.b16 %v7178
  %v7254 = vunpack.c.l.b16 %v7179
  %v7255 = vunpack.c.h.b16 %v7179
  %v7256 = vunpack.c.l.b16 %v7180
  %v7257 = vunpack.c.l.b16 %v7181
  %v7258 = vunpack.c.h.b16 %v7181
  %v7259 = vunpack.c.l.b16 %v7182
  %v7260 = vunpack.c.l.b16 %v7183
  %v7261 = vunpack.c.h.b16 %v7183
  %v7262 = vunpack.c.l.b16 %v7184
  %v7263 = vunpack.c.l.b16 %v7185
  %v7264 = vunpack.c.h.b16 %v7185
  %v7265 = vunpack.c.l.b16 %v7186
  %v7266 = vunpack.c.l.b16 %v7187
  %v7267 = vunpack.c.h.b16 %v7187
  %v7268 = vunpack.c.l.b16 %v7188
  %v7269 = vpack.c.b16 %v7224, %v7221
  %v7270 = vpack.c.b16 %v7225, %v7222
  %v7271 = vpack.c.b16 %v7226, %v7223
  %v7272 = vpack.c.b16 %v7230, %v7227
  %v7273 = vpack.c.b16 %v7231, %v7228
  %v7274 = vpack.c.b16 %v7232, %v7229
  %v7275 = vpack.c.b16 %v7236, %v7233
  %v7276 = vpack.c.b16 %v7237, %v7234
  %v7277 = vpack.c.b16 %v7238, %v7235
  %v7278 = vpack.c.b16 %v7242, %v7239
  %v7279 = vpack.c.b16 %v7243, %v7240
  %v7280 = vpack.c.b16 %v7244, %v7241
  %v7281 = vpack.c.b16 %v7248, %v7245
  %v7282 = vpack.c.b16 %v7249, %v7246
  %v7283 = vpack.c.b16 %v7250, %v7247
  %v7284 = vpack.c.b16 %v7254, %v7251
  %v7285 = vpack.c.b16 %v7255, %v7252
  %v7286 = vpack.c.b16 %v7256, %v7253
  %v7287 = vpack.c.b16 %v7260, %v7257
  %v7288 = vpack.c.b16 %v7261, %v7258
  %v7289 = vpack.c.b16 %v7262, %v7259
  %v7290 = vpack.c.b16 %v7266, %v7263
  %v7291 = vpack.c.b16 %v7267, %v7264
  %v7292 = vpack.c.b16 %v7268, %v7265
  %7317 = vmatprep.subr.bf16.mxu0 %v7291
  %7318 = vmatpush1.bf16.msra.mxu0 %v7290
  %7319 = vmatprep.subr.bf16.mxu0 %v7288
  %7320 = vmatpush1.bf16.msra.mxu0 %v7287
  %7321 = vmatprep.subr.bf16.mxu0 %v7285
  %7322 = vmatpush1.bf16.msra.mxu0 %v7284
  %7323 = vmatprep.subr.bf16.mxu0 %v7282
  %7324 = vmatpush1.bf16.msra.mxu0 %v7281
  %7325 = vmatprep.subr.bf16.mxu0 %v7279
  %7326 = vmatpush1.bf16.msra.mxu0 %v7278
  %7327 = vmatprep.subr.bf16.mxu0 %v7276
  %7328 = vmatpush1.bf16.msra.mxu0 %v7275
  %7329 = vmatprep.subr.bf16.mxu0 %v7273
  %7330 = vmatpush1.bf16.msra.mxu0 %v7272
  %7331 = vmatprep.subr.bf16.mxu0 %v7270
  %7332 = vmatpush1.bf16.msra.mxu0 %v7269
  %7333 = vmatprep.subr.bf16.mxu0 0
  %7334 = vmatpush2.bf16.msra.mxu0 0
  %7335 = vmatprep.subr.bf16.mxu0 0
  %7336 = vmatpush2.bf16.msra.mxu0 0
  %7337 = vmatprep.subr.bf16.mxu0 0
  %7338 = vmatpush2.bf16.msra.mxu0 0
  %7339 = vmatprep.subr.bf16.mxu0 0
  %7340 = vmatpush2.bf16.msra.mxu0 0
  %7341 = vmatprep.subr.bf16.mxu0 0
  %7342 = vmatpush2.bf16.msra.mxu0 0
  %7343 = vmatprep.subr.bf16.mxu0 0
  %7344 = vmatpush2.bf16.msra.mxu0 0
  %7345 = vmatprep.subr.bf16.mxu0 0
  %7346 = vmatpush2.bf16.msra.mxu0 0
  %7347 = vmatprep.subr.bf16.mxu0 0
  %7348 = vmatpush2.bf16.msra.mxu0 0
  %7349 = vmatprep.mubr.bf16.mxu0 0
  %7350 = vmatmul.mubr.bf16.gmra.mxu0 %v6911
  %v7351 = vpop.f32.mrf.mxu0
  %v7352 = vadd.f32 %v574, %v7351
  %v7353 = vpop.f32.mrf.mxu0
  %v7354 = vadd.f32 %v578, %v7353
  %v7355 = vpop.f32.mrf.mxu0
  %v7356 = vpop.f32.mrf.mxu0
  %7357 = vdwg.mxu0
  %7358 = vmatprep.subr.bf16.mxu0 0
  %7359 = vmatpush1.bf16.msra.mxu0 %v7292
  %7360 = vmatprep.subr.bf16.mxu0 0
  %7361 = vmatpush1.bf16.msra.mxu0 %v7289
  %7362 = vmatprep.subr.bf16.mxu0 0
  %7363 = vmatpush1.bf16.msra.mxu0 %v7286
  %7364 = vmatprep.subr.bf16.mxu0 0
  %7365 = vmatpush1.bf16.msra.mxu0 %v7283
  %7366 = vmatprep.subr.bf16.mxu0 0
  %7367 = vmatpush1.bf16.msra.mxu0 %v7280
  %7368 = vmatprep.subr.bf16.mxu0 0
  %7369 = vmatpush1.bf16.msra.mxu0 %v7277
  %7370 = vmatprep.subr.bf16.mxu0 0
  %7371 = vmatpush1.bf16.msra.mxu0 %v7274
  %7372 = vmatprep.subr.bf16.mxu0 0
  %7373 = vmatpush1.bf16.msra.mxu0 %v7271
  %7374 = vmatprep.subr.bf16.mxu0 0
  %7375 = vmatpush2.bf16.msra.mxu0 0
  %7376 = vmatprep.subr.bf16.mxu0 0
  %7377 = vmatpush2.bf16.msra.mxu0 0
  %7378 = vmatprep.subr.bf16.mxu0 0
  %7379 = vmatpush2.bf16.msra.mxu0 0
  %7380 = vmatprep.subr.bf16.mxu0 0
  %7381 = vmatpush2.bf16.msra.mxu0 0
  %7382 = vmatprep.subr.bf16.mxu0 0
  %7383 = vmatpush2.bf16.msra.mxu0 0
  %7384 = vmatprep.subr.bf16.mxu0 0
  %7385 = vmatpush2.bf16.msra.mxu0 0
  %7386 = vmatprep.subr.bf16.mxu0 0
  %7387 = vmatpush2.bf16.msra.mxu0 0
  %7388 = vmatprep.subr.bf16.mxu0 0
  %7389 = vmatpush2.bf16.msra.mxu0 0
  %7390 = vmatprep.mubr.bf16.mxu0 0
  %7391 = vmatmul.mubr.bf16.gmra.mxu0 %v6911
  %v7392 = vpop.f32.mrf.mxu0
  %v7393 = vadd.f32 %v582, %v7392
  %v7394 = vpop.f32.mrf.mxu0
  %v7395 = vpop.f32.mrf.mxu0
  %v7396 = vpop.f32.mrf.mxu0
  %7397 = vdwg.mxu0
  %v7398 = vadd.f32 %v7111, %v7352
  %v7399 = vxor.u32 %v7398, 2147483648
  %v7400 = vmul.f32 %v7399, 1.442695
  %v7401 = vpow.pop %v7400
  %v7402 = vadd.f32 %v7401, 1.0
  %v7403 = vrcp.pop %v7402
  %v7404 = vmul.f32 1.0, %v7403
  %v7405 = vadd.f32 %v7113, %v7354
  %v7406 = vxor.u32 %v7405, 2147483648
  %v7407 = vmul.f32 %v7406, 1.442695
  %v7408 = vpow.pop %v7407
  %v7409 = vadd.f32 %v7408, 1.0
  %v7410 = vrcp.pop %v7409
  %v7411 = vmul.f32 1.0, %v7410
  %v7412 = vmul.f32 %v7404, %v7393
  %v7413 = vadd.f32 %v7152, %v7412
  %v7414 = vtanh.pop %v7413
  %v7415 = vsub.f32 1.0, %v7411
  %v7416 = vmul.f32 %v7415, %v7414
  %v7417 = vmul.f32 %v7411, %v6910
  %v7418 = vadd.f32 %v7416, %v7417
  %v7419 = vpack.c.bf16 %v7418, %v7418
  %s7420 = scalar_lea.vmem %s7, 52
  %7421 = vst [vmem:[%s7420] sm:$0xf] %v7419
  %s7422 = scalar_lea.vmem %s0, 56
  %v7423 = vld [vmem:[%s7422] sm:$0xf]
  %v7424 = vld [vmem:[%s2] sm:$0xff]
  %v7425 = vld [vmem:[%s2 + $0x8] sm:$0xf]
  %v7426 = vld [vmem:[%s2 + $0xc] sm:$0xff]
  %v7427 = vld [vmem:[%s2 + $0x14] sm:$0xf]
  %v7428 = vld [vmem:[%s2 + $0x18] sm:$0xff]
  %v7429 = vld [vmem:[%s2 + $0x20] sm:$0xf]
  %v7430 = vld [vmem:[%s2 + $0x24] sm:$0xff]
  %v7431 = vld [vmem:[%s2 + $0x2c] sm:$0xf]
  %v7432 = vld [vmem:[%s2 + $0x30] sm:$0xff]
  %v7433 = vld [vmem:[%s2 + $0x38] sm:$0xf]
  %v7434 = vld [vmem:[%s2 + $0x3c] sm:$0xff]
  %v7435 = vld [vmem:[%s2 + $0x44] sm:$0xf]
  %v7436 = vld [vmem:[%s2 + $0x48] sm:$0xff]
  %v7437 = vld [vmem:[%s2 + $0x50] sm:$0xf]
  %v7438 = vld [vmem:[%s2 + $0x54] sm:$0xff]
  %v7439 = vld [vmem:[%s2 + $0x5c] sm:$0xf]
  %v7440 = vld [vmem:[%s2 + $0x60] sm:$0xff]
  %v7441 = vld [vmem:[%s2 + $0x68] sm:$0xf]
  %v7442 = vld [vmem:[%s2 + $0x6c] sm:$0xff]
  %v7443 = vld [vmem:[%s2 + $0x74] sm:$0xf]
  %v7444 = vld [vmem:[%s2 + $0x78] sm:$0xff]
  %v7445 = vld [vmem:[%s2 + $0x80] sm:$0xf]
  %v7446 = vld [vmem:[%s2 + $0x84] sm:$0xff]
  %v7447 = vld [vmem:[%s2 + $0x8c] sm:$0xf]
  %v7448 = vld [vmem:[%s2 + $0x90] sm:$0xff]
  %v7449 = vld [vmem:[%s2 + $0x98] sm:$0xf]
  %v7450 = vld [vmem:[%s2 + $0x9c] sm:$0xff]
  %v7451 = vld [vmem:[%s2 + $0xa4] sm:$0xf]
  %v7452 = vld [vmem:[%s2 + $0xa8] sm:$0xff]
  %v7453 = vld [vmem:[%s2 + $0xb0] sm:$0xf]
  %v7454 = vld [vmem:[%s2 + $0xb4] sm:$0xff]
  %v7455 = vld [vmem:[%s2 + $0xbc] sm:$0xf]
  %v7488 = vunpack.c.l.b16 %v7424
  %v7489 = vunpack.c.h.b16 %v7424
  %v7490 = vunpack.c.l.b16 %v7425
  %v7491 = vunpack.c.l.b16 %v7426
  %v7492 = vunpack.c.h.b16 %v7426
  %v7493 = vunpack.c.l.b16 %v7427
  %v7494 = vunpack.c.l.b16 %v7428
  %v7495 = vunpack.c.h.b16 %v7428
  %v7496 = vunpack.c.l.b16 %v7429
  %v7497 = vunpack.c.l.b16 %v7430
  %v7498 = vunpack.c.h.b16 %v7430
  %v7499 = vunpack.c.l.b16 %v7431
  %v7500 = vunpack.c.l.b16 %v7432
  %v7501 = vunpack.c.h.b16 %v7432
  %v7502 = vunpack.c.l.b16 %v7433
  %v7503 = vunpack.c.l.b16 %v7434
  %v7504 = vunpack.c.h.b16 %v7434
  %v7505 = vunpack.c.l.b16 %v7435
  %v7506 = vunpack.c.l.b16 %v7436
  %v7507 = vunpack.c.h.b16 %v7436
  %v7508 = vunpack.c.l.b16 %v7437
  %v7509 = vunpack.c.l.b16 %v7438
  %v7510 = vunpack.c.h.b16 %v7438
  %v7511 = vunpack.c.l.b16 %v7439
  %v7512 = vunpack.c.l.b16 %v7440
  %v7513 = vunpack.c.h.b16 %v7440
  %v7514 = vunpack.c.l.b16 %v7441
  %v7515 = vunpack.c.l.b16 %v7442
  %v7516 = vunpack.c.h.b16 %v7442
  %v7517 = vunpack.c.l.b16 %v7443
  %v7518 = vunpack.c.l.b16 %v7444
  %v7519 = vunpack.c.h.b16 %v7444
  %v7520 = vunpack.c.l.b16 %v7445
  %v7521 = vunpack.c.l.b16 %v7446
  %v7522 = vunpack.c.h.b16 %v7446
  %v7523 = vunpack.c.l.b16 %v7447
  %v7524 = vunpack.c.l.b16 %v7448
  %v7525 = vunpack.c.h.b16 %v7448
  %v7526 = vunpack.c.l.b16 %v7449
  %v7527 = vunpack.c.l.b16 %v7450
  %v7528 = vunpack.c.h.b16 %v7450
  %v7529 = vunpack.c.l.b16 %v7451
  %v7530 = vunpack.c.l.b16 %v7452
  %v7531 = vunpack.c.h.b16 %v7452
  %v7532 = vunpack.c.l.b16 %v7453
  %v7533 = vunpack.c.l.b16 %v7454
  %v7534 = vunpack.c.h.b16 %v7454
  %v7535 = vunpack.c.l.b16 %v7455
  %v7536 = vpack.c.b16 %v7491, %v7488
  %v7537 = vpack.c.b16 %v7492, %v7489
  %v7538 = vpack.c.b16 %v7493, %v7490
  %v7539 = vpack.c.b16 %v7497, %v7494
  %v7540 = vpack.c.b16 %v7498, %v7495
  %v7541 = vpack.c.b16 %v7499, %v7496
  %v7542 = vpack.c.b16 %v7503, %v7500
  %v7543 = vpack.c.b16 %v7504, %v7501
  %v7544 = vpack.c.b16 %v7505, %v7502
  %v7545 = vpack.c.b16 %v7509, %v7506
  %v7546 = vpack.c.b16 %v7510, %v7507
  %v7547 = vpack.c.b16 %v7511, %v7508
  %v7548 = vpack.c.b16 %v7515, %v7512
  %v7549 = vpack.c.b16 %v7516, %v7513
  %v7550 = vpack.c.b16 %v7517, %v7514
  %v7551 = vpack.c.b16 %v7521, %v7518
  %v7552 = vpack.c.b16 %v7522, %v7519
  %v7553 = vpack.c.b16 %v7523, %v7520
  %v7554 = vpack.c.b16 %v7527, %v7524
  %v7555 = vpack.c.b16 %v7528, %v7525
  %v7556 = vpack.c.b16 %v7529, %v7526
  %v7557 = vpack.c.b16 %v7533, %v7530
  %v7558 = vpack.c.b16 %v7534, %v7531
  %v7559 = vpack.c.b16 %v7535, %v7532
  %7584 = vmatprep.subr.bf16.mxu0 %v7558
  %7585 = vmatpush1.bf16.msra.mxu0 %v7557
  %7586 = vmatprep.subr.bf16.mxu0 %v7555
  %7587 = vmatpush1.bf16.msra.mxu0 %v7554
  %7588 = vmatprep.subr.bf16.mxu0 %v7552
  %7589 = vmatpush1.bf16.msra.mxu0 %v7551
  %7590 = vmatprep.subr.bf16.mxu0 %v7549
  %7591 = vmatpush1.bf16.msra.mxu0 %v7548
  %7592 = vmatprep.subr.bf16.mxu0 %v7546
  %7593 = vmatpush1.bf16.msra.mxu0 %v7545
  %7594 = vmatprep.subr.bf16.mxu0 %v7543
  %7595 = vmatpush1.bf16.msra.mxu0 %v7542
  %7596 = vmatprep.subr.bf16.mxu0 %v7540
  %7597 = vmatpush1.bf16.msra.mxu0 %v7539
  %7598 = vmatprep.subr.bf16.mxu0 %v7537
  %7599 = vmatpush1.bf16.msra.mxu0 %v7536
  %7600 = vmatprep.subr.bf16.mxu0 0
  %7601 = vmatpush2.bf16.msra.mxu0 0
  %7602 = vmatprep.subr.bf16.mxu0 0
  %7603 = vmatpush2.bf16.msra.mxu0 0
  %7604 = vmatprep.subr.bf16.mxu0 0
  %7605 = vmatpush2.bf16.msra.mxu0 0
  %7606 = vmatprep.subr.bf16.mxu0 0
  %7607 = vmatpush2.bf16.msra.mxu0 0
  %7608 = vmatprep.subr.bf16.mxu0 0
  %7609 = vmatpush2.bf16.msra.mxu0 0
  %7610 = vmatprep.subr.bf16.mxu0 0
  %7611 = vmatpush2.bf16.msra.mxu0 0
  %7612 = vmatprep.subr.bf16.mxu0 0
  %7613 = vmatpush2.bf16.msra.mxu0 0
  %7614 = vmatprep.subr.bf16.mxu0 0
  %7615 = vmatpush2.bf16.msra.mxu0 0
  %7616 = vmatprep.mubr.bf16.mxu0 0
  %7617 = vmatmul.mubr.bf16.gmra.mxu0 %v7423
  %v7618 = vpop.f32.mrf.mxu0
  %v7619 = vadd.f32 %v247, %v7618
  %v7620 = vpop.f32.mrf.mxu0
  %v7621 = vadd.f32 %v249, %v7620
  %v7622 = vpop.f32.mrf.mxu0
  %v7623 = vpop.f32.mrf.mxu0
  %7624 = vdwg.mxu0
  %7625 = vmatprep.subr.bf16.mxu0 0
  %7626 = vmatpush1.bf16.msra.mxu0 %v7559
  %7627 = vmatprep.subr.bf16.mxu0 0
  %7628 = vmatpush1.bf16.msra.mxu0 %v7556
  %7629 = vmatprep.subr.bf16.mxu0 0
  %7630 = vmatpush1.bf16.msra.mxu0 %v7553
  %7631 = vmatprep.subr.bf16.mxu0 0
  %7632 = vmatpush1.bf16.msra.mxu0 %v7550
  %7633 = vmatprep.subr.bf16.mxu0 0
  %7634 = vmatpush1.bf16.msra.mxu0 %v7547
  %7635 = vmatprep.subr.bf16.mxu0 0
  %7636 = vmatpush1.bf16.msra.mxu0 %v7544
  %7637 = vmatprep.subr.bf16.mxu0 0
  %7638 = vmatpush1.bf16.msra.mxu0 %v7541
  %7639 = vmatprep.subr.bf16.mxu0 0
  %7640 = vmatpush1.bf16.msra.mxu0 %v7538
  %7641 = vmatprep.subr.bf16.mxu0 0
  %7642 = vmatpush2.bf16.msra.mxu0 0
  %7643 = vmatprep.subr.bf16.mxu0 0
  %7644 = vmatpush2.bf16.msra.mxu0 0
  %7645 = vmatprep.subr.bf16.mxu0 0
  %7646 = vmatpush2.bf16.msra.mxu0 0
  %7647 = vmatprep.subr.bf16.mxu0 0
  %7648 = vmatpush2.bf16.msra.mxu0 0
  %7649 = vmatprep.subr.bf16.mxu0 0
  %7650 = vmatpush2.bf16.msra.mxu0 0
  %7651 = vmatprep.subr.bf16.mxu0 0
  %7652 = vmatpush2.bf16.msra.mxu0 0
  %7653 = vmatprep.subr.bf16.mxu0 0
  %7654 = vmatpush2.bf16.msra.mxu0 0
  %7655 = vmatprep.subr.bf16.mxu0 0
  %7656 = vmatpush2.bf16.msra.mxu0 0
  %7657 = vmatprep.mubr.bf16.mxu0 0
  %7658 = vmatmul.mubr.bf16.gmra.mxu0 %v7423
  %v7659 = vpop.f32.mrf.mxu0
  %v7660 = vadd.f32 %v288, %v7659
  %v7661 = vpop.f32.mrf.mxu0
  %v7662 = vpop.f32.mrf.mxu0
  %v7663 = vpop.f32.mrf.mxu0
  %7664 = vdwg.mxu0
  %v7665 = vld [vmem:[%s5] sm:$0xff]
  %v7666 = vld [vmem:[%s5 + $0x8] sm:$0xf]
  %v7667 = vld [vmem:[%s5 + $0xc] sm:$0xff]
  %v7668 = vld [vmem:[%s5 + $0x14] sm:$0xf]
  %v7669 = vld [vmem:[%s5 + $0x18] sm:$0xff]
  %v7670 = vld [vmem:[%s5 + $0x20] sm:$0xf]
  %v7671 = vld [vmem:[%s5 + $0x24] sm:$0xff]
  %v7672 = vld [vmem:[%s5 + $0x2c] sm:$0xf]
  %v7673 = vld [vmem:[%s5 + $0x30] sm:$0xff]
  %v7674 = vld [vmem:[%s5 + $0x38] sm:$0xf]
  %v7675 = vld [vmem:[%s5 + $0x3c] sm:$0xff]
  %v7676 = vld [vmem:[%s5 + $0x44] sm:$0xf]
  %v7677 = vld [vmem:[%s5 + $0x48] sm:$0xff]
  %v7678 = vld [vmem:[%s5 + $0x50] sm:$0xf]
  %v7679 = vld [vmem:[%s5 + $0x54] sm:$0xff]
  %v7680 = vld [vmem:[%s5 + $0x5c] sm:$0xf]
  %v7681 = vld [vmem:[%s5 + $0x60] sm:$0xff]
  %v7682 = vld [vmem:[%s5 + $0x68] sm:$0xf]
  %v7683 = vld [vmem:[%s5 + $0x6c] sm:$0xff]
  %v7684 = vld [vmem:[%s5 + $0x74] sm:$0xf]
  %v7685 = vld [vmem:[%s5 + $0x78] sm:$0xff]
  %v7686 = vld [vmem:[%s5 + $0x80] sm:$0xf]
  %v7687 = vld [vmem:[%s5 + $0x84] sm:$0xff]
  %v7688 = vld [vmem:[%s5 + $0x8c] sm:$0xf]
  %v7689 = vld [vmem:[%s5 + $0x90] sm:$0xff]
  %v7690 = vld [vmem:[%s5 + $0x98] sm:$0xf]
  %v7691 = vld [vmem:[%s5 + $0x9c] sm:$0xff]
  %v7692 = vld [vmem:[%s5 + $0xa4] sm:$0xf]
  %v7693 = vld [vmem:[%s5 + $0xa8] sm:$0xff]
  %v7694 = vld [vmem:[%s5 + $0xb0] sm:$0xf]
  %v7695 = vld [vmem:[%s5 + $0xb4] sm:$0xff]
  %v7696 = vld [vmem:[%s5 + $0xbc] sm:$0xf]
  %v7729 = vunpack.c.l.b16 %v7665
  %v7730 = vunpack.c.h.b16 %v7665
  %v7731 = vunpack.c.l.b16 %v7666
  %v7732 = vunpack.c.l.b16 %v7667
  %v7733 = vunpack.c.h.b16 %v7667
  %v7734 = vunpack.c.l.b16 %v7668
  %v7735 = vunpack.c.l.b16 %v7669
  %v7736 = vunpack.c.h.b16 %v7669
  %v7737 = vunpack.c.l.b16 %v7670
  %v7738 = vunpack.c.l.b16 %v7671
  %v7739 = vunpack.c.h.b16 %v7671
  %v7740 = vunpack.c.l.b16 %v7672
  %v7741 = vunpack.c.l.b16 %v7673
  %v7742 = vunpack.c.h.b16 %v7673
  %v7743 = vunpack.c.l.b16 %v7674
  %v7744 = vunpack.c.l.b16 %v7675
  %v7745 = vunpack.c.h.b16 %v7675
  %v7746 = vunpack.c.l.b16 %v7676
  %v7747 = vunpack.c.l.b16 %v7677
  %v7748 = vunpack.c.h.b16 %v7677
  %v7749 = vunpack.c.l.b16 %v7678
  %v7750 = vunpack.c.l.b16 %v7679
  %v7751 = vunpack.c.h.b16 %v7679
  %v7752 = vunpack.c.l.b16 %v7680
  %v7753 = vunpack.c.l.b16 %v7681
  %v7754 = vunpack.c.h.b16 %v7681
  %v7755 = vunpack.c.l.b16 %v7682
  %v7756 = vunpack.c.l.b16 %v7683
  %v7757 = vunpack.c.h.b16 %v7683
  %v7758 = vunpack.c.l.b16 %v7684
  %v7759 = vunpack.c.l.b16 %v7685
  %v7760 = vunpack.c.h.b16 %v7685
  %v7761 = vunpack.c.l.b16 %v7686
  %v7762 = vunpack.c.l.b16 %v7687
  %v7763 = vunpack.c.h.b16 %v7687
  %v7764 = vunpack.c.l.b16 %v7688
  %v7765 = vunpack.c.l.b16 %v7689
  %v7766 = vunpack.c.h.b16 %v7689
  %v7767 = vunpack.c.l.b16 %v7690
  %v7768 = vunpack.c.l.b16 %v7691
  %v7769 = vunpack.c.h.b16 %v7691
  %v7770 = vunpack.c.l.b16 %v7692
  %v7771 = vunpack.c.l.b16 %v7693
  %v7772 = vunpack.c.h.b16 %v7693
  %v7773 = vunpack.c.l.b16 %v7694
  %v7774 = vunpack.c.l.b16 %v7695
  %v7775 = vunpack.c.h.b16 %v7695
  %v7776 = vunpack.c.l.b16 %v7696
  %v7777 = vpack.c.b16 %v7732, %v7729
  %v7778 = vpack.c.b16 %v7733, %v7730
  %v7779 = vpack.c.b16 %v7734, %v7731
  %v7780 = vpack.c.b16 %v7738, %v7735
  %v7781 = vpack.c.b16 %v7739, %v7736
  %v7782 = vpack.c.b16 %v7740, %v7737
  %v7783 = vpack.c.b16 %v7744, %v7741
  %v7784 = vpack.c.b16 %v7745, %v7742
  %v7785 = vpack.c.b16 %v7746, %v7743
  %v7786 = vpack.c.b16 %v7750, %v7747
  %v7787 = vpack.c.b16 %v7751, %v7748
  %v7788 = vpack.c.b16 %v7752, %v7749
  %v7789 = vpack.c.b16 %v7756, %v7753
  %v7790 = vpack.c.b16 %v7757, %v7754
  %v7791 = vpack.c.b16 %v7758, %v7755
  %v7792 = vpack.c.b16 %v7762, %v7759
  %v7793 = vpack.c.b16 %v7763, %v7760
  %v7794 = vpack.c.b16 %v7764, %v7761
  %v7795 = vpack.c.b16 %v7768, %v7765
  %v7796 = vpack.c.b16 %v7769, %v7766
  %v7797 = vpack.c.b16 %v7770, %v7767
  %v7798 = vpack.c.b16 %v7774, %v7771
  %v7799 = vpack.c.b16 %v7775, %v7772
  %v7800 = vpack.c.b16 %v7776, %v7773
  %7825 = vmatprep.subr.bf16.mxu0 %v7799
  %7826 = vmatpush1.bf16.msra.mxu0 %v7798
  %7827 = vmatprep.subr.bf16.mxu0 %v7796
  %7828 = vmatpush1.bf16.msra.mxu0 %v7795
  %7829 = vmatprep.subr.bf16.mxu0 %v7793
  %7830 = vmatpush1.bf16.msra.mxu0 %v7792
  %7831 = vmatprep.subr.bf16.mxu0 %v7790
  %7832 = vmatpush1.bf16.msra.mxu0 %v7789
  %7833 = vmatprep.subr.bf16.mxu0 %v7787
  %7834 = vmatpush1.bf16.msra.mxu0 %v7786
  %7835 = vmatprep.subr.bf16.mxu0 %v7784
  %7836 = vmatpush1.bf16.msra.mxu0 %v7783
  %7837 = vmatprep.subr.bf16.mxu0 %v7781
  %7838 = vmatpush1.bf16.msra.mxu0 %v7780
  %7839 = vmatprep.subr.bf16.mxu0 %v7778
  %7840 = vmatpush1.bf16.msra.mxu0 %v7777
  %7841 = vmatprep.subr.bf16.mxu0 0
  %7842 = vmatpush2.bf16.msra.mxu0 0
  %7843 = vmatprep.subr.bf16.mxu0 0
  %7844 = vmatpush2.bf16.msra.mxu0 0
  %7845 = vmatprep.subr.bf16.mxu0 0
  %7846 = vmatpush2.bf16.msra.mxu0 0
  %7847 = vmatprep.subr.bf16.mxu0 0
  %7848 = vmatpush2.bf16.msra.mxu0 0
  %7849 = vmatprep.subr.bf16.mxu0 0
  %7850 = vmatpush2.bf16.msra.mxu0 0
  %7851 = vmatprep.subr.bf16.mxu0 0
  %7852 = vmatpush2.bf16.msra.mxu0 0
  %7853 = vmatprep.subr.bf16.mxu0 0
  %7854 = vmatpush2.bf16.msra.mxu0 0
  %7855 = vmatprep.subr.bf16.mxu0 0
  %7856 = vmatpush2.bf16.msra.mxu0 0
  %7857 = vmatprep.mubr.bf16.mxu0 0
  %7858 = vmatmul.mubr.bf16.gmra.mxu0 %v7419
  %v7859 = vpop.f32.mrf.mxu0
  %v7860 = vadd.f32 %v574, %v7859
  %v7861 = vpop.f32.mrf.mxu0
  %v7862 = vadd.f32 %v578, %v7861
  %v7863 = vpop.f32.mrf.mxu0
  %v7864 = vpop.f32.mrf.mxu0
  %7865 = vdwg.mxu0
  %7866 = vmatprep.subr.bf16.mxu0 0
  %7867 = vmatpush1.bf16.msra.mxu0 %v7800
  %7868 = vmatprep.subr.bf16.mxu0 0
  %7869 = vmatpush1.bf16.msra.mxu0 %v7797
  %7870 = vmatprep.subr.bf16.mxu0 0
  %7871 = vmatpush1.bf16.msra.mxu0 %v7794
  %7872 = vmatprep.subr.bf16.mxu0 0
  %7873 = vmatpush1.bf16.msra.mxu0 %v7791
  %7874 = vmatprep.subr.bf16.mxu0 0
  %7875 = vmatpush1.bf16.msra.mxu0 %v7788
  %7876 = vmatprep.subr.bf16.mxu0 0
  %7877 = vmatpush1.bf16.msra.mxu0 %v7785
  %7878 = vmatprep.subr.bf16.mxu0 0
  %7879 = vmatpush1.bf16.msra.mxu0 %v7782
  %7880 = vmatprep.subr.bf16.mxu0 0
  %7881 = vmatpush1.bf16.msra.mxu0 %v7779
  %7882 = vmatprep.subr.bf16.mxu0 0
  %7883 = vmatpush2.bf16.msra.mxu0 0
  %7884 = vmatprep.subr.bf16.mxu0 0
  %7885 = vmatpush2.bf16.msra.mxu0 0
  %7886 = vmatprep.subr.bf16.mxu0 0
  %7887 = vmatpush2.bf16.msra.mxu0 0
  %7888 = vmatprep.subr.bf16.mxu0 0
  %7889 = vmatpush2.bf16.msra.mxu0 0
  %7890 = vmatprep.subr.bf16.mxu0 0
  %7891 = vmatpush2.bf16.msra.mxu0 0
  %7892 = vmatprep.subr.bf16.mxu0 0
  %7893 = vmatpush2.bf16.msra.mxu0 0
  %7894 = vmatprep.subr.bf16.mxu0 0
  %7895 = vmatpush2.bf16.msra.mxu0 0
  %7896 = vmatprep.subr.bf16.mxu0 0
  %7897 = vmatpush2.bf16.msra.mxu0 0
  %7898 = vmatprep.mubr.bf16.mxu0 0
  %7899 = vmatmul.mubr.bf16.gmra.mxu0 %v7419
  %v7900 = vpop.f32.mrf.mxu0
  %v7901 = vadd.f32 %v582, %v7900
  %v7902 = vpop.f32.mrf.mxu0
  %v7903 = vpop.f32.mrf.mxu0
  %v7904 = vpop.f32.mrf.mxu0
  %7905 = vdwg.mxu0
  %v7906 = vadd.f32 %v7619, %v7860
  %v7907 = vxor.u32 %v7906, 2147483648
  %v7908 = vmul.f32 %v7907, 1.442695
  %v7909 = vpow.pop %v7908
  %v7910 = vadd.f32 %v7909, 1.0
  %v7911 = vrcp.pop %v7910
  %v7912 = vmul.f32 1.0, %v7911
  %v7913 = vadd.f32 %v7621, %v7862
  %v7914 = vxor.u32 %v7913, 2147483648
  %v7915 = vmul.f32 %v7914, 1.442695
  %v7916 = vpow.pop %v7915
  %v7917 = vadd.f32 %v7916, 1.0
  %v7918 = vrcp.pop %v7917
  %v7919 = vmul.f32 1.0, %v7918
  %v7920 = vmul.f32 %v7912, %v7901
  %v7921 = vadd.f32 %v7660, %v7920
  %v7922 = vtanh.pop %v7921
  %v7923 = vsub.f32 1.0, %v7919
  %v7924 = vmul.f32 %v7923, %v7922
  %v7925 = vmul.f32 %v7919, %v7418
  %v7926 = vadd.f32 %v7924, %v7925
  %v7927 = vpack.c.bf16 %v7926, %v7926
  %s7928 = scalar_lea.vmem %s7, 56
  %7929 = vst [vmem:[%s7928] sm:$0xf] %v7927
  %s7930 = scalar_lea.vmem %s0, 60
  %v7931 = vld [vmem:[%s7930] sm:$0xf]
  %v7932 = vld [vmem:[%s2] sm:$0xff]
  %v7933 = vld [vmem:[%s2 + $0x8] sm:$0xf]
  %v7934 = vld [vmem:[%s2 + $0xc] sm:$0xff]
  %v7935 = vld [vmem:[%s2 + $0x14] sm:$0xf]
  %v7936 = vld [vmem:[%s2 + $0x18] sm:$0xff]
  %v7937 = vld [vmem:[%s2 + $0x20] sm:$0xf]
  %v7938 = vld [vmem:[%s2 + $0x24] sm:$0xff]
  %v7939 = vld [vmem:[%s2 + $0x2c] sm:$0xf]
  %v7940 = vld [vmem:[%s2 + $0x30] sm:$0xff]
  %v7941 = vld [vmem:[%s2 + $0x38] sm:$0xf]
  %v7942 = vld [vmem:[%s2 + $0x3c] sm:$0xff]
  %v7943 = vld [vmem:[%s2 + $0x44] sm:$0xf]
  %v7944 = vld [vmem:[%s2 + $0x48] sm:$0xff]
  %v7945 = vld [vmem:[%s2 + $0x50] sm:$0xf]
  %v7946 = vld [vmem:[%s2 + $0x54] sm:$0xff]
  %v7947 = vld [vmem:[%s2 + $0x5c] sm:$0xf]
  %v7948 = vld [vmem:[%s2 + $0x60] sm:$0xff]
  %v7949 = vld [vmem:[%s2 + $0x68] sm:$0xf]
  %v7950 = vld [vmem:[%s2 + $0x6c] sm:$0xff]
  %v7951 = vld [vmem:[%s2 + $0x74] sm:$0xf]
  %v7952 = vld [vmem:[%s2 + $0x78] sm:$0xff]
  %v7953 = vld [vmem:[%s2 + $0x80] sm:$0xf]
  %v7954 = vld [vmem:[%s2 + $0x84] sm:$0xff]
  %v7955 = vld [vmem:[%s2 + $0x8c] sm:$0xf]
  %v7956 = vld [vmem:[%s2 + $0x90] sm:$0xff]
  %v7957 = vld [vmem:[%s2 + $0x98] sm:$0xf]
  %v7958 = vld [vmem:[%s2 + $0x9c] sm:$0xff]
  %v7959 = vld [vmem:[%s2 + $0xa4] sm:$0xf]
  %v7960 = vld [vmem:[%s2 + $0xa8] sm:$0xff]
  %v7961 = vld [vmem:[%s2 + $0xb0] sm:$0xf]
  %v7962 = vld [vmem:[%s2 + $0xb4] sm:$0xff]
  %v7963 = vld [vmem:[%s2 + $0xbc] sm:$0xf]
  %v7996 = vunpack.c.l.b16 %v7932
  %v7997 = vunpack.c.h.b16 %v7932
  %v7998 = vunpack.c.l.b16 %v7933
  %v7999 = vunpack.c.l.b16 %v7934
  %v8000 = vunpack.c.h.b16 %v7934
  %v8001 = vunpack.c.l.b16 %v7935
  %v8002 = vunpack.c.l.b16 %v7936
  %v8003 = vunpack.c.h.b16 %v7936
  %v8004 = vunpack.c.l.b16 %v7937
  %v8005 = vunpack.c.l.b16 %v7938
  %v8006 = vunpack.c.h.b16 %v7938
  %v8007 = vunpack.c.l.b16 %v7939
  %v8008 = vunpack.c.l.b16 %v7940
  %v8009 = vunpack.c.h.b16 %v7940
  %v8010 = vunpack.c.l.b16 %v7941
  %v8011 = vunpack.c.l.b16 %v7942
  %v8012 = vunpack.c.h.b16 %v7942
  %v8013 = vunpack.c.l.b16 %v7943
  %v8014 = vunpack.c.l.b16 %v7944
  %v8015 = vunpack.c.h.b16 %v7944
  %v8016 = vunpack.c.l.b16 %v7945
  %v8017 = vunpack.c.l.b16 %v7946
  %v8018 = vunpack.c.h.b16 %v7946
  %v8019 = vunpack.c.l.b16 %v7947
  %v8020 = vunpack.c.l.b16 %v7948
  %v8021 = vunpack.c.h.b16 %v7948
  %v8022 = vunpack.c.l.b16 %v7949
  %v8023 = vunpack.c.l.b16 %v7950
  %v8024 = vunpack.c.h.b16 %v7950
  %v8025 = vunpack.c.l.b16 %v7951
  %v8026 = vunpack.c.l.b16 %v7952
  %v8027 = vunpack.c.h.b16 %v7952
  %v8028 = vunpack.c.l.b16 %v7953
  %v8029 = vunpack.c.l.b16 %v7954
  %v8030 = vunpack.c.h.b16 %v7954
  %v8031 = vunpack.c.l.b16 %v7955
  %v8032 = vunpack.c.l.b16 %v7956
  %v8033 = vunpack.c.h.b16 %v7956
  %v8034 = vunpack.c.l.b16 %v7957
  %v8035 = vunpack.c.l.b16 %v7958
  %v8036 = vunpack.c.h.b16 %v7958
  %v8037 = vunpack.c.l.b16 %v7959
  %v8038 = vunpack.c.l.b16 %v7960
  %v8039 = vunpack.c.h.b16 %v7960
  %v8040 = vunpack.c.l.b16 %v7961
  %v8041 = vunpack.c.l.b16 %v7962
  %v8042 = vunpack.c.h.b16 %v7962
  %v8043 = vunpack.c.l.b16 %v7963
  %v8044 = vpack.c.b16 %v7999, %v7996
  %v8045 = vpack.c.b16 %v8000, %v7997
  %v8046 = vpack.c.b16 %v8001, %v7998
  %v8047 = vpack.c.b16 %v8005, %v8002
  %v8048 = vpack.c.b16 %v8006, %v8003
  %v8049 = vpack.c.b16 %v8007, %v8004
  %v8050 = vpack.c.b16 %v8011, %v8008
  %v8051 = vpack.c.b16 %v8012, %v8009
  %v8052 = vpack.c.b16 %v8013, %v8010
  %v8053 = vpack.c.b16 %v8017, %v8014
  %v8054 = vpack.c.b16 %v8018, %v8015
  %v8055 = vpack.c.b16 %v8019, %v8016
  %v8056 = vpack.c.b16 %v8023, %v8020
  %v8057 = vpack.c.b16 %v8024, %v8021
  %v8058 = vpack.c.b16 %v8025, %v8022
  %v8059 = vpack.c.b16 %v8029, %v8026
  %v8060 = vpack.c.b16 %v8030, %v8027
  %v8061 = vpack.c.b16 %v8031, %v8028
  %v8062 = vpack.c.b16 %v8035, %v8032
  %v8063 = vpack.c.b16 %v8036, %v8033
  %v8064 = vpack.c.b16 %v8037, %v8034
  %v8065 = vpack.c.b16 %v8041, %v8038
  %v8066 = vpack.c.b16 %v8042, %v8039
  %v8067 = vpack.c.b16 %v8043, %v8040
  %8092 = vmatprep.subr.bf16.mxu0 %v8066
  %8093 = vmatpush1.bf16.msra.mxu0 %v8065
  %8094 = vmatprep.subr.bf16.mxu0 %v8063
  %8095 = vmatpush1.bf16.msra.mxu0 %v8062
  %8096 = vmatprep.subr.bf16.mxu0 %v8060
  %8097 = vmatpush1.bf16.msra.mxu0 %v8059
  %8098 = vmatprep.subr.bf16.mxu0 %v8057
  %8099 = vmatpush1.bf16.msra.mxu0 %v8056
  %8100 = vmatprep.subr.bf16.mxu0 %v8054
  %8101 = vmatpush1.bf16.msra.mxu0 %v8053
  %8102 = vmatprep.subr.bf16.mxu0 %v8051
  %8103 = vmatpush1.bf16.msra.mxu0 %v8050
  %8104 = vmatprep.subr.bf16.mxu0 %v8048
  %8105 = vmatpush1.bf16.msra.mxu0 %v8047
  %8106 = vmatprep.subr.bf16.mxu0 %v8045
  %8107 = vmatpush1.bf16.msra.mxu0 %v8044
  %8108 = vmatprep.subr.bf16.mxu0 0
  %8109 = vmatpush2.bf16.msra.mxu0 0
  %8110 = vmatprep.subr.bf16.mxu0 0
  %8111 = vmatpush2.bf16.msra.mxu0 0
  %8112 = vmatprep.subr.bf16.mxu0 0
  %8113 = vmatpush2.bf16.msra.mxu0 0
  %8114 = vmatprep.subr.bf16.mxu0 0
  %8115 = vmatpush2.bf16.msra.mxu0 0
  %8116 = vmatprep.subr.bf16.mxu0 0
  %8117 = vmatpush2.bf16.msra.mxu0 0
  %8118 = vmatprep.subr.bf16.mxu0 0
  %8119 = vmatpush2.bf16.msra.mxu0 0
  %8120 = vmatprep.subr.bf16.mxu0 0
  %8121 = vmatpush2.bf16.msra.mxu0 0
  %8122 = vmatprep.subr.bf16.mxu0 0
  %8123 = vmatpush2.bf16.msra.mxu0 0
  %8124 = vmatprep.mubr.bf16.mxu0 0
  %8125 = vmatmul.mubr.bf16.gmra.mxu0 %v7931
  %v8126 = vpop.f32.mrf.mxu0
  %v8127 = vadd.f32 %v247, %v8126
  %v8128 = vpop.f32.mrf.mxu0
  %v8129 = vadd.f32 %v249, %v8128
  %v8130 = vpop.f32.mrf.mxu0
  %v8131 = vpop.f32.mrf.mxu0
  %8132 = vdwg.mxu0
  %8133 = vmatprep.subr.bf16.mxu0 0
  %8134 = vmatpush1.bf16.msra.mxu0 %v8067
  %8135 = vmatprep.subr.bf16.mxu0 0
  %8136 = vmatpush1.bf16.msra.mxu0 %v8064
  %8137 = vmatprep.subr.bf16.mxu0 0
  %8138 = vmatpush1.bf16.msra.mxu0 %v8061
  %8139 = vmatprep.subr.bf16.mxu0 0
  %8140 = vmatpush1.bf16.msra.mxu0 %v8058
  %8141 = vmatprep.subr.bf16.mxu0 0
  %8142 = vmatpush1.bf16.msra.mxu0 %v8055
  %8143 = vmatprep.subr.bf16.mxu0 0
  %8144 = vmatpush1.bf16.msra.mxu0 %v8052
  %8145 = vmatprep.subr.bf16.mxu0 0
  %8146 = vmatpush1.bf16.msra.mxu0 %v8049
  %8147 = vmatprep.subr.bf16.mxu0 0
  %8148 = vmatpush1.bf16.msra.mxu0 %v8046
  %8149 = vmatprep.subr.bf16.mxu0 0
  %8150 = vmatpush2.bf16.msra.mxu0 0
  %8151 = vmatprep.subr.bf16.mxu0 0
  %8152 = vmatpush2.bf16.msra.mxu0 0
  %8153 = vmatprep.subr.bf16.mxu0 0
  %8154 = vmatpush2.bf16.msra.mxu0 0
  %8155 = vmatprep.subr.bf16.mxu0 0
  %8156 = vmatpush2.bf16.msra.mxu0 0
  %8157 = vmatprep.subr.bf16.mxu0 0
  %8158 = vmatpush2.bf16.msra.mxu0 0
  %8159 = vmatprep.subr.bf16.mxu0 0
  %8160 = vmatpush2.bf16.msra.mxu0 0
  %8161 = vmatprep.subr.bf16.mxu0 0
  %8162 = vmatpush2.bf16.msra.mxu0 0
  %8163 = vmatprep.subr.bf16.mxu0 0
  %8164 = vmatpush2.bf16.msra.mxu0 0
  %8165 = vmatprep.mubr.bf16.mxu0 0
  %8166 = vmatmul.mubr.bf16.gmra.mxu0 %v7931
  %v8167 = vpop.f32.mrf.mxu0
  %v8168 = vadd.f32 %v288, %v8167
  %v8169 = vpop.f32.mrf.mxu0
  %v8170 = vpop.f32.mrf.mxu0
  %v8171 = vpop.f32.mrf.mxu0
  %8172 = vdwg.mxu0
  %v8173 = vld [vmem:[%s5] sm:$0xff]
  %v8174 = vld [vmem:[%s5 + $0x8] sm:$0xf]
  %v8175 = vld [vmem:[%s5 + $0xc] sm:$0xff]
  %v8176 = vld [vmem:[%s5 + $0x14] sm:$0xf]
  %v8177 = vld [vmem:[%s5 + $0x18] sm:$0xff]
  %v8178 = vld [vmem:[%s5 + $0x20] sm:$0xf]
  %v8179 = vld [vmem:[%s5 + $0x24] sm:$0xff]
  %v8180 = vld [vmem:[%s5 + $0x2c] sm:$0xf]
  %v8181 = vld [vmem:[%s5 + $0x30] sm:$0xff]
  %v8182 = vld [vmem:[%s5 + $0x38] sm:$0xf]
  %v8183 = vld [vmem:[%s5 + $0x3c] sm:$0xff]
  %v8184 = vld [vmem:[%s5 + $0x44] sm:$0xf]
  %v8185 = vld [vmem:[%s5 + $0x48] sm:$0xff]
  %v8186 = vld [vmem:[%s5 + $0x50] sm:$0xf]
  %v8187 = vld [vmem:[%s5 + $0x54] sm:$0xff]
  %v8188 = vld [vmem:[%s5 + $0x5c] sm:$0xf]
  %v8189 = vld [vmem:[%s5 + $0x60] sm:$0xff]
  %v8190 = vld [vmem:[%s5 + $0x68] sm:$0xf]
  %v8191 = vld [vmem:[%s5 + $0x6c] sm:$0xff]
  %v8192 = vld [vmem:[%s5 + $0x74] sm:$0xf]
  %v8193 = vld [vmem:[%s5 + $0x78] sm:$0xff]
  %v8194 = vld [vmem:[%s5 + $0x80] sm:$0xf]
  %v8195 = vld [vmem:[%s5 + $0x84] sm:$0xff]
  %v8196 = vld [vmem:[%s5 + $0x8c] sm:$0xf]
  %v8197 = vld [vmem:[%s5 + $0x90] sm:$0xff]
  %v8198 = vld [vmem:[%s5 + $0x98] sm:$0xf]
  %v8199 = vld [vmem:[%s5 + $0x9c] sm:$0xff]
  %v8200 = vld [vmem:[%s5 + $0xa4] sm:$0xf]
  %v8201 = vld [vmem:[%s5 + $0xa8] sm:$0xff]
  %v8202 = vld [vmem:[%s5 + $0xb0] sm:$0xf]
  %v8203 = vld [vmem:[%s5 + $0xb4] sm:$0xff]
  %v8204 = vld [vmem:[%s5 + $0xbc] sm:$0xf]
  %v8237 = vunpack.c.l.b16 %v8173
  %v8238 = vunpack.c.h.b16 %v8173
  %v8239 = vunpack.c.l.b16 %v8174
  %v8240 = vunpack.c.l.b16 %v8175
  %v8241 = vunpack.c.h.b16 %v8175
  %v8242 = vunpack.c.l.b16 %v8176
  %v8243 = vunpack.c.l.b16 %v8177
  %v8244 = vunpack.c.h.b16 %v8177
  %v8245 = vunpack.c.l.b16 %v8178
  %v8246 = vunpack.c.l.b16 %v8179
  %v8247 = vunpack.c.h.b16 %v8179
  %v8248 = vunpack.c.l.b16 %v8180
  %v8249 = vunpack.c.l.b16 %v8181
  %v8250 = vunpack.c.h.b16 %v8181
  %v8251 = vunpack.c.l.b16 %v8182
  %v8252 = vunpack.c.l.b16 %v8183
  %v8253 = vunpack.c.h.b16 %v8183
  %v8254 = vunpack.c.l.b16 %v8184
  %v8255 = vunpack.c.l.b16 %v8185
  %v8256 = vunpack.c.h.b16 %v8185
  %v8257 = vunpack.c.l.b16 %v8186
  %v8258 = vunpack.c.l.b16 %v8187
  %v8259 = vunpack.c.h.b16 %v8187
  %v8260 = vunpack.c.l.b16 %v8188
  %v8261 = vunpack.c.l.b16 %v8189
  %v8262 = vunpack.c.h.b16 %v8189
  %v8263 = vunpack.c.l.b16 %v8190
  %v8264 = vunpack.c.l.b16 %v8191
  %v8265 = vunpack.c.h.b16 %v8191
  %v8266 = vunpack.c.l.b16 %v8192
  %v8267 = vunpack.c.l.b16 %v8193
  %v8268 = vunpack.c.h.b16 %v8193
  %v8269 = vunpack.c.l.b16 %v8194
  %v8270 = vunpack.c.l.b16 %v8195
  %v8271 = vunpack.c.h.b16 %v8195
  %v8272 = vunpack.c.l.b16 %v8196
  %v8273 = vunpack.c.l.b16 %v8197
  %v8274 = vunpack.c.h.b16 %v8197
  %v8275 = vunpack.c.l.b16 %v8198
  %v8276 = vunpack.c.l.b16 %v8199
  %v8277 = vunpack.c.h.b16 %v8199
  %v8278 = vunpack.c.l.b16 %v8200
  %v8279 = vunpack.c.l.b16 %v8201
  %v8280 = vunpack.c.h.b16 %v8201
  %v8281 = vunpack.c.l.b16 %v8202
  %v8282 = vunpack.c.l.b16 %v8203
  %v8283 = vunpack.c.h.b16 %v8203
  %v8284 = vunpack.c.l.b16 %v8204
  %v8285 = vpack.c.b16 %v8240, %v8237
  %v8286 = vpack.c.b16 %v8241, %v8238
  %v8287 = vpack.c.b16 %v8242, %v8239
  %v8288 = vpack.c.b16 %v8246, %v8243
  %v8289 = vpack.c.b16 %v8247, %v8244
  %v8290 = vpack.c.b16 %v8248, %v8245
  %v8291 = vpack.c.b16 %v8252, %v8249
  %v8292 = vpack.c.b16 %v8253, %v8250
  %v8293 = vpack.c.b16 %v8254, %v8251
  %v8294 = vpack.c.b16 %v8258, %v8255
  %v8295 = vpack.c.b16 %v8259, %v8256
  %v8296 = vpack.c.b16 %v8260, %v8257
  %v8297 = vpack.c.b16 %v8264, %v8261
  %v8298 = vpack.c.b16 %v8265, %v8262
  %v8299 = vpack.c.b16 %v8266, %v8263
  %v8300 = vpack.c.b16 %v8270, %v8267
  %v8301 = vpack.c.b16 %v8271, %v8268
  %v8302 = vpack.c.b16 %v8272, %v8269
  %v8303 = vpack.c.b16 %v8276, %v8273
  %v8304 = vpack.c.b16 %v8277, %v8274
  %v8305 = vpack.c.b16 %v8278, %v8275
  %v8306 = vpack.c.b16 %v8282, %v8279
  %v8307 = vpack.c.b16 %v8283, %v8280
  %v8308 = vpack.c.b16 %v8284, %v8281
  %8333 = vmatprep.subr.bf16.mxu0 %v8307
  %8334 = vmatpush1.bf16.msra.mxu0 %v8306
  %8335 = vmatprep.subr.bf16.mxu0 %v8304
  %8336 = vmatpush1.bf16.msra.mxu0 %v8303
  %8337 = vmatprep.subr.bf16.mxu0 %v8301
  %8338 = vmatpush1.bf16.msra.mxu0 %v8300
  %8339 = vmatprep.subr.bf16.mxu0 %v8298
  %8340 = vmatpush1.bf16.msra.mxu0 %v8297
  %8341 = vmatprep.subr.bf16.mxu0 %v8295
  %8342 = vmatpush1.bf16.msra.mxu0 %v8294
  %8343 = vmatprep.subr.bf16.mxu0 %v8292
  %8344 = vmatpush1.bf16.msra.mxu0 %v8291
  %8345 = vmatprep.subr.bf16.mxu0 %v8289
  %8346 = vmatpush1.bf16.msra.mxu0 %v8288
  %8347 = vmatprep.subr.bf16.mxu0 %v8286
  %8348 = vmatpush1.bf16.msra.mxu0 %v8285
  %8349 = vmatprep.subr.bf16.mxu0 0
  %8350 = vmatpush2.bf16.msra.mxu0 0
  %8351 = vmatprep.subr.bf16.mxu0 0
  %8352 = vmatpush2.bf16.msra.mxu0 0
  %8353 = vmatprep.subr.bf16.mxu0 0
  %8354 = vmatpush2.bf16.msra.mxu0 0
  %8355 = vmatprep.subr.bf16.mxu0 0
  %8356 = vmatpush2.bf16.msra.mxu0 0
  %8357 = vmatprep.subr.bf16.mxu0 0
  %8358 = vmatpush2.bf16.msra.mxu0 0
  %8359 = vmatprep.subr.bf16.mxu0 0
  %8360 = vmatpush2.bf16.msra.mxu0 0
  %8361 = vmatprep.subr.bf16.mxu0 0
  %8362 = vmatpush2.bf16.msra.mxu0 0
  %8363 = vmatprep.subr.bf16.mxu0 0
  %8364 = vmatpush2.bf16.msra.mxu0 0
  %8365 = vmatprep.mubr.bf16.mxu0 0
  %8366 = vmatmul.mubr.bf16.gmra.mxu0 %v7927
  %v8367 = vpop.f32.mrf.mxu0
  %v8368 = vadd.f32 %v574, %v8367
  %v8369 = vpop.f32.mrf.mxu0
  %v8370 = vadd.f32 %v578, %v8369
  %v8371 = vpop.f32.mrf.mxu0
  %v8372 = vpop.f32.mrf.mxu0
  %8373 = vdwg.mxu0
  %8374 = vmatprep.subr.bf16.mxu0 0
  %8375 = vmatpush1.bf16.msra.mxu0 %v8308
  %8376 = vmatprep.subr.bf16.mxu0 0
  %8377 = vmatpush1.bf16.msra.mxu0 %v8305
  %8378 = vmatprep.subr.bf16.mxu0 0
  %8379 = vmatpush1.bf16.msra.mxu0 %v8302
  %8380 = vmatprep.subr.bf16.mxu0 0
  %8381 = vmatpush1.bf16.msra.mxu0 %v8299
  %8382 = vmatprep.subr.bf16.mxu0 0
  %8383 = vmatpush1.bf16.msra.mxu0 %v8296
  %8384 = vmatprep.subr.bf16.mxu0 0
  %8385 = vmatpush1.bf16.msra.mxu0 %v8293
  %8386 = vmatprep.subr.bf16.mxu0 0
  %8387 = vmatpush1.bf16.msra.mxu0 %v8290
  %8388 = vmatprep.subr.bf16.mxu0 0
  %8389 = vmatpush1.bf16.msra.mxu0 %v8287
  %8390 = vmatprep.subr.bf16.mxu0 0
  %8391 = vmatpush2.bf16.msra.mxu0 0
  %8392 = vmatprep.subr.bf16.mxu0 0
  %8393 = vmatpush2.bf16.msra.mxu0 0
  %8394 = vmatprep.subr.bf16.mxu0 0
  %8395 = vmatpush2.bf16.msra.mxu0 0
  %8396 = vmatprep.subr.bf16.mxu0 0
  %8397 = vmatpush2.bf16.msra.mxu0 0
  %8398 = vmatprep.subr.bf16.mxu0 0
  %8399 = vmatpush2.bf16.msra.mxu0 0
  %8400 = vmatprep.subr.bf16.mxu0 0
  %8401 = vmatpush2.bf16.msra.mxu0 0
  %8402 = vmatprep.subr.bf16.mxu0 0
  %8403 = vmatpush2.bf16.msra.mxu0 0
  %8404 = vmatprep.subr.bf16.mxu0 0
  %8405 = vmatpush2.bf16.msra.mxu0 0
  %8406 = vmatprep.mubr.bf16.mxu0 0
  %8407 = vmatmul.mubr.bf16.gmra.mxu0 %v7927
  %v8408 = vpop.f32.mrf.mxu0
  %v8409 = vadd.f32 %v582, %v8408
  %v8410 = vpop.f32.mrf.mxu0
  %v8411 = vpop.f32.mrf.mxu0
  %v8412 = vpop.f32.mrf.mxu0
  %8413 = vdwg.mxu0
  %v8414 = vadd.f32 %v8127, %v8368
  %v8415 = vxor.u32 %v8414, 2147483648
  %v8416 = vmul.f32 %v8415, 1.442695
  %v8417 = vpow.pop %v8416
  %v8418 = vadd.f32 %v8417, 1.0
  %v8419 = vrcp.pop %v8418
  %v8420 = vmul.f32 1.0, %v8419
  %v8421 = vadd.f32 %v8129, %v8370
  %v8422 = vxor.u32 %v8421, 2147483648
  %v8423 = vmul.f32 %v8422, 1.442695
  %v8424 = vpow.pop %v8423
  %v8425 = vadd.f32 %v8424, 1.0
  %v8426 = vrcp.pop %v8425
  %v8427 = vmul.f32 1.0, %v8426
  %v8428 = vmul.f32 %v8420, %v8409
  %v8429 = vadd.f32 %v8168, %v8428
  %v8430 = vtanh.pop %v8429
  %v8431 = vsub.f32 1.0, %v8427
  %v8432 = vmul.f32 %v8431, %v8430
  %v8433 = vmul.f32 %v8427, %v7926
  %v8434 = vadd.f32 %v8432, %v8433
  %v8435 = vpack.c.bf16 %v8434, %v8434
  %s8436 = scalar_lea.vmem %s7, 60
  %8437 = vst [vmem:[%s8436] sm:$0xf] %v8435
  %8438 = vst [vmem:[#allocation2] sm:$0xff] %v8434
  // Predicated region
  $region34: #{decoder_forward.2} parent=0 // pred_check
    _
  $region35: #{decoder_forward.2} parent=0 // pred_check_branch
    %8440 = sbr.rel (0) target = $region37
  $region36: #{decoder_forward.2} parent=0 // pred_region
    _
  $region37: #{decoder_forward.2} parent=0 // pred_fallthru
    _
  // Predicated region
  $region38: #{decoder_forward.2} parent=0 // pred_check
    _
  $region39: #{decoder_forward.2} parent=0 // pred_check_branch
    %8442 = sbr.rel (0) target = $region41
  $region40: #{decoder_forward.2} parent=0 // pred_region
    _
  $region41: #{decoder_forward.2} parent=0 // pred_fallthru
    _

</llo_original>
